<compile_context>
chip_gen: v7x
topology: tpu7x:2x2x1
jax: 0.10.0
libtpu: 0.0.40
codegen_flags: <defaults>
</compile_context>

<pallas_src>
import functools

import numpy as np
import jax
import jax.numpy as jnp
from jax.experimental import pallas as pl
from jax.experimental.pallas import tpu as pltpu


# ----------------------------- configuration --------------------------------
EMBED_DIMS = 32
NUM_HEADS = 4
WINDOW_SIZE = 4
SHIFT_SIZE = 2
HEAD_DIM = EMBED_DIMS // NUM_HEADS
SCALE = HEAD_DIM ** (-0.5)
N_TOK = WINDOW_SIZE * WINDOW_SIZE          # tokens per window
NEG_INF = -1e9                             # off-window-block mask value


# ------------------------------ Pallas kernel --------------------------------
def _swin_attn_kernel(x_ref, wqkv_ref, bqkv_ref, wproj_ref, bproj_ref,
                      bias_ref, o_ref, qkv_ref, oh_ref, *, num_heads, head_dim):
    """All windows of one batch element.  x_ref block: (1, L, C), L = nW*N."""
    C = num_heads * head_dim

    x = x_ref[0].astype(jnp.float32)                                   # (L, C)

    # QKV projection (MXU, M=L).  Scale already folded into the Q columns.
    # Kept in VMEM scratch to bound vreg live ranges across the head loop.
    qkv_ref[...] = (jnp.dot(x, wqkv_ref[...],
                            preferred_element_type=jnp.float32)
                    + bqkv_ref[0])                                     # (L, 3C)

    for h in range(num_heads):                                         # static
        lo = h * head_dim
        q = qkv_ref[:, lo:lo + head_dim]                               # (L, hd)
        k = qkv_ref[:, C + lo:C + lo + head_dim]                       # (L, hd)
        v = qkv_ref[:, 2 * C + lo:2 * C + lo + head_dim]               # (L, hd)

        # q @ k^T over the full packed sequence -> lane-dense (L, L) scores.
        s = jax.lax.dot_general(q, k, (((1,), (1,)), ((), ())),
                                preferred_element_type=jnp.float32)    # (L, L)
        # rel-pos bias + shift mask + block-diagonal window mask, one add.
        s = s + bias_ref[h]

        # numerically-stable softmax; off-block entries underflow to exact 0.
        s = s - jnp.max(s, axis=-1, keepdims=True)
        p = jnp.exp(s)                                                 # (L, L)
        denom = jnp.sum(p, axis=-1, keepdims=True)                     # (L, 1)

        # Un-normalized P @ V, then normalize the small (L, hd) head output
        # instead of rescaling the 64-vreg p tile.
        o_h = jnp.dot(p, v, preferred_element_type=jnp.float32)        # (L, hd)
        oh_ref[:, lo:lo + head_dim] = o_h * pl.reciprocal(denom, approx=False)

    # Single K=C output projection over all concatenated heads.
    out = jnp.dot(oh_ref[...], wproj_ref[...],
                  preferred_element_type=jnp.float32) + bproj_ref[0]   # (L, C)
    o_ref[0] = out.astype(o_ref.dtype)


# -------------------------- setup-time constant prep --------------------------
def build_relative_position_bias(table):
    """table: ((2Wh-1)*(2Ww-1), num_heads) -> (num_heads, N, N)."""
    Wh = Ww = WINDOW_SIZE

    def double_step_seq(step1, len1, step2, len2):
        seq1 = np.arange(0, step1 * len1, step1)
        seq2 = np.arange(0, step2 * len2, step2)
        return (seq1[:, None] + seq2[None, :]).reshape(1, -1)

    rel_index_coords = double_step_seq(2 * Ww - 1, Wh, 1, Ww)
    rel_position_index = rel_index_coords + rel_index_coords.T
    rel_position_index = np.flip(rel_position_index, axis=1).copy()
    bias = table[rel_position_index.reshape(-1)]               # (N*N, num_heads)
    bias = bias.reshape(N_TOK, N_TOK, NUM_HEADS)
    return jnp.transpose(bias, (2, 0, 1)).astype(jnp.float32)  # (nh, N, N)


def build_shift_mask(H_pad, W_pad, ws, shift):
    """Returns (nW, N, N) float32 mask (0 or -100)."""
    nW = (H_pad // ws) * (W_pad // ws)
    if shift == 0:
        return np.zeros((nW, ws * ws, ws * ws), np.float32)
    img_mask = np.zeros((1, H_pad, W_pad, 1), np.float32)
    h_slices = (slice(0, -ws), slice(-ws, -shift), slice(-shift, None))
    w_slices = (slice(0, -ws), slice(-ws, -shift), slice(-shift, None))
    cnt = 0
    for h in h_slices:
        for w in w_slices:
            img_mask[:, h, w, :] = cnt
            cnt += 1
    mw = img_mask.reshape(1, H_pad // ws, ws, W_pad // ws, ws, 1)
    mw = mw.transpose(0, 1, 3, 2, 4, 5).reshape(-1, ws * ws)
    attn_mask = mw[:, None, :] - mw[:, :, None]
    attn_mask = np.where(attn_mask != 0, -100.0, 0.0).astype(np.float32)
    return attn_mask


def _padded_hw(hw_shape, ws):
    H, W = hw_shape
    return H + (ws - H % ws) % ws, W + (ws - W % ws) % ws


def make_pallas_attention(params, hw_shape):
    """Precompute (once) the packed bias + scale-folded weights; return attn_fn."""
    C = EMBED_DIMS
    ws, shift = WINDOW_SIZE, SHIFT_SIZE
    H_pad, W_pad = _padded_hw(hw_shape, ws)
    nW = (H_pad // ws) * (W_pad // ws)
    L = nW * N_TOK

    # Fold the 1/sqrt(head_dim) scale into the Q columns (constant transform).
    wqkv_s = params["wqkv"].astype(jnp.float32).at[:, :C].multiply(SCALE)
    bqkv_s = params["bqkv"].astype(jnp.float32).at[:C].multiply(SCALE)
    bqkv_s = bqkv_s.reshape(1, 3 * C)
    wproj = params["wproj"].astype(jnp.float32)
    bproj = params["bproj"].astype(jnp.float32).reshape(1, C)

    # Combined bias (num_heads, L, L), built ONCE: diagonal window blocks carry
    # rel-pos bias + shift mask; off-diagonal blocks carry NEG_INF.
    rel_bias = build_relative_position_bias(params["rel_table"])        # (nh,N,N)
    attn_mask = jnp.asarray(build_shift_mask(H_pad, W_pad, ws, shift))  # (nW,N,N)
    diag = rel_bias[:, None, :, :] + attn_mask[None, :, :, :]           # (nh,nW,N,N)
    same_w = jnp.eye(nW, dtype=bool)[None, :, None, :, None]            # (1,nW,1,nW,1)
    full_bias = jnp.where(same_w, diag[:, :, :, None, :], NEG_INF)      # (nh,nW,N,nW,N)
    full_bias = full_bias.reshape(NUM_HEADS, L, L).astype(jnp.float32)
    full_bias = jax.block_until_ready(full_bias)   # materialize once, reuse forever

    kernel = functools.partial(_swin_attn_kernel,
                               num_heads=NUM_HEADS, head_dim=HEAD_DIM)

    def attn_fn(xw):
        """xw: (B, nW, N, C) -> (B, nW, N, C)."""
        B = xw.shape[0]
        x_flat = xw.reshape(B, L, C)             # free layout plumbing in XLA

        out = pl.pallas_call(
            kernel,
            out_shape=jax.ShapeDtypeStruct((B, L, C), xw.dtype),
            grid=(B,),
            in_specs=[
                pl.BlockSpec((1, L, C), lambda b: (b, 0, 0)),            # x (packed)
                pl.BlockSpec((C, 3 * C), lambda b: (0, 0)),              # Wqkv (scaled)
                pl.BlockSpec((1, 3 * C), lambda b: (0, 0)),              # bqkv (scaled)
                pl.BlockSpec((C, C), lambda b: (0, 0)),                  # Wproj
                pl.BlockSpec((1, C), lambda b: (0, 0)),                  # bproj
                pl.BlockSpec((NUM_HEADS, L, L), lambda b: (0, 0, 0)),    # packed bias
            ],
            out_specs=pl.BlockSpec((1, L, C), lambda b: (b, 0, 0)),
            scratch_shapes=[
                pltpu.VMEM((L, 3 * C), jnp.float32),   # qkv
                pltpu.VMEM((L, C), jnp.float32),       # concatenated head outputs
            ],
            compiler_params=pltpu.CompilerParams(
                dimension_semantics=("parallel",)),
        )(x_flat, wqkv_s, bqkv_s, wproj, bproj, full_bias)

        return out.reshape(B, nW, N_TOK, C)

    return attn_fn


# ------------------------------- JAX glue -------------------------------------
def window_partition(x, ws):
    B, H, W, C = x.shape
    x = x.reshape(B, H // ws, ws, W // ws, ws, C)
    return x.transpose(0, 1, 3, 2, 4, 5).reshape(-1, ws, ws, C)


def window_reverse(windows, H, W, ws):
    B = windows.shape[0] // ((H // ws) * (W // ws))
    x = windows.reshape(B, H // ws, W // ws, ws, ws, -1)
    return x.transpose(0, 1, 3, 2, 4, 5).reshape(B, H, W, -1)


def shift_window_msa_forward(query, hw_shape, attn_fn):
    """Full ShiftWindowMSA forward. query: (B, L, C)."""
    B, L, C = query.shape
    H, W = hw_shape
    assert L == H * W
    ws, shift = WINDOW_SIZE, SHIFT_SIZE

    x = query.reshape(B, H, W, C)
    pad_r = (ws - W % ws) % ws
    pad_b = (ws - H % ws) % ws
    x = jnp.pad(x, ((0, 0), (0, pad_b), (0, pad_r), (0, 0)))
    H_pad, W_pad = H + pad_b, W + pad_r

    if shift > 0:
        x = jnp.roll(x, shift=(-shift, -shift), axis=(1, 2))

    nW = (H_pad // ws) * (W_pad // ws)
    windows = window_partition(x, ws)                       # (B*nW, ws, ws, C)
    xw = windows.reshape(B, nW, ws * ws, C)

    out = attn_fn(xw)                                       # (B, nW, N, C)

    out = out.reshape(B * nW, ws, ws, C)
    x = window_reverse(out, H_pad, W_pad, ws)
    if shift > 0:
        x = jnp.roll(x, shift=(shift, shift), axis=(1, 2))
    x = x[:, :H, :W, :]
    # DropPath / dropouts are identity in eval mode.
    return x.reshape(B, H * W, C)


# ------------------------- pure-JAX reference attention -----------------------
def make_ref_attention(params, hw_shape):
    ws, shift = WINDOW_SIZE, SHIFT_SIZE
    H_pad, W_pad = _padded_hw(hw_shape, ws)
    rel_bias = build_relative_position_bias(params["rel_table"])        # (nh,N,N)
    attn_mask = jnp.asarray(build_shift_mask(H_pad, W_pad, ws, shift))  # (nW,N,N)
    wqkv, bqkv = params["wqkv"], params["bqkv"]
    wproj, bproj = params["wproj"], params["bproj"]

    def attn_fn(xw):
        B, nW, N, C = xw.shape
        qkv = xw @ wqkv + bqkv                                  # (B,nW,N,3C)
        qkv = qkv.reshape(B, nW, N, 3, NUM_HEADS, HEAD_DIM)
        q, k, v = qkv[..., 0, :, :], qkv[..., 1, :, :], qkv[..., 2, :, :]
        attn = jnp.einsum('bwqhd,bwkhd->bwhqk', q * SCALE, k)
        attn = attn + rel_bias[None, None] + attn_mask[None, :, None]
        attn = jax.nn.softmax(attn, axis=-1)
        out = jnp.einsum('bwhqk,bwkhd->bwqhd', attn, v).reshape(B, nW, N, C)
        return out @ wproj + bproj

    return attn_fn


# ----------------------------------- main -------------------------------------
if __name__ == "__main__":
    key = jax.random.PRNGKey(0)
    k_x, k_qkv, k_bq, k_pr, k_bp, k_tab = jax.random.split(key, 6)

    B, H, W, C = 2, 14, 14, EMBED_DIMS          # H,W not multiple of 4 -> pad path
    query = jax.random.normal(k_x, (B, H * W, C), dtype=jnp.float32)

    params = {
        # layout: weights stored as (in_features, out_features); y = x @ W + b
        "wqkv": jax.random.normal(k_qkv, (C, 3 * C), jnp.float32) * 0.05,
        "bqkv": jax.random.normal(k_bq, (3 * C,), jnp.float32) * 0.01,
        "wproj": jax.random.normal(k_pr, (C, C), jnp.float32) * 0.05,
        "bproj": jax.random.normal(k_bp, (C,), jnp.float32) * 0.01,
        "rel_table": jax.random.normal(
            k_tab, ((2 * WINDOW_SIZE - 1) ** 2, NUM_HEADS), jnp.float32) * 0.02,
    }

    # Constants (packed bias, scale-folded weights) are precomputed once here
    # and reused for every forward call.
    pallas_attn = make_pallas_attention(params, (H, W))
    ref_attn = make_ref_attention(params, (H, W))

    out_pallas = shift_window_msa_forward(query, (H, W), pallas_attn)
    out_ref = shift_window_msa_forward(query, (H, W), ref_attn)
    jax.block_until_ready(out_pallas)
    jax.block_until_ready(out_ref)

    np.testing.assert_allclose(np.asarray(out_pallas), np.asarray(out_ref),
                               rtol=1e-4, atol=1e-4)
    assert out_pallas.shape == (B, H * W, C)
    print("KERNEL_OK")
</pallas_src>

<mosaic_0001>
module attributes {stable_mosaic.version = 11 : i64} {
  func.func @_swin_attn_kernel(%arg0: i32, %arg1: memref<1x256x32xf32, #tpu.memory_space<vmem>>, %arg2: memref<32x96xf32, #tpu.memory_space<vmem>>, %arg3: memref<1x96xf32, #tpu.memory_space<vmem>>, %arg4: memref<32x32xf32, #tpu.memory_space<vmem>>, %arg5: memref<1x32xf32, #tpu.memory_space<vmem>>, %arg6: memref<4x256x256xf32, #tpu.memory_space<vmem>>, %arg7: memref<1x256x32xf32, #tpu.memory_space<vmem>>, %arg8: memref<256x96xf32, #tpu.memory_space<vmem>>, %arg9: memref<256x32xf32, #tpu.memory_space<vmem>>) attributes {dimension_semantics = [#tpu.dimension_semantics<parallel>], iteration_bounds = array<i64: 2>, scalar_prefetch = 0 : i64, scratch_operands = 2 : i64, tpu.core_type = #tpu.core_type<tc>, window_params = [{transform_indices = @transform_0, window_bounds = array<i64: 1, 256, 32>}, {pipeline_mode = #tpu.pipeline_mode<synchronous>, transform_indices = @transform_1, window_bounds = array<i64: 32, 96>}, {pipeline_mode = #tpu.pipeline_mode<synchronous>, transform_indices = @transform_2, window_bounds = array<i64: 1, 96>}, {pipeline_mode = #tpu.pipeline_mode<synchronous>, transform_indices = @transform_3, window_bounds = array<i64: 32, 32>}, {pipeline_mode = #tpu.pipeline_mode<synchronous>, transform_indices = @transform_4, window_bounds = array<i64: 1, 32>}, {pipeline_mode = #tpu.pipeline_mode<synchronous>, transform_indices = @transform_5, window_bounds = array<i64: 4, 256, 256>}, {transform_indices = @transform_6, window_bounds = array<i64: 1, 256, 32>}]} {
    %c0 = arith.constant 0 : index
    %c0_0 = arith.constant 0 : index
    %c0_1 = arith.constant 0 : index
    %0 = vector.load %arg1[%c0, %c0_0, %c0_1] : memref<1x256x32xf32, #tpu.memory_space<vmem>>, vector<1x256x32xf32>
    %1 = vector.shape_cast %0 : vector<1x256x32xf32> to vector<256x32xf32>
    %c0_2 = arith.constant 0 : index
    %c0_3 = arith.constant 0 : index
    %2 = vector.load %arg2[%c0_2, %c0_3] : memref<32x96xf32, #tpu.memory_space<vmem>>, vector<32x96xf32>
    %cst = arith.constant dense<0.000000e+00> : vector<256x96xf32>
    %3 = tpu.matmul %1, %2, %cst {dimension_numbers = #tpu.dot_dimension_numbers<[1], [0], [0], [1], [0, 0, 1, 1], [], []>} : vector<256x32xf32>, vector<32x96xf32>, vector<256x96xf32> -> vector<256x96xf32>
    %c0_4 = arith.constant 0 : index
    %c0_5 = arith.constant 0 : index
    %4 = vector.load %arg3[%c0_4, %c0_5] : memref<1x96xf32, #tpu.memory_space<vmem>>, vector<1x96xf32>
    %5 = vector.shape_cast %4 : vector<1x96xf32> to vector<96xf32>
    %6 = vector.shape_cast %5 : vector<96xf32> to vector<1x96xf32>
    %7 = vector.broadcast %6 : vector<1x96xf32> to vector<256x96xf32>
    %8 = arith.addf %3, %7 : vector<256x96xf32>
    %c0_6 = arith.constant 0 : index
    %c0_7 = arith.constant 0 : index
    %9 = vector.load %arg8[%c0_6, %c0_7] : memref<256x96xf32, #tpu.memory_space<vmem>>, vector<256x96xf32>
    tpu.vector_store %arg8[%c0_6, %c0_7], %8 {strides = array<i32>} : memref<256x96xf32, #tpu.memory_space<vmem>>, vector<256x96xf32>,
    %c0_8 = arith.constant 0 : index
    %c0_9 = arith.constant 0 : index
    %10 = vector.load %arg8[%c0_8, %c0_9] : memref<256x96xf32, #tpu.memory_space<vmem>>, vector<256x8xf32>
    %c0_10 = arith.constant 0 : index
    %c32 = arith.constant 32 : index
    %11 = vector.load %arg8[%c0_10, %c32] : memref<256x96xf32, #tpu.memory_space<vmem>>, vector<256x8xf32>
    %c0_11 = arith.constant 0 : index
    %c64 = arith.constant 64 : index
    %12 = vector.load %arg8[%c0_11, %c64] : memref<256x96xf32, #tpu.memory_space<vmem>>, vector<256x8xf32>
    %cst_12 = arith.constant dense<0.000000e+00> : vector<256x256xf32>
    %13 = tpu.matmul %10, %11, %cst_12 {dimension_numbers = #tpu.dot_dimension_numbers<[1], [1], [0], [0], [0, 0, 1, 0], [], []>} : vector<256x8xf32>, vector<256x8xf32>, vector<256x256xf32> -> vector<256x256xf32>
    %c0_13 = arith.constant 0 : index
    %c0_14 = arith.constant 0 : index
    %c0_15 = arith.constant 0 : index
    %14 = vector.load %arg6[%c0_13, %c0_14, %c0_15] : memref<4x256x256xf32, #tpu.memory_space<vmem>>, vector<1x256x256xf32>
    %15 = vector.shape_cast %14 : vector<1x256x256xf32> to vector<256x256xf32>
    %16 = arith.addf %13, %15 : vector<256x256xf32>
    %cst_16 = arith.constant dense<0xFF800000> : vector<256xf32>
    %17 = vector.multi_reduction <maximumf>, %16, %cst_16 [1] : vector<256x256xf32> to vector<256xf32>
    %18 = vector.shape_cast %17 : vector<256xf32> to vector<256x1xf32>
    %19 = vector.broadcast %18 : vector<256x1xf32> to vector<256x256xf32>
    %20 = arith.subf %16, %19 : vector<256x256xf32>
    %21 = math.exp %20 : vector<256x256xf32>
    %cst_17 = arith.constant dense<0.000000e+00> : vector<256xf32>
    %22 = vector.multi_reduction <add>, %21, %cst_17 [1] : vector<256x256xf32> to vector<256xf32>
    %23 = vector.shape_cast %22 : vector<256xf32> to vector<256x1xf32>
    %cst_18 = arith.constant dense<0.000000e+00> : vector<256x8xf32>
    %24 = tpu.matmul %21, %12, %cst_18 {dimension_numbers = #tpu.dot_dimension_numbers<[1], [0], [0], [1], [0, 0, 1, 1], [], []>} : vector<256x256xf32>, vector<256x8xf32>, vector<256x8xf32> -> vector<256x8xf32>
    %25 = tpu.reciprocal %23 : vector<256x1xf32> -> vector<256x1xf32>
    %26 = vector.broadcast %25 : vector<256x1xf32> to vector<256x8xf32>
    %27 = arith.mulf %24, %26 : vector<256x8xf32>
    %c0_19 = arith.constant 0 : index
    %c0_20 = arith.constant 0 : index
    %28 = vector.load %arg9[%c0_19, %c0_20] : memref<256x32xf32, #tpu.memory_space<vmem>>, vector<256x8xf32>
    tpu.vector_store %arg9[%c0_19, %c0_20], %27 {strides = array<i32>} : memref<256x32xf32, #tpu.memory_space<vmem>>, vector<256x8xf32>,
    %c0_21 = arith.constant 0 : index
    %c8 = arith.constant 8 : index
    %29 = vector.load %arg8[%c0_21, %c8] : memref<256x96xf32, #tpu.memory_space<vmem>>, vector<256x8xf32>
    %c0_22 = arith.constant 0 : index
    %c40 = arith.constant 40 : index
    %30 = vector.load %arg8[%c0_22, %c40] : memref<256x96xf32, #tpu.memory_space<vmem>>, vector<256x8xf32>
    %c0_23 = arith.constant 0 : index
    %c72 = arith.constant 72 : index
    %31 = vector.load %arg8[%c0_23, %c72] : memref<256x96xf32, #tpu.memory_space<vmem>>, vector<256x8xf32>
    %cst_24 = arith.constant dense<0.000000e+00> : vector<256x256xf32>
    %32 = tpu.matmul %29, %30, %cst_24 {dimension_numbers = #tpu.dot_dimension_numbers<[1], [1], [0], [0], [0, 0, 1, 0], [], []>} : vector<256x8xf32>, vector<256x8xf32>, vector<256x256xf32> -> vector<256x256xf32>
    %c1 = arith.constant 1 : index
    %c0_25 = arith.constant 0 : index
    %c0_26 = arith.constant 0 : index
    %33 = vector.load %arg6[%c1, %c0_25, %c0_26] : memref<4x256x256xf32, #tpu.memory_space<vmem>>, vector<1x256x256xf32>
    %34 = vector.shape_cast %33 : vector<1x256x256xf32> to vector<256x256xf32>
    %35 = arith.addf %32, %34 : vector<256x256xf32>
    %cst_27 = arith.constant dense<0xFF800000> : vector<256xf32>
    %36 = vector.multi_reduction <maximumf>, %35, %cst_27 [1] : vector<256x256xf32> to vector<256xf32>
    %37 = vector.shape_cast %36 : vector<256xf32> to vector<256x1xf32>
    %38 = vector.broadcast %37 : vector<256x1xf32> to vector<256x256xf32>
    %39 = arith.subf %35, %38 : vector<256x256xf32>
    %40 = math.exp %39 : vector<256x256xf32>
    %cst_28 = arith.constant dense<0.000000e+00> : vector<256xf32>
    %41 = vector.multi_reduction <add>, %40, %cst_28 [1] : vector<256x256xf32> to vector<256xf32>
    %42 = vector.shape_cast %41 : vector<256xf32> to vector<256x1xf32>
    %cst_29 = arith.constant dense<0.000000e+00> : vector<256x8xf32>
    %43 = tpu.matmul %40, %31, %cst_29 {dimension_numbers = #tpu.dot_dimension_numbers<[1], [0], [0], [1], [0, 0, 1, 1], [], []>} : vector<256x256xf32>, vector<256x8xf32>, vector<256x8xf32> -> vector<256x8xf32>
    %44 = tpu.reciprocal %42 : vector<256x1xf32> -> vector<256x1xf32>
    %45 = vector.broadcast %44 : vector<256x1xf32> to vector<256x8xf32>
    %46 = arith.mulf %43, %45 : vector<256x8xf32>
    %c0_30 = arith.constant 0 : index
    %c8_31 = arith.constant 8 : index
    %47 = vector.load %arg9[%c0_30, %c8_31] : memref<256x32xf32, #tpu.memory_space<vmem>>, vector<256x8xf32>
    tpu.vector_store %arg9[%c0_30, %c8_31], %46 {strides = array<i32>} : memref<256x32xf32, #tpu.memory_space<vmem>>, vector<256x8xf32>,
    %c0_32 = arith.constant 0 : index
    %c16 = arith.constant 16 : index
    %48 = vector.load %arg8[%c0_32, %c16] : memref<256x96xf32, #tpu.memory_space<vmem>>, vector<256x8xf32>
    %c0_33 = arith.constant 0 : index
    %c48 = arith.constant 48 : index
    %49 = vector.load %arg8[%c0_33, %c48] : memref<256x96xf32, #tpu.memory_space<vmem>>, vector<256x8xf32>
    %c0_34 = arith.constant 0 : index
    %c80 = arith.constant 80 : index
    %50 = vector.load %arg8[%c0_34, %c80] : memref<256x96xf32, #tpu.memory_space<vmem>>, vector<256x8xf32>
    %cst_35 = arith.constant dense<0.000000e+00> : vector<256x256xf32>
    %51 = tpu.matmul %48, %49, %cst_35 {dimension_numbers = #tpu.dot_dimension_numbers<[1], [1], [0], [0], [0, 0, 1, 0], [], []>} : vector<256x8xf32>, vector<256x8xf32>, vector<256x256xf32> -> vector<256x256xf32>
    %c2 = arith.constant 2 : index
    %c0_36 = arith.constant 0 : index
    %c0_37 = arith.constant 0 : index
    %52 = vector.load %arg6[%c2, %c0_36, %c0_37] : memref<4x256x256xf32, #tpu.memory_space<vmem>>, vector<1x256x256xf32>
    %53 = vector.shape_cast %52 : vector<1x256x256xf32> to vector<256x256xf32>
    %54 = arith.addf %51, %53 : vector<256x256xf32>
    %cst_38 = arith.constant dense<0xFF800000> : vector<256xf32>
    %55 = vector.multi_reduction <maximumf>, %54, %cst_38 [1] : vector<256x256xf32> to vector<256xf32>
    %56 = vector.shape_cast %55 : vector<256xf32> to vector<256x1xf32>
    %57 = vector.broadcast %56 : vector<256x1xf32> to vector<256x256xf32>
    %58 = arith.subf %54, %57 : vector<256x256xf32>
    %59 = math.exp %58 : vector<256x256xf32>
    %cst_39 = arith.constant dense<0.000000e+00> : vector<256xf32>
    %60 = vector.multi_reduction <add>, %59, %cst_39 [1] : vector<256x256xf32> to vector<256xf32>
    %61 = vector.shape_cast %60 : vector<256xf32> to vector<256x1xf32>
    %cst_40 = arith.constant dense<0.000000e+00> : vector<256x8xf32>
    %62 = tpu.matmul %59, %50, %cst_40 {dimension_numbers = #tpu.dot_dimension_numbers<[1], [0], [0], [1], [0, 0, 1, 1], [], []>} : vector<256x256xf32>, vector<256x8xf32>, vector<256x8xf32> -> vector<256x8xf32>
    %63 = tpu.reciprocal %61 : vector<256x1xf32> -> vector<256x1xf32>
    %64 = vector.broadcast %63 : vector<256x1xf32> to vector<256x8xf32>
    %65 = arith.mulf %62, %64 : vector<256x8xf32>
    %c0_41 = arith.constant 0 : index
    %c16_42 = arith.constant 16 : index
    %66 = vector.load %arg9[%c0_41, %c16_42] : memref<256x32xf32, #tpu.memory_space<vmem>>, vector<256x8xf32>
    tpu.vector_store %arg9[%c0_41, %c16_42], %65 {strides = array<i32>} : memref<256x32xf32, #tpu.memory_space<vmem>>, vector<256x8xf32>,
    %c0_43 = arith.constant 0 : index
    %c24 = arith.constant 24 : index
    %67 = vector.load %arg8[%c0_43, %c24] : memref<256x96xf32, #tpu.memory_space<vmem>>, vector<256x8xf32>
    %c0_44 = arith.constant 0 : index
    %c56 = arith.constant 56 : index
    %68 = vector.load %arg8[%c0_44, %c56] : memref<256x96xf32, #tpu.memory_space<vmem>>, vector<256x8xf32>
    %c0_45 = arith.constant 0 : index
    %c88 = arith.constant 88 : index
    %69 = vector.load %arg8[%c0_45, %c88] : memref<256x96xf32, #tpu.memory_space<vmem>>, vector<256x8xf32>
    %cst_46 = arith.constant dense<0.000000e+00> : vector<256x256xf32>
    %70 = tpu.matmul %67, %68, %cst_46 {dimension_numbers = #tpu.dot_dimension_numbers<[1], [1], [0], [0], [0, 0, 1, 0], [], []>} : vector<256x8xf32>, vector<256x8xf32>, vector<256x256xf32> -> vector<256x256xf32>
    %c3 = arith.constant 3 : index
    %c0_47 = arith.constant 0 : index
    %c0_48 = arith.constant 0 : index
    %71 = vector.load %arg6[%c3, %c0_47, %c0_48] : memref<4x256x256xf32, #tpu.memory_space<vmem>>, vector<1x256x256xf32>
    %72 = vector.shape_cast %71 : vector<1x256x256xf32> to vector<256x256xf32>
    %73 = arith.addf %70, %72 : vector<256x256xf32>
    %cst_49 = arith.constant dense<0xFF800000> : vector<256xf32>
    %74 = vector.multi_reduction <maximumf>, %73, %cst_49 [1] : vector<256x256xf32> to vector<256xf32>
    %75 = vector.shape_cast %74 : vector<256xf32> to vector<256x1xf32>
    %76 = vector.broadcast %75 : vector<256x1xf32> to vector<256x256xf32>
    %77 = arith.subf %73, %76 : vector<256x256xf32>
    %78 = math.exp %77 : vector<256x256xf32>
    %cst_50 = arith.constant dense<0.000000e+00> : vector<256xf32>
    %79 = vector.multi_reduction <add>, %78, %cst_50 [1] : vector<256x256xf32> to vector<256xf32>
    %80 = vector.shape_cast %79 : vector<256xf32> to vector<256x1xf32>
    %cst_51 = arith.constant dense<0.000000e+00> : vector<256x8xf32>
    %81 = tpu.matmul %78, %69, %cst_51 {dimension_numbers = #tpu.dot_dimension_numbers<[1], [0], [0], [1], [0, 0, 1, 1], [], []>} : vector<256x256xf32>, vector<256x8xf32>, vector<256x8xf32> -> vector<256x8xf32>
    %82 = tpu.reciprocal %80 : vector<256x1xf32> -> vector<256x1xf32>
    %83 = vector.broadcast %82 : vector<256x1xf32> to vector<256x8xf32>
    %84 = arith.mulf %81, %83 : vector<256x8xf32>
    %c0_52 = arith.constant 0 : index
    %c24_53 = arith.constant 24 : index
    %85 = vector.load %arg9[%c0_52, %c24_53] : memref<256x32xf32, #tpu.memory_space<vmem>>, vector<256x8xf32>
    tpu.vector_store %arg9[%c0_52, %c24_53], %84 {strides = array<i32>} : memref<256x32xf32, #tpu.memory_space<vmem>>, vector<256x8xf32>,
    %c0_54 = arith.constant 0 : index
    %c0_55 = arith.constant 0 : index
    %86 = vector.load %arg9[%c0_54, %c0_55] : memref<256x32xf32, #tpu.memory_space<vmem>>, vector<256x32xf32>
    %c0_56 = arith.constant 0 : index
    %c0_57 = arith.constant 0 : index
    %87 = vector.load %arg4[%c0_56, %c0_57] : memref<32x32xf32, #tpu.memory_space<vmem>>, vector<32x32xf32>
    %cst_58 = arith.constant dense<0.000000e+00> : vector<256x32xf32>
    %88 = tpu.matmul %86, %87, %cst_58 {dimension_numbers = #tpu.dot_dimension_numbers<[1], [0], [0], [1], [0, 0, 1, 1], [], []>} : vector<256x32xf32>, vector<32x32xf32>, vector<256x32xf32> -> vector<256x32xf32>
    %c0_59 = arith.constant 0 : index
    %c0_60 = arith.constant 0 : index
    %89 = vector.load %arg5[%c0_59, %c0_60] : memref<1x32xf32, #tpu.memory_space<vmem>>, vector<1x32xf32>
    %90 = vector.shape_cast %89 : vector<1x32xf32> to vector<32xf32>
    %91 = vector.shape_cast %90 : vector<32xf32> to vector<1x32xf32>
    %92 = vector.broadcast %91 : vector<1x32xf32> to vector<256x32xf32>
    %93 = arith.addf %88, %92 : vector<256x32xf32>
    %c0_61 = arith.constant 0 : index
    %c0_62 = arith.constant 0 : index
    %c0_63 = arith.constant 0 : index
    %94 = vector.load %arg7[%c0_61, %c0_62, %c0_63] : memref<1x256x32xf32, #tpu.memory_space<vmem>>, vector<1x256x32xf32>
    %95 = vector.shape_cast %94 : vector<1x256x32xf32> to vector<256x32xf32>
    %96 = vector.shape_cast %93 : vector<256x32xf32> to vector<1x256x32xf32>
    tpu.vector_store %arg7[%c0_61, %c0_62, %c0_63], %96 {strides = array<i32>} : memref<1x256x32xf32, #tpu.memory_space<vmem>>, vector<1x256x32xf32>,
    return
  }
  func.func @transform_0(%arg0: i32) -> (i32, i32, i32) {
    %c0_i32 = arith.constant 0 : i32
    %c0_i32_0 = arith.constant 0 : i32
    %c0_i32_1 = arith.constant 0 : i32
    return %arg0, %c0_i32, %c0_i32_0 : i32, i32, i32
  }
  func.func @transform_1(%arg0: i32) -> (i32, i32) {
    %c0_i32 = arith.constant 0 : i32
    %c0_i32_0 = arith.constant 0 : i32
    %c0_i32_1 = arith.constant 0 : i32
    return %c0_i32, %c0_i32_0 : i32, i32
  }
  func.func @transform_2(%arg0: i32) -> (i32, i32) {
    %c0_i32 = arith.constant 0 : i32
    %c0_i32_0 = arith.constant 0 : i32
    %c0_i32_1 = arith.constant 0 : i32
    return %c0_i32, %c0_i32_0 : i32, i32
  }
  func.func @transform_3(%arg0: i32) -> (i32, i32) {
    %c0_i32 = arith.constant 0 : i32
    %c0_i32_0 = arith.constant 0 : i32
    %c0_i32_1 = arith.constant 0 : i32
    return %c0_i32, %c0_i32_0 : i32, i32
  }
  func.func @transform_4(%arg0: i32) -> (i32, i32) {
    %c0_i32 = arith.constant 0 : i32
    %c0_i32_0 = arith.constant 0 : i32
    %c0_i32_1 = arith.constant 0 : i32
    return %c0_i32, %c0_i32_0 : i32, i32
  }
  func.func @transform_5(%arg0: i32) -> (i32, i32, i32) {
    %c0_i32 = arith.constant 0 : i32
    %c0_i32_0 = arith.constant 0 : i32
    %c0_i32_1 = arith.constant 0 : i32
    %c0_i32_2 = arith.constant 0 : i32
    return %c0_i32, %c0_i32_0, %c0_i32_1 : i32, i32, i32
  }
  func.func @transform_6(%arg0: i32) -> (i32, i32, i32) {
    %c0_i32 = arith.constant 0 : i32
    %c0_i32_0 = arith.constant 0 : i32
    %c0_i32_1 = arith.constant 0 : i32
    return %arg0, %c0_i32, %c0_i32_0 : i32, i32, i32
  }
}

</mosaic_0001>

<llo_original>
// kernel: tpu_custom_call.1
$region0: #{tpu_custom_call.1}
  #allocation0 [shape = 'u32[]', space=smem, size = 0x4, offset = 0x4, fixed_abs, tag = 'smem constant byte address 0x4 - core index']
  #allocation1 [shape = 'u32[144,128]{1,0:T(1,128)}', space=vmem, size = 0x12000, scoped, tag = 'internal scratch']
  #allocation2 [shape = 'f32[256,96]{1,0:T(8,128)}', space=vmem, size = 0x20000, scoped, tag = 'scratch operand']
  #allocation3 [shape = 'f32[256,32]{1,0:T(8,128)}', space=vmem, size = 0x20000, scoped, tag = 'scratch operand']
  %s0 = inlined_call_operand.vmem [shape: f32[2,256,32], index: 0, kind: input, shape index: {}]
  %s1 = inlined_call_operand.vmem [shape: f32[32,96], index: 1, kind: input, shape index: {}]
  %s2 = inlined_call_operand.vmem [shape: f32[1,96], index: 2, kind: input, shape index: {}]
  %s3 = inlined_call_operand.vmem [shape: f32[32,32], index: 3, kind: input, shape index: {}]
  %s4 = inlined_call_operand.vmem [shape: f32[1,32], index: 4, kind: input, shape index: {}]
  %s5 = inlined_call_operand.hbm [shape: f32[4,256,256], index: 5, kind: input, shape index: {}]
  %s6 = inlined_call_operand.vmem [shape: f32[2,256,32], index: 6, kind: output, shape index: {}]
  %s7 = sld [smem:[#allocation0]]
  $region61: #{tpu_custom_call.1} parent=0
    _
  %s9 = ssub.s32 1, %s7
  %s10 = scalar_select 0, %s9, %s7
  $region1: #{tpu_custom_call.1} parent=0
    #allocation4 [shape = 'u8[1048576]{0}', space=vmem, size = 0x100000, scoped, tag = 'input window, operand 5, single buffered']
    #allocation5 [shape = 's32[2]{0}', space=sflag, size = 0x8, scoped, tag = 'scoped memory for tpu_custom_call.1']
    %11 = vsyncpa [#allocation5], 0
    loop: start=0, step=1, limit=4
    $region2: #{tpu_custom_call.1} parent=1 // loop_pre_header
      _
    $region3: #{tpu_custom_call.1} parent=1 // loop_header
      %s13 = sphi 0, %s17
      %p14 = scmp.ge.s32.totalorder %s13, 4
      %s23 = sphi 0, %s25
      %s26 = sphi 0, %s23
      %s27 = sphi 0, %s26
      %s43 = sphi 0, %s27
      %s47 = sphi 0, %s47
      %s49 = sphi 0, %s47
      %s50 = sphi 0, %s49
      %s64 = sphi 0, %s50
      %s68 = sphi 0, %s68
      %s70 = sphi 0, %s68
      %s71 = sphi 0, %s70
      %s85 = sphi 0, %s71
      %s89 = sphi 0, %s89
      %s91 = sphi 0, %s89
      %s92 = sphi 0, %s91
      %s106 = sphi 0, %s92
      %s110 = sphi 0, %s110
      %s112 = sphi 0, %s110
      %s113 = sphi 0, %s112
      %s127 = sphi 0, %s113
      %s131 = sphi 0, %s131
      %s133 = sphi 0, %s131
      %s134 = sphi 0, %s133
      %s148 = sphi 0, %s134
      %s154 = sphi 0, %s156
      %s157 = sphi 0, %s154
      %s158 = sphi 0, %s157
      %s174 = sphi 0, %s158
    $region4: #{tpu_custom_call.1} parent=1 // loop_header_branch
      %16 = sbr.rel (%p14) target = $region8
    $region5: #{tpu_custom_call.1} parent=1 // loop_body
      %s18 = ssub.s32 %s13, 1
      %s19 = ssub.s32 %s13, 2
      %s20 = sadd.s32 %s13, 1
      %s21 = ssub.s32 %s13, %s20
      %p22 = scmp.eq.s32.totalorder %s21, 0
      %s24 = sadd.s32 %s23, 1
      %s25 = scalar_select %p22, %s23, %s24
      %p28 = pneg %p22
      %p29 = scmp.eq.s32.totalorder %s13, 1
      %p30 = por %p28, %p29
      %p31 = scmp.ne.s32.totalorder %s23, %s26
      %p32 = scmp.eq.s32.totalorder %s13, 0
      %p33 = por %p31, %p32
      %p34 = scmp.ne.s32.totalorder %s23, %s26
      %p35 = scmp.eq.s32.totalorder %s18, 1
      %p36 = por %p34, %p35
      %p37 = scmp.ne.s32.totalorder %s26, %s27
      %p38 = scmp.eq.s32.totalorder %s18, 0
      %p39 = por %p37, %p38
      %p40 = scmp.ne.s32.totalorder %s26, %s27
      %p41 = scmp.eq.s32.totalorder %s19, 1
      %p42 = por %p40, %p41
      %p44 = scmp.ne.s32.totalorder %s27, %s43
      %p45 = scmp.eq.s32.totalorder %s19, 0
      %p46 = por %p44, %p45
      %s48 = sadd.s32 %s47, 1
      %p51 = scmp.eq.s32.totalorder %s13, 1
      %p52 = scmp.ne.s32.totalorder %s47, %s49
      %p53 = scmp.eq.s32.totalorder %s13, 0
      %p54 = por %p52, %p53
      %p55 = scmp.ne.s32.totalorder %s47, %s49
      %p56 = scmp.eq.s32.totalorder %s18, 1
      %p57 = por %p55, %p56
      %p58 = scmp.ne.s32.totalorder %s49, %s50
      %p59 = scmp.eq.s32.totalorder %s18, 0
      %p60 = por %p58, %p59
      %p61 = scmp.ne.s32.totalorder %s49, %s50
      %p62 = scmp.eq.s32.totalorder %s19, 1
      %p63 = por %p61, %p62
      %p65 = scmp.ne.s32.totalorder %s50, %s64
      %p66 = scmp.eq.s32.totalorder %s19, 0
      %p67 = por %p65, %p66
      %s69 = sadd.s32 %s68, 1
      %p72 = scmp.eq.s32.totalorder %s13, 1
      %p73 = scmp.ne.s32.totalorder %s68, %s70
      %p74 = scmp.eq.s32.totalorder %s13, 0
      %p75 = por %p73, %p74
      %p76 = scmp.ne.s32.totalorder %s68, %s70
      %p77 = scmp.eq.s32.totalorder %s18, 1
      %p78 = por %p76, %p77
      %p79 = scmp.ne.s32.totalorder %s70, %s71
      %p80 = scmp.eq.s32.totalorder %s18, 0
      %p81 = por %p79, %p80
      %p82 = scmp.ne.s32.totalorder %s70, %s71
      %p83 = scmp.eq.s32.totalorder %s19, 1
      %p84 = por %p82, %p83
      %p86 = scmp.ne.s32.totalorder %s71, %s85
      %p87 = scmp.eq.s32.totalorder %s19, 0
      %p88 = por %p86, %p87
      %s90 = sadd.s32 %s89, 1
      %p93 = scmp.eq.s32.totalorder %s13, 1
      %p94 = scmp.ne.s32.totalorder %s89, %s91
      %p95 = scmp.eq.s32.totalorder %s13, 0
      %p96 = por %p94, %p95
      %p97 = scmp.ne.s32.totalorder %s89, %s91
      %p98 = scmp.eq.s32.totalorder %s18, 1
      %p99 = por %p97, %p98
      %p100 = scmp.ne.s32.totalorder %s91, %s92
      %p101 = scmp.eq.s32.totalorder %s18, 0
      %p102 = por %p100, %p101
      %p103 = scmp.ne.s32.totalorder %s91, %s92
      %p104 = scmp.eq.s32.totalorder %s19, 1
      %p105 = por %p103, %p104
      %p107 = scmp.ne.s32.totalorder %s92, %s106
      %p108 = scmp.eq.s32.totalorder %s19, 0
      %p109 = por %p107, %p108
      %s111 = sadd.s32 %s110, 1
      %p114 = scmp.eq.s32.totalorder %s13, 1
      %p115 = scmp.ne.s32.totalorder %s110, %s112
      %p116 = scmp.eq.s32.totalorder %s13, 0
      %p117 = por %p115, %p116
      %p118 = scmp.ne.s32.totalorder %s110, %s112
      %p119 = scmp.eq.s32.totalorder %s18, 1
      %p120 = por %p118, %p119
      %p121 = scmp.ne.s32.totalorder %s112, %s113
      %p122 = scmp.eq.s32.totalorder %s18, 0
      %p123 = por %p121, %p122
      %p124 = scmp.ne.s32.totalorder %s112, %s113
      %p125 = scmp.eq.s32.totalorder %s19, 1
      %p126 = por %p124, %p125
      %p128 = scmp.ne.s32.totalorder %s113, %s127
      %p129 = scmp.eq.s32.totalorder %s19, 0
      %p130 = por %p128, %p129
      %s132 = sadd.s32 %s131, 1
      %p135 = scmp.eq.s32.totalorder %s13, 1
      %p136 = scmp.ne.s32.totalorder %s131, %s133
      %p137 = scmp.eq.s32.totalorder %s13, 0
      %p138 = por %p136, %p137
      %p139 = scmp.ne.s32.totalorder %s131, %s133
      %p140 = scmp.eq.s32.totalorder %s18, 1
      %p141 = por %p139, %p140
      %p142 = scmp.ne.s32.totalorder %s133, %s134
      %p143 = scmp.eq.s32.totalorder %s18, 0
      %p144 = por %p142, %p143
      %p145 = scmp.ne.s32.totalorder %s133, %s134
      %p146 = scmp.eq.s32.totalorder %s19, 1
      %p147 = por %p145, %p146
      %p149 = scmp.ne.s32.totalorder %s134, %s148
      %p150 = scmp.eq.s32.totalorder %s19, 0
      %p151 = por %p149, %p150
      %s152 = ssub.s32 %s13, %s20
      %p153 = scmp.eq.s32.totalorder %s152, 0
      %s155 = sadd.s32 %s154, 1
      %s156 = scalar_select %p153, %s154, %s155
      %p159 = pneg %p153
      %p160 = scmp.eq.s32.totalorder %s13, 1
      %p161 = por %p159, %p160
      %p162 = scmp.ne.s32.totalorder %s154, %s157
      %p163 = scmp.eq.s32.totalorder %s13, 0
      %p164 = por %p162, %p163
      %p165 = scmp.ne.s32.totalorder %s154, %s157
      %p166 = scmp.eq.s32.totalorder %s18, 1
      %p167 = por %p165, %p166
      %p168 = scmp.ne.s32.totalorder %s157, %s158
      %p169 = scmp.eq.s32.totalorder %s18, 0
      %p170 = por %p168, %p169
      %p171 = scmp.ne.s32.totalorder %s157, %s158
      %p172 = scmp.eq.s32.totalorder %s19, 1
      %p173 = por %p171, %p172
      %p175 = scmp.ne.s32.totalorder %s158, %s174
      %p176 = scmp.eq.s32.totalorder %s19, 0
      %p177 = por %p175, %p176
      %p178 = scmp.le.s32.totalorder 1, %s13
      %p179 = scmp.lt.s32.totalorder %s13, 3
      %p180 = pnand %p178, %p179
      %p181 = pneg %p180
      // Predicated region
      $region9: #{tpu_custom_call.1} parent=5 // pred_check
        _
      $region10: #{tpu_custom_call.1} parent=5 // pred_check_branch
        %183 = sbr.rel (%p180) target = $region12
      $region11: #{tpu_custom_call.1} parent=5 // pred_region
        %s184 = ssub.s32 %s13, 1
        // Predicated region
        $region13: #{tpu_custom_call.1} parent=11 // pred_check
          %p185 = pneg %p60
        $region14: #{tpu_custom_call.1} parent=11 // pred_check_branch
          %187 = sbr.rel (%p185) target = $region16
        $region15: #{tpu_custom_call.1} parent=11 // pred_region
          _
        $region16: #{tpu_custom_call.1} parent=11 // pred_fallthru
          _
        // Predicated region
        $region17: #{tpu_custom_call.1} parent=11 // pred_check
          %p188 = pneg %p81
        $region18: #{tpu_custom_call.1} parent=11 // pred_check_branch
          %190 = sbr.rel (%p188) target = $region20
        $region19: #{tpu_custom_call.1} parent=11 // pred_region
          _
        $region20: #{tpu_custom_call.1} parent=11 // pred_fallthru
          _
        // Predicated region
        $region21: #{tpu_custom_call.1} parent=11 // pred_check
          %p191 = pneg %p102
        $region22: #{tpu_custom_call.1} parent=11 // pred_check_branch
          %193 = sbr.rel (%p191) target = $region24
        $region23: #{tpu_custom_call.1} parent=11 // pred_region
          _
        $region24: #{tpu_custom_call.1} parent=11 // pred_fallthru
          _
        // Predicated region
        $region25: #{tpu_custom_call.1} parent=11 // pred_check
          %p194 = pneg %p123
        $region26: #{tpu_custom_call.1} parent=11 // pred_check_branch
          %196 = sbr.rel (%p194) target = $region28
        $region27: #{tpu_custom_call.1} parent=11 // pred_region
          _
        $region28: #{tpu_custom_call.1} parent=11 // pred_fallthru
          _
        // Predicated region
        $region29: #{tpu_custom_call.1} parent=11 // pred_check
          %p197 = pneg %p144
        $region30: #{tpu_custom_call.1} parent=11 // pred_check_branch
          %199 = sbr.rel (%p197) target = $region32
        $region31: #{tpu_custom_call.1} parent=11 // pred_region
          %s201 = ssub.s32 32768, 32768
          %202 = vsyncadd [#allocation5], %s201
          %s203 = sshll.u32 [#allocation4], 4
          %s204 = int_to_ptr.vmem [resolvable:$true] %s203
          %209 = dma.hbm_to_vmem [thread:$0]  %s5, 32768, %s204, [#allocation5], 256, 256, 16
        $region32: #{tpu_custom_call.1} parent=11 // pred_fallthru
          _
      $region12: #{tpu_custom_call.1} parent=5 // pred_fallthru
        _
      %p210 = scmp.lt.s32.totalorder %s13, 2
      // Predicated region
      $region33: #{tpu_custom_call.1} parent=5 // pred_check
        %p211 = pneg %p210
      $region34: #{tpu_custom_call.1} parent=5 // pred_check_branch
        %213 = sbr.rel (%p211) target = $region36
      $region35: #{tpu_custom_call.1} parent=5 // pred_region
        // Predicated region
        $region37: #{tpu_custom_call.1} parent=35 // pred_check
          %p214 = pneg %p33
        $region38: #{tpu_custom_call.1} parent=35 // pred_check_branch
          %216 = sbr.rel (%p214) target = $region40
        $region39: #{tpu_custom_call.1} parent=35 // pred_region
          %p217 = scmp.lt.s32.totalorder %s13, 1
          %s218 = scalar_select %p217, %s13, 1
          %s219 = smul.addr %s218, 32
          %s220 = smul.addr %s219, 8
          %s221 = scalar_lea.vmem %s0, %s220
        $region40: #{tpu_custom_call.1} parent=35 // pred_fallthru
          _
      $region36: #{tpu_custom_call.1} parent=5 // pred_fallthru
        _
      %p222 = scmp.le.s32.totalorder 1, %s13
      %p223 = scmp.lt.s32.totalorder %s13, 3
      %p224 = pnand %p222, %p223
      %p225 = pneg %p224
      // Predicated region
      $region41: #{tpu_custom_call.1} parent=5 // pred_check
        _
      $region42: #{tpu_custom_call.1} parent=5 // pred_check_branch
        %227 = sbr.rel (%p224) target = $region44
      $region43: #{tpu_custom_call.1} parent=5 // pred_region
        %s228 = ssub.s32 %s13, 1
        // Predicated region
        $region45: #{tpu_custom_call.1} parent=43 // pred_check
          %p229 = pneg %p144
        $region46: #{tpu_custom_call.1} parent=43 // pred_check_branch
          %231 = sbr.rel (%p229) target = $region48
        $region47: #{tpu_custom_call.1} parent=43 // pred_region
          %232 = dma.done [#allocation5], 32768
        $region48: #{tpu_custom_call.1} parent=43 // pred_fallthru
          _
        %p233 = scmp.lt.s32.totalorder %s18, 1
        %s234 = scalar_select %p233, %s18, 1
        %s235 = smul.addr %s234, 32
        %s236 = smul.addr %s235, 8
        %s237 = scalar_lea.vmem %s0, %s236
        %p238 = pneg %p39
        %p239 = pneg %p36
        %p240 = pneg %p60
        %p241 = pneg %p57
        %p242 = pneg %p81
        %p243 = pneg %p78
        %p244 = pneg %p102
        %p245 = pneg %p99
        %p246 = pneg %p123
        %p247 = pneg %p120
        %p248 = pneg %p144
        %p249 = pneg %p141
        %p250 = pneg %p170
        %p251 = pneg %p167
        %p252 = scmp.lt.s32.totalorder %s18, 1
        %s253 = scalar_select %p252, %s18, 1
        %s254 = smul.addr %s253, 32
        %s255 = smul.addr %s254, 8
        %s256 = scalar_lea.vmem %s6, %s255
        %p257 = scmp.lt.s32.totalorder %s18, 1
        %s258 = scalar_select %p257, %s18, 1
        %s259 = smul.addr %s258, 32
        %s260 = smul.addr %s259, 8
        %s261 = scalar_lea.vmem %s0, %s260
        %p262 = scmp.lt.s32.totalorder %s18, 1
        %s263 = scalar_select %p262, %s18, 1
        %s264 = smul.addr %s263, 32
        %s265 = smul.addr %s264, 8
        %s266 = scalar_lea.vmem %s6, %s265
        %v267 = vld [vmem:[%s261] sm:$0xff]
        %v268 = vld [vmem:[%s261 + $0x8] sm:$0xff]
        %v269 = vld [vmem:[%s261 + $0x10] sm:$0xff]
        %v270 = vld [vmem:[%s261 + $0x18] sm:$0xff]
        %v271 = vld [vmem:[%s261 + $0x20] sm:$0xff]
        %v272 = vld [vmem:[%s261 + $0x28] sm:$0xff]
        %v273 = vld [vmem:[%s261 + $0x30] sm:$0xff]
        %v274 = vld [vmem:[%s261 + $0x38] sm:$0xff]
        %v275 = vld [vmem:[%s261 + $0x40] sm:$0xff]
        %v276 = vld [vmem:[%s261 + $0x48] sm:$0xff]
        %v277 = vld [vmem:[%s261 + $0x50] sm:$0xff]
        %v278 = vld [vmem:[%s261 + $0x58] sm:$0xff]
        %v279 = vld [vmem:[%s261 + $0x60] sm:$0xff]
        %v280 = vld [vmem:[%s261 + $0x68] sm:$0xff]
        %v281 = vld [vmem:[%s261 + $0x70] sm:$0xff]
        %v282 = vld [vmem:[%s261 + $0x78] sm:$0xff]
        %v283 = vld [vmem:[%s261 + $0x80] sm:$0xff]
        %v284 = vld [vmem:[%s261 + $0x88] sm:$0xff]
        %v285 = vld [vmem:[%s261 + $0x90] sm:$0xff]
        %v286 = vld [vmem:[%s261 + $0x98] sm:$0xff]
        %v287 = vld [vmem:[%s261 + $0xa0] sm:$0xff]
        %v288 = vld [vmem:[%s261 + $0xa8] sm:$0xff]
        %v289 = vld [vmem:[%s261 + $0xb0] sm:$0xff]
        %v290 = vld [vmem:[%s261 + $0xb8] sm:$0xff]
        %v291 = vld [vmem:[%s261 + $0xc0] sm:$0xff]
        %v292 = vld [vmem:[%s261 + $0xc8] sm:$0xff]
        %v293 = vld [vmem:[%s261 + $0xd0] sm:$0xff]
        %v294 = vld [vmem:[%s261 + $0xd8] sm:$0xff]
        %v295 = vld [vmem:[%s261 + $0xe0] sm:$0xff]
        %v296 = vld [vmem:[%s261 + $0xe8] sm:$0xff]
        %v297 = vld [vmem:[%s261 + $0xf0] sm:$0xff]
        %v298 = vld [vmem:[%s261 + $0xf8] sm:$0xff]
        %v299 = vld [vmem:[%s1] sm:$0xff]
        %v300 = vld [vmem:[%s1 + $0x8] sm:$0xff]
        %v301 = vld [vmem:[%s1 + $0x10] sm:$0xff]
        %v302 = vld [vmem:[%s1 + $0x18] sm:$0xff]
        %v303 = vld [vmem:[%s2] sm:$0x1]
        %v305 = vlaneseq
        %v306 = vshrl.u32 %v305, 7
        %v307 = vsub.s32 0, %v306
        %v308 = vrot.slane %v303, %v307
        %vm310 = vcmask 261120
        %v312 = vsel %vm310, %v267, 0
        %v315 = vsel %vm310, %v268, 0
        %v318 = vsel %vm310, %v269, 0
        %v321 = vsel %vm310, %v270, 0
        %v324 = vsel %vm310, %v271, 0
        %v327 = vsel %vm310, %v272, 0
        %v330 = vsel %vm310, %v273, 0
        %v333 = vsel %vm310, %v274, 0
        %v336 = vsel %vm310, %v275, 0
        %v339 = vsel %vm310, %v276, 0
        %v342 = vsel %vm310, %v277, 0
        %v345 = vsel %vm310, %v278, 0
        %v348 = vsel %vm310, %v279, 0
        %v351 = vsel %vm310, %v280, 0
        %v354 = vsel %vm310, %v281, 0
        %v357 = vsel %vm310, %v282, 0
        %v360 = vsel %vm310, %v283, 0
        %v363 = vsel %vm310, %v284, 0
        %v366 = vsel %vm310, %v285, 0
        %v369 = vsel %vm310, %v286, 0
        %v372 = vsel %vm310, %v287, 0
        %v375 = vsel %vm310, %v288, 0
        %v378 = vsel %vm310, %v289, 0
        %v381 = vsel %vm310, %v290, 0
        %v384 = vsel %vm310, %v291, 0
        %v387 = vsel %vm310, %v292, 0
        %v390 = vsel %vm310, %v293, 0
        %v393 = vsel %vm310, %v294, 0
        %v396 = vsel %vm310, %v295, 0
        %v399 = vsel %vm310, %v296, 0
        %v402 = vsel %vm310, %v297, 0
        %v405 = vsel %vm310, %v298, 0
        %407 = vmatprep.subr.mxu0 0.0
        %408 = vmatpush1.msra.mxu0 %v299
        %409 = vmatprep.subr.mxu0 0.0
        %410 = vmatpush1.msra.mxu0 %v300
        %411 = vmatprep.subr.mxu0 0.0
        %412 = vmatpush1.msra.mxu0 %v301
        %413 = vmatprep.subr.mxu0 0.0
        %414 = vmatpush1.msra.mxu0 %v302
        %415 = vmatprep.subr.mxu0 0.0
        %416 = vmatpush1.msra.mxu0 0.0
        %417 = vmatprep.subr.mxu0 0.0
        %418 = vmatpush1.msra.mxu0 0.0
        %419 = vmatprep.subr.mxu0 0.0
        %420 = vmatpush1.msra.mxu0 0.0
        %421 = vmatprep.subr.mxu0 0.0
        %422 = vmatpush1.msra.mxu0 0.0
        %423 = vmatprep.subr.mxu0 0.0
        %424 = vmatpush1.msra.mxu0 0.0
        %425 = vmatprep.subr.mxu0 0.0
        %426 = vmatpush1.msra.mxu0 0.0
        %427 = vmatprep.subr.mxu0 0.0
        %428 = vmatpush1.msra.mxu0 0.0
        %429 = vmatprep.subr.mxu0 0.0
        %430 = vmatpush1.msra.mxu0 0.0
        %431 = vmatprep.subr.mxu0 0.0
        %432 = vmatpush1.msra.mxu0 0.0
        %433 = vmatprep.subr.mxu0 0.0
        %434 = vmatpush1.msra.mxu0 0.0
        %435 = vmatprep.subr.mxu0 0.0
        %436 = vmatpush1.msra.mxu0 0.0
        %437 = vmatprep.subr.mxu0 0.0
        %438 = vmatpush1.msra.mxu0 0.0
        %439 = vmatprep.subr.mxu0 0.0
        %440 = vmatpush1.msra.mxu0 0.0
        %441 = vmatprep.subr.mxu0 0.0
        %442 = vmatpush1.msra.mxu0 0.0
        %443 = vmatprep.subr.mxu0 0.0
        %444 = vmatpush1.msra.mxu0 0.0
        %445 = vmatprep.subr.mxu0 0.0
        %446 = vmatpush1.msra.mxu0 0.0
        %447 = vmatprep.subr.mxu0 0.0
        %448 = vmatpush1.msra.mxu0 0.0
        %449 = vmatprep.subr.mxu0 0.0
        %450 = vmatpush1.msra.mxu0 0.0
        %451 = vmatprep.subr.mxu0 0.0
        %452 = vmatpush1.msra.mxu0 0.0
        %453 = vmatprep.subr.mxu0 0.0
        %454 = vmatpush1.msra.mxu0 0.0
        %455 = vmatprep.subr.mxu0 0.0
        %456 = vmatpush1.msra.mxu0 0.0
        %457 = vmatprep.subr.mxu0 0.0
        %458 = vmatpush1.msra.mxu0 0.0
        %459 = vmatprep.subr.mxu0 0.0
        %460 = vmatpush1.msra.mxu0 0.0
        %461 = vmatprep.subr.mxu0 0.0
        %462 = vmatpush1.msra.mxu0 0.0
        %463 = vmatprep.subr.mxu0 0.0
        %464 = vmatpush1.msra.mxu0 0.0
        %465 = vmatprep.subr.mxu0 0.0
        %466 = vmatpush1.msra.mxu0 0.0
        %467 = vmatprep.subr.mxu0 0.0
        %468 = vmatpush1.msra.mxu0 0.0
        %469 = vmatprep.subr.mxu0 0.0
        %470 = vmatpush1.msra.mxu0 0.0
        %471 = vmatprep.mubr.f32.mxu0 0.0
        %472 = vmatmul.mubr.f32.gmra.mrb[0].mxu0 %v312
        %v473 = vpop.f32.mrb[0].mxu0
        %v474 = vadd.f32 %v308, %v473
        %v475 = vpop.f32.mrb[0].mxu0
        %476 = vmatprep.mubr.f32.mxu0 0.0
        %477 = vmatmul.mubr.f32.gmra.mrb[0].mxu0 %v315
        %v478 = vpop.f32.mrb[0].mxu0
        %v479 = vadd.f32 %v308, %v478
        %v480 = vpop.f32.mrb[0].mxu0
        %481 = vmatprep.mubr.f32.mxu0 0.0
        %482 = vmatmul.mubr.f32.gmra.mrb[0].mxu0 %v318
        %v483 = vpop.f32.mrb[0].mxu0
        %v484 = vadd.f32 %v308, %v483
        %v485 = vpop.f32.mrb[0].mxu0
        %486 = vmatprep.mubr.f32.mxu0 0.0
        %487 = vmatmul.mubr.f32.gmra.mrb[0].mxu0 %v321
        %v488 = vpop.f32.mrb[0].mxu0
        %v489 = vadd.f32 %v308, %v488
        %v490 = vpop.f32.mrb[0].mxu0
        %491 = vmatprep.mubr.f32.mxu0 0.0
        %492 = vmatmul.mubr.f32.gmra.mrb[0].mxu0 %v324
        %v493 = vpop.f32.mrb[0].mxu0
        %v494 = vadd.f32 %v308, %v493
        %v495 = vpop.f32.mrb[0].mxu0
        %496 = vmatprep.mubr.f32.mxu0 0.0
        %497 = vmatmul.mubr.f32.gmra.mrb[0].mxu0 %v327
        %v498 = vpop.f32.mrb[0].mxu0
        %v499 = vadd.f32 %v308, %v498
        %v500 = vpop.f32.mrb[0].mxu0
        %501 = vmatprep.mubr.f32.mxu0 0.0
        %502 = vmatmul.mubr.f32.gmra.mrb[0].mxu0 %v330
        %v503 = vpop.f32.mrb[0].mxu0
        %v504 = vadd.f32 %v308, %v503
        %v505 = vpop.f32.mrb[0].mxu0
        %506 = vmatprep.mubr.f32.mxu0 0.0
        %507 = vmatmul.mubr.f32.gmra.mrb[0].mxu0 %v333
        %v508 = vpop.f32.mrb[0].mxu0
        %v509 = vadd.f32 %v308, %v508
        %v510 = vpop.f32.mrb[0].mxu0
        %511 = vmatprep.mubr.f32.mxu0 0.0
        %512 = vmatmul.mubr.f32.gmra.mrb[0].mxu0 %v336
        %v513 = vpop.f32.mrb[0].mxu0
        %v514 = vadd.f32 %v308, %v513
        %v515 = vpop.f32.mrb[0].mxu0
        %516 = vmatprep.mubr.f32.mxu0 0.0
        %517 = vmatmul.mubr.f32.gmra.mrb[0].mxu0 %v339
        %v518 = vpop.f32.mrb[0].mxu0
        %v519 = vadd.f32 %v308, %v518
        %v520 = vpop.f32.mrb[0].mxu0
        %521 = vmatprep.mubr.f32.mxu0 0.0
        %522 = vmatmul.mubr.f32.gmra.mrb[0].mxu0 %v342
        %v523 = vpop.f32.mrb[0].mxu0
        %v524 = vadd.f32 %v308, %v523
        %v525 = vpop.f32.mrb[0].mxu0
        %526 = vmatprep.mubr.f32.mxu0 0.0
        %527 = vmatmul.mubr.f32.gmra.mrb[0].mxu0 %v345
        %v528 = vpop.f32.mrb[0].mxu0
        %v529 = vadd.f32 %v308, %v528
        %v530 = vpop.f32.mrb[0].mxu0
        %531 = vmatprep.mubr.f32.mxu0 0.0
        %532 = vmatmul.mubr.f32.gmra.mrb[0].mxu0 %v348
        %v533 = vpop.f32.mrb[0].mxu0
        %v534 = vadd.f32 %v308, %v533
        %v535 = vpop.f32.mrb[0].mxu0
        %536 = vmatprep.mubr.f32.mxu0 0.0
        %537 = vmatmul.mubr.f32.gmra.mrb[0].mxu0 %v351
        %v538 = vpop.f32.mrb[0].mxu0
        %v539 = vadd.f32 %v308, %v538
        %v540 = vpop.f32.mrb[0].mxu0
        %541 = vmatprep.mubr.f32.mxu0 0.0
        %542 = vmatmul.mubr.f32.gmra.mrb[0].mxu0 %v354
        %v543 = vpop.f32.mrb[0].mxu0
        %v544 = vadd.f32 %v308, %v543
        %v545 = vpop.f32.mrb[0].mxu0
        %546 = vmatprep.mubr.f32.mxu0 0.0
        %547 = vmatmul.mubr.f32.gmra.mrb[0].mxu0 %v357
        %v548 = vpop.f32.mrb[0].mxu0
        %v549 = vadd.f32 %v308, %v548
        %v550 = vpop.f32.mrb[0].mxu0
        %551 = vmatprep.mubr.f32.mxu0 0.0
        %552 = vmatmul.mubr.f32.gmra.mrb[0].mxu0 %v360
        %v553 = vpop.f32.mrb[0].mxu0
        %v554 = vadd.f32 %v308, %v553
        %v555 = vpop.f32.mrb[0].mxu0
        %556 = vmatprep.mubr.f32.mxu0 0.0
        %557 = vmatmul.mubr.f32.gmra.mrb[0].mxu0 %v363
        %v558 = vpop.f32.mrb[0].mxu0
        %v559 = vadd.f32 %v308, %v558
        %v560 = vpop.f32.mrb[0].mxu0
        %561 = vmatprep.mubr.f32.mxu0 0.0
        %562 = vmatmul.mubr.f32.gmra.mrb[0].mxu0 %v366
        %v563 = vpop.f32.mrb[0].mxu0
        %v564 = vadd.f32 %v308, %v563
        %v565 = vpop.f32.mrb[0].mxu0
        %566 = vmatprep.mubr.f32.mxu0 0.0
        %567 = vmatmul.mubr.f32.gmra.mrb[0].mxu0 %v369
        %v568 = vpop.f32.mrb[0].mxu0
        %v569 = vadd.f32 %v308, %v568
        %v570 = vpop.f32.mrb[0].mxu0
        %571 = vmatprep.mubr.f32.mxu0 0.0
        %572 = vmatmul.mubr.f32.gmra.mrb[0].mxu0 %v372
        %v573 = vpop.f32.mrb[0].mxu0
        %v574 = vadd.f32 %v308, %v573
        %v575 = vpop.f32.mrb[0].mxu0
        %576 = vmatprep.mubr.f32.mxu0 0.0
        %577 = vmatmul.mubr.f32.gmra.mrb[0].mxu0 %v375
        %v578 = vpop.f32.mrb[0].mxu0
        %v579 = vadd.f32 %v308, %v578
        %v580 = vpop.f32.mrb[0].mxu0
        %581 = vmatprep.mubr.f32.mxu0 0.0
        %582 = vmatmul.mubr.f32.gmra.mrb[0].mxu0 %v378
        %v583 = vpop.f32.mrb[0].mxu0
        %v584 = vadd.f32 %v308, %v583
        %v585 = vpop.f32.mrb[0].mxu0
        %586 = vmatprep.mubr.f32.mxu0 0.0
        %587 = vmatmul.mubr.f32.gmra.mrb[0].mxu0 %v381
        %v588 = vpop.f32.mrb[0].mxu0
        %v589 = vadd.f32 %v308, %v588
        %v590 = vpop.f32.mrb[0].mxu0
        %591 = vmatprep.mubr.f32.mxu0 0.0
        %592 = vmatmul.mubr.f32.gmra.mrb[0].mxu0 %v384
        %v593 = vpop.f32.mrb[0].mxu0
        %v594 = vadd.f32 %v308, %v593
        %v595 = vpop.f32.mrb[0].mxu0
        %596 = vmatprep.mubr.f32.mxu0 0.0
        %597 = vmatmul.mubr.f32.gmra.mrb[0].mxu0 %v387
        %v598 = vpop.f32.mrb[0].mxu0
        %v599 = vadd.f32 %v308, %v598
        %v600 = vpop.f32.mrb[0].mxu0
        %601 = vmatprep.mubr.f32.mxu0 0.0
        %602 = vmatmul.mubr.f32.gmra.mrb[0].mxu0 %v390
        %v603 = vpop.f32.mrb[0].mxu0
        %v604 = vadd.f32 %v308, %v603
        %v605 = vpop.f32.mrb[0].mxu0
        %606 = vmatprep.mubr.f32.mxu0 0.0
        %607 = vmatmul.mubr.f32.gmra.mrb[0].mxu0 %v393
        %v608 = vpop.f32.mrb[0].mxu0
        %v609 = vadd.f32 %v308, %v608
        %v610 = vpop.f32.mrb[0].mxu0
        %611 = vmatprep.mubr.f32.mxu0 0.0
        %612 = vmatmul.mubr.f32.gmra.mrb[0].mxu0 %v396
        %v613 = vpop.f32.mrb[0].mxu0
        %v614 = vadd.f32 %v308, %v613
        %v615 = vpop.f32.mrb[0].mxu0
        %616 = vmatprep.mubr.f32.mxu0 0.0
        %617 = vmatmul.mubr.f32.gmra.mrb[0].mxu0 %v399
        %v618 = vpop.f32.mrb[0].mxu0
        %v619 = vadd.f32 %v308, %v618
        %v620 = vpop.f32.mrb[0].mxu0
        %621 = vmatprep.mubr.f32.mxu0 0.0
        %622 = vmatmul.mubr.f32.gmra.mrb[0].mxu0 %v402
        %v623 = vpop.f32.mrb[0].mxu0
        %v624 = vadd.f32 %v308, %v623
        %v625 = vpop.f32.mrb[0].mxu0
        %626 = vmatprep.mubr.f32.mxu0 0.0
        %627 = vmatmul.mubr.f32.gmra.mrb[0].mxu0 %v405
        %v628 = vpop.f32.mrb[0].mxu0
        %v629 = vadd.f32 %v308, %v628
        %v630 = vpop.f32.mrb[0].mxu0
        %631 = vdwg.mxu0
        %vm632 = vcmask 785408
        %633 = vst.msk [vmem:[#allocation2] sm:$0xff] %vm632, %v474
        %634 = vst.msk [vmem:[#allocation2 + $0x8] sm:$0xff] %vm632, %v479
        %635 = vst.msk [vmem:[#allocation2 + $0x10] sm:$0xff] %vm632, %v484
        %636 = vst.msk [vmem:[#allocation2 + $0x18] sm:$0xff] %vm632, %v489
        %637 = vst.msk [vmem:[#allocation2 + $0x20] sm:$0xff] %vm632, %v494
        %638 = vst.msk [vmem:[#allocation2 + $0x28] sm:$0xff] %vm632, %v499
        %639 = vst.msk [vmem:[#allocation2 + $0x30] sm:$0xff] %vm632, %v504
        %640 = vst.msk [vmem:[#allocation2 + $0x38] sm:$0xff] %vm632, %v509
        %641 = vst.msk [vmem:[#allocation2 + $0x40] sm:$0xff] %vm632, %v514
        %642 = vst.msk [vmem:[#allocation2 + $0x48] sm:$0xff] %vm632, %v519
        %643 = vst.msk [vmem:[#allocation2 + $0x50] sm:$0xff] %vm632, %v524
        %644 = vst.msk [vmem:[#allocation2 + $0x58] sm:$0xff] %vm632, %v529
        %645 = vst.msk [vmem:[#allocation2 + $0x60] sm:$0xff] %vm632, %v534
        %646 = vst.msk [vmem:[#allocation2 + $0x68] sm:$0xff] %vm632, %v539
        %647 = vst.msk [vmem:[#allocation2 + $0x70] sm:$0xff] %vm632, %v544
        %648 = vst.msk [vmem:[#allocation2 + $0x78] sm:$0xff] %vm632, %v549
        %649 = vst.msk [vmem:[#allocation2 + $0x80] sm:$0xff] %vm632, %v554
        %650 = vst.msk [vmem:[#allocation2 + $0x88] sm:$0xff] %vm632, %v559
        %651 = vst.msk [vmem:[#allocation2 + $0x90] sm:$0xff] %vm632, %v564
        %652 = vst.msk [vmem:[#allocation2 + $0x98] sm:$0xff] %vm632, %v569
        %653 = vst.msk [vmem:[#allocation2 + $0xa0] sm:$0xff] %vm632, %v574
        %654 = vst.msk [vmem:[#allocation2 + $0xa8] sm:$0xff] %vm632, %v579
        %655 = vst.msk [vmem:[#allocation2 + $0xb0] sm:$0xff] %vm632, %v584
        %656 = vst.msk [vmem:[#allocation2 + $0xb8] sm:$0xff] %vm632, %v589
        %657 = vst.msk [vmem:[#allocation2 + $0xc0] sm:$0xff] %vm632, %v594
        %658 = vst.msk [vmem:[#allocation2 + $0xc8] sm:$0xff] %vm632, %v599
        %659 = vst.msk [vmem:[#allocation2 + $0xd0] sm:$0xff] %vm632, %v604
        %660 = vst.msk [vmem:[#allocation2 + $0xd8] sm:$0xff] %vm632, %v609
        %661 = vst.msk [vmem:[#allocation2 + $0xe0] sm:$0xff] %vm632, %v614
        %662 = vst.msk [vmem:[#allocation2 + $0xe8] sm:$0xff] %vm632, %v619
        %663 = vst.msk [vmem:[#allocation2 + $0xf0] sm:$0xff] %vm632, %v624
        %664 = vst.msk [vmem:[#allocation2 + $0xf8] sm:$0xff] %vm632, %v629
        %v665 = vld [vmem:[#allocation2] sm:$0xff]
        %v666 = vld [vmem:[#allocation2 + $0x8] sm:$0xff]
        %v667 = vld [vmem:[#allocation2 + $0x10] sm:$0xff]
        %v668 = vld [vmem:[#allocation2 + $0x18] sm:$0xff]
        %v669 = vld [vmem:[#allocation2 + $0x20] sm:$0xff]
        %v670 = vld [vmem:[#allocation2 + $0x28] sm:$0xff]
        %v671 = vld [vmem:[#allocation2 + $0x30] sm:$0xff]
        %v672 = vld [vmem:[#allocation2 + $0x38] sm:$0xff]
        %v673 = vld [vmem:[#allocation2 + $0x40] sm:$0xff]
        %v674 = vld [vmem:[#allocation2 + $0x48] sm:$0xff]
        %v675 = vld [vmem:[#allocation2 + $0x50] sm:$0xff]
        %v676 = vld [vmem:[#allocation2 + $0x58] sm:$0xff]
        %v677 = vld [vmem:[#allocation2 + $0x60] sm:$0xff]
        %v678 = vld [vmem:[#allocation2 + $0x68] sm:$0xff]
        %v679 = vld [vmem:[#allocation2 + $0x70] sm:$0xff]
        %v680 = vld [vmem:[#allocation2 + $0x78] sm:$0xff]
        %v681 = vld [vmem:[#allocation2 + $0x80] sm:$0xff]
        %v682 = vld [vmem:[#allocation2 + $0x88] sm:$0xff]
        %v683 = vld [vmem:[#allocation2 + $0x90] sm:$0xff]
        %v684 = vld [vmem:[#allocation2 + $0x98] sm:$0xff]
        %v685 = vld [vmem:[#allocation2 + $0xa0] sm:$0xff]
        %v686 = vld [vmem:[#allocation2 + $0xa8] sm:$0xff]
        %v687 = vld [vmem:[#allocation2 + $0xb0] sm:$0xff]
        %v688 = vld [vmem:[#allocation2 + $0xb8] sm:$0xff]
        %v689 = vld [vmem:[#allocation2 + $0xc0] sm:$0xff]
        %v690 = vld [vmem:[#allocation2 + $0xc8] sm:$0xff]
        %v691 = vld [vmem:[#allocation2 + $0xd0] sm:$0xff]
        %v692 = vld [vmem:[#allocation2 + $0xd8] sm:$0xff]
        %v693 = vld [vmem:[#allocation2 + $0xe0] sm:$0xff]
        %v694 = vld [vmem:[#allocation2 + $0xe8] sm:$0xff]
        %v695 = vld [vmem:[#allocation2 + $0xf0] sm:$0xff]
        %v696 = vld [vmem:[#allocation2 + $0xf8] sm:$0xff]
        %v697 = vld [vmem:[#allocation4] sm:$0xff]
        %v698 = vld [vmem:[#allocation4 + $0x8] sm:$0xff]
        %v699 = vld [vmem:[#allocation4 + $0x10] sm:$0xff]
        %v700 = vld [vmem:[#allocation4 + $0x18] sm:$0xff]
        %v701 = vld [vmem:[#allocation4 + $0x20] sm:$0xff]
        %v702 = vld [vmem:[#allocation4 + $0x28] sm:$0xff]
        %v703 = vld [vmem:[#allocation4 + $0x30] sm:$0xff]
        %v704 = vld [vmem:[#allocation4 + $0x38] sm:$0xff]
        %v705 = vld [vmem:[#allocation4 + $0x40] sm:$0xff]
        %v706 = vld [vmem:[#allocation4 + $0x48] sm:$0xff]
        %v707 = vld [vmem:[#allocation4 + $0x50] sm:$0xff]
        %v708 = vld [vmem:[#allocation4 + $0x58] sm:$0xff]
        %v709 = vld [vmem:[#allocation4 + $0x60] sm:$0xff]
        %v710 = vld [vmem:[#allocation4 + $0x68] sm:$0xff]
        %v711 = vld [vmem:[#allocation4 + $0x70] sm:$0xff]
        %v712 = vld [vmem:[#allocation4 + $0x78] sm:$0xff]
        %v713 = vld [vmem:[#allocation4 + $0x80] sm:$0xff]
        %v714 = vld [vmem:[#allocation4 + $0x88] sm:$0xff]
        %v715 = vld [vmem:[#allocation4 + $0x90] sm:$0xff]
        %v716 = vld [vmem:[#allocation4 + $0x98] sm:$0xff]
        %v717 = vld [vmem:[#allocation4 + $0xa0] sm:$0xff]
        %v718 = vld [vmem:[#allocation4 + $0xa8] sm:$0xff]
        %v719 = vld [vmem:[#allocation4 + $0xb0] sm:$0xff]
        %v720 = vld [vmem:[#allocation4 + $0xb8] sm:$0xff]
        %v721 = vld [vmem:[#allocation4 + $0xc0] sm:$0xff]
        %v722 = vld [vmem:[#allocation4 + $0xc8] sm:$0xff]
        %v723 = vld [vmem:[#allocation4 + $0xd0] sm:$0xff]
        %v724 = vld [vmem:[#allocation4 + $0xd8] sm:$0xff]
        %v725 = vld [vmem:[#allocation4 + $0xe0] sm:$0xff]
        %v726 = vld [vmem:[#allocation4 + $0xe8] sm:$0xff]
        %v727 = vld [vmem:[#allocation4 + $0xf0] sm:$0xff]
        %v728 = vld [vmem:[#allocation4 + $0xf8] sm:$0xff]
        %v729 = vld [vmem:[#allocation4 + $0x100] sm:$0xff]
        %v730 = vld [vmem:[#allocation4 + $0x108] sm:$0xff]
        %v731 = vld [vmem:[#allocation4 + $0x110] sm:$0xff]
        %v732 = vld [vmem:[#allocation4 + $0x118] sm:$0xff]
        %v733 = vld [vmem:[#allocation4 + $0x120] sm:$0xff]
        %v734 = vld [vmem:[#allocation4 + $0x128] sm:$0xff]
        %v735 = vld [vmem:[#allocation4 + $0x130] sm:$0xff]
        %v736 = vld [vmem:[#allocation4 + $0x138] sm:$0xff]
        %v737 = vld [vmem:[#allocation4 + $0x140] sm:$0xff]
        %v738 = vld [vmem:[#allocation4 + $0x148] sm:$0xff]
        %v739 = vld [vmem:[#allocation4 + $0x150] sm:$0xff]
        %v740 = vld [vmem:[#allocation4 + $0x158] sm:$0xff]
        %v741 = vld [vmem:[#allocation4 + $0x160] sm:$0xff]
        %v742 = vld [vmem:[#allocation4 + $0x168] sm:$0xff]
        %v743 = vld [vmem:[#allocation4 + $0x170] sm:$0xff]
        %v744 = vld [vmem:[#allocation4 + $0x178] sm:$0xff]
        %v745 = vld [vmem:[#allocation4 + $0x180] sm:$0xff]
        %v746 = vld [vmem:[#allocation4 + $0x188] sm:$0xff]
        %v747 = vld [vmem:[#allocation4 + $0x190] sm:$0xff]
        %v748 = vld [vmem:[#allocation4 + $0x198] sm:$0xff]
        %v749 = vld [vmem:[#allocation4 + $0x1a0] sm:$0xff]
        %v750 = vld [vmem:[#allocation4 + $0x1a8] sm:$0xff]
        %v751 = vld [vmem:[#allocation4 + $0x1b0] sm:$0xff]
        %v752 = vld [vmem:[#allocation4 + $0x1b8] sm:$0xff]
        %v753 = vld [vmem:[#allocation4 + $0x1c0] sm:$0xff]
        %v754 = vld [vmem:[#allocation4 + $0x1c8] sm:$0xff]
        %v755 = vld [vmem:[#allocation4 + $0x1d0] sm:$0xff]
        %v756 = vld [vmem:[#allocation4 + $0x1d8] sm:$0xff]
        %v757 = vld [vmem:[#allocation4 + $0x1e0] sm:$0xff]
        %v758 = vld [vmem:[#allocation4 + $0x1e8] sm:$0xff]
        %v759 = vld [vmem:[#allocation4 + $0x1f0] sm:$0xff]
        %v760 = vld [vmem:[#allocation4 + $0x1f8] sm:$0xff]
        %793 = vrot.lane.b32.xlu0 %v665, 96
        %v794 = vpop.permute.xlu0 %793
        %795 = vrot.lane.b32.xlu0 %v666, 96
        %v796 = vpop.permute.xlu0 %795
        %797 = vrot.lane.b32.xlu0 %v667, 96
        %v798 = vpop.permute.xlu0 %797
        %799 = vrot.lane.b32.xlu0 %v668, 96
        %v800 = vpop.permute.xlu0 %799
        %801 = vrot.lane.b32.xlu0 %v669, 96
        %v802 = vpop.permute.xlu0 %801
        %803 = vrot.lane.b32.xlu0 %v670, 96
        %v804 = vpop.permute.xlu0 %803
        %805 = vrot.lane.b32.xlu0 %v671, 96
        %v806 = vpop.permute.xlu0 %805
        %807 = vrot.lane.b32.xlu0 %v672, 96
        %v808 = vpop.permute.xlu0 %807
        %809 = vrot.lane.b32.xlu0 %v673, 96
        %v810 = vpop.permute.xlu0 %809
        %811 = vrot.lane.b32.xlu0 %v674, 96
        %v812 = vpop.permute.xlu0 %811
        %813 = vrot.lane.b32.xlu0 %v675, 96
        %v814 = vpop.permute.xlu0 %813
        %815 = vrot.lane.b32.xlu0 %v676, 96
        %v816 = vpop.permute.xlu0 %815
        %817 = vrot.lane.b32.xlu0 %v677, 96
        %v818 = vpop.permute.xlu0 %817
        %819 = vrot.lane.b32.xlu0 %v678, 96
        %v820 = vpop.permute.xlu0 %819
        %821 = vrot.lane.b32.xlu0 %v679, 96
        %v822 = vpop.permute.xlu0 %821
        %823 = vrot.lane.b32.xlu0 %v680, 96
        %v824 = vpop.permute.xlu0 %823
        %825 = vrot.lane.b32.xlu0 %v681, 96
        %v826 = vpop.permute.xlu0 %825
        %827 = vrot.lane.b32.xlu0 %v682, 96
        %v828 = vpop.permute.xlu0 %827
        %829 = vrot.lane.b32.xlu0 %v683, 96
        %v830 = vpop.permute.xlu0 %829
        %831 = vrot.lane.b32.xlu0 %v684, 96
        %v832 = vpop.permute.xlu0 %831
        %833 = vrot.lane.b32.xlu0 %v685, 96
        %v834 = vpop.permute.xlu0 %833
        %835 = vrot.lane.b32.xlu0 %v686, 96
        %v836 = vpop.permute.xlu0 %835
        %837 = vrot.lane.b32.xlu0 %v687, 96
        %v838 = vpop.permute.xlu0 %837
        %839 = vrot.lane.b32.xlu0 %v688, 96
        %v840 = vpop.permute.xlu0 %839
        %841 = vrot.lane.b32.xlu0 %v689, 96
        %v842 = vpop.permute.xlu0 %841
        %843 = vrot.lane.b32.xlu0 %v690, 96
        %v844 = vpop.permute.xlu0 %843
        %845 = vrot.lane.b32.xlu0 %v691, 96
        %v846 = vpop.permute.xlu0 %845
        %847 = vrot.lane.b32.xlu0 %v692, 96
        %v848 = vpop.permute.xlu0 %847
        %849 = vrot.lane.b32.xlu0 %v693, 96
        %v850 = vpop.permute.xlu0 %849
        %851 = vrot.lane.b32.xlu0 %v694, 96
        %v852 = vpop.permute.xlu0 %851
        %853 = vrot.lane.b32.xlu0 %v695, 96
        %v854 = vpop.permute.xlu0 %853
        %855 = vrot.lane.b32.xlu0 %v696, 96
        %v856 = vpop.permute.xlu0 %855
        %vm857 = vcmask 64512
        %v858 = vsel %vm857, %v665, 0
        %v860 = vsel %vm857, %v666, 0
        %v862 = vsel %vm857, %v667, 0
        %v864 = vsel %vm857, %v668, 0
        %v866 = vsel %vm857, %v669, 0
        %v868 = vsel %vm857, %v670, 0
        %v870 = vsel %vm857, %v671, 0
        %v872 = vsel %vm857, %v672, 0
        %v874 = vsel %vm857, %v673, 0
        %v876 = vsel %vm857, %v674, 0
        %v878 = vsel %vm857, %v675, 0
        %v880 = vsel %vm857, %v676, 0
        %v882 = vsel %vm857, %v677, 0
        %v884 = vsel %vm857, %v678, 0
        %v886 = vsel %vm857, %v679, 0
        %v888 = vsel %vm857, %v680, 0
        %v890 = vsel %vm857, %v681, 0
        %v892 = vsel %vm857, %v682, 0
        %v894 = vsel %vm857, %v683, 0
        %v896 = vsel %vm857, %v684, 0
        %v898 = vsel %vm857, %v685, 0
        %v900 = vsel %vm857, %v686, 0
        %v902 = vsel %vm857, %v687, 0
        %v904 = vsel %vm857, %v688, 0
        %v906 = vsel %vm857, %v689, 0
        %v908 = vsel %vm857, %v690, 0
        %v910 = vsel %vm857, %v691, 0
        %v912 = vsel %vm857, %v692, 0
        %v914 = vsel %vm857, %v693, 0
        %v916 = vsel %vm857, %v694, 0
        %v918 = vsel %vm857, %v695, 0
        %v920 = vsel %vm857, %v696, 0
        %v922 = vsel %vm857, %v794, 0
        %v924 = vsel %vm857, %v796, 0
        %v926 = vsel %vm857, %v798, 0
        %v928 = vsel %vm857, %v800, 0
        %v930 = vsel %vm857, %v802, 0
        %v932 = vsel %vm857, %v804, 0
        %v934 = vsel %vm857, %v806, 0
        %v936 = vsel %vm857, %v808, 0
        %v938 = vsel %vm857, %v810, 0
        %v940 = vsel %vm857, %v812, 0
        %v942 = vsel %vm857, %v814, 0
        %v944 = vsel %vm857, %v816, 0
        %v946 = vsel %vm857, %v818, 0
        %v948 = vsel %vm857, %v820, 0
        %v950 = vsel %vm857, %v822, 0
        %v952 = vsel %vm857, %v824, 0
        %v954 = vsel %vm857, %v826, 0
        %v956 = vsel %vm857, %v828, 0
        %v958 = vsel %vm857, %v830, 0
        %v960 = vsel %vm857, %v832, 0
        %v962 = vsel %vm857, %v834, 0
        %v964 = vsel %vm857, %v836, 0
        %v966 = vsel %vm857, %v838, 0
        %v968 = vsel %vm857, %v840, 0
        %v970 = vsel %vm857, %v842, 0
        %v972 = vsel %vm857, %v844, 0
        %v974 = vsel %vm857, %v846, 0
        %v976 = vsel %vm857, %v848, 0
        %v978 = vsel %vm857, %v850, 0
        %v980 = vsel %vm857, %v852, 0
        %v982 = vsel %vm857, %v854, 0
        %v984 = vsel %vm857, %v856, 0
        %986 = vmatprep.subr.mxu0 0.0
        %987 = vmatpush1.xpose.msra.mxu0 %v922
        %988 = vmatprep.subr.mxu0 0.0
        %989 = vmatpush1.xpose.msra.mxu0 %v924
        %990 = vmatprep.subr.mxu0 0.0
        %991 = vmatpush1.xpose.msra.mxu0 %v926
        %992 = vmatprep.subr.mxu0 0.0
        %993 = vmatpush1.xpose.msra.mxu0 %v928
        %994 = vmatprep.subr.mxu0 0.0
        %995 = vmatpush1.xpose.msra.mxu0 %v930
        %996 = vmatprep.subr.mxu0 0.0
        %997 = vmatpush1.xpose.msra.mxu0 %v932
        %998 = vmatprep.subr.mxu0 0.0
        %999 = vmatpush1.xpose.msra.mxu0 %v934
        %1000 = vmatprep.subr.mxu0 0.0
        %1001 = vmatpush1.xpose.msra.mxu0 %v936
        %1002 = vmatprep.subr.mxu0 0.0
        %1003 = vmatpush1.xpose.msra.mxu0 %v938
        %1004 = vmatprep.subr.mxu0 0.0
        %1005 = vmatpush1.xpose.msra.mxu0 %v940
        %1006 = vmatprep.subr.mxu0 0.0
        %1007 = vmatpush1.xpose.msra.mxu0 %v942
        %1008 = vmatprep.subr.mxu0 0.0
        %1009 = vmatpush1.xpose.msra.mxu0 %v944
        %1010 = vmatprep.subr.mxu0 0.0
        %1011 = vmatpush1.xpose.msra.mxu0 %v946
        %1012 = vmatprep.subr.mxu0 0.0
        %1013 = vmatpush1.xpose.msra.mxu0 %v948
        %1014 = vmatprep.subr.mxu0 0.0
        %1015 = vmatpush1.xpose.msra.mxu0 %v950
        %1016 = vmatprep.subr.mxu0 0.0
        %1017 = vmatpush1.xpose.msra.mxu0 %v952
        %1018 = vmatprep.subr.mxu0 0.0
        %1019 = vmatpush1.xpose.msra.mxu0 %v954
        %1020 = vmatprep.subr.mxu0 0.0
        %1021 = vmatpush1.xpose.msra.mxu0 %v956
        %1022 = vmatprep.subr.mxu0 0.0
        %1023 = vmatpush1.xpose.msra.mxu0 %v958
        %1024 = vmatprep.subr.mxu0 0.0
        %1025 = vmatpush1.xpose.msra.mxu0 %v960
        %1026 = vmatprep.subr.mxu0 0.0
        %1027 = vmatpush1.xpose.msra.mxu0 %v962
        %1028 = vmatprep.subr.mxu0 0.0
        %1029 = vmatpush1.xpose.msra.mxu0 %v964
        %1030 = vmatprep.subr.mxu0 0.0
        %1031 = vmatpush1.xpose.msra.mxu0 %v966
        %1032 = vmatprep.subr.mxu0 0.0
        %1033 = vmatpush1.xpose.msra.mxu0 %v968
        %1034 = vmatprep.subr.mxu0 0.0
        %1035 = vmatpush1.xpose.msra.mxu0 %v970
        %1036 = vmatprep.subr.mxu0 0.0
        %1037 = vmatpush1.xpose.msra.mxu0 %v972
        %1038 = vmatprep.subr.mxu0 0.0
        %1039 = vmatpush1.xpose.msra.mxu0 %v974
        %1040 = vmatprep.subr.mxu0 0.0
        %1041 = vmatpush1.xpose.msra.mxu0 %v976
        %1042 = vmatprep.subr.mxu0 0.0
        %1043 = vmatpush1.xpose.msra.mxu0 %v978
        %1044 = vmatprep.subr.mxu0 0.0
        %1045 = vmatpush1.xpose.msra.mxu0 %v980
        %1046 = vmatprep.subr.mxu0 0.0
        %1047 = vmatpush1.xpose.msra.mxu0 %v982
        %1048 = vmatprep.subr.mxu0 0.0
        %1049 = vmatpush1.xpose.msra.mxu0 %v984
        %1050 = vmatprep.mubr.f32.mxu0 0.0
        %1051 = vmatmul.mubr.f32.gmra.mrb[0].mxu0 %v858
        %v1052 = vpop.f32.mrb[0].mxu0
        %v1053 = vadd.f32 %v697, %v1052
        %v1054 = vpop.f32.mrb[0].mxu0
        %v1055 = vadd.f32 %v698, %v1054
        %1056 = vmatprep.mubr.f32.mxu0 0.0
        %1057 = vmatmul.mubr.f32.gmra.mrb[0].mxu0 %v860
        %v1058 = vpop.f32.mrb[0].mxu0
        %v1059 = vadd.f32 %v699, %v1058
        %v1060 = vpop.f32.mrb[0].mxu0
        %v1061 = vadd.f32 %v700, %v1060
        %1062 = vmatprep.mubr.f32.mxu0 0.0
        %1063 = vmatmul.mubr.f32.gmra.mrb[0].mxu0 %v862
        %v1064 = vpop.f32.mrb[0].mxu0
        %v1065 = vadd.f32 %v701, %v1064
        %v1066 = vpop.f32.mrb[0].mxu0
        %v1067 = vadd.f32 %v702, %v1066
        %1068 = vmatprep.mubr.f32.mxu0 0.0
        %1069 = vmatmul.mubr.f32.gmra.mrb[0].mxu0 %v864
        %v1070 = vpop.f32.mrb[0].mxu0
        %v1071 = vadd.f32 %v703, %v1070
        %v1072 = vpop.f32.mrb[0].mxu0
        %v1073 = vadd.f32 %v704, %v1072
        %1074 = vmatprep.mubr.f32.mxu0 0.0
        %1075 = vmatmul.mubr.f32.gmra.mrb[0].mxu0 %v866
        %v1076 = vpop.f32.mrb[0].mxu0
        %v1077 = vadd.f32 %v705, %v1076
        %v1078 = vpop.f32.mrb[0].mxu0
        %v1079 = vadd.f32 %v706, %v1078
        %1080 = vmatprep.mubr.f32.mxu0 0.0
        %1081 = vmatmul.mubr.f32.gmra.mrb[0].mxu0 %v868
        %v1082 = vpop.f32.mrb[0].mxu0
        %v1083 = vadd.f32 %v707, %v1082
        %v1084 = vpop.f32.mrb[0].mxu0
        %v1085 = vadd.f32 %v708, %v1084
        %1086 = vmatprep.mubr.f32.mxu0 0.0
        %1087 = vmatmul.mubr.f32.gmra.mrb[0].mxu0 %v870
        %v1088 = vpop.f32.mrb[0].mxu0
        %v1089 = vadd.f32 %v709, %v1088
        %v1090 = vpop.f32.mrb[0].mxu0
        %v1091 = vadd.f32 %v710, %v1090
        %1092 = vmatprep.mubr.f32.mxu0 0.0
        %1093 = vmatmul.mubr.f32.gmra.mrb[0].mxu0 %v872
        %v1094 = vpop.f32.mrb[0].mxu0
        %v1095 = vadd.f32 %v711, %v1094
        %v1096 = vpop.f32.mrb[0].mxu0
        %v1097 = vadd.f32 %v712, %v1096
        %1098 = vmatprep.mubr.f32.mxu0 0.0
        %1099 = vmatmul.mubr.f32.gmra.mrb[0].mxu0 %v874
        %v1100 = vpop.f32.mrb[0].mxu0
        %v1101 = vadd.f32 %v713, %v1100
        %v1102 = vpop.f32.mrb[0].mxu0
        %v1103 = vadd.f32 %v714, %v1102
        %1104 = vmatprep.mubr.f32.mxu0 0.0
        %1105 = vmatmul.mubr.f32.gmra.mrb[0].mxu0 %v876
        %v1106 = vpop.f32.mrb[0].mxu0
        %v1107 = vadd.f32 %v715, %v1106
        %v1108 = vpop.f32.mrb[0].mxu0
        %v1109 = vadd.f32 %v716, %v1108
        %1110 = vmatprep.mubr.f32.mxu0 0.0
        %1111 = vmatmul.mubr.f32.gmra.mrb[0].mxu0 %v878
        %v1112 = vpop.f32.mrb[0].mxu0
        %v1113 = vadd.f32 %v717, %v1112
        %v1114 = vpop.f32.mrb[0].mxu0
        %v1115 = vadd.f32 %v718, %v1114
        %1116 = vmatprep.mubr.f32.mxu0 0.0
        %1117 = vmatmul.mubr.f32.gmra.mrb[0].mxu0 %v880
        %v1118 = vpop.f32.mrb[0].mxu0
        %v1119 = vadd.f32 %v719, %v1118
        %v1120 = vpop.f32.mrb[0].mxu0
        %v1121 = vadd.f32 %v720, %v1120
        %1122 = vmatprep.mubr.f32.mxu0 0.0
        %1123 = vmatmul.mubr.f32.gmra.mrb[0].mxu0 %v882
        %v1124 = vpop.f32.mrb[0].mxu0
        %v1125 = vadd.f32 %v721, %v1124
        %v1126 = vpop.f32.mrb[0].mxu0
        %v1127 = vadd.f32 %v722, %v1126
        %1128 = vmatprep.mubr.f32.mxu0 0.0
        %1129 = vmatmul.mubr.f32.gmra.mrb[0].mxu0 %v884
        %v1130 = vpop.f32.mrb[0].mxu0
        %v1131 = vadd.f32 %v723, %v1130
        %v1132 = vpop.f32.mrb[0].mxu0
        %v1133 = vadd.f32 %v724, %v1132
        %1134 = vmatprep.mubr.f32.mxu0 0.0
        %1135 = vmatmul.mubr.f32.gmra.mrb[0].mxu0 %v886
        %v1136 = vpop.f32.mrb[0].mxu0
        %v1137 = vadd.f32 %v725, %v1136
        %v1138 = vpop.f32.mrb[0].mxu0
        %v1139 = vadd.f32 %v726, %v1138
        %1140 = vmatprep.mubr.f32.mxu0 0.0
        %1141 = vmatmul.mubr.f32.gmra.mrb[0].mxu0 %v888
        %v1142 = vpop.f32.mrb[0].mxu0
        %v1143 = vadd.f32 %v727, %v1142
        %v1144 = vpop.f32.mrb[0].mxu0
        %v1145 = vadd.f32 %v728, %v1144
        %1146 = vmatprep.mubr.f32.mxu0 0.0
        %1147 = vmatmul.mubr.f32.gmra.mrb[0].mxu0 %v890
        %v1148 = vpop.f32.mrb[0].mxu0
        %v1149 = vadd.f32 %v729, %v1148
        %v1150 = vpop.f32.mrb[0].mxu0
        %v1151 = vadd.f32 %v730, %v1150
        %1152 = vmatprep.mubr.f32.mxu0 0.0
        %1153 = vmatmul.mubr.f32.gmra.mrb[0].mxu0 %v892
        %v1154 = vpop.f32.mrb[0].mxu0
        %v1155 = vadd.f32 %v731, %v1154
        %v1156 = vpop.f32.mrb[0].mxu0
        %v1157 = vadd.f32 %v732, %v1156
        %1158 = vmatprep.mubr.f32.mxu0 0.0
        %1159 = vmatmul.mubr.f32.gmra.mrb[0].mxu0 %v894
        %v1160 = vpop.f32.mrb[0].mxu0
        %v1161 = vadd.f32 %v733, %v1160
        %v1162 = vpop.f32.mrb[0].mxu0
        %v1163 = vadd.f32 %v734, %v1162
        %1164 = vmatprep.mubr.f32.mxu0 0.0
        %1165 = vmatmul.mubr.f32.gmra.mrb[0].mxu0 %v896
        %v1166 = vpop.f32.mrb[0].mxu0
        %v1167 = vadd.f32 %v735, %v1166
        %v1168 = vpop.f32.mrb[0].mxu0
        %v1169 = vadd.f32 %v736, %v1168
        %1170 = vmatprep.mubr.f32.mxu0 0.0
        %1171 = vmatmul.mubr.f32.gmra.mrb[0].mxu0 %v898
        %v1172 = vpop.f32.mrb[0].mxu0
        %v1173 = vadd.f32 %v737, %v1172
        %v1174 = vpop.f32.mrb[0].mxu0
        %v1175 = vadd.f32 %v738, %v1174
        %1176 = vmatprep.mubr.f32.mxu0 0.0
        %1177 = vmatmul.mubr.f32.gmra.mrb[0].mxu0 %v900
        %v1178 = vpop.f32.mrb[0].mxu0
        %v1179 = vadd.f32 %v739, %v1178
        %v1180 = vpop.f32.mrb[0].mxu0
        %v1181 = vadd.f32 %v740, %v1180
        %1182 = vmatprep.mubr.f32.mxu0 0.0
        %1183 = vmatmul.mubr.f32.gmra.mrb[0].mxu0 %v902
        %v1184 = vpop.f32.mrb[0].mxu0
        %v1185 = vadd.f32 %v741, %v1184
        %v1186 = vpop.f32.mrb[0].mxu0
        %v1187 = vadd.f32 %v742, %v1186
        %1188 = vmatprep.mubr.f32.mxu0 0.0
        %1189 = vmatmul.mubr.f32.gmra.mrb[0].mxu0 %v904
        %v1190 = vpop.f32.mrb[0].mxu0
        %v1191 = vadd.f32 %v743, %v1190
        %v1192 = vpop.f32.mrb[0].mxu0
        %v1193 = vadd.f32 %v744, %v1192
        %1194 = vmatprep.mubr.f32.mxu0 0.0
        %1195 = vmatmul.mubr.f32.gmra.mrb[0].mxu0 %v906
        %v1196 = vpop.f32.mrb[0].mxu0
        %v1197 = vadd.f32 %v745, %v1196
        %v1198 = vpop.f32.mrb[0].mxu0
        %v1199 = vadd.f32 %v746, %v1198
        %1200 = vmatprep.mubr.f32.mxu0 0.0
        %1201 = vmatmul.mubr.f32.gmra.mrb[0].mxu0 %v908
        %v1202 = vpop.f32.mrb[0].mxu0
        %v1203 = vadd.f32 %v747, %v1202
        %v1204 = vpop.f32.mrb[0].mxu0
        %v1205 = vadd.f32 %v748, %v1204
        %1206 = vmatprep.mubr.f32.mxu0 0.0
        %1207 = vmatmul.mubr.f32.gmra.mrb[0].mxu0 %v910
        %v1208 = vpop.f32.mrb[0].mxu0
        %v1209 = vadd.f32 %v749, %v1208
        %v1210 = vpop.f32.mrb[0].mxu0
        %v1211 = vadd.f32 %v750, %v1210
        %1212 = vmatprep.mubr.f32.mxu0 0.0
        %1213 = vmatmul.mubr.f32.gmra.mrb[0].mxu0 %v912
        %v1214 = vpop.f32.mrb[0].mxu0
        %v1215 = vadd.f32 %v751, %v1214
        %v1216 = vpop.f32.mrb[0].mxu0
        %v1217 = vadd.f32 %v752, %v1216
        %1218 = vmatprep.mubr.f32.mxu0 0.0
        %1219 = vmatmul.mubr.f32.gmra.mrb[0].mxu0 %v914
        %v1220 = vpop.f32.mrb[0].mxu0
        %v1221 = vadd.f32 %v753, %v1220
        %v1222 = vpop.f32.mrb[0].mxu0
        %v1223 = vadd.f32 %v754, %v1222
        %1224 = vmatprep.mubr.f32.mxu0 0.0
        %1225 = vmatmul.mubr.f32.gmra.mrb[0].mxu0 %v916
        %v1226 = vpop.f32.mrb[0].mxu0
        %v1227 = vadd.f32 %v755, %v1226
        %v1228 = vpop.f32.mrb[0].mxu0
        %v1229 = vadd.f32 %v756, %v1228
        %1230 = vmatprep.mubr.f32.mxu0 0.0
        %1231 = vmatmul.mubr.f32.gmra.mrb[0].mxu0 %v918
        %v1232 = vpop.f32.mrb[0].mxu0
        %v1233 = vadd.f32 %v757, %v1232
        %v1234 = vpop.f32.mrb[0].mxu0
        %v1235 = vadd.f32 %v758, %v1234
        %1236 = vmatprep.mubr.f32.mxu0 0.0
        %1237 = vmatmul.mubr.f32.gmra.mrb[0].mxu0 %v920
        %v1238 = vpop.f32.mrb[0].mxu0
        %v1239 = vadd.f32 %v759, %v1238
        %v1240 = vpop.f32.mrb[0].mxu0
        %v1241 = vadd.f32 %v760, %v1240
        %1242 = vdwg.mxu0
        %v1243 = vmax.f32 %v1053, %v1055
        %1244 = vmax.xlane.f32.xlu0 %v1243
        %v1245 = vpop.xlane.xlu0 %1244
        %v1246 = vmax.f32 %v1059, %v1061
        %1247 = vmax.xlane.f32.xlu0 %v1246
        %v1248 = vpop.xlane.xlu0 %1247
        %v1249 = vmax.f32 %v1065, %v1067
        %1250 = vmax.xlane.f32.xlu0 %v1249
        %v1251 = vpop.xlane.xlu0 %1250
        %v1252 = vmax.f32 %v1071, %v1073
        %1253 = vmax.xlane.f32.xlu0 %v1252
        %v1254 = vpop.xlane.xlu0 %1253
        %v1255 = vmax.f32 %v1077, %v1079
        %1256 = vmax.xlane.f32.xlu0 %v1255
        %v1257 = vpop.xlane.xlu0 %1256
        %v1258 = vmax.f32 %v1083, %v1085
        %1259 = vmax.xlane.f32.xlu0 %v1258
        %v1260 = vpop.xlane.xlu0 %1259
        %v1261 = vmax.f32 %v1089, %v1091
        %1262 = vmax.xlane.f32.xlu0 %v1261
        %v1263 = vpop.xlane.xlu0 %1262
        %v1264 = vmax.f32 %v1095, %v1097
        %1265 = vmax.xlane.f32.xlu0 %v1264
        %v1266 = vpop.xlane.xlu0 %1265
        %v1267 = vmax.f32 %v1101, %v1103
        %1268 = vmax.xlane.f32.xlu0 %v1267
        %v1269 = vpop.xlane.xlu0 %1268
        %v1270 = vmax.f32 %v1107, %v1109
        %1271 = vmax.xlane.f32.xlu0 %v1270
        %v1272 = vpop.xlane.xlu0 %1271
        %v1273 = vmax.f32 %v1113, %v1115
        %1274 = vmax.xlane.f32.xlu0 %v1273
        %v1275 = vpop.xlane.xlu0 %1274
        %v1276 = vmax.f32 %v1119, %v1121
        %1277 = vmax.xlane.f32.xlu0 %v1276
        %v1278 = vpop.xlane.xlu0 %1277
        %v1279 = vmax.f32 %v1125, %v1127
        %1280 = vmax.xlane.f32.xlu0 %v1279
        %v1281 = vpop.xlane.xlu0 %1280
        %v1282 = vmax.f32 %v1131, %v1133
        %1283 = vmax.xlane.f32.xlu0 %v1282
        %v1284 = vpop.xlane.xlu0 %1283
        %v1285 = vmax.f32 %v1137, %v1139
        %1286 = vmax.xlane.f32.xlu0 %v1285
        %v1287 = vpop.xlane.xlu0 %1286
        %v1288 = vmax.f32 %v1143, %v1145
        %1289 = vmax.xlane.f32.xlu0 %v1288
        %v1290 = vpop.xlane.xlu0 %1289
        %v1291 = vmax.f32 %v1149, %v1151
        %1292 = vmax.xlane.f32.xlu0 %v1291
        %v1293 = vpop.xlane.xlu0 %1292
        %v1294 = vmax.f32 %v1155, %v1157
        %1295 = vmax.xlane.f32.xlu0 %v1294
        %v1296 = vpop.xlane.xlu0 %1295
        %v1297 = vmax.f32 %v1161, %v1163
        %1298 = vmax.xlane.f32.xlu0 %v1297
        %v1299 = vpop.xlane.xlu0 %1298
        %v1300 = vmax.f32 %v1167, %v1169
        %1301 = vmax.xlane.f32.xlu0 %v1300
        %v1302 = vpop.xlane.xlu0 %1301
        %v1303 = vmax.f32 %v1173, %v1175
        %1304 = vmax.xlane.f32.xlu0 %v1303
        %v1305 = vpop.xlane.xlu0 %1304
        %v1306 = vmax.f32 %v1179, %v1181
        %1307 = vmax.xlane.f32.xlu0 %v1306
        %v1308 = vpop.xlane.xlu0 %1307
        %v1309 = vmax.f32 %v1185, %v1187
        %1310 = vmax.xlane.f32.xlu0 %v1309
        %v1311 = vpop.xlane.xlu0 %1310
        %v1312 = vmax.f32 %v1191, %v1193
        %1313 = vmax.xlane.f32.xlu0 %v1312
        %v1314 = vpop.xlane.xlu0 %1313
        %v1315 = vmax.f32 %v1197, %v1199
        %1316 = vmax.xlane.f32.xlu0 %v1315
        %v1317 = vpop.xlane.xlu0 %1316
        %v1318 = vmax.f32 %v1203, %v1205
        %1319 = vmax.xlane.f32.xlu0 %v1318
        %v1320 = vpop.xlane.xlu0 %1319
        %v1321 = vmax.f32 %v1209, %v1211
        %1322 = vmax.xlane.f32.xlu0 %v1321
        %v1323 = vpop.xlane.xlu0 %1322
        %v1324 = vmax.f32 %v1215, %v1217
        %1325 = vmax.xlane.f32.xlu0 %v1324
        %v1326 = vpop.xlane.xlu0 %1325
        %v1327 = vmax.f32 %v1221, %v1223
        %1328 = vmax.xlane.f32.xlu0 %v1327
        %v1329 = vpop.xlane.xlu0 %1328
        %v1330 = vmax.f32 %v1227, %v1229
        %1331 = vmax.xlane.f32.xlu0 %v1330
        %v1332 = vpop.xlane.xlu0 %1331
        %v1333 = vmax.f32 %v1233, %v1235
        %1334 = vmax.xlane.f32.xlu0 %v1333
        %v1335 = vpop.xlane.xlu0 %1334
        %v1336 = vmax.f32 %v1239, %v1241
        %1337 = vmax.xlane.f32.xlu0 %v1336
        %v1338 = vpop.xlane.xlu0 %1337
        %v1339 = vsub.f32 %v1053, %v1245
        %v1340 = vsub.f32 %v1055, %v1245
        %v1341 = vsub.f32 %v1059, %v1248
        %v1342 = vsub.f32 %v1061, %v1248
        %v1343 = vsub.f32 %v1065, %v1251
        %v1344 = vsub.f32 %v1067, %v1251
        %v1345 = vsub.f32 %v1071, %v1254
        %v1346 = vsub.f32 %v1073, %v1254
        %v1347 = vsub.f32 %v1077, %v1257
        %v1348 = vsub.f32 %v1079, %v1257
        %v1349 = vsub.f32 %v1083, %v1260
        %v1350 = vsub.f32 %v1085, %v1260
        %v1351 = vsub.f32 %v1089, %v1263
        %v1352 = vsub.f32 %v1091, %v1263
        %v1353 = vsub.f32 %v1095, %v1266
        %v1354 = vsub.f32 %v1097, %v1266
        %v1355 = vsub.f32 %v1101, %v1269
        %v1356 = vsub.f32 %v1103, %v1269
        %v1357 = vsub.f32 %v1107, %v1272
        %v1358 = vsub.f32 %v1109, %v1272
        %v1359 = vsub.f32 %v1113, %v1275
        %v1360 = vsub.f32 %v1115, %v1275
        %v1361 = vsub.f32 %v1119, %v1278
        %v1362 = vsub.f32 %v1121, %v1278
        %v1363 = vsub.f32 %v1125, %v1281
        %v1364 = vsub.f32 %v1127, %v1281
        %v1365 = vsub.f32 %v1131, %v1284
        %v1366 = vsub.f32 %v1133, %v1284
        %v1367 = vsub.f32 %v1137, %v1287
        %v1368 = vsub.f32 %v1139, %v1287
        %v1369 = vsub.f32 %v1143, %v1290
        %v1370 = vsub.f32 %v1145, %v1290
        %v1371 = vsub.f32 %v1149, %v1293
        %v1372 = vsub.f32 %v1151, %v1293
        %v1373 = vsub.f32 %v1155, %v1296
        %v1374 = vsub.f32 %v1157, %v1296
        %v1375 = vsub.f32 %v1161, %v1299
        %v1376 = vsub.f32 %v1163, %v1299
        %v1377 = vsub.f32 %v1167, %v1302
        %v1378 = vsub.f32 %v1169, %v1302
        %v1379 = vsub.f32 %v1173, %v1305
        %v1380 = vsub.f32 %v1175, %v1305
        %v1381 = vsub.f32 %v1179, %v1308
        %v1382 = vsub.f32 %v1181, %v1308
        %v1383 = vsub.f32 %v1185, %v1311
        %v1384 = vsub.f32 %v1187, %v1311
        %v1385 = vsub.f32 %v1191, %v1314
        %v1386 = vsub.f32 %v1193, %v1314
        %v1387 = vsub.f32 %v1197, %v1317
        %v1388 = vsub.f32 %v1199, %v1317
        %v1389 = vsub.f32 %v1203, %v1320
        %v1390 = vsub.f32 %v1205, %v1320
        %v1391 = vsub.f32 %v1209, %v1323
        %v1392 = vsub.f32 %v1211, %v1323
        %v1393 = vsub.f32 %v1215, %v1326
        %v1394 = vsub.f32 %v1217, %v1326
        %v1395 = vsub.f32 %v1221, %v1329
        %v1396 = vsub.f32 %v1223, %v1329
        %v1397 = vsub.f32 %v1227, %v1332
        %v1398 = vsub.f32 %v1229, %v1332
        %v1399 = vsub.f32 %v1233, %v1335
        %v1400 = vsub.f32 %v1235, %v1335
        %v1401 = vsub.f32 %v1239, %v1338
        %v1402 = vsub.f32 %v1241, %v1338
        %v1403 = vmul.f32 %v1339, 1.442695
        %v1404 = vpow.pop %v1403
        %v1405 = vmul.f32 %v1340, 1.442695
        %v1406 = vpow.pop %v1405
        %v1407 = vmul.f32 %v1341, 1.442695
        %v1408 = vpow.pop %v1407
        %v1409 = vmul.f32 %v1342, 1.442695
        %v1410 = vpow.pop %v1409
        %v1411 = vmul.f32 %v1343, 1.442695
        %v1412 = vpow.pop %v1411
        %v1413 = vmul.f32 %v1344, 1.442695
        %v1414 = vpow.pop %v1413
        %v1415 = vmul.f32 %v1345, 1.442695
        %v1416 = vpow.pop %v1415
        %v1417 = vmul.f32 %v1346, 1.442695
        %v1418 = vpow.pop %v1417
        %v1419 = vmul.f32 %v1347, 1.442695
        %v1420 = vpow.pop %v1419
        %v1421 = vmul.f32 %v1348, 1.442695
        %v1422 = vpow.pop %v1421
        %v1423 = vmul.f32 %v1349, 1.442695
        %v1424 = vpow.pop %v1423
        %v1425 = vmul.f32 %v1350, 1.442695
        %v1426 = vpow.pop %v1425
        %v1427 = vmul.f32 %v1351, 1.442695
        %v1428 = vpow.pop %v1427
        %v1429 = vmul.f32 %v1352, 1.442695
        %v1430 = vpow.pop %v1429
        %v1431 = vmul.f32 %v1353, 1.442695
        %v1432 = vpow.pop %v1431
        %v1433 = vmul.f32 %v1354, 1.442695
        %v1434 = vpow.pop %v1433
        %v1435 = vmul.f32 %v1355, 1.442695
        %v1436 = vpow.pop %v1435
        %v1437 = vmul.f32 %v1356, 1.442695
        %v1438 = vpow.pop %v1437
        %v1439 = vmul.f32 %v1357, 1.442695
        %v1440 = vpow.pop %v1439
        %v1441 = vmul.f32 %v1358, 1.442695
        %v1442 = vpow.pop %v1441
        %v1443 = vmul.f32 %v1359, 1.442695
        %v1444 = vpow.pop %v1443
        %v1445 = vmul.f32 %v1360, 1.442695
        %v1446 = vpow.pop %v1445
        %v1447 = vmul.f32 %v1361, 1.442695
        %v1448 = vpow.pop %v1447
        %v1449 = vmul.f32 %v1362, 1.442695
        %v1450 = vpow.pop %v1449
        %v1451 = vmul.f32 %v1363, 1.442695
        %v1452 = vpow.pop %v1451
        %v1453 = vmul.f32 %v1364, 1.442695
        %v1454 = vpow.pop %v1453
        %v1455 = vmul.f32 %v1365, 1.442695
        %v1456 = vpow.pop %v1455
        %v1457 = vmul.f32 %v1366, 1.442695
        %v1458 = vpow.pop %v1457
        %v1459 = vmul.f32 %v1367, 1.442695
        %v1460 = vpow.pop %v1459
        %v1461 = vmul.f32 %v1368, 1.442695
        %v1462 = vpow.pop %v1461
        %v1463 = vmul.f32 %v1369, 1.442695
        %v1464 = vpow.pop %v1463
        %v1465 = vmul.f32 %v1370, 1.442695
        %v1466 = vpow.pop %v1465
        %v1467 = vmul.f32 %v1371, 1.442695
        %v1468 = vpow.pop %v1467
        %v1469 = vmul.f32 %v1372, 1.442695
        %v1470 = vpow.pop %v1469
        %v1471 = vmul.f32 %v1373, 1.442695
        %v1472 = vpow.pop %v1471
        %v1473 = vmul.f32 %v1374, 1.442695
        %v1474 = vpow.pop %v1473
        %v1475 = vmul.f32 %v1375, 1.442695
        %v1476 = vpow.pop %v1475
        %v1477 = vmul.f32 %v1376, 1.442695
        %v1478 = vpow.pop %v1477
        %v1479 = vmul.f32 %v1377, 1.442695
        %v1480 = vpow.pop %v1479
        %v1481 = vmul.f32 %v1378, 1.442695
        %v1482 = vpow.pop %v1481
        %v1483 = vmul.f32 %v1379, 1.442695
        %v1484 = vpow.pop %v1483
        %v1485 = vmul.f32 %v1380, 1.442695
        %v1486 = vpow.pop %v1485
        %v1487 = vmul.f32 %v1381, 1.442695
        %v1488 = vpow.pop %v1487
        %v1489 = vmul.f32 %v1382, 1.442695
        %v1490 = vpow.pop %v1489
        %v1491 = vmul.f32 %v1383, 1.442695
        %v1492 = vpow.pop %v1491
        %v1493 = vmul.f32 %v1384, 1.442695
        %v1494 = vpow.pop %v1493
        %v1495 = vmul.f32 %v1385, 1.442695
        %v1496 = vpow.pop %v1495
        %v1497 = vmul.f32 %v1386, 1.442695
        %v1498 = vpow.pop %v1497
        %v1499 = vmul.f32 %v1387, 1.442695
        %v1500 = vpow.pop %v1499
        %v1501 = vmul.f32 %v1388, 1.442695
        %v1502 = vpow.pop %v1501
        %v1503 = vmul.f32 %v1389, 1.442695
        %v1504 = vpow.pop %v1503
        %v1505 = vmul.f32 %v1390, 1.442695
        %v1506 = vpow.pop %v1505
        %v1507 = vmul.f32 %v1391, 1.442695
        %v1508 = vpow.pop %v1507
        %v1509 = vmul.f32 %v1392, 1.442695
        %v1510 = vpow.pop %v1509
        %v1511 = vmul.f32 %v1393, 1.442695
        %v1512 = vpow.pop %v1511
        %v1513 = vmul.f32 %v1394, 1.442695
        %v1514 = vpow.pop %v1513
        %v1515 = vmul.f32 %v1395, 1.442695
        %v1516 = vpow.pop %v1515
        %v1517 = vmul.f32 %v1396, 1.442695
        %v1518 = vpow.pop %v1517
        %v1519 = vmul.f32 %v1397, 1.442695
        %v1520 = vpow.pop %v1519
        %v1521 = vmul.f32 %v1398, 1.442695
        %v1522 = vpow.pop %v1521
        %v1523 = vmul.f32 %v1399, 1.442695
        %v1524 = vpow.pop %v1523
        %v1525 = vmul.f32 %v1400, 1.442695
        %v1526 = vpow.pop %v1525
        %v1527 = vmul.f32 %v1401, 1.442695
        %v1528 = vpow.pop %v1527
        %v1529 = vmul.f32 %v1402, 1.442695
        %v1530 = vpow.pop %v1529
        %v1531 = vadd.f32 %v1404, %v1406
        %1532 = vadd.xlane.f32.xlu0 %v1531
        %v1533 = vpop.xlane.xlu0 %1532
        %v1534 = vadd.f32 %v1408, %v1410
        %1535 = vadd.xlane.f32.xlu0 %v1534
        %v1536 = vpop.xlane.xlu0 %1535
        %v1537 = vadd.f32 %v1412, %v1414
        %1538 = vadd.xlane.f32.xlu0 %v1537
        %v1539 = vpop.xlane.xlu0 %1538
        %v1540 = vadd.f32 %v1416, %v1418
        %1541 = vadd.xlane.f32.xlu0 %v1540
        %v1542 = vpop.xlane.xlu0 %1541
        %v1543 = vadd.f32 %v1420, %v1422
        %1544 = vadd.xlane.f32.xlu0 %v1543
        %v1545 = vpop.xlane.xlu0 %1544
        %v1546 = vadd.f32 %v1424, %v1426
        %1547 = vadd.xlane.f32.xlu0 %v1546
        %v1548 = vpop.xlane.xlu0 %1547
        %v1549 = vadd.f32 %v1428, %v1430
        %1550 = vadd.xlane.f32.xlu0 %v1549
        %v1551 = vpop.xlane.xlu0 %1550
        %v1552 = vadd.f32 %v1432, %v1434
        %1553 = vadd.xlane.f32.xlu0 %v1552
        %v1554 = vpop.xlane.xlu0 %1553
        %v1555 = vadd.f32 %v1436, %v1438
        %1556 = vadd.xlane.f32.xlu0 %v1555
        %v1557 = vpop.xlane.xlu0 %1556
        %v1558 = vadd.f32 %v1440, %v1442
        %1559 = vadd.xlane.f32.xlu0 %v1558
        %v1560 = vpop.xlane.xlu0 %1559
        %v1561 = vadd.f32 %v1444, %v1446
        %1562 = vadd.xlane.f32.xlu0 %v1561
        %v1563 = vpop.xlane.xlu0 %1562
        %v1564 = vadd.f32 %v1448, %v1450
        %1565 = vadd.xlane.f32.xlu0 %v1564
        %v1566 = vpop.xlane.xlu0 %1565
        %v1567 = vadd.f32 %v1452, %v1454
        %1568 = vadd.xlane.f32.xlu0 %v1567
        %v1569 = vpop.xlane.xlu0 %1568
        %v1570 = vadd.f32 %v1456, %v1458
        %1571 = vadd.xlane.f32.xlu0 %v1570
        %v1572 = vpop.xlane.xlu0 %1571
        %v1573 = vadd.f32 %v1460, %v1462
        %1574 = vadd.xlane.f32.xlu0 %v1573
        %v1575 = vpop.xlane.xlu0 %1574
        %v1576 = vadd.f32 %v1464, %v1466
        %1577 = vadd.xlane.f32.xlu0 %v1576
        %v1578 = vpop.xlane.xlu0 %1577
        %v1579 = vadd.f32 %v1468, %v1470
        %1580 = vadd.xlane.f32.xlu0 %v1579
        %v1581 = vpop.xlane.xlu0 %1580
        %v1582 = vadd.f32 %v1472, %v1474
        %1583 = vadd.xlane.f32.xlu0 %v1582
        %v1584 = vpop.xlane.xlu0 %1583
        %v1585 = vadd.f32 %v1476, %v1478
        %1586 = vadd.xlane.f32.xlu0 %v1585
        %v1587 = vpop.xlane.xlu0 %1586
        %v1588 = vadd.f32 %v1480, %v1482
        %1589 = vadd.xlane.f32.xlu0 %v1588
        %v1590 = vpop.xlane.xlu0 %1589
        %v1591 = vadd.f32 %v1484, %v1486
        %1592 = vadd.xlane.f32.xlu0 %v1591
        %v1593 = vpop.xlane.xlu0 %1592
        %v1594 = vadd.f32 %v1488, %v1490
        %1595 = vadd.xlane.f32.xlu0 %v1594
        %v1596 = vpop.xlane.xlu0 %1595
        %v1597 = vadd.f32 %v1492, %v1494
        %1598 = vadd.xlane.f32.xlu0 %v1597
        %v1599 = vpop.xlane.xlu0 %1598
        %v1600 = vadd.f32 %v1496, %v1498
        %1601 = vadd.xlane.f32.xlu0 %v1600
        %v1602 = vpop.xlane.xlu0 %1601
        %v1603 = vadd.f32 %v1500, %v1502
        %1604 = vadd.xlane.f32.xlu0 %v1603
        %v1605 = vpop.xlane.xlu0 %1604
        %v1606 = vadd.f32 %v1504, %v1506
        %1607 = vadd.xlane.f32.xlu0 %v1606
        %v1608 = vpop.xlane.xlu0 %1607
        %v1609 = vadd.f32 %v1508, %v1510
        %1610 = vadd.xlane.f32.xlu0 %v1609
        %v1611 = vpop.xlane.xlu0 %1610
        %v1612 = vadd.f32 %v1512, %v1514
        %1613 = vadd.xlane.f32.xlu0 %v1612
        %v1614 = vpop.xlane.xlu0 %1613
        %v1615 = vadd.f32 %v1516, %v1518
        %1616 = vadd.xlane.f32.xlu0 %v1615
        %v1617 = vpop.xlane.xlu0 %1616
        %v1618 = vadd.f32 %v1520, %v1522
        %1619 = vadd.xlane.f32.xlu0 %v1618
        %v1620 = vpop.xlane.xlu0 %1619
        %v1621 = vadd.f32 %v1524, %v1526
        %1622 = vadd.xlane.f32.xlu0 %v1621
        %v1623 = vpop.xlane.xlu0 %1622
        %v1624 = vadd.f32 %v1528, %v1530
        %1625 = vadd.xlane.f32.xlu0 %v1624
        %v1626 = vpop.xlane.xlu0 %1625
        %1627 = vrot.lane.b32.xlu0 %v665, 64
        %v1628 = vpop.permute.xlu0 %1627
        %1629 = vrot.lane.b32.xlu0 %v666, 64
        %v1630 = vpop.permute.xlu0 %1629
        %1631 = vrot.lane.b32.xlu0 %v667, 64
        %v1632 = vpop.permute.xlu0 %1631
        %1633 = vrot.lane.b32.xlu0 %v668, 64
        %v1634 = vpop.permute.xlu0 %1633
        %1635 = vrot.lane.b32.xlu0 %v669, 64
        %v1636 = vpop.permute.xlu0 %1635
        %1637 = vrot.lane.b32.xlu0 %v670, 64
        %v1638 = vpop.permute.xlu0 %1637
        %1639 = vrot.lane.b32.xlu0 %v671, 64
        %v1640 = vpop.permute.xlu0 %1639
        %1641 = vrot.lane.b32.xlu0 %v672, 64
        %v1642 = vpop.permute.xlu0 %1641
        %1643 = vrot.lane.b32.xlu0 %v673, 64
        %v1644 = vpop.permute.xlu0 %1643
        %1645 = vrot.lane.b32.xlu0 %v674, 64
        %v1646 = vpop.permute.xlu0 %1645
        %1647 = vrot.lane.b32.xlu0 %v675, 64
        %v1648 = vpop.permute.xlu0 %1647
        %1649 = vrot.lane.b32.xlu0 %v676, 64
        %v1650 = vpop.permute.xlu0 %1649
        %1651 = vrot.lane.b32.xlu0 %v677, 64
        %v1652 = vpop.permute.xlu0 %1651
        %1653 = vrot.lane.b32.xlu0 %v678, 64
        %v1654 = vpop.permute.xlu0 %1653
        %1655 = vrot.lane.b32.xlu0 %v679, 64
        %v1656 = vpop.permute.xlu0 %1655
        %1657 = vrot.lane.b32.xlu0 %v680, 64
        %v1658 = vpop.permute.xlu0 %1657
        %1659 = vrot.lane.b32.xlu0 %v681, 64
        %v1660 = vpop.permute.xlu0 %1659
        %1661 = vrot.lane.b32.xlu0 %v682, 64
        %v1662 = vpop.permute.xlu0 %1661
        %1663 = vrot.lane.b32.xlu0 %v683, 64
        %v1664 = vpop.permute.xlu0 %1663
        %1665 = vrot.lane.b32.xlu0 %v684, 64
        %v1666 = vpop.permute.xlu0 %1665
        %1667 = vrot.lane.b32.xlu0 %v685, 64
        %v1668 = vpop.permute.xlu0 %1667
        %1669 = vrot.lane.b32.xlu0 %v686, 64
        %v1670 = vpop.permute.xlu0 %1669
        %1671 = vrot.lane.b32.xlu0 %v687, 64
        %v1672 = vpop.permute.xlu0 %1671
        %1673 = vrot.lane.b32.xlu0 %v688, 64
        %v1674 = vpop.permute.xlu0 %1673
        %1675 = vrot.lane.b32.xlu0 %v689, 64
        %v1676 = vpop.permute.xlu0 %1675
        %1677 = vrot.lane.b32.xlu0 %v690, 64
        %v1678 = vpop.permute.xlu0 %1677
        %1679 = vrot.lane.b32.xlu0 %v691, 64
        %v1680 = vpop.permute.xlu0 %1679
        %1681 = vrot.lane.b32.xlu0 %v692, 64
        %v1682 = vpop.permute.xlu0 %1681
        %1683 = vrot.lane.b32.xlu0 %v693, 64
        %v1684 = vpop.permute.xlu0 %1683
        %1685 = vrot.lane.b32.xlu0 %v694, 64
        %v1686 = vpop.permute.xlu0 %1685
        %1687 = vrot.lane.b32.xlu0 %v695, 64
        %v1688 = vpop.permute.xlu0 %1687
        %1689 = vrot.lane.b32.xlu0 %v696, 64
        %v1690 = vpop.permute.xlu0 %1689
        %1723 = vmatprep.subr.mxu0 0.0
        %1724 = vmatpush1.msra.mxu0 %v1628
        %1725 = vmatprep.subr.mxu0 0.0
        %1726 = vmatpush1.msra.mxu0 %v1630
        %1727 = vmatprep.subr.mxu0 0.0
        %1728 = vmatpush1.msra.mxu0 %v1632
        %1729 = vmatprep.subr.mxu0 0.0
        %1730 = vmatpush1.msra.mxu0 %v1634
        %1731 = vmatprep.subr.mxu0 0.0
        %1732 = vmatpush1.msra.mxu0 %v1636
        %1733 = vmatprep.subr.mxu0 0.0
        %1734 = vmatpush1.msra.mxu0 %v1638
        %1735 = vmatprep.subr.mxu0 0.0
        %1736 = vmatpush1.msra.mxu0 %v1640
        %1737 = vmatprep.subr.mxu0 0.0
        %1738 = vmatpush1.msra.mxu0 %v1642
        %1739 = vmatprep.subr.mxu0 0.0
        %1740 = vmatpush1.msra.mxu0 %v1644
        %1741 = vmatprep.subr.mxu0 0.0
        %1742 = vmatpush1.msra.mxu0 %v1646
        %1743 = vmatprep.subr.mxu0 0.0
        %1744 = vmatpush1.msra.mxu0 %v1648
        %1745 = vmatprep.subr.mxu0 0.0
        %1746 = vmatpush1.msra.mxu0 %v1650
        %1747 = vmatprep.subr.mxu0 0.0
        %1748 = vmatpush1.msra.mxu0 %v1652
        %1749 = vmatprep.subr.mxu0 0.0
        %1750 = vmatpush1.msra.mxu0 %v1654
        %1751 = vmatprep.subr.mxu0 0.0
        %1752 = vmatpush1.msra.mxu0 %v1656
        %1753 = vmatprep.subr.mxu0 0.0
        %1754 = vmatpush1.msra.mxu0 %v1658
        %1755 = vmatprep.subr.mxu0 0.0
        %1756 = vmatpush1.msra.mxu0 %v1660
        %1757 = vmatprep.subr.mxu0 0.0
        %1758 = vmatpush1.msra.mxu0 %v1662
        %1759 = vmatprep.subr.mxu0 0.0
        %1760 = vmatpush1.msra.mxu0 %v1664
        %1761 = vmatprep.subr.mxu0 0.0
        %1762 = vmatpush1.msra.mxu0 %v1666
        %1763 = vmatprep.subr.mxu0 0.0
        %1764 = vmatpush1.msra.mxu0 %v1668
        %1765 = vmatprep.subr.mxu0 0.0
        %1766 = vmatpush1.msra.mxu0 %v1670
        %1767 = vmatprep.subr.mxu0 0.0
        %1768 = vmatpush1.msra.mxu0 %v1672
        %1769 = vmatprep.subr.mxu0 0.0
        %1770 = vmatpush1.msra.mxu0 %v1674
        %1771 = vmatprep.subr.mxu0 0.0
        %1772 = vmatpush1.msra.mxu0 %v1676
        %1773 = vmatprep.subr.mxu0 0.0
        %1774 = vmatpush1.msra.mxu0 %v1678
        %1775 = vmatprep.subr.mxu0 0.0
        %1776 = vmatpush1.msra.mxu0 %v1680
        %1777 = vmatprep.subr.mxu0 0.0
        %1778 = vmatpush1.msra.mxu0 %v1682
        %1779 = vmatprep.subr.mxu0 0.0
        %1780 = vmatpush1.msra.mxu0 %v1684
        %1781 = vmatprep.subr.mxu0 0.0
        %1782 = vmatpush1.msra.mxu0 %v1686
        %1783 = vmatprep.subr.mxu0 0.0
        %1784 = vmatpush1.msra.mxu0 %v1688
        %1785 = vmatprep.subr.mxu0 0.0
        %1786 = vmatpush1.msra.mxu0 %v1690
        %1787 = vmatprep.mubr.f32.mxu0 %v1406
        %1788 = vmatmul.mubr.f32.gmra.mrb[0].mxu0 %v1404
        %v1789 = vpop.f32.mrb[0].mxu0
        %v1790 = vadd.f32 0.0, %v1789
        %v1791 = vpop.f32.mrb[0].mxu0
        %1792 = vmatprep.mubr.f32.mxu0 %v1410
        %1793 = vmatmul.mubr.f32.gmra.mrb[0].mxu0 %v1408
        %v1794 = vpop.f32.mrb[0].mxu0
        %v1795 = vadd.f32 0.0, %v1794
        %v1796 = vpop.f32.mrb[0].mxu0
        %1797 = vmatprep.mubr.f32.mxu0 %v1414
        %1798 = vmatmul.mubr.f32.gmra.mrb[0].mxu0 %v1412
        %v1799 = vpop.f32.mrb[0].mxu0
        %v1800 = vadd.f32 0.0, %v1799
        %v1801 = vpop.f32.mrb[0].mxu0
        %1802 = vmatprep.mubr.f32.mxu0 %v1418
        %1803 = vmatmul.mubr.f32.gmra.mrb[0].mxu0 %v1416
        %v1804 = vpop.f32.mrb[0].mxu0
        %v1805 = vadd.f32 0.0, %v1804
        %v1806 = vpop.f32.mrb[0].mxu0
        %1807 = vmatprep.mubr.f32.mxu0 %v1422
        %1808 = vmatmul.mubr.f32.gmra.mrb[0].mxu0 %v1420
        %v1809 = vpop.f32.mrb[0].mxu0
        %v1810 = vadd.f32 0.0, %v1809
        %v1811 = vpop.f32.mrb[0].mxu0
        %1812 = vmatprep.mubr.f32.mxu0 %v1426
        %1813 = vmatmul.mubr.f32.gmra.mrb[0].mxu0 %v1424
        %v1814 = vpop.f32.mrb[0].mxu0
        %v1815 = vadd.f32 0.0, %v1814
        %v1816 = vpop.f32.mrb[0].mxu0
        %1817 = vmatprep.mubr.f32.mxu0 %v1430
        %1818 = vmatmul.mubr.f32.gmra.mrb[0].mxu0 %v1428
        %v1819 = vpop.f32.mrb[0].mxu0
        %v1820 = vadd.f32 0.0, %v1819
        %v1821 = vpop.f32.mrb[0].mxu0
        %1822 = vmatprep.mubr.f32.mxu0 %v1434
        %1823 = vmatmul.mubr.f32.gmra.mrb[0].mxu0 %v1432
        %v1824 = vpop.f32.mrb[0].mxu0
        %v1825 = vadd.f32 0.0, %v1824
        %v1826 = vpop.f32.mrb[0].mxu0
        %1827 = vmatprep.mubr.f32.mxu0 %v1438
        %1828 = vmatmul.mubr.f32.gmra.mrb[0].mxu0 %v1436
        %v1829 = vpop.f32.mrb[0].mxu0
        %v1830 = vadd.f32 0.0, %v1829
        %v1831 = vpop.f32.mrb[0].mxu0
        %1832 = vmatprep.mubr.f32.mxu0 %v1442
        %1833 = vmatmul.mubr.f32.gmra.mrb[0].mxu0 %v1440
        %v1834 = vpop.f32.mrb[0].mxu0
        %v1835 = vadd.f32 0.0, %v1834
        %v1836 = vpop.f32.mrb[0].mxu0
        %1837 = vmatprep.mubr.f32.mxu0 %v1446
        %1838 = vmatmul.mubr.f32.gmra.mrb[0].mxu0 %v1444
        %v1839 = vpop.f32.mrb[0].mxu0
        %v1840 = vadd.f32 0.0, %v1839
        %v1841 = vpop.f32.mrb[0].mxu0
        %1842 = vmatprep.mubr.f32.mxu0 %v1450
        %1843 = vmatmul.mubr.f32.gmra.mrb[0].mxu0 %v1448
        %v1844 = vpop.f32.mrb[0].mxu0
        %v1845 = vadd.f32 0.0, %v1844
        %v1846 = vpop.f32.mrb[0].mxu0
        %1847 = vmatprep.mubr.f32.mxu0 %v1454
        %1848 = vmatmul.mubr.f32.gmra.mrb[0].mxu0 %v1452
        %v1849 = vpop.f32.mrb[0].mxu0
        %v1850 = vadd.f32 0.0, %v1849
        %v1851 = vpop.f32.mrb[0].mxu0
        %1852 = vmatprep.mubr.f32.mxu0 %v1458
        %1853 = vmatmul.mubr.f32.gmra.mrb[0].mxu0 %v1456
        %v1854 = vpop.f32.mrb[0].mxu0
        %v1855 = vadd.f32 0.0, %v1854
        %v1856 = vpop.f32.mrb[0].mxu0
        %1857 = vmatprep.mubr.f32.mxu0 %v1462
        %1858 = vmatmul.mubr.f32.gmra.mrb[0].mxu0 %v1460
        %v1859 = vpop.f32.mrb[0].mxu0
        %v1860 = vadd.f32 0.0, %v1859
        %v1861 = vpop.f32.mrb[0].mxu0
        %1862 = vmatprep.mubr.f32.mxu0 %v1466
        %1863 = vmatmul.mubr.f32.gmra.mrb[0].mxu0 %v1464
        %v1864 = vpop.f32.mrb[0].mxu0
        %v1865 = vadd.f32 0.0, %v1864
        %v1866 = vpop.f32.mrb[0].mxu0
        %1867 = vmatprep.mubr.f32.mxu0 %v1470
        %1868 = vmatmul.mubr.f32.gmra.mrb[0].mxu0 %v1468
        %v1869 = vpop.f32.mrb[0].mxu0
        %v1870 = vadd.f32 0.0, %v1869
        %v1871 = vpop.f32.mrb[0].mxu0
        %1872 = vmatprep.mubr.f32.mxu0 %v1474
        %1873 = vmatmul.mubr.f32.gmra.mrb[0].mxu0 %v1472
        %v1874 = vpop.f32.mrb[0].mxu0
        %v1875 = vadd.f32 0.0, %v1874
        %v1876 = vpop.f32.mrb[0].mxu0
        %1877 = vmatprep.mubr.f32.mxu0 %v1478
        %1878 = vmatmul.mubr.f32.gmra.mrb[0].mxu0 %v1476
        %v1879 = vpop.f32.mrb[0].mxu0
        %v1880 = vadd.f32 0.0, %v1879
        %v1881 = vpop.f32.mrb[0].mxu0
        %1882 = vmatprep.mubr.f32.mxu0 %v1482
        %1883 = vmatmul.mubr.f32.gmra.mrb[0].mxu0 %v1480
        %v1884 = vpop.f32.mrb[0].mxu0
        %v1885 = vadd.f32 0.0, %v1884
        %v1886 = vpop.f32.mrb[0].mxu0
        %1887 = vmatprep.mubr.f32.mxu0 %v1486
        %1888 = vmatmul.mubr.f32.gmra.mrb[0].mxu0 %v1484
        %v1889 = vpop.f32.mrb[0].mxu0
        %v1890 = vadd.f32 0.0, %v1889
        %v1891 = vpop.f32.mrb[0].mxu0
        %1892 = vmatprep.mubr.f32.mxu0 %v1490
        %1893 = vmatmul.mubr.f32.gmra.mrb[0].mxu0 %v1488
        %v1894 = vpop.f32.mrb[0].mxu0
        %v1895 = vadd.f32 0.0, %v1894
        %v1896 = vpop.f32.mrb[0].mxu0
        %1897 = vmatprep.mubr.f32.mxu0 %v1494
        %1898 = vmatmul.mubr.f32.gmra.mrb[0].mxu0 %v1492
        %v1899 = vpop.f32.mrb[0].mxu0
        %v1900 = vadd.f32 0.0, %v1899
        %v1901 = vpop.f32.mrb[0].mxu0
        %1902 = vmatprep.mubr.f32.mxu0 %v1498
        %1903 = vmatmul.mubr.f32.gmra.mrb[0].mxu0 %v1496
        %v1904 = vpop.f32.mrb[0].mxu0
        %v1905 = vadd.f32 0.0, %v1904
        %v1906 = vpop.f32.mrb[0].mxu0
        %1907 = vmatprep.mubr.f32.mxu0 %v1502
        %1908 = vmatmul.mubr.f32.gmra.mrb[0].mxu0 %v1500
        %v1909 = vpop.f32.mrb[0].mxu0
        %v1910 = vadd.f32 0.0, %v1909
        %v1911 = vpop.f32.mrb[0].mxu0
        %1912 = vmatprep.mubr.f32.mxu0 %v1506
        %1913 = vmatmul.mubr.f32.gmra.mrb[0].mxu0 %v1504
        %v1914 = vpop.f32.mrb[0].mxu0
        %v1915 = vadd.f32 0.0, %v1914
        %v1916 = vpop.f32.mrb[0].mxu0
        %1917 = vmatprep.mubr.f32.mxu0 %v1510
        %1918 = vmatmul.mubr.f32.gmra.mrb[0].mxu0 %v1508
        %v1919 = vpop.f32.mrb[0].mxu0
        %v1920 = vadd.f32 0.0, %v1919
        %v1921 = vpop.f32.mrb[0].mxu0
        %1922 = vmatprep.mubr.f32.mxu0 %v1514
        %1923 = vmatmul.mubr.f32.gmra.mrb[0].mxu0 %v1512
        %v1924 = vpop.f32.mrb[0].mxu0
        %v1925 = vadd.f32 0.0, %v1924
        %v1926 = vpop.f32.mrb[0].mxu0
        %1927 = vmatprep.mubr.f32.mxu0 %v1518
        %1928 = vmatmul.mubr.f32.gmra.mrb[0].mxu0 %v1516
        %v1929 = vpop.f32.mrb[0].mxu0
        %v1930 = vadd.f32 0.0, %v1929
        %v1931 = vpop.f32.mrb[0].mxu0
        %1932 = vmatprep.mubr.f32.mxu0 %v1522
        %1933 = vmatmul.mubr.f32.gmra.mrb[0].mxu0 %v1520
        %v1934 = vpop.f32.mrb[0].mxu0
        %v1935 = vadd.f32 0.0, %v1934
        %v1936 = vpop.f32.mrb[0].mxu0
        %1937 = vmatprep.mubr.f32.mxu0 %v1526
        %1938 = vmatmul.mubr.f32.gmra.mrb[0].mxu0 %v1524
        %v1939 = vpop.f32.mrb[0].mxu0
        %v1940 = vadd.f32 0.0, %v1939
        %v1941 = vpop.f32.mrb[0].mxu0
        %1942 = vmatprep.mubr.f32.mxu0 %v1530
        %1943 = vmatmul.mubr.f32.gmra.mrb[0].mxu0 %v1528
        %v1944 = vpop.f32.mrb[0].mxu0
        %v1945 = vadd.f32 0.0, %v1944
        %v1946 = vpop.f32.mrb[0].mxu0
        %1947 = vdwg.mxu0
        %v1948 = vrcp.pop %v1533
        %v1949 = vrcp.pop %v1536
        %v1950 = vrcp.pop %v1539
        %v1951 = vrcp.pop %v1542
        %v1952 = vrcp.pop %v1545
        %v1953 = vrcp.pop %v1548
        %v1954 = vrcp.pop %v1551
        %v1955 = vrcp.pop %v1554
        %v1956 = vrcp.pop %v1557
        %v1957 = vrcp.pop %v1560
        %v1958 = vrcp.pop %v1563
        %v1959 = vrcp.pop %v1566
        %v1960 = vrcp.pop %v1569
        %v1961 = vrcp.pop %v1572
        %v1962 = vrcp.pop %v1575
        %v1963 = vrcp.pop %v1578
        %v1964 = vrcp.pop %v1581
        %v1965 = vrcp.pop %v1584
        %v1966 = vrcp.pop %v1587
        %v1967 = vrcp.pop %v1590
        %v1968 = vrcp.pop %v1593
        %v1969 = vrcp.pop %v1596
        %v1970 = vrcp.pop %v1599
        %v1971 = vrcp.pop %v1602
        %v1972 = vrcp.pop %v1605
        %v1973 = vrcp.pop %v1608
        %v1974 = vrcp.pop %v1611
        %v1975 = vrcp.pop %v1614
        %v1976 = vrcp.pop %v1617
        %v1977 = vrcp.pop %v1620
        %v1978 = vrcp.pop %v1623
        %v1979 = vrcp.pop %v1626
        %v1980 = vmul.f32 %v1790, %v1948
        %v1981 = vmul.f32 %v1795, %v1949
        %v1982 = vmul.f32 %v1800, %v1950
        %v1983 = vmul.f32 %v1805, %v1951
        %v1984 = vmul.f32 %v1810, %v1952
        %v1985 = vmul.f32 %v1815, %v1953
        %v1986 = vmul.f32 %v1820, %v1954
        %v1987 = vmul.f32 %v1825, %v1955
        %v1988 = vmul.f32 %v1830, %v1956
        %v1989 = vmul.f32 %v1835, %v1957
        %v1990 = vmul.f32 %v1840, %v1958
        %v1991 = vmul.f32 %v1845, %v1959
        %v1992 = vmul.f32 %v1850, %v1960
        %v1993 = vmul.f32 %v1855, %v1961
        %v1994 = vmul.f32 %v1860, %v1962
        %v1995 = vmul.f32 %v1865, %v1963
        %v1996 = vmul.f32 %v1870, %v1964
        %v1997 = vmul.f32 %v1875, %v1965
        %v1998 = vmul.f32 %v1880, %v1966
        %v1999 = vmul.f32 %v1885, %v1967
        %v2000 = vmul.f32 %v1890, %v1968
        %v2001 = vmul.f32 %v1895, %v1969
        %v2002 = vmul.f32 %v1900, %v1970
        %v2003 = vmul.f32 %v1905, %v1971
        %v2004 = vmul.f32 %v1910, %v1972
        %v2005 = vmul.f32 %v1915, %v1973
        %v2006 = vmul.f32 %v1920, %v1974
        %v2007 = vmul.f32 %v1925, %v1975
        %v2008 = vmul.f32 %v1930, %v1976
        %v2009 = vmul.f32 %v1935, %v1977
        %v2010 = vmul.f32 %v1940, %v1978
        %v2011 = vmul.f32 %v1945, %v1979
        %2012 = vst.msk [vmem:[#allocation3] sm:$0xff] %vm857, %v1980
        %2013 = vst.msk [vmem:[#allocation3 + $0x8] sm:$0xff] %vm857, %v1981
        %2014 = vst.msk [vmem:[#allocation3 + $0x10] sm:$0xff] %vm857, %v1982
        %2015 = vst.msk [vmem:[#allocation3 + $0x18] sm:$0xff] %vm857, %v1983
        %2016 = vst.msk [vmem:[#allocation3 + $0x20] sm:$0xff] %vm857, %v1984
        %2017 = vst.msk [vmem:[#allocation3 + $0x28] sm:$0xff] %vm857, %v1985
        %2018 = vst.msk [vmem:[#allocation3 + $0x30] sm:$0xff] %vm857, %v1986
        %2019 = vst.msk [vmem:[#allocation3 + $0x38] sm:$0xff] %vm857, %v1987
        %2020 = vst.msk [vmem:[#allocation3 + $0x40] sm:$0xff] %vm857, %v1988
        %2021 = vst.msk [vmem:[#allocation3 + $0x48] sm:$0xff] %vm857, %v1989
        %2022 = vst.msk [vmem:[#allocation3 + $0x50] sm:$0xff] %vm857, %v1990
        %2023 = vst.msk [vmem:[#allocation3 + $0x58] sm:$0xff] %vm857, %v1991
        %2024 = vst.msk [vmem:[#allocation3 + $0x60] sm:$0xff] %vm857, %v1992
        %2025 = vst.msk [vmem:[#allocation3 + $0x68] sm:$0xff] %vm857, %v1993
        %2026 = vst.msk [vmem:[#allocation3 + $0x70] sm:$0xff] %vm857, %v1994
        %2027 = vst.msk [vmem:[#allocation3 + $0x78] sm:$0xff] %vm857, %v1995
        %2028 = vst.msk [vmem:[#allocation3 + $0x80] sm:$0xff] %vm857, %v1996
        %2029 = vst.msk [vmem:[#allocation3 + $0x88] sm:$0xff] %vm857, %v1997
        %2030 = vst.msk [vmem:[#allocation3 + $0x90] sm:$0xff] %vm857, %v1998
        %2031 = vst.msk [vmem:[#allocation3 + $0x98] sm:$0xff] %vm857, %v1999
        %2032 = vst.msk [vmem:[#allocation3 + $0xa0] sm:$0xff] %vm857, %v2000
        %2033 = vst.msk [vmem:[#allocation3 + $0xa8] sm:$0xff] %vm857, %v2001
        %2034 = vst.msk [vmem:[#allocation3 + $0xb0] sm:$0xff] %vm857, %v2002
        %2035 = vst.msk [vmem:[#allocation3 + $0xb8] sm:$0xff] %vm857, %v2003
        %2036 = vst.msk [vmem:[#allocation3 + $0xc0] sm:$0xff] %vm857, %v2004
        %2037 = vst.msk [vmem:[#allocation3 + $0xc8] sm:$0xff] %vm857, %v2005
        %2038 = vst.msk [vmem:[#allocation3 + $0xd0] sm:$0xff] %vm857, %v2006
        %2039 = vst.msk [vmem:[#allocation3 + $0xd8] sm:$0xff] %vm857, %v2007
        %2040 = vst.msk [vmem:[#allocation3 + $0xe0] sm:$0xff] %vm857, %v2008
        %2041 = vst.msk [vmem:[#allocation3 + $0xe8] sm:$0xff] %vm857, %v2009
        %2042 = vst.msk [vmem:[#allocation3 + $0xf0] sm:$0xff] %vm857, %v2010
        %2043 = vst.msk [vmem:[#allocation3 + $0xf8] sm:$0xff] %vm857, %v2011
        %v2044 = vld [vmem:[#allocation2] sm:$0xff]
        %v2045 = vld [vmem:[#allocation2 + $0x8] sm:$0xff]
        %v2046 = vld [vmem:[#allocation2 + $0x10] sm:$0xff]
        %v2047 = vld [vmem:[#allocation2 + $0x18] sm:$0xff]
        %v2048 = vld [vmem:[#allocation2 + $0x20] sm:$0xff]
        %v2049 = vld [vmem:[#allocation2 + $0x28] sm:$0xff]
        %v2050 = vld [vmem:[#allocation2 + $0x30] sm:$0xff]
        %v2051 = vld [vmem:[#allocation2 + $0x38] sm:$0xff]
        %v2052 = vld [vmem:[#allocation2 + $0x40] sm:$0xff]
        %v2053 = vld [vmem:[#allocation2 + $0x48] sm:$0xff]
        %v2054 = vld [vmem:[#allocation2 + $0x50] sm:$0xff]
        %v2055 = vld [vmem:[#allocation2 + $0x58] sm:$0xff]
        %v2056 = vld [vmem:[#allocation2 + $0x60] sm:$0xff]
        %v2057 = vld [vmem:[#allocation2 + $0x68] sm:$0xff]
        %v2058 = vld [vmem:[#allocation2 + $0x70] sm:$0xff]
        %v2059 = vld [vmem:[#allocation2 + $0x78] sm:$0xff]
        %v2060 = vld [vmem:[#allocation2 + $0x80] sm:$0xff]
        %v2061 = vld [vmem:[#allocation2 + $0x88] sm:$0xff]
        %v2062 = vld [vmem:[#allocation2 + $0x90] sm:$0xff]
        %v2063 = vld [vmem:[#allocation2 + $0x98] sm:$0xff]
        %v2064 = vld [vmem:[#allocation2 + $0xa0] sm:$0xff]
        %v2065 = vld [vmem:[#allocation2 + $0xa8] sm:$0xff]
        %v2066 = vld [vmem:[#allocation2 + $0xb0] sm:$0xff]
        %v2067 = vld [vmem:[#allocation2 + $0xb8] sm:$0xff]
        %v2068 = vld [vmem:[#allocation2 + $0xc0] sm:$0xff]
        %v2069 = vld [vmem:[#allocation2 + $0xc8] sm:$0xff]
        %v2070 = vld [vmem:[#allocation2 + $0xd0] sm:$0xff]
        %v2071 = vld [vmem:[#allocation2 + $0xd8] sm:$0xff]
        %v2072 = vld [vmem:[#allocation2 + $0xe0] sm:$0xff]
        %v2073 = vld [vmem:[#allocation2 + $0xe8] sm:$0xff]
        %v2074 = vld [vmem:[#allocation2 + $0xf0] sm:$0xff]
        %v2075 = vld [vmem:[#allocation2 + $0xf8] sm:$0xff]
        %s2076 = scalar_lea.vmem [#allocation4], 512
        %v2077 = vld [vmem:[%s2076] sm:$0xff]
        %v2078 = vld [vmem:[%s2076 + $0x8] sm:$0xff]
        %v2079 = vld [vmem:[%s2076 + $0x10] sm:$0xff]
        %v2080 = vld [vmem:[%s2076 + $0x18] sm:$0xff]
        %v2081 = vld [vmem:[%s2076 + $0x20] sm:$0xff]
        %v2082 = vld [vmem:[%s2076 + $0x28] sm:$0xff]
        %v2083 = vld [vmem:[%s2076 + $0x30] sm:$0xff]
        %v2084 = vld [vmem:[%s2076 + $0x38] sm:$0xff]
        %v2085 = vld [vmem:[%s2076 + $0x40] sm:$0xff]
        %v2086 = vld [vmem:[%s2076 + $0x48] sm:$0xff]
        %v2087 = vld [vmem:[%s2076 + $0x50] sm:$0xff]
        %v2088 = vld [vmem:[%s2076 + $0x58] sm:$0xff]
        %v2089 = vld [vmem:[%s2076 + $0x60] sm:$0xff]
        %v2090 = vld [vmem:[%s2076 + $0x68] sm:$0xff]
        %v2091 = vld [vmem:[%s2076 + $0x70] sm:$0xff]
        %v2092 = vld [vmem:[%s2076 + $0x78] sm:$0xff]
        %v2093 = vld [vmem:[%s2076 + $0x80] sm:$0xff]
        %v2094 = vld [vmem:[%s2076 + $0x88] sm:$0xff]
        %v2095 = vld [vmem:[%s2076 + $0x90] sm:$0xff]
        %v2096 = vld [vmem:[%s2076 + $0x98] sm:$0xff]
        %v2097 = vld [vmem:[%s2076 + $0xa0] sm:$0xff]
        %v2098 = vld [vmem:[%s2076 + $0xa8] sm:$0xff]
        %v2099 = vld [vmem:[%s2076 + $0xb0] sm:$0xff]
        %v2100 = vld [vmem:[%s2076 + $0xb8] sm:$0xff]
        %v2101 = vld [vmem:[%s2076 + $0xc0] sm:$0xff]
        %v2102 = vld [vmem:[%s2076 + $0xc8] sm:$0xff]
        %v2103 = vld [vmem:[%s2076 + $0xd0] sm:$0xff]
        %v2104 = vld [vmem:[%s2076 + $0xd8] sm:$0xff]
        %v2105 = vld [vmem:[%s2076 + $0xe0] sm:$0xff]
        %v2106 = vld [vmem:[%s2076 + $0xe8] sm:$0xff]
        %v2107 = vld [vmem:[%s2076 + $0xf0] sm:$0xff]
        %v2108 = vld [vmem:[%s2076 + $0xf8] sm:$0xff]
        %v2109 = vld [vmem:[%s2076 + $0x100] sm:$0xff]
        %v2110 = vld [vmem:[%s2076 + $0x108] sm:$0xff]
        %v2111 = vld [vmem:[%s2076 + $0x110] sm:$0xff]
        %v2112 = vld [vmem:[%s2076 + $0x118] sm:$0xff]
        %v2113 = vld [vmem:[%s2076 + $0x120] sm:$0xff]
        %v2114 = vld [vmem:[%s2076 + $0x128] sm:$0xff]
        %v2115 = vld [vmem:[%s2076 + $0x130] sm:$0xff]
        %v2116 = vld [vmem:[%s2076 + $0x138] sm:$0xff]
        %v2117 = vld [vmem:[%s2076 + $0x140] sm:$0xff]
        %v2118 = vld [vmem:[%s2076 + $0x148] sm:$0xff]
        %v2119 = vld [vmem:[%s2076 + $0x150] sm:$0xff]
        %v2120 = vld [vmem:[%s2076 + $0x158] sm:$0xff]
        %v2121 = vld [vmem:[%s2076 + $0x160] sm:$0xff]
        %v2122 = vld [vmem:[%s2076 + $0x168] sm:$0xff]
        %v2123 = vld [vmem:[%s2076 + $0x170] sm:$0xff]
        %v2124 = vld [vmem:[%s2076 + $0x178] sm:$0xff]
        %v2125 = vld [vmem:[%s2076 + $0x180] sm:$0xff]
        %v2126 = vld [vmem:[%s2076 + $0x188] sm:$0xff]
        %v2127 = vld [vmem:[%s2076 + $0x190] sm:$0xff]
        %v2128 = vld [vmem:[%s2076 + $0x198] sm:$0xff]
        %v2129 = vld [vmem:[%s2076 + $0x1a0] sm:$0xff]
        %v2130 = vld [vmem:[%s2076 + $0x1a8] sm:$0xff]
        %v2131 = vld [vmem:[%s2076 + $0x1b0] sm:$0xff]
        %v2132 = vld [vmem:[%s2076 + $0x1b8] sm:$0xff]
        %v2133 = vld [vmem:[%s2076 + $0x1c0] sm:$0xff]
        %v2134 = vld [vmem:[%s2076 + $0x1c8] sm:$0xff]
        %v2135 = vld [vmem:[%s2076 + $0x1d0] sm:$0xff]
        %v2136 = vld [vmem:[%s2076 + $0x1d8] sm:$0xff]
        %v2137 = vld [vmem:[%s2076 + $0x1e0] sm:$0xff]
        %v2138 = vld [vmem:[%s2076 + $0x1e8] sm:$0xff]
        %v2139 = vld [vmem:[%s2076 + $0x1f0] sm:$0xff]
        %v2140 = vld [vmem:[%s2076 + $0x1f8] sm:$0xff]
        %2173 = vrot.lane.b32.xlu0 %v2044, 120
        %v2174 = vpop.permute.xlu0 %2173
        %2175 = vrot.lane.b32.xlu0 %v2045, 120
        %v2176 = vpop.permute.xlu0 %2175
        %2177 = vrot.lane.b32.xlu0 %v2046, 120
        %v2178 = vpop.permute.xlu0 %2177
        %2179 = vrot.lane.b32.xlu0 %v2047, 120
        %v2180 = vpop.permute.xlu0 %2179
        %2181 = vrot.lane.b32.xlu0 %v2048, 120
        %v2182 = vpop.permute.xlu0 %2181
        %2183 = vrot.lane.b32.xlu0 %v2049, 120
        %v2184 = vpop.permute.xlu0 %2183
        %2185 = vrot.lane.b32.xlu0 %v2050, 120
        %v2186 = vpop.permute.xlu0 %2185
        %2187 = vrot.lane.b32.xlu0 %v2051, 120
        %v2188 = vpop.permute.xlu0 %2187
        %2189 = vrot.lane.b32.xlu0 %v2052, 120
        %v2190 = vpop.permute.xlu0 %2189
        %2191 = vrot.lane.b32.xlu0 %v2053, 120
        %v2192 = vpop.permute.xlu0 %2191
        %2193 = vrot.lane.b32.xlu0 %v2054, 120
        %v2194 = vpop.permute.xlu0 %2193
        %2195 = vrot.lane.b32.xlu0 %v2055, 120
        %v2196 = vpop.permute.xlu0 %2195
        %2197 = vrot.lane.b32.xlu0 %v2056, 120
        %v2198 = vpop.permute.xlu0 %2197
        %2199 = vrot.lane.b32.xlu0 %v2057, 120
        %v2200 = vpop.permute.xlu0 %2199
        %2201 = vrot.lane.b32.xlu0 %v2058, 120
        %v2202 = vpop.permute.xlu0 %2201
        %2203 = vrot.lane.b32.xlu0 %v2059, 120
        %v2204 = vpop.permute.xlu0 %2203
        %2205 = vrot.lane.b32.xlu0 %v2060, 120
        %v2206 = vpop.permute.xlu0 %2205
        %2207 = vrot.lane.b32.xlu0 %v2061, 120
        %v2208 = vpop.permute.xlu0 %2207
        %2209 = vrot.lane.b32.xlu0 %v2062, 120
        %v2210 = vpop.permute.xlu0 %2209
        %2211 = vrot.lane.b32.xlu0 %v2063, 120
        %v2212 = vpop.permute.xlu0 %2211
        %2213 = vrot.lane.b32.xlu0 %v2064, 120
        %v2214 = vpop.permute.xlu0 %2213
        %2215 = vrot.lane.b32.xlu0 %v2065, 120
        %v2216 = vpop.permute.xlu0 %2215
        %2217 = vrot.lane.b32.xlu0 %v2066, 120
        %v2218 = vpop.permute.xlu0 %2217
        %2219 = vrot.lane.b32.xlu0 %v2067, 120
        %v2220 = vpop.permute.xlu0 %2219
        %2221 = vrot.lane.b32.xlu0 %v2068, 120
        %v2222 = vpop.permute.xlu0 %2221
        %2223 = vrot.lane.b32.xlu0 %v2069, 120
        %v2224 = vpop.permute.xlu0 %2223
        %2225 = vrot.lane.b32.xlu0 %v2070, 120
        %v2226 = vpop.permute.xlu0 %2225
        %2227 = vrot.lane.b32.xlu0 %v2071, 120
        %v2228 = vpop.permute.xlu0 %2227
        %2229 = vrot.lane.b32.xlu0 %v2072, 120
        %v2230 = vpop.permute.xlu0 %2229
        %2231 = vrot.lane.b32.xlu0 %v2073, 120
        %v2232 = vpop.permute.xlu0 %2231
        %2233 = vrot.lane.b32.xlu0 %v2074, 120
        %v2234 = vpop.permute.xlu0 %2233
        %2235 = vrot.lane.b32.xlu0 %v2075, 120
        %v2236 = vpop.permute.xlu0 %2235
        %2237 = vrot.lane.b32.xlu0 %v2044, 88
        %v2238 = vpop.permute.xlu0 %2237
        %2239 = vrot.lane.b32.xlu0 %v2045, 88
        %v2240 = vpop.permute.xlu0 %2239
        %2241 = vrot.lane.b32.xlu0 %v2046, 88
        %v2242 = vpop.permute.xlu0 %2241
        %2243 = vrot.lane.b32.xlu0 %v2047, 88
        %v2244 = vpop.permute.xlu0 %2243
        %2245 = vrot.lane.b32.xlu0 %v2048, 88
        %v2246 = vpop.permute.xlu0 %2245
        %2247 = vrot.lane.b32.xlu0 %v2049, 88
        %v2248 = vpop.permute.xlu0 %2247
        %2249 = vrot.lane.b32.xlu0 %v2050, 88
        %v2250 = vpop.permute.xlu0 %2249
        %2251 = vrot.lane.b32.xlu0 %v2051, 88
        %v2252 = vpop.permute.xlu0 %2251
        %2253 = vrot.lane.b32.xlu0 %v2052, 88
        %v2254 = vpop.permute.xlu0 %2253
        %2255 = vrot.lane.b32.xlu0 %v2053, 88
        %v2256 = vpop.permute.xlu0 %2255
        %2257 = vrot.lane.b32.xlu0 %v2054, 88
        %v2258 = vpop.permute.xlu0 %2257
        %2259 = vrot.lane.b32.xlu0 %v2055, 88
        %v2260 = vpop.permute.xlu0 %2259
        %2261 = vrot.lane.b32.xlu0 %v2056, 88
        %v2262 = vpop.permute.xlu0 %2261
        %2263 = vrot.lane.b32.xlu0 %v2057, 88
        %v2264 = vpop.permute.xlu0 %2263
        %2265 = vrot.lane.b32.xlu0 %v2058, 88
        %v2266 = vpop.permute.xlu0 %2265
        %2267 = vrot.lane.b32.xlu0 %v2059, 88
        %v2268 = vpop.permute.xlu0 %2267
        %2269 = vrot.lane.b32.xlu0 %v2060, 88
        %v2270 = vpop.permute.xlu0 %2269
        %2271 = vrot.lane.b32.xlu0 %v2061, 88
        %v2272 = vpop.permute.xlu0 %2271
        %2273 = vrot.lane.b32.xlu0 %v2062, 88
        %v2274 = vpop.permute.xlu0 %2273
        %2275 = vrot.lane.b32.xlu0 %v2063, 88
        %v2276 = vpop.permute.xlu0 %2275
        %2277 = vrot.lane.b32.xlu0 %v2064, 88
        %v2278 = vpop.permute.xlu0 %2277
        %2279 = vrot.lane.b32.xlu0 %v2065, 88
        %v2280 = vpop.permute.xlu0 %2279
        %2281 = vrot.lane.b32.xlu0 %v2066, 88
        %v2282 = vpop.permute.xlu0 %2281
        %2283 = vrot.lane.b32.xlu0 %v2067, 88
        %v2284 = vpop.permute.xlu0 %2283
        %2285 = vrot.lane.b32.xlu0 %v2068, 88
        %v2286 = vpop.permute.xlu0 %2285
        %2287 = vrot.lane.b32.xlu0 %v2069, 88
        %v2288 = vpop.permute.xlu0 %2287
        %2289 = vrot.lane.b32.xlu0 %v2070, 88
        %v2290 = vpop.permute.xlu0 %2289
        %2291 = vrot.lane.b32.xlu0 %v2071, 88
        %v2292 = vpop.permute.xlu0 %2291
        %2293 = vrot.lane.b32.xlu0 %v2072, 88
        %v2294 = vpop.permute.xlu0 %2293
        %2295 = vrot.lane.b32.xlu0 %v2073, 88
        %v2296 = vpop.permute.xlu0 %2295
        %2297 = vrot.lane.b32.xlu0 %v2074, 88
        %v2298 = vpop.permute.xlu0 %2297
        %2299 = vrot.lane.b32.xlu0 %v2075, 88
        %v2300 = vpop.permute.xlu0 %2299
        %v2301 = vsel %vm857, %v2174, 0
        %v2303 = vsel %vm857, %v2176, 0
        %v2305 = vsel %vm857, %v2178, 0
        %v2307 = vsel %vm857, %v2180, 0
        %v2309 = vsel %vm857, %v2182, 0
        %v2311 = vsel %vm857, %v2184, 0
        %v2313 = vsel %vm857, %v2186, 0
        %v2315 = vsel %vm857, %v2188, 0
        %v2317 = vsel %vm857, %v2190, 0
        %v2319 = vsel %vm857, %v2192, 0
        %v2321 = vsel %vm857, %v2194, 0
        %v2323 = vsel %vm857, %v2196, 0
        %v2325 = vsel %vm857, %v2198, 0
        %v2327 = vsel %vm857, %v2200, 0
        %v2329 = vsel %vm857, %v2202, 0
        %v2331 = vsel %vm857, %v2204, 0
        %v2333 = vsel %vm857, %v2206, 0
        %v2335 = vsel %vm857, %v2208, 0
        %v2337 = vsel %vm857, %v2210, 0
        %v2339 = vsel %vm857, %v2212, 0
        %v2341 = vsel %vm857, %v2214, 0
        %v2343 = vsel %vm857, %v2216, 0
        %v2345 = vsel %vm857, %v2218, 0
        %v2347 = vsel %vm857, %v2220, 0
        %v2349 = vsel %vm857, %v2222, 0
        %v2351 = vsel %vm857, %v2224, 0
        %v2353 = vsel %vm857, %v2226, 0
        %v2355 = vsel %vm857, %v2228, 0
        %v2357 = vsel %vm857, %v2230, 0
        %v2359 = vsel %vm857, %v2232, 0
        %v2361 = vsel %vm857, %v2234, 0
        %v2363 = vsel %vm857, %v2236, 0
        %v2365 = vsel %vm857, %v2238, 0
        %v2367 = vsel %vm857, %v2240, 0
        %v2369 = vsel %vm857, %v2242, 0
        %v2371 = vsel %vm857, %v2244, 0
        %v2373 = vsel %vm857, %v2246, 0
        %v2375 = vsel %vm857, %v2248, 0
        %v2377 = vsel %vm857, %v2250, 0
        %v2379 = vsel %vm857, %v2252, 0
        %v2381 = vsel %vm857, %v2254, 0
        %v2383 = vsel %vm857, %v2256, 0
        %v2385 = vsel %vm857, %v2258, 0
        %v2387 = vsel %vm857, %v2260, 0
        %v2389 = vsel %vm857, %v2262, 0
        %v2391 = vsel %vm857, %v2264, 0
        %v2393 = vsel %vm857, %v2266, 0
        %v2395 = vsel %vm857, %v2268, 0
        %v2397 = vsel %vm857, %v2270, 0
        %v2399 = vsel %vm857, %v2272, 0
        %v2401 = vsel %vm857, %v2274, 0
        %v2403 = vsel %vm857, %v2276, 0
        %v2405 = vsel %vm857, %v2278, 0
        %v2407 = vsel %vm857, %v2280, 0
        %v2409 = vsel %vm857, %v2282, 0
        %v2411 = vsel %vm857, %v2284, 0
        %v2413 = vsel %vm857, %v2286, 0
        %v2415 = vsel %vm857, %v2288, 0
        %v2417 = vsel %vm857, %v2290, 0
        %v2419 = vsel %vm857, %v2292, 0
        %v2421 = vsel %vm857, %v2294, 0
        %v2423 = vsel %vm857, %v2296, 0
        %v2425 = vsel %vm857, %v2298, 0
        %v2427 = vsel %vm857, %v2300, 0
        %2429 = vmatprep.subr.mxu0 0.0
        %2430 = vmatpush1.xpose.msra.mxu0 %v2365
        %2431 = vmatprep.subr.mxu0 0.0
        %2432 = vmatpush1.xpose.msra.mxu0 %v2367
        %2433 = vmatprep.subr.mxu0 0.0
        %2434 = vmatpush1.xpose.msra.mxu0 %v2369
        %2435 = vmatprep.subr.mxu0 0.0
        %2436 = vmatpush1.xpose.msra.mxu0 %v2371
        %2437 = vmatprep.subr.mxu0 0.0
        %2438 = vmatpush1.xpose.msra.mxu0 %v2373
        %2439 = vmatprep.subr.mxu0 0.0
        %2440 = vmatpush1.xpose.msra.mxu0 %v2375
        %2441 = vmatprep.subr.mxu0 0.0
        %2442 = vmatpush1.xpose.msra.mxu0 %v2377
        %2443 = vmatprep.subr.mxu0 0.0
        %2444 = vmatpush1.xpose.msra.mxu0 %v2379
        %2445 = vmatprep.subr.mxu0 0.0
        %2446 = vmatpush1.xpose.msra.mxu0 %v2381
        %2447 = vmatprep.subr.mxu0 0.0
        %2448 = vmatpush1.xpose.msra.mxu0 %v2383
        %2449 = vmatprep.subr.mxu0 0.0
        %2450 = vmatpush1.xpose.msra.mxu0 %v2385
        %2451 = vmatprep.subr.mxu0 0.0
        %2452 = vmatpush1.xpose.msra.mxu0 %v2387
        %2453 = vmatprep.subr.mxu0 0.0
        %2454 = vmatpush1.xpose.msra.mxu0 %v2389
        %2455 = vmatprep.subr.mxu0 0.0
        %2456 = vmatpush1.xpose.msra.mxu0 %v2391
        %2457 = vmatprep.subr.mxu0 0.0
        %2458 = vmatpush1.xpose.msra.mxu0 %v2393
        %2459 = vmatprep.subr.mxu0 0.0
        %2460 = vmatpush1.xpose.msra.mxu0 %v2395
        %2461 = vmatprep.subr.mxu0 0.0
        %2462 = vmatpush1.xpose.msra.mxu0 %v2397
        %2463 = vmatprep.subr.mxu0 0.0
        %2464 = vmatpush1.xpose.msra.mxu0 %v2399
        %2465 = vmatprep.subr.mxu0 0.0
        %2466 = vmatpush1.xpose.msra.mxu0 %v2401
        %2467 = vmatprep.subr.mxu0 0.0
        %2468 = vmatpush1.xpose.msra.mxu0 %v2403
        %2469 = vmatprep.subr.mxu0 0.0
        %2470 = vmatpush1.xpose.msra.mxu0 %v2405
        %2471 = vmatprep.subr.mxu0 0.0
        %2472 = vmatpush1.xpose.msra.mxu0 %v2407
        %2473 = vmatprep.subr.mxu0 0.0
        %2474 = vmatpush1.xpose.msra.mxu0 %v2409
        %2475 = vmatprep.subr.mxu0 0.0
        %2476 = vmatpush1.xpose.msra.mxu0 %v2411
        %2477 = vmatprep.subr.mxu0 0.0
        %2478 = vmatpush1.xpose.msra.mxu0 %v2413
        %2479 = vmatprep.subr.mxu0 0.0
        %2480 = vmatpush1.xpose.msra.mxu0 %v2415
        %2481 = vmatprep.subr.mxu0 0.0
        %2482 = vmatpush1.xpose.msra.mxu0 %v2417
        %2483 = vmatprep.subr.mxu0 0.0
        %2484 = vmatpush1.xpose.msra.mxu0 %v2419
        %2485 = vmatprep.subr.mxu0 0.0
        %2486 = vmatpush1.xpose.msra.mxu0 %v2421
        %2487 = vmatprep.subr.mxu0 0.0
        %2488 = vmatpush1.xpose.msra.mxu0 %v2423
        %2489 = vmatprep.subr.mxu0 0.0
        %2490 = vmatpush1.xpose.msra.mxu0 %v2425
        %2491 = vmatprep.subr.mxu0 0.0
        %2492 = vmatpush1.xpose.msra.mxu0 %v2427
        %2493 = vmatprep.mubr.f32.mxu0 0.0
        %2494 = vmatmul.mubr.f32.gmra.mrb[0].mxu0 %v2301
        %v2495 = vpop.f32.mrb[0].mxu0
        %v2496 = vadd.f32 %v2077, %v2495
        %v2497 = vpop.f32.mrb[0].mxu0
        %v2498 = vadd.f32 %v2078, %v2497
        %2499 = vmatprep.mubr.f32.mxu0 0.0
        %2500 = vmatmul.mubr.f32.gmra.mrb[0].mxu0 %v2303
        %v2501 = vpop.f32.mrb[0].mxu0
        %v2502 = vadd.f32 %v2079, %v2501
        %v2503 = vpop.f32.mrb[0].mxu0
        %v2504 = vadd.f32 %v2080, %v2503
        %2505 = vmatprep.mubr.f32.mxu0 0.0
        %2506 = vmatmul.mubr.f32.gmra.mrb[0].mxu0 %v2305
        %v2507 = vpop.f32.mrb[0].mxu0
        %v2508 = vadd.f32 %v2081, %v2507
        %v2509 = vpop.f32.mrb[0].mxu0
        %v2510 = vadd.f32 %v2082, %v2509
        %2511 = vmatprep.mubr.f32.mxu0 0.0
        %2512 = vmatmul.mubr.f32.gmra.mrb[0].mxu0 %v2307
        %v2513 = vpop.f32.mrb[0].mxu0
        %v2514 = vadd.f32 %v2083, %v2513
        %v2515 = vpop.f32.mrb[0].mxu0
        %v2516 = vadd.f32 %v2084, %v2515
        %2517 = vmatprep.mubr.f32.mxu0 0.0
        %2518 = vmatmul.mubr.f32.gmra.mrb[0].mxu0 %v2309
        %v2519 = vpop.f32.mrb[0].mxu0
        %v2520 = vadd.f32 %v2085, %v2519
        %v2521 = vpop.f32.mrb[0].mxu0
        %v2522 = vadd.f32 %v2086, %v2521
        %2523 = vmatprep.mubr.f32.mxu0 0.0
        %2524 = vmatmul.mubr.f32.gmra.mrb[0].mxu0 %v2311
        %v2525 = vpop.f32.mrb[0].mxu0
        %v2526 = vadd.f32 %v2087, %v2525
        %v2527 = vpop.f32.mrb[0].mxu0
        %v2528 = vadd.f32 %v2088, %v2527
        %2529 = vmatprep.mubr.f32.mxu0 0.0
        %2530 = vmatmul.mubr.f32.gmra.mrb[0].mxu0 %v2313
        %v2531 = vpop.f32.mrb[0].mxu0
        %v2532 = vadd.f32 %v2089, %v2531
        %v2533 = vpop.f32.mrb[0].mxu0
        %v2534 = vadd.f32 %v2090, %v2533
        %2535 = vmatprep.mubr.f32.mxu0 0.0
        %2536 = vmatmul.mubr.f32.gmra.mrb[0].mxu0 %v2315
        %v2537 = vpop.f32.mrb[0].mxu0
        %v2538 = vadd.f32 %v2091, %v2537
        %v2539 = vpop.f32.mrb[0].mxu0
        %v2540 = vadd.f32 %v2092, %v2539
        %2541 = vmatprep.mubr.f32.mxu0 0.0
        %2542 = vmatmul.mubr.f32.gmra.mrb[0].mxu0 %v2317
        %v2543 = vpop.f32.mrb[0].mxu0
        %v2544 = vadd.f32 %v2093, %v2543
        %v2545 = vpop.f32.mrb[0].mxu0
        %v2546 = vadd.f32 %v2094, %v2545
        %2547 = vmatprep.mubr.f32.mxu0 0.0
        %2548 = vmatmul.mubr.f32.gmra.mrb[0].mxu0 %v2319
        %v2549 = vpop.f32.mrb[0].mxu0
        %v2550 = vadd.f32 %v2095, %v2549
        %v2551 = vpop.f32.mrb[0].mxu0
        %v2552 = vadd.f32 %v2096, %v2551
        %2553 = vmatprep.mubr.f32.mxu0 0.0
        %2554 = vmatmul.mubr.f32.gmra.mrb[0].mxu0 %v2321
        %v2555 = vpop.f32.mrb[0].mxu0
        %v2556 = vadd.f32 %v2097, %v2555
        %v2557 = vpop.f32.mrb[0].mxu0
        %v2558 = vadd.f32 %v2098, %v2557
        %2559 = vmatprep.mubr.f32.mxu0 0.0
        %2560 = vmatmul.mubr.f32.gmra.mrb[0].mxu0 %v2323
        %v2561 = vpop.f32.mrb[0].mxu0
        %v2562 = vadd.f32 %v2099, %v2561
        %v2563 = vpop.f32.mrb[0].mxu0
        %v2564 = vadd.f32 %v2100, %v2563
        %2565 = vmatprep.mubr.f32.mxu0 0.0
        %2566 = vmatmul.mubr.f32.gmra.mrb[0].mxu0 %v2325
        %v2567 = vpop.f32.mrb[0].mxu0
        %v2568 = vadd.f32 %v2101, %v2567
        %v2569 = vpop.f32.mrb[0].mxu0
        %v2570 = vadd.f32 %v2102, %v2569
        %2571 = vmatprep.mubr.f32.mxu0 0.0
        %2572 = vmatmul.mubr.f32.gmra.mrb[0].mxu0 %v2327
        %v2573 = vpop.f32.mrb[0].mxu0
        %v2574 = vadd.f32 %v2103, %v2573
        %v2575 = vpop.f32.mrb[0].mxu0
        %v2576 = vadd.f32 %v2104, %v2575
        %2577 = vmatprep.mubr.f32.mxu0 0.0
        %2578 = vmatmul.mubr.f32.gmra.mrb[0].mxu0 %v2329
        %v2579 = vpop.f32.mrb[0].mxu0
        %v2580 = vadd.f32 %v2105, %v2579
        %v2581 = vpop.f32.mrb[0].mxu0
        %v2582 = vadd.f32 %v2106, %v2581
        %2583 = vmatprep.mubr.f32.mxu0 0.0
        %2584 = vmatmul.mubr.f32.gmra.mrb[0].mxu0 %v2331
        %v2585 = vpop.f32.mrb[0].mxu0
        %v2586 = vadd.f32 %v2107, %v2585
        %v2587 = vpop.f32.mrb[0].mxu0
        %v2588 = vadd.f32 %v2108, %v2587
        %2589 = vmatprep.mubr.f32.mxu0 0.0
        %2590 = vmatmul.mubr.f32.gmra.mrb[0].mxu0 %v2333
        %v2591 = vpop.f32.mrb[0].mxu0
        %v2592 = vadd.f32 %v2109, %v2591
        %v2593 = vpop.f32.mrb[0].mxu0
        %v2594 = vadd.f32 %v2110, %v2593
        %2595 = vmatprep.mubr.f32.mxu0 0.0
        %2596 = vmatmul.mubr.f32.gmra.mrb[0].mxu0 %v2335
        %v2597 = vpop.f32.mrb[0].mxu0
        %v2598 = vadd.f32 %v2111, %v2597
        %v2599 = vpop.f32.mrb[0].mxu0
        %v2600 = vadd.f32 %v2112, %v2599
        %2601 = vmatprep.mubr.f32.mxu0 0.0
        %2602 = vmatmul.mubr.f32.gmra.mrb[0].mxu0 %v2337
        %v2603 = vpop.f32.mrb[0].mxu0
        %v2604 = vadd.f32 %v2113, %v2603
        %v2605 = vpop.f32.mrb[0].mxu0
        %v2606 = vadd.f32 %v2114, %v2605
        %2607 = vmatprep.mubr.f32.mxu0 0.0
        %2608 = vmatmul.mubr.f32.gmra.mrb[0].mxu0 %v2339
        %v2609 = vpop.f32.mrb[0].mxu0
        %v2610 = vadd.f32 %v2115, %v2609
        %v2611 = vpop.f32.mrb[0].mxu0
        %v2612 = vadd.f32 %v2116, %v2611
        %2613 = vmatprep.mubr.f32.mxu0 0.0
        %2614 = vmatmul.mubr.f32.gmra.mrb[0].mxu0 %v2341
        %v2615 = vpop.f32.mrb[0].mxu0
        %v2616 = vadd.f32 %v2117, %v2615
        %v2617 = vpop.f32.mrb[0].mxu0
        %v2618 = vadd.f32 %v2118, %v2617
        %2619 = vmatprep.mubr.f32.mxu0 0.0
        %2620 = vmatmul.mubr.f32.gmra.mrb[0].mxu0 %v2343
        %v2621 = vpop.f32.mrb[0].mxu0
        %v2622 = vadd.f32 %v2119, %v2621
        %v2623 = vpop.f32.mrb[0].mxu0
        %v2624 = vadd.f32 %v2120, %v2623
        %2625 = vmatprep.mubr.f32.mxu0 0.0
        %2626 = vmatmul.mubr.f32.gmra.mrb[0].mxu0 %v2345
        %v2627 = vpop.f32.mrb[0].mxu0
        %v2628 = vadd.f32 %v2121, %v2627
        %v2629 = vpop.f32.mrb[0].mxu0
        %v2630 = vadd.f32 %v2122, %v2629
        %2631 = vmatprep.mubr.f32.mxu0 0.0
        %2632 = vmatmul.mubr.f32.gmra.mrb[0].mxu0 %v2347
        %v2633 = vpop.f32.mrb[0].mxu0
        %v2634 = vadd.f32 %v2123, %v2633
        %v2635 = vpop.f32.mrb[0].mxu0
        %v2636 = vadd.f32 %v2124, %v2635
        %2637 = vmatprep.mubr.f32.mxu0 0.0
        %2638 = vmatmul.mubr.f32.gmra.mrb[0].mxu0 %v2349
        %v2639 = vpop.f32.mrb[0].mxu0
        %v2640 = vadd.f32 %v2125, %v2639
        %v2641 = vpop.f32.mrb[0].mxu0
        %v2642 = vadd.f32 %v2126, %v2641
        %2643 = vmatprep.mubr.f32.mxu0 0.0
        %2644 = vmatmul.mubr.f32.gmra.mrb[0].mxu0 %v2351
        %v2645 = vpop.f32.mrb[0].mxu0
        %v2646 = vadd.f32 %v2127, %v2645
        %v2647 = vpop.f32.mrb[0].mxu0
        %v2648 = vadd.f32 %v2128, %v2647
        %2649 = vmatprep.mubr.f32.mxu0 0.0
        %2650 = vmatmul.mubr.f32.gmra.mrb[0].mxu0 %v2353
        %v2651 = vpop.f32.mrb[0].mxu0
        %v2652 = vadd.f32 %v2129, %v2651
        %v2653 = vpop.f32.mrb[0].mxu0
        %v2654 = vadd.f32 %v2130, %v2653
        %2655 = vmatprep.mubr.f32.mxu0 0.0
        %2656 = vmatmul.mubr.f32.gmra.mrb[0].mxu0 %v2355
        %v2657 = vpop.f32.mrb[0].mxu0
        %v2658 = vadd.f32 %v2131, %v2657
        %v2659 = vpop.f32.mrb[0].mxu0
        %v2660 = vadd.f32 %v2132, %v2659
        %2661 = vmatprep.mubr.f32.mxu0 0.0
        %2662 = vmatmul.mubr.f32.gmra.mrb[0].mxu0 %v2357
        %v2663 = vpop.f32.mrb[0].mxu0
        %v2664 = vadd.f32 %v2133, %v2663
        %v2665 = vpop.f32.mrb[0].mxu0
        %v2666 = vadd.f32 %v2134, %v2665
        %2667 = vmatprep.mubr.f32.mxu0 0.0
        %2668 = vmatmul.mubr.f32.gmra.mrb[0].mxu0 %v2359
        %v2669 = vpop.f32.mrb[0].mxu0
        %v2670 = vadd.f32 %v2135, %v2669
        %v2671 = vpop.f32.mrb[0].mxu0
        %v2672 = vadd.f32 %v2136, %v2671
        %2673 = vmatprep.mubr.f32.mxu0 0.0
        %2674 = vmatmul.mubr.f32.gmra.mrb[0].mxu0 %v2361
        %v2675 = vpop.f32.mrb[0].mxu0
        %v2676 = vadd.f32 %v2137, %v2675
        %v2677 = vpop.f32.mrb[0].mxu0
        %v2678 = vadd.f32 %v2138, %v2677
        %2679 = vmatprep.mubr.f32.mxu0 0.0
        %2680 = vmatmul.mubr.f32.gmra.mrb[0].mxu0 %v2363
        %v2681 = vpop.f32.mrb[0].mxu0
        %v2682 = vadd.f32 %v2139, %v2681
        %v2683 = vpop.f32.mrb[0].mxu0
        %v2684 = vadd.f32 %v2140, %v2683
        %2685 = vdwg.mxu0
        %v2686 = vmax.f32 %v2496, %v2498
        %2687 = vmax.xlane.f32.xlu0 %v2686
        %v2688 = vpop.xlane.xlu0 %2687
        %v2689 = vmax.f32 %v2502, %v2504
        %2690 = vmax.xlane.f32.xlu0 %v2689
        %v2691 = vpop.xlane.xlu0 %2690
        %v2692 = vmax.f32 %v2508, %v2510
        %2693 = vmax.xlane.f32.xlu0 %v2692
        %v2694 = vpop.xlane.xlu0 %2693
        %v2695 = vmax.f32 %v2514, %v2516
        %2696 = vmax.xlane.f32.xlu0 %v2695
        %v2697 = vpop.xlane.xlu0 %2696
        %v2698 = vmax.f32 %v2520, %v2522
        %2699 = vmax.xlane.f32.xlu0 %v2698
        %v2700 = vpop.xlane.xlu0 %2699
        %v2701 = vmax.f32 %v2526, %v2528
        %2702 = vmax.xlane.f32.xlu0 %v2701
        %v2703 = vpop.xlane.xlu0 %2702
        %v2704 = vmax.f32 %v2532, %v2534
        %2705 = vmax.xlane.f32.xlu0 %v2704
        %v2706 = vpop.xlane.xlu0 %2705
        %v2707 = vmax.f32 %v2538, %v2540
        %2708 = vmax.xlane.f32.xlu0 %v2707
        %v2709 = vpop.xlane.xlu0 %2708
        %v2710 = vmax.f32 %v2544, %v2546
        %2711 = vmax.xlane.f32.xlu0 %v2710
        %v2712 = vpop.xlane.xlu0 %2711
        %v2713 = vmax.f32 %v2550, %v2552
        %2714 = vmax.xlane.f32.xlu0 %v2713
        %v2715 = vpop.xlane.xlu0 %2714
        %v2716 = vmax.f32 %v2556, %v2558
        %2717 = vmax.xlane.f32.xlu0 %v2716
        %v2718 = vpop.xlane.xlu0 %2717
        %v2719 = vmax.f32 %v2562, %v2564
        %2720 = vmax.xlane.f32.xlu0 %v2719
        %v2721 = vpop.xlane.xlu0 %2720
        %v2722 = vmax.f32 %v2568, %v2570
        %2723 = vmax.xlane.f32.xlu0 %v2722
        %v2724 = vpop.xlane.xlu0 %2723
        %v2725 = vmax.f32 %v2574, %v2576
        %2726 = vmax.xlane.f32.xlu0 %v2725
        %v2727 = vpop.xlane.xlu0 %2726
        %v2728 = vmax.f32 %v2580, %v2582
        %2729 = vmax.xlane.f32.xlu0 %v2728
        %v2730 = vpop.xlane.xlu0 %2729
        %v2731 = vmax.f32 %v2586, %v2588
        %2732 = vmax.xlane.f32.xlu0 %v2731
        %v2733 = vpop.xlane.xlu0 %2732
        %v2734 = vmax.f32 %v2592, %v2594
        %2735 = vmax.xlane.f32.xlu0 %v2734
        %v2736 = vpop.xlane.xlu0 %2735
        %v2737 = vmax.f32 %v2598, %v2600
        %2738 = vmax.xlane.f32.xlu0 %v2737
        %v2739 = vpop.xlane.xlu0 %2738
        %v2740 = vmax.f32 %v2604, %v2606
        %2741 = vmax.xlane.f32.xlu0 %v2740
        %v2742 = vpop.xlane.xlu0 %2741
        %v2743 = vmax.f32 %v2610, %v2612
        %2744 = vmax.xlane.f32.xlu0 %v2743
        %v2745 = vpop.xlane.xlu0 %2744
        %v2746 = vmax.f32 %v2616, %v2618
        %2747 = vmax.xlane.f32.xlu0 %v2746
        %v2748 = vpop.xlane.xlu0 %2747
        %v2749 = vmax.f32 %v2622, %v2624
        %2750 = vmax.xlane.f32.xlu0 %v2749
        %v2751 = vpop.xlane.xlu0 %2750
        %v2752 = vmax.f32 %v2628, %v2630
        %2753 = vmax.xlane.f32.xlu0 %v2752
        %v2754 = vpop.xlane.xlu0 %2753
        %v2755 = vmax.f32 %v2634, %v2636
        %2756 = vmax.xlane.f32.xlu0 %v2755
        %v2757 = vpop.xlane.xlu0 %2756
        %v2758 = vmax.f32 %v2640, %v2642
        %2759 = vmax.xlane.f32.xlu0 %v2758
        %v2760 = vpop.xlane.xlu0 %2759
        %v2761 = vmax.f32 %v2646, %v2648
        %2762 = vmax.xlane.f32.xlu0 %v2761
        %v2763 = vpop.xlane.xlu0 %2762
        %v2764 = vmax.f32 %v2652, %v2654
        %2765 = vmax.xlane.f32.xlu0 %v2764
        %v2766 = vpop.xlane.xlu0 %2765
        %v2767 = vmax.f32 %v2658, %v2660
        %2768 = vmax.xlane.f32.xlu0 %v2767
        %v2769 = vpop.xlane.xlu0 %2768
        %v2770 = vmax.f32 %v2664, %v2666
        %2771 = vmax.xlane.f32.xlu0 %v2770
        %v2772 = vpop.xlane.xlu0 %2771
        %v2773 = vmax.f32 %v2670, %v2672
        %2774 = vmax.xlane.f32.xlu0 %v2773
        %v2775 = vpop.xlane.xlu0 %2774
        %v2776 = vmax.f32 %v2676, %v2678
        %2777 = vmax.xlane.f32.xlu0 %v2776
        %v2778 = vpop.xlane.xlu0 %2777
        %v2779 = vmax.f32 %v2682, %v2684
        %2780 = vmax.xlane.f32.xlu0 %v2779
        %v2781 = vpop.xlane.xlu0 %2780
        %v2782 = vsub.f32 %v2496, %v2688
        %v2783 = vsub.f32 %v2498, %v2688
        %v2784 = vsub.f32 %v2502, %v2691
        %v2785 = vsub.f32 %v2504, %v2691
        %v2786 = vsub.f32 %v2508, %v2694
        %v2787 = vsub.f32 %v2510, %v2694
        %v2788 = vsub.f32 %v2514, %v2697
        %v2789 = vsub.f32 %v2516, %v2697
        %v2790 = vsub.f32 %v2520, %v2700
        %v2791 = vsub.f32 %v2522, %v2700
        %v2792 = vsub.f32 %v2526, %v2703
        %v2793 = vsub.f32 %v2528, %v2703
        %v2794 = vsub.f32 %v2532, %v2706
        %v2795 = vsub.f32 %v2534, %v2706
        %v2796 = vsub.f32 %v2538, %v2709
        %v2797 = vsub.f32 %v2540, %v2709
        %v2798 = vsub.f32 %v2544, %v2712
        %v2799 = vsub.f32 %v2546, %v2712
        %v2800 = vsub.f32 %v2550, %v2715
        %v2801 = vsub.f32 %v2552, %v2715
        %v2802 = vsub.f32 %v2556, %v2718
        %v2803 = vsub.f32 %v2558, %v2718
        %v2804 = vsub.f32 %v2562, %v2721
        %v2805 = vsub.f32 %v2564, %v2721
        %v2806 = vsub.f32 %v2568, %v2724
        %v2807 = vsub.f32 %v2570, %v2724
        %v2808 = vsub.f32 %v2574, %v2727
        %v2809 = vsub.f32 %v2576, %v2727
        %v2810 = vsub.f32 %v2580, %v2730
        %v2811 = vsub.f32 %v2582, %v2730
        %v2812 = vsub.f32 %v2586, %v2733
        %v2813 = vsub.f32 %v2588, %v2733
        %v2814 = vsub.f32 %v2592, %v2736
        %v2815 = vsub.f32 %v2594, %v2736
        %v2816 = vsub.f32 %v2598, %v2739
        %v2817 = vsub.f32 %v2600, %v2739
        %v2818 = vsub.f32 %v2604, %v2742
        %v2819 = vsub.f32 %v2606, %v2742
        %v2820 = vsub.f32 %v2610, %v2745
        %v2821 = vsub.f32 %v2612, %v2745
        %v2822 = vsub.f32 %v2616, %v2748
        %v2823 = vsub.f32 %v2618, %v2748
        %v2824 = vsub.f32 %v2622, %v2751
        %v2825 = vsub.f32 %v2624, %v2751
        %v2826 = vsub.f32 %v2628, %v2754
        %v2827 = vsub.f32 %v2630, %v2754
        %v2828 = vsub.f32 %v2634, %v2757
        %v2829 = vsub.f32 %v2636, %v2757
        %v2830 = vsub.f32 %v2640, %v2760
        %v2831 = vsub.f32 %v2642, %v2760
        %v2832 = vsub.f32 %v2646, %v2763
        %v2833 = vsub.f32 %v2648, %v2763
        %v2834 = vsub.f32 %v2652, %v2766
        %v2835 = vsub.f32 %v2654, %v2766
        %v2836 = vsub.f32 %v2658, %v2769
        %v2837 = vsub.f32 %v2660, %v2769
        %v2838 = vsub.f32 %v2664, %v2772
        %v2839 = vsub.f32 %v2666, %v2772
        %v2840 = vsub.f32 %v2670, %v2775
        %v2841 = vsub.f32 %v2672, %v2775
        %v2842 = vsub.f32 %v2676, %v2778
        %v2843 = vsub.f32 %v2678, %v2778
        %v2844 = vsub.f32 %v2682, %v2781
        %v2845 = vsub.f32 %v2684, %v2781
        %v2846 = vmul.f32 %v2782, 1.442695
        %v2847 = vpow.pop %v2846
        %v2848 = vmul.f32 %v2783, 1.442695
        %v2849 = vpow.pop %v2848
        %v2850 = vmul.f32 %v2784, 1.442695
        %v2851 = vpow.pop %v2850
        %v2852 = vmul.f32 %v2785, 1.442695
        %v2853 = vpow.pop %v2852
        %v2854 = vmul.f32 %v2786, 1.442695
        %v2855 = vpow.pop %v2854
        %v2856 = vmul.f32 %v2787, 1.442695
        %v2857 = vpow.pop %v2856
        %v2858 = vmul.f32 %v2788, 1.442695
        %v2859 = vpow.pop %v2858
        %v2860 = vmul.f32 %v2789, 1.442695
        %v2861 = vpow.pop %v2860
        %v2862 = vmul.f32 %v2790, 1.442695
        %v2863 = vpow.pop %v2862
        %v2864 = vmul.f32 %v2791, 1.442695
        %v2865 = vpow.pop %v2864
        %v2866 = vmul.f32 %v2792, 1.442695
        %v2867 = vpow.pop %v2866
        %v2868 = vmul.f32 %v2793, 1.442695
        %v2869 = vpow.pop %v2868
        %v2870 = vmul.f32 %v2794, 1.442695
        %v2871 = vpow.pop %v2870
        %v2872 = vmul.f32 %v2795, 1.442695
        %v2873 = vpow.pop %v2872
        %v2874 = vmul.f32 %v2796, 1.442695
        %v2875 = vpow.pop %v2874
        %v2876 = vmul.f32 %v2797, 1.442695
        %v2877 = vpow.pop %v2876
        %v2878 = vmul.f32 %v2798, 1.442695
        %v2879 = vpow.pop %v2878
        %v2880 = vmul.f32 %v2799, 1.442695
        %v2881 = vpow.pop %v2880
        %v2882 = vmul.f32 %v2800, 1.442695
        %v2883 = vpow.pop %v2882
        %v2884 = vmul.f32 %v2801, 1.442695
        %v2885 = vpow.pop %v2884
        %v2886 = vmul.f32 %v2802, 1.442695
        %v2887 = vpow.pop %v2886
        %v2888 = vmul.f32 %v2803, 1.442695
        %v2889 = vpow.pop %v2888
        %v2890 = vmul.f32 %v2804, 1.442695
        %v2891 = vpow.pop %v2890
        %v2892 = vmul.f32 %v2805, 1.442695
        %v2893 = vpow.pop %v2892
        %v2894 = vmul.f32 %v2806, 1.442695
        %v2895 = vpow.pop %v2894
        %v2896 = vmul.f32 %v2807, 1.442695
        %v2897 = vpow.pop %v2896
        %v2898 = vmul.f32 %v2808, 1.442695
        %v2899 = vpow.pop %v2898
        %v2900 = vmul.f32 %v2809, 1.442695
        %v2901 = vpow.pop %v2900
        %v2902 = vmul.f32 %v2810, 1.442695
        %v2903 = vpow.pop %v2902
        %v2904 = vmul.f32 %v2811, 1.442695
        %v2905 = vpow.pop %v2904
        %v2906 = vmul.f32 %v2812, 1.442695
        %v2907 = vpow.pop %v2906
        %v2908 = vmul.f32 %v2813, 1.442695
        %v2909 = vpow.pop %v2908
        %v2910 = vmul.f32 %v2814, 1.442695
        %v2911 = vpow.pop %v2910
        %v2912 = vmul.f32 %v2815, 1.442695
        %v2913 = vpow.pop %v2912
        %v2914 = vmul.f32 %v2816, 1.442695
        %v2915 = vpow.pop %v2914
        %v2916 = vmul.f32 %v2817, 1.442695
        %v2917 = vpow.pop %v2916
        %v2918 = vmul.f32 %v2818, 1.442695
        %v2919 = vpow.pop %v2918
        %v2920 = vmul.f32 %v2819, 1.442695
        %v2921 = vpow.pop %v2920
        %v2922 = vmul.f32 %v2820, 1.442695
        %v2923 = vpow.pop %v2922
        %v2924 = vmul.f32 %v2821, 1.442695
        %v2925 = vpow.pop %v2924
        %v2926 = vmul.f32 %v2822, 1.442695
        %v2927 = vpow.pop %v2926
        %v2928 = vmul.f32 %v2823, 1.442695
        %v2929 = vpow.pop %v2928
        %v2930 = vmul.f32 %v2824, 1.442695
        %v2931 = vpow.pop %v2930
        %v2932 = vmul.f32 %v2825, 1.442695
        %v2933 = vpow.pop %v2932
        %v2934 = vmul.f32 %v2826, 1.442695
        %v2935 = vpow.pop %v2934
        %v2936 = vmul.f32 %v2827, 1.442695
        %v2937 = vpow.pop %v2936
        %v2938 = vmul.f32 %v2828, 1.442695
        %v2939 = vpow.pop %v2938
        %v2940 = vmul.f32 %v2829, 1.442695
        %v2941 = vpow.pop %v2940
        %v2942 = vmul.f32 %v2830, 1.442695
        %v2943 = vpow.pop %v2942
        %v2944 = vmul.f32 %v2831, 1.442695
        %v2945 = vpow.pop %v2944
        %v2946 = vmul.f32 %v2832, 1.442695
        %v2947 = vpow.pop %v2946
        %v2948 = vmul.f32 %v2833, 1.442695
        %v2949 = vpow.pop %v2948
        %v2950 = vmul.f32 %v2834, 1.442695
        %v2951 = vpow.pop %v2950
        %v2952 = vmul.f32 %v2835, 1.442695
        %v2953 = vpow.pop %v2952
        %v2954 = vmul.f32 %v2836, 1.442695
        %v2955 = vpow.pop %v2954
        %v2956 = vmul.f32 %v2837, 1.442695
        %v2957 = vpow.pop %v2956
        %v2958 = vmul.f32 %v2838, 1.442695
        %v2959 = vpow.pop %v2958
        %v2960 = vmul.f32 %v2839, 1.442695
        %v2961 = vpow.pop %v2960
        %v2962 = vmul.f32 %v2840, 1.442695
        %v2963 = vpow.pop %v2962
        %v2964 = vmul.f32 %v2841, 1.442695
        %v2965 = vpow.pop %v2964
        %v2966 = vmul.f32 %v2842, 1.442695
        %v2967 = vpow.pop %v2966
        %v2968 = vmul.f32 %v2843, 1.442695
        %v2969 = vpow.pop %v2968
        %v2970 = vmul.f32 %v2844, 1.442695
        %v2971 = vpow.pop %v2970
        %v2972 = vmul.f32 %v2845, 1.442695
        %v2973 = vpow.pop %v2972
        %v2974 = vadd.f32 %v2847, %v2849
        %2975 = vadd.xlane.f32.xlu0 %v2974
        %v2976 = vpop.xlane.xlu0 %2975
        %v2977 = vadd.f32 %v2851, %v2853
        %2978 = vadd.xlane.f32.xlu0 %v2977
        %v2979 = vpop.xlane.xlu0 %2978
        %v2980 = vadd.f32 %v2855, %v2857
        %2981 = vadd.xlane.f32.xlu0 %v2980
        %v2982 = vpop.xlane.xlu0 %2981
        %v2983 = vadd.f32 %v2859, %v2861
        %2984 = vadd.xlane.f32.xlu0 %v2983
        %v2985 = vpop.xlane.xlu0 %2984
        %v2986 = vadd.f32 %v2863, %v2865
        %2987 = vadd.xlane.f32.xlu0 %v2986
        %v2988 = vpop.xlane.xlu0 %2987
        %v2989 = vadd.f32 %v2867, %v2869
        %2990 = vadd.xlane.f32.xlu0 %v2989
        %v2991 = vpop.xlane.xlu0 %2990
        %v2992 = vadd.f32 %v2871, %v2873
        %2993 = vadd.xlane.f32.xlu0 %v2992
        %v2994 = vpop.xlane.xlu0 %2993
        %v2995 = vadd.f32 %v2875, %v2877
        %2996 = vadd.xlane.f32.xlu0 %v2995
        %v2997 = vpop.xlane.xlu0 %2996
        %v2998 = vadd.f32 %v2879, %v2881
        %2999 = vadd.xlane.f32.xlu0 %v2998
        %v3000 = vpop.xlane.xlu0 %2999
        %v3001 = vadd.f32 %v2883, %v2885
        %3002 = vadd.xlane.f32.xlu0 %v3001
        %v3003 = vpop.xlane.xlu0 %3002
        %v3004 = vadd.f32 %v2887, %v2889
        %3005 = vadd.xlane.f32.xlu0 %v3004
        %v3006 = vpop.xlane.xlu0 %3005
        %v3007 = vadd.f32 %v2891, %v2893
        %3008 = vadd.xlane.f32.xlu0 %v3007
        %v3009 = vpop.xlane.xlu0 %3008
        %v3010 = vadd.f32 %v2895, %v2897
        %3011 = vadd.xlane.f32.xlu0 %v3010
        %v3012 = vpop.xlane.xlu0 %3011
        %v3013 = vadd.f32 %v2899, %v2901
        %3014 = vadd.xlane.f32.xlu0 %v3013
        %v3015 = vpop.xlane.xlu0 %3014
        %v3016 = vadd.f32 %v2903, %v2905
        %3017 = vadd.xlane.f32.xlu0 %v3016
        %v3018 = vpop.xlane.xlu0 %3017
        %v3019 = vadd.f32 %v2907, %v2909
        %3020 = vadd.xlane.f32.xlu0 %v3019
        %v3021 = vpop.xlane.xlu0 %3020
        %v3022 = vadd.f32 %v2911, %v2913
        %3023 = vadd.xlane.f32.xlu0 %v3022
        %v3024 = vpop.xlane.xlu0 %3023
        %v3025 = vadd.f32 %v2915, %v2917
        %3026 = vadd.xlane.f32.xlu0 %v3025
        %v3027 = vpop.xlane.xlu0 %3026
        %v3028 = vadd.f32 %v2919, %v2921
        %3029 = vadd.xlane.f32.xlu0 %v3028
        %v3030 = vpop.xlane.xlu0 %3029
        %v3031 = vadd.f32 %v2923, %v2925
        %3032 = vadd.xlane.f32.xlu0 %v3031
        %v3033 = vpop.xlane.xlu0 %3032
        %v3034 = vadd.f32 %v2927, %v2929
        %3035 = vadd.xlane.f32.xlu0 %v3034
        %v3036 = vpop.xlane.xlu0 %3035
        %v3037 = vadd.f32 %v2931, %v2933
        %3038 = vadd.xlane.f32.xlu0 %v3037
        %v3039 = vpop.xlane.xlu0 %3038
        %v3040 = vadd.f32 %v2935, %v2937
        %3041 = vadd.xlane.f32.xlu0 %v3040
        %v3042 = vpop.xlane.xlu0 %3041
        %v3043 = vadd.f32 %v2939, %v2941
        %3044 = vadd.xlane.f32.xlu0 %v3043
        %v3045 = vpop.xlane.xlu0 %3044
        %v3046 = vadd.f32 %v2943, %v2945
        %3047 = vadd.xlane.f32.xlu0 %v3046
        %v3048 = vpop.xlane.xlu0 %3047
        %v3049 = vadd.f32 %v2947, %v2949
        %3050 = vadd.xlane.f32.xlu0 %v3049
        %v3051 = vpop.xlane.xlu0 %3050
        %v3052 = vadd.f32 %v2951, %v2953
        %3053 = vadd.xlane.f32.xlu0 %v3052
        %v3054 = vpop.xlane.xlu0 %3053
        %v3055 = vadd.f32 %v2955, %v2957
        %3056 = vadd.xlane.f32.xlu0 %v3055
        %v3057 = vpop.xlane.xlu0 %3056
        %v3058 = vadd.f32 %v2959, %v2961
        %3059 = vadd.xlane.f32.xlu0 %v3058
        %v3060 = vpop.xlane.xlu0 %3059
        %v3061 = vadd.f32 %v2963, %v2965
        %3062 = vadd.xlane.f32.xlu0 %v3061
        %v3063 = vpop.xlane.xlu0 %3062
        %v3064 = vadd.f32 %v2967, %v2969
        %3065 = vadd.xlane.f32.xlu0 %v3064
        %v3066 = vpop.xlane.xlu0 %3065
        %v3067 = vadd.f32 %v2971, %v2973
        %3068 = vadd.xlane.f32.xlu0 %v3067
        %v3069 = vpop.xlane.xlu0 %3068
        %3070 = vrot.lane.b32.xlu0 %v2044, 56
        %v3071 = vpop.permute.xlu0 %3070
        %3072 = vrot.lane.b32.xlu0 %v2045, 56
        %v3073 = vpop.permute.xlu0 %3072
        %3074 = vrot.lane.b32.xlu0 %v2046, 56
        %v3075 = vpop.permute.xlu0 %3074
        %3076 = vrot.lane.b32.xlu0 %v2047, 56
        %v3077 = vpop.permute.xlu0 %3076
        %3078 = vrot.lane.b32.xlu0 %v2048, 56
        %v3079 = vpop.permute.xlu0 %3078
        %3080 = vrot.lane.b32.xlu0 %v2049, 56
        %v3081 = vpop.permute.xlu0 %3080
        %3082 = vrot.lane.b32.xlu0 %v2050, 56
        %v3083 = vpop.permute.xlu0 %3082
        %3084 = vrot.lane.b32.xlu0 %v2051, 56
        %v3085 = vpop.permute.xlu0 %3084
        %3086 = vrot.lane.b32.xlu0 %v2052, 56
        %v3087 = vpop.permute.xlu0 %3086
        %3088 = vrot.lane.b32.xlu0 %v2053, 56
        %v3089 = vpop.permute.xlu0 %3088
        %3090 = vrot.lane.b32.xlu0 %v2054, 56
        %v3091 = vpop.permute.xlu0 %3090
        %3092 = vrot.lane.b32.xlu0 %v2055, 56
        %v3093 = vpop.permute.xlu0 %3092
        %3094 = vrot.lane.b32.xlu0 %v2056, 56
        %v3095 = vpop.permute.xlu0 %3094
        %3096 = vrot.lane.b32.xlu0 %v2057, 56
        %v3097 = vpop.permute.xlu0 %3096
        %3098 = vrot.lane.b32.xlu0 %v2058, 56
        %v3099 = vpop.permute.xlu0 %3098
        %3100 = vrot.lane.b32.xlu0 %v2059, 56
        %v3101 = vpop.permute.xlu0 %3100
        %3102 = vrot.lane.b32.xlu0 %v2060, 56
        %v3103 = vpop.permute.xlu0 %3102
        %3104 = vrot.lane.b32.xlu0 %v2061, 56
        %v3105 = vpop.permute.xlu0 %3104
        %3106 = vrot.lane.b32.xlu0 %v2062, 56
        %v3107 = vpop.permute.xlu0 %3106
        %3108 = vrot.lane.b32.xlu0 %v2063, 56
        %v3109 = vpop.permute.xlu0 %3108
        %3110 = vrot.lane.b32.xlu0 %v2064, 56
        %v3111 = vpop.permute.xlu0 %3110
        %3112 = vrot.lane.b32.xlu0 %v2065, 56
        %v3113 = vpop.permute.xlu0 %3112
        %3114 = vrot.lane.b32.xlu0 %v2066, 56
        %v3115 = vpop.permute.xlu0 %3114
        %3116 = vrot.lane.b32.xlu0 %v2067, 56
        %v3117 = vpop.permute.xlu0 %3116
        %3118 = vrot.lane.b32.xlu0 %v2068, 56
        %v3119 = vpop.permute.xlu0 %3118
        %3120 = vrot.lane.b32.xlu0 %v2069, 56
        %v3121 = vpop.permute.xlu0 %3120
        %3122 = vrot.lane.b32.xlu0 %v2070, 56
        %v3123 = vpop.permute.xlu0 %3122
        %3124 = vrot.lane.b32.xlu0 %v2071, 56
        %v3125 = vpop.permute.xlu0 %3124
        %3126 = vrot.lane.b32.xlu0 %v2072, 56
        %v3127 = vpop.permute.xlu0 %3126
        %3128 = vrot.lane.b32.xlu0 %v2073, 56
        %v3129 = vpop.permute.xlu0 %3128
        %3130 = vrot.lane.b32.xlu0 %v2074, 56
        %v3131 = vpop.permute.xlu0 %3130
        %3132 = vrot.lane.b32.xlu0 %v2075, 56
        %v3133 = vpop.permute.xlu0 %3132
        %3166 = vmatprep.subr.mxu0 0.0
        %3167 = vmatpush1.msra.mxu0 %v3071
        %3168 = vmatprep.subr.mxu0 0.0
        %3169 = vmatpush1.msra.mxu0 %v3073
        %3170 = vmatprep.subr.mxu0 0.0
        %3171 = vmatpush1.msra.mxu0 %v3075
        %3172 = vmatprep.subr.mxu0 0.0
        %3173 = vmatpush1.msra.mxu0 %v3077
        %3174 = vmatprep.subr.mxu0 0.0
        %3175 = vmatpush1.msra.mxu0 %v3079
        %3176 = vmatprep.subr.mxu0 0.0
        %3177 = vmatpush1.msra.mxu0 %v3081
        %3178 = vmatprep.subr.mxu0 0.0
        %3179 = vmatpush1.msra.mxu0 %v3083
        %3180 = vmatprep.subr.mxu0 0.0
        %3181 = vmatpush1.msra.mxu0 %v3085
        %3182 = vmatprep.subr.mxu0 0.0
        %3183 = vmatpush1.msra.mxu0 %v3087
        %3184 = vmatprep.subr.mxu0 0.0
        %3185 = vmatpush1.msra.mxu0 %v3089
        %3186 = vmatprep.subr.mxu0 0.0
        %3187 = vmatpush1.msra.mxu0 %v3091
        %3188 = vmatprep.subr.mxu0 0.0
        %3189 = vmatpush1.msra.mxu0 %v3093
        %3190 = vmatprep.subr.mxu0 0.0
        %3191 = vmatpush1.msra.mxu0 %v3095
        %3192 = vmatprep.subr.mxu0 0.0
        %3193 = vmatpush1.msra.mxu0 %v3097
        %3194 = vmatprep.subr.mxu0 0.0
        %3195 = vmatpush1.msra.mxu0 %v3099
        %3196 = vmatprep.subr.mxu0 0.0
        %3197 = vmatpush1.msra.mxu0 %v3101
        %3198 = vmatprep.subr.mxu0 0.0
        %3199 = vmatpush1.msra.mxu0 %v3103
        %3200 = vmatprep.subr.mxu0 0.0
        %3201 = vmatpush1.msra.mxu0 %v3105
        %3202 = vmatprep.subr.mxu0 0.0
        %3203 = vmatpush1.msra.mxu0 %v3107
        %3204 = vmatprep.subr.mxu0 0.0
        %3205 = vmatpush1.msra.mxu0 %v3109
        %3206 = vmatprep.subr.mxu0 0.0
        %3207 = vmatpush1.msra.mxu0 %v3111
        %3208 = vmatprep.subr.mxu0 0.0
        %3209 = vmatpush1.msra.mxu0 %v3113
        %3210 = vmatprep.subr.mxu0 0.0
        %3211 = vmatpush1.msra.mxu0 %v3115
        %3212 = vmatprep.subr.mxu0 0.0
        %3213 = vmatpush1.msra.mxu0 %v3117
        %3214 = vmatprep.subr.mxu0 0.0
        %3215 = vmatpush1.msra.mxu0 %v3119
        %3216 = vmatprep.subr.mxu0 0.0
        %3217 = vmatpush1.msra.mxu0 %v3121
        %3218 = vmatprep.subr.mxu0 0.0
        %3219 = vmatpush1.msra.mxu0 %v3123
        %3220 = vmatprep.subr.mxu0 0.0
        %3221 = vmatpush1.msra.mxu0 %v3125
        %3222 = vmatprep.subr.mxu0 0.0
        %3223 = vmatpush1.msra.mxu0 %v3127
        %3224 = vmatprep.subr.mxu0 0.0
        %3225 = vmatpush1.msra.mxu0 %v3129
        %3226 = vmatprep.subr.mxu0 0.0
        %3227 = vmatpush1.msra.mxu0 %v3131
        %3228 = vmatprep.subr.mxu0 0.0
        %3229 = vmatpush1.msra.mxu0 %v3133
        %3230 = vmatprep.mubr.f32.mxu0 %v2849
        %3231 = vmatmul.mubr.f32.gmra.mrb[0].mxu0 %v2847
        %v3232 = vpop.f32.mrb[0].mxu0
        %v3233 = vadd.f32 0.0, %v3232
        %v3234 = vpop.f32.mrb[0].mxu0
        %3235 = vmatprep.mubr.f32.mxu0 %v2853
        %3236 = vmatmul.mubr.f32.gmra.mrb[0].mxu0 %v2851
        %v3237 = vpop.f32.mrb[0].mxu0
        %v3238 = vadd.f32 0.0, %v3237
        %v3239 = vpop.f32.mrb[0].mxu0
        %3240 = vmatprep.mubr.f32.mxu0 %v2857
        %3241 = vmatmul.mubr.f32.gmra.mrb[0].mxu0 %v2855
        %v3242 = vpop.f32.mrb[0].mxu0
        %v3243 = vadd.f32 0.0, %v3242
        %v3244 = vpop.f32.mrb[0].mxu0
        %3245 = vmatprep.mubr.f32.mxu0 %v2861
        %3246 = vmatmul.mubr.f32.gmra.mrb[0].mxu0 %v2859
        %v3247 = vpop.f32.mrb[0].mxu0
        %v3248 = vadd.f32 0.0, %v3247
        %v3249 = vpop.f32.mrb[0].mxu0
        %3250 = vmatprep.mubr.f32.mxu0 %v2865
        %3251 = vmatmul.mubr.f32.gmra.mrb[0].mxu0 %v2863
        %v3252 = vpop.f32.mrb[0].mxu0
        %v3253 = vadd.f32 0.0, %v3252
        %v3254 = vpop.f32.mrb[0].mxu0
        %3255 = vmatprep.mubr.f32.mxu0 %v2869
        %3256 = vmatmul.mubr.f32.gmra.mrb[0].mxu0 %v2867
        %v3257 = vpop.f32.mrb[0].mxu0
        %v3258 = vadd.f32 0.0, %v3257
        %v3259 = vpop.f32.mrb[0].mxu0
        %3260 = vmatprep.mubr.f32.mxu0 %v2873
        %3261 = vmatmul.mubr.f32.gmra.mrb[0].mxu0 %v2871
        %v3262 = vpop.f32.mrb[0].mxu0
        %v3263 = vadd.f32 0.0, %v3262
        %v3264 = vpop.f32.mrb[0].mxu0
        %3265 = vmatprep.mubr.f32.mxu0 %v2877
        %3266 = vmatmul.mubr.f32.gmra.mrb[0].mxu0 %v2875
        %v3267 = vpop.f32.mrb[0].mxu0
        %v3268 = vadd.f32 0.0, %v3267
        %v3269 = vpop.f32.mrb[0].mxu0
        %3270 = vmatprep.mubr.f32.mxu0 %v2881
        %3271 = vmatmul.mubr.f32.gmra.mrb[0].mxu0 %v2879
        %v3272 = vpop.f32.mrb[0].mxu0
        %v3273 = vadd.f32 0.0, %v3272
        %v3274 = vpop.f32.mrb[0].mxu0
        %3275 = vmatprep.mubr.f32.mxu0 %v2885
        %3276 = vmatmul.mubr.f32.gmra.mrb[0].mxu0 %v2883
        %v3277 = vpop.f32.mrb[0].mxu0
        %v3278 = vadd.f32 0.0, %v3277
        %v3279 = vpop.f32.mrb[0].mxu0
        %3280 = vmatprep.mubr.f32.mxu0 %v2889
        %3281 = vmatmul.mubr.f32.gmra.mrb[0].mxu0 %v2887
        %v3282 = vpop.f32.mrb[0].mxu0
        %v3283 = vadd.f32 0.0, %v3282
        %v3284 = vpop.f32.mrb[0].mxu0
        %3285 = vmatprep.mubr.f32.mxu0 %v2893
        %3286 = vmatmul.mubr.f32.gmra.mrb[0].mxu0 %v2891
        %v3287 = vpop.f32.mrb[0].mxu0
        %v3288 = vadd.f32 0.0, %v3287
        %v3289 = vpop.f32.mrb[0].mxu0
        %3290 = vmatprep.mubr.f32.mxu0 %v2897
        %3291 = vmatmul.mubr.f32.gmra.mrb[0].mxu0 %v2895
        %v3292 = vpop.f32.mrb[0].mxu0
        %v3293 = vadd.f32 0.0, %v3292
        %v3294 = vpop.f32.mrb[0].mxu0
        %3295 = vmatprep.mubr.f32.mxu0 %v2901
        %3296 = vmatmul.mubr.f32.gmra.mrb[0].mxu0 %v2899
        %v3297 = vpop.f32.mrb[0].mxu0
        %v3298 = vadd.f32 0.0, %v3297
        %v3299 = vpop.f32.mrb[0].mxu0
        %3300 = vmatprep.mubr.f32.mxu0 %v2905
        %3301 = vmatmul.mubr.f32.gmra.mrb[0].mxu0 %v2903
        %v3302 = vpop.f32.mrb[0].mxu0
        %v3303 = vadd.f32 0.0, %v3302
        %v3304 = vpop.f32.mrb[0].mxu0
        %3305 = vmatprep.mubr.f32.mxu0 %v2909
        %3306 = vmatmul.mubr.f32.gmra.mrb[0].mxu0 %v2907
        %v3307 = vpop.f32.mrb[0].mxu0
        %v3308 = vadd.f32 0.0, %v3307
        %v3309 = vpop.f32.mrb[0].mxu0
        %3310 = vmatprep.mubr.f32.mxu0 %v2913
        %3311 = vmatmul.mubr.f32.gmra.mrb[0].mxu0 %v2911
        %v3312 = vpop.f32.mrb[0].mxu0
        %v3313 = vadd.f32 0.0, %v3312
        %v3314 = vpop.f32.mrb[0].mxu0
        %3315 = vmatprep.mubr.f32.mxu0 %v2917
        %3316 = vmatmul.mubr.f32.gmra.mrb[0].mxu0 %v2915
        %v3317 = vpop.f32.mrb[0].mxu0
        %v3318 = vadd.f32 0.0, %v3317
        %v3319 = vpop.f32.mrb[0].mxu0
        %3320 = vmatprep.mubr.f32.mxu0 %v2921
        %3321 = vmatmul.mubr.f32.gmra.mrb[0].mxu0 %v2919
        %v3322 = vpop.f32.mrb[0].mxu0
        %v3323 = vadd.f32 0.0, %v3322
        %v3324 = vpop.f32.mrb[0].mxu0
        %3325 = vmatprep.mubr.f32.mxu0 %v2925
        %3326 = vmatmul.mubr.f32.gmra.mrb[0].mxu0 %v2923
        %v3327 = vpop.f32.mrb[0].mxu0
        %v3328 = vadd.f32 0.0, %v3327
        %v3329 = vpop.f32.mrb[0].mxu0
        %3330 = vmatprep.mubr.f32.mxu0 %v2929
        %3331 = vmatmul.mubr.f32.gmra.mrb[0].mxu0 %v2927
        %v3332 = vpop.f32.mrb[0].mxu0
        %v3333 = vadd.f32 0.0, %v3332
        %v3334 = vpop.f32.mrb[0].mxu0
        %3335 = vmatprep.mubr.f32.mxu0 %v2933
        %3336 = vmatmul.mubr.f32.gmra.mrb[0].mxu0 %v2931
        %v3337 = vpop.f32.mrb[0].mxu0
        %v3338 = vadd.f32 0.0, %v3337
        %v3339 = vpop.f32.mrb[0].mxu0
        %3340 = vmatprep.mubr.f32.mxu0 %v2937
        %3341 = vmatmul.mubr.f32.gmra.mrb[0].mxu0 %v2935
        %v3342 = vpop.f32.mrb[0].mxu0
        %v3343 = vadd.f32 0.0, %v3342
        %v3344 = vpop.f32.mrb[0].mxu0
        %3345 = vmatprep.mubr.f32.mxu0 %v2941
        %3346 = vmatmul.mubr.f32.gmra.mrb[0].mxu0 %v2939
        %v3347 = vpop.f32.mrb[0].mxu0
        %v3348 = vadd.f32 0.0, %v3347
        %v3349 = vpop.f32.mrb[0].mxu0
        %3350 = vmatprep.mubr.f32.mxu0 %v2945
        %3351 = vmatmul.mubr.f32.gmra.mrb[0].mxu0 %v2943
        %v3352 = vpop.f32.mrb[0].mxu0
        %v3353 = vadd.f32 0.0, %v3352
        %v3354 = vpop.f32.mrb[0].mxu0
        %3355 = vmatprep.mubr.f32.mxu0 %v2949
        %3356 = vmatmul.mubr.f32.gmra.mrb[0].mxu0 %v2947
        %v3357 = vpop.f32.mrb[0].mxu0
        %v3358 = vadd.f32 0.0, %v3357
        %v3359 = vpop.f32.mrb[0].mxu0
        %3360 = vmatprep.mubr.f32.mxu0 %v2953
        %3361 = vmatmul.mubr.f32.gmra.mrb[0].mxu0 %v2951
        %v3362 = vpop.f32.mrb[0].mxu0
        %v3363 = vadd.f32 0.0, %v3362
        %v3364 = vpop.f32.mrb[0].mxu0
        %3365 = vmatprep.mubr.f32.mxu0 %v2957
        %3366 = vmatmul.mubr.f32.gmra.mrb[0].mxu0 %v2955
        %v3367 = vpop.f32.mrb[0].mxu0
        %v3368 = vadd.f32 0.0, %v3367
        %v3369 = vpop.f32.mrb[0].mxu0
        %3370 = vmatprep.mubr.f32.mxu0 %v2961
        %3371 = vmatmul.mubr.f32.gmra.mrb[0].mxu0 %v2959
        %v3372 = vpop.f32.mrb[0].mxu0
        %v3373 = vadd.f32 0.0, %v3372
        %v3374 = vpop.f32.mrb[0].mxu0
        %3375 = vmatprep.mubr.f32.mxu0 %v2965
        %3376 = vmatmul.mubr.f32.gmra.mrb[0].mxu0 %v2963
        %v3377 = vpop.f32.mrb[0].mxu0
        %v3378 = vadd.f32 0.0, %v3377
        %v3379 = vpop.f32.mrb[0].mxu0
        %3380 = vmatprep.mubr.f32.mxu0 %v2969
        %3381 = vmatmul.mubr.f32.gmra.mrb[0].mxu0 %v2967
        %v3382 = vpop.f32.mrb[0].mxu0
        %v3383 = vadd.f32 0.0, %v3382
        %v3384 = vpop.f32.mrb[0].mxu0
        %3385 = vmatprep.mubr.f32.mxu0 %v2973
        %3386 = vmatmul.mubr.f32.gmra.mrb[0].mxu0 %v2971
        %v3387 = vpop.f32.mrb[0].mxu0
        %v3388 = vadd.f32 0.0, %v3387
        %v3389 = vpop.f32.mrb[0].mxu0
        %3390 = vdwg.mxu0
        %v3391 = vrcp.pop %v2976
        %v3392 = vrcp.pop %v2979
        %v3393 = vrcp.pop %v2982
        %v3394 = vrcp.pop %v2985
        %v3395 = vrcp.pop %v2988
        %v3396 = vrcp.pop %v2991
        %v3397 = vrcp.pop %v2994
        %v3398 = vrcp.pop %v2997
        %v3399 = vrcp.pop %v3000
        %v3400 = vrcp.pop %v3003
        %v3401 = vrcp.pop %v3006
        %v3402 = vrcp.pop %v3009
        %v3403 = vrcp.pop %v3012
        %v3404 = vrcp.pop %v3015
        %v3405 = vrcp.pop %v3018
        %v3406 = vrcp.pop %v3021
        %v3407 = vrcp.pop %v3024
        %v3408 = vrcp.pop %v3027
        %v3409 = vrcp.pop %v3030
        %v3410 = vrcp.pop %v3033
        %v3411 = vrcp.pop %v3036
        %v3412 = vrcp.pop %v3039
        %v3413 = vrcp.pop %v3042
        %v3414 = vrcp.pop %v3045
        %v3415 = vrcp.pop %v3048
        %v3416 = vrcp.pop %v3051
        %v3417 = vrcp.pop %v3054
        %v3418 = vrcp.pop %v3057
        %v3419 = vrcp.pop %v3060
        %v3420 = vrcp.pop %v3063
        %v3421 = vrcp.pop %v3066
        %v3422 = vrcp.pop %v3069
        %v3423 = vmul.f32 %v3233, %v3391
        %v3424 = vmul.f32 %v3238, %v3392
        %v3425 = vmul.f32 %v3243, %v3393
        %v3426 = vmul.f32 %v3248, %v3394
        %v3427 = vmul.f32 %v3253, %v3395
        %v3428 = vmul.f32 %v3258, %v3396
        %v3429 = vmul.f32 %v3263, %v3397
        %v3430 = vmul.f32 %v3268, %v3398
        %v3431 = vmul.f32 %v3273, %v3399
        %v3432 = vmul.f32 %v3278, %v3400
        %v3433 = vmul.f32 %v3283, %v3401
        %v3434 = vmul.f32 %v3288, %v3402
        %v3435 = vmul.f32 %v3293, %v3403
        %v3436 = vmul.f32 %v3298, %v3404
        %v3437 = vmul.f32 %v3303, %v3405
        %v3438 = vmul.f32 %v3308, %v3406
        %v3439 = vmul.f32 %v3313, %v3407
        %v3440 = vmul.f32 %v3318, %v3408
        %v3441 = vmul.f32 %v3323, %v3409
        %v3442 = vmul.f32 %v3328, %v3410
        %v3443 = vmul.f32 %v3333, %v3411
        %v3444 = vmul.f32 %v3338, %v3412
        %v3445 = vmul.f32 %v3343, %v3413
        %v3446 = vmul.f32 %v3348, %v3414
        %v3447 = vmul.f32 %v3353, %v3415
        %v3448 = vmul.f32 %v3358, %v3416
        %v3449 = vmul.f32 %v3363, %v3417
        %v3450 = vmul.f32 %v3368, %v3418
        %v3451 = vmul.f32 %v3373, %v3419
        %v3452 = vmul.f32 %v3378, %v3420
        %v3453 = vmul.f32 %v3383, %v3421
        %v3454 = vmul.f32 %v3388, %v3422
        %3487 = vrot.lane.b32.xlu0 %v3423, 8
        %v3488 = vpop.permute.xlu0 %3487
        %3489 = vrot.lane.b32.xlu0 %v3424, 8
        %v3490 = vpop.permute.xlu0 %3489
        %3491 = vrot.lane.b32.xlu0 %v3425, 8
        %v3492 = vpop.permute.xlu0 %3491
        %3493 = vrot.lane.b32.xlu0 %v3426, 8
        %v3494 = vpop.permute.xlu0 %3493
        %3495 = vrot.lane.b32.xlu0 %v3427, 8
        %v3496 = vpop.permute.xlu0 %3495
        %3497 = vrot.lane.b32.xlu0 %v3428, 8
        %v3498 = vpop.permute.xlu0 %3497
        %3499 = vrot.lane.b32.xlu0 %v3429, 8
        %v3500 = vpop.permute.xlu0 %3499
        %3501 = vrot.lane.b32.xlu0 %v3430, 8
        %v3502 = vpop.permute.xlu0 %3501
        %3503 = vrot.lane.b32.xlu0 %v3431, 8
        %v3504 = vpop.permute.xlu0 %3503
        %3505 = vrot.lane.b32.xlu0 %v3432, 8
        %v3506 = vpop.permute.xlu0 %3505
        %3507 = vrot.lane.b32.xlu0 %v3433, 8
        %v3508 = vpop.permute.xlu0 %3507
        %3509 = vrot.lane.b32.xlu0 %v3434, 8
        %v3510 = vpop.permute.xlu0 %3509
        %3511 = vrot.lane.b32.xlu0 %v3435, 8
        %v3512 = vpop.permute.xlu0 %3511
        %3513 = vrot.lane.b32.xlu0 %v3436, 8
        %v3514 = vpop.permute.xlu0 %3513
        %3515 = vrot.lane.b32.xlu0 %v3437, 8
        %v3516 = vpop.permute.xlu0 %3515
        %3517 = vrot.lane.b32.xlu0 %v3438, 8
        %v3518 = vpop.permute.xlu0 %3517
        %3519 = vrot.lane.b32.xlu0 %v3439, 8
        %v3520 = vpop.permute.xlu0 %3519
        %3521 = vrot.lane.b32.xlu0 %v3440, 8
        %v3522 = vpop.permute.xlu0 %3521
        %3523 = vrot.lane.b32.xlu0 %v3441, 8
        %v3524 = vpop.permute.xlu0 %3523
        %3525 = vrot.lane.b32.xlu0 %v3442, 8
        %v3526 = vpop.permute.xlu0 %3525
        %3527 = vrot.lane.b32.xlu0 %v3443, 8
        %v3528 = vpop.permute.xlu0 %3527
        %3529 = vrot.lane.b32.xlu0 %v3444, 8
        %v3530 = vpop.permute.xlu0 %3529
        %3531 = vrot.lane.b32.xlu0 %v3445, 8
        %v3532 = vpop.permute.xlu0 %3531
        %3533 = vrot.lane.b32.xlu0 %v3446, 8
        %v3534 = vpop.permute.xlu0 %3533
        %3535 = vrot.lane.b32.xlu0 %v3447, 8
        %v3536 = vpop.permute.xlu0 %3535
        %3537 = vrot.lane.b32.xlu0 %v3448, 8
        %v3538 = vpop.permute.xlu0 %3537
        %3539 = vrot.lane.b32.xlu0 %v3449, 8
        %v3540 = vpop.permute.xlu0 %3539
        %3541 = vrot.lane.b32.xlu0 %v3450, 8
        %v3542 = vpop.permute.xlu0 %3541
        %3543 = vrot.lane.b32.xlu0 %v3451, 8
        %v3544 = vpop.permute.xlu0 %3543
        %3545 = vrot.lane.b32.xlu0 %v3452, 8
        %v3546 = vpop.permute.xlu0 %3545
        %3547 = vrot.lane.b32.xlu0 %v3453, 8
        %v3548 = vpop.permute.xlu0 %3547
        %3549 = vrot.lane.b32.xlu0 %v3454, 8
        %v3550 = vpop.permute.xlu0 %3549
        %vm3583 = vcmask 130112
        %3584 = vst.msk [vmem:[#allocation3] sm:$0xff] %vm3583, %v3488
        %3585 = vst.msk [vmem:[#allocation3 + $0x8] sm:$0xff] %vm3583, %v3490
        %3586 = vst.msk [vmem:[#allocation3 + $0x10] sm:$0xff] %vm3583, %v3492
        %3587 = vst.msk [vmem:[#allocation3 + $0x18] sm:$0xff] %vm3583, %v3494
        %3588 = vst.msk [vmem:[#allocation3 + $0x20] sm:$0xff] %vm3583, %v3496
        %3589 = vst.msk [vmem:[#allocation3 + $0x28] sm:$0xff] %vm3583, %v3498
        %3590 = vst.msk [vmem:[#allocation3 + $0x30] sm:$0xff] %vm3583, %v3500
        %3591 = vst.msk [vmem:[#allocation3 + $0x38] sm:$0xff] %vm3583, %v3502
        %3592 = vst.msk [vmem:[#allocation3 + $0x40] sm:$0xff] %vm3583, %v3504
        %3593 = vst.msk [vmem:[#allocation3 + $0x48] sm:$0xff] %vm3583, %v3506
        %3594 = vst.msk [vmem:[#allocation3 + $0x50] sm:$0xff] %vm3583, %v3508
        %3595 = vst.msk [vmem:[#allocation3 + $0x58] sm:$0xff] %vm3583, %v3510
        %3596 = vst.msk [vmem:[#allocation3 + $0x60] sm:$0xff] %vm3583, %v3512
        %3597 = vst.msk [vmem:[#allocation3 + $0x68] sm:$0xff] %vm3583, %v3514
        %3598 = vst.msk [vmem:[#allocation3 + $0x70] sm:$0xff] %vm3583, %v3516
        %3599 = vst.msk [vmem:[#allocation3 + $0x78] sm:$0xff] %vm3583, %v3518
        %3600 = vst.msk [vmem:[#allocation3 + $0x80] sm:$0xff] %vm3583, %v3520
        %3601 = vst.msk [vmem:[#allocation3 + $0x88] sm:$0xff] %vm3583, %v3522
        %3602 = vst.msk [vmem:[#allocation3 + $0x90] sm:$0xff] %vm3583, %v3524
        %3603 = vst.msk [vmem:[#allocation3 + $0x98] sm:$0xff] %vm3583, %v3526
        %3604 = vst.msk [vmem:[#allocation3 + $0xa0] sm:$0xff] %vm3583, %v3528
        %3605 = vst.msk [vmem:[#allocation3 + $0xa8] sm:$0xff] %vm3583, %v3530
        %3606 = vst.msk [vmem:[#allocation3 + $0xb0] sm:$0xff] %vm3583, %v3532
        %3607 = vst.msk [vmem:[#allocation3 + $0xb8] sm:$0xff] %vm3583, %v3534
        %3608 = vst.msk [vmem:[#allocation3 + $0xc0] sm:$0xff] %vm3583, %v3536
        %3609 = vst.msk [vmem:[#allocation3 + $0xc8] sm:$0xff] %vm3583, %v3538
        %3610 = vst.msk [vmem:[#allocation3 + $0xd0] sm:$0xff] %vm3583, %v3540
        %3611 = vst.msk [vmem:[#allocation3 + $0xd8] sm:$0xff] %vm3583, %v3542
        %3612 = vst.msk [vmem:[#allocation3 + $0xe0] sm:$0xff] %vm3583, %v3544
        %3613 = vst.msk [vmem:[#allocation3 + $0xe8] sm:$0xff] %vm3583, %v3546
        %3614 = vst.msk [vmem:[#allocation3 + $0xf0] sm:$0xff] %vm3583, %v3548
        %3615 = vst.msk [vmem:[#allocation3 + $0xf8] sm:$0xff] %vm3583, %v3550
        %v3616 = vld [vmem:[#allocation2] sm:$0xff]
        %v3617 = vld [vmem:[#allocation2 + $0x8] sm:$0xff]
        %v3618 = vld [vmem:[#allocation2 + $0x10] sm:$0xff]
        %v3619 = vld [vmem:[#allocation2 + $0x18] sm:$0xff]
        %v3620 = vld [vmem:[#allocation2 + $0x20] sm:$0xff]
        %v3621 = vld [vmem:[#allocation2 + $0x28] sm:$0xff]
        %v3622 = vld [vmem:[#allocation2 + $0x30] sm:$0xff]
        %v3623 = vld [vmem:[#allocation2 + $0x38] sm:$0xff]
        %v3624 = vld [vmem:[#allocation2 + $0x40] sm:$0xff]
        %v3625 = vld [vmem:[#allocation2 + $0x48] sm:$0xff]
        %v3626 = vld [vmem:[#allocation2 + $0x50] sm:$0xff]
        %v3627 = vld [vmem:[#allocation2 + $0x58] sm:$0xff]
        %v3628 = vld [vmem:[#allocation2 + $0x60] sm:$0xff]
        %v3629 = vld [vmem:[#allocation2 + $0x68] sm:$0xff]
        %v3630 = vld [vmem:[#allocation2 + $0x70] sm:$0xff]
        %v3631 = vld [vmem:[#allocation2 + $0x78] sm:$0xff]
        %v3632 = vld [vmem:[#allocation2 + $0x80] sm:$0xff]
        %v3633 = vld [vmem:[#allocation2 + $0x88] sm:$0xff]
        %v3634 = vld [vmem:[#allocation2 + $0x90] sm:$0xff]
        %v3635 = vld [vmem:[#allocation2 + $0x98] sm:$0xff]
        %v3636 = vld [vmem:[#allocation2 + $0xa0] sm:$0xff]
        %v3637 = vld [vmem:[#allocation2 + $0xa8] sm:$0xff]
        %v3638 = vld [vmem:[#allocation2 + $0xb0] sm:$0xff]
        %v3639 = vld [vmem:[#allocation2 + $0xb8] sm:$0xff]
        %v3640 = vld [vmem:[#allocation2 + $0xc0] sm:$0xff]
        %v3641 = vld [vmem:[#allocation2 + $0xc8] sm:$0xff]
        %v3642 = vld [vmem:[#allocation2 + $0xd0] sm:$0xff]
        %v3643 = vld [vmem:[#allocation2 + $0xd8] sm:$0xff]
        %v3644 = vld [vmem:[#allocation2 + $0xe0] sm:$0xff]
        %v3645 = vld [vmem:[#allocation2 + $0xe8] sm:$0xff]
        %v3646 = vld [vmem:[#allocation2 + $0xf0] sm:$0xff]
        %v3647 = vld [vmem:[#allocation2 + $0xf8] sm:$0xff]
        %s3648 = scalar_lea.vmem [#allocation4], 1024
        %v3649 = vld [vmem:[%s3648] sm:$0xff]
        %v3650 = vld [vmem:[%s3648 + $0x8] sm:$0xff]
        %v3651 = vld [vmem:[%s3648 + $0x10] sm:$0xff]
        %v3652 = vld [vmem:[%s3648 + $0x18] sm:$0xff]
        %v3653 = vld [vmem:[%s3648 + $0x20] sm:$0xff]
        %v3654 = vld [vmem:[%s3648 + $0x28] sm:$0xff]
        %v3655 = vld [vmem:[%s3648 + $0x30] sm:$0xff]
        %v3656 = vld [vmem:[%s3648 + $0x38] sm:$0xff]
        %v3657 = vld [vmem:[%s3648 + $0x40] sm:$0xff]
        %v3658 = vld [vmem:[%s3648 + $0x48] sm:$0xff]
        %v3659 = vld [vmem:[%s3648 + $0x50] sm:$0xff]
        %v3660 = vld [vmem:[%s3648 + $0x58] sm:$0xff]
        %v3661 = vld [vmem:[%s3648 + $0x60] sm:$0xff]
        %v3662 = vld [vmem:[%s3648 + $0x68] sm:$0xff]
        %v3663 = vld [vmem:[%s3648 + $0x70] sm:$0xff]
        %v3664 = vld [vmem:[%s3648 + $0x78] sm:$0xff]
        %v3665 = vld [vmem:[%s3648 + $0x80] sm:$0xff]
        %v3666 = vld [vmem:[%s3648 + $0x88] sm:$0xff]
        %v3667 = vld [vmem:[%s3648 + $0x90] sm:$0xff]
        %v3668 = vld [vmem:[%s3648 + $0x98] sm:$0xff]
        %v3669 = vld [vmem:[%s3648 + $0xa0] sm:$0xff]
        %v3670 = vld [vmem:[%s3648 + $0xa8] sm:$0xff]
        %v3671 = vld [vmem:[%s3648 + $0xb0] sm:$0xff]
        %v3672 = vld [vmem:[%s3648 + $0xb8] sm:$0xff]
        %v3673 = vld [vmem:[%s3648 + $0xc0] sm:$0xff]
        %v3674 = vld [vmem:[%s3648 + $0xc8] sm:$0xff]
        %v3675 = vld [vmem:[%s3648 + $0xd0] sm:$0xff]
        %v3676 = vld [vmem:[%s3648 + $0xd8] sm:$0xff]
        %v3677 = vld [vmem:[%s3648 + $0xe0] sm:$0xff]
        %v3678 = vld [vmem:[%s3648 + $0xe8] sm:$0xff]
        %v3679 = vld [vmem:[%s3648 + $0xf0] sm:$0xff]
        %v3680 = vld [vmem:[%s3648 + $0xf8] sm:$0xff]
        %v3681 = vld [vmem:[%s3648 + $0x100] sm:$0xff]
        %v3682 = vld [vmem:[%s3648 + $0x108] sm:$0xff]
        %v3683 = vld [vmem:[%s3648 + $0x110] sm:$0xff]
        %v3684 = vld [vmem:[%s3648 + $0x118] sm:$0xff]
        %v3685 = vld [vmem:[%s3648 + $0x120] sm:$0xff]
        %v3686 = vld [vmem:[%s3648 + $0x128] sm:$0xff]
        %v3687 = vld [vmem:[%s3648 + $0x130] sm:$0xff]
        %v3688 = vld [vmem:[%s3648 + $0x138] sm:$0xff]
        %v3689 = vld [vmem:[%s3648 + $0x140] sm:$0xff]
        %v3690 = vld [vmem:[%s3648 + $0x148] sm:$0xff]
        %v3691 = vld [vmem:[%s3648 + $0x150] sm:$0xff]
        %v3692 = vld [vmem:[%s3648 + $0x158] sm:$0xff]
        %v3693 = vld [vmem:[%s3648 + $0x160] sm:$0xff]
        %v3694 = vld [vmem:[%s3648 + $0x168] sm:$0xff]
        %v3695 = vld [vmem:[%s3648 + $0x170] sm:$0xff]
        %v3696 = vld [vmem:[%s3648 + $0x178] sm:$0xff]
        %v3697 = vld [vmem:[%s3648 + $0x180] sm:$0xff]
        %v3698 = vld [vmem:[%s3648 + $0x188] sm:$0xff]
        %v3699 = vld [vmem:[%s3648 + $0x190] sm:$0xff]
        %v3700 = vld [vmem:[%s3648 + $0x198] sm:$0xff]
        %v3701 = vld [vmem:[%s3648 + $0x1a0] sm:$0xff]
        %v3702 = vld [vmem:[%s3648 + $0x1a8] sm:$0xff]
        %v3703 = vld [vmem:[%s3648 + $0x1b0] sm:$0xff]
        %v3704 = vld [vmem:[%s3648 + $0x1b8] sm:$0xff]
        %v3705 = vld [vmem:[%s3648 + $0x1c0] sm:$0xff]
        %v3706 = vld [vmem:[%s3648 + $0x1c8] sm:$0xff]
        %v3707 = vld [vmem:[%s3648 + $0x1d0] sm:$0xff]
        %v3708 = vld [vmem:[%s3648 + $0x1d8] sm:$0xff]
        %v3709 = vld [vmem:[%s3648 + $0x1e0] sm:$0xff]
        %v3710 = vld [vmem:[%s3648 + $0x1e8] sm:$0xff]
        %v3711 = vld [vmem:[%s3648 + $0x1f0] sm:$0xff]
        %v3712 = vld [vmem:[%s3648 + $0x1f8] sm:$0xff]
        %3745 = vrot.lane.b32.xlu0 %v3616, 112
        %v3746 = vpop.permute.xlu0 %3745
        %3747 = vrot.lane.b32.xlu0 %v3617, 112
        %v3748 = vpop.permute.xlu0 %3747
        %3749 = vrot.lane.b32.xlu0 %v3618, 112
        %v3750 = vpop.permute.xlu0 %3749
        %3751 = vrot.lane.b32.xlu0 %v3619, 112
        %v3752 = vpop.permute.xlu0 %3751
        %3753 = vrot.lane.b32.xlu0 %v3620, 112
        %v3754 = vpop.permute.xlu0 %3753
        %3755 = vrot.lane.b32.xlu0 %v3621, 112
        %v3756 = vpop.permute.xlu0 %3755
        %3757 = vrot.lane.b32.xlu0 %v3622, 112
        %v3758 = vpop.permute.xlu0 %3757
        %3759 = vrot.lane.b32.xlu0 %v3623, 112
        %v3760 = vpop.permute.xlu0 %3759
        %3761 = vrot.lane.b32.xlu0 %v3624, 112
        %v3762 = vpop.permute.xlu0 %3761
        %3763 = vrot.lane.b32.xlu0 %v3625, 112
        %v3764 = vpop.permute.xlu0 %3763
        %3765 = vrot.lane.b32.xlu0 %v3626, 112
        %v3766 = vpop.permute.xlu0 %3765
        %3767 = vrot.lane.b32.xlu0 %v3627, 112
        %v3768 = vpop.permute.xlu0 %3767
        %3769 = vrot.lane.b32.xlu0 %v3628, 112
        %v3770 = vpop.permute.xlu0 %3769
        %3771 = vrot.lane.b32.xlu0 %v3629, 112
        %v3772 = vpop.permute.xlu0 %3771
        %3773 = vrot.lane.b32.xlu0 %v3630, 112
        %v3774 = vpop.permute.xlu0 %3773
        %3775 = vrot.lane.b32.xlu0 %v3631, 112
        %v3776 = vpop.permute.xlu0 %3775
        %3777 = vrot.lane.b32.xlu0 %v3632, 112
        %v3778 = vpop.permute.xlu0 %3777
        %3779 = vrot.lane.b32.xlu0 %v3633, 112
        %v3780 = vpop.permute.xlu0 %3779
        %3781 = vrot.lane.b32.xlu0 %v3634, 112
        %v3782 = vpop.permute.xlu0 %3781
        %3783 = vrot.lane.b32.xlu0 %v3635, 112
        %v3784 = vpop.permute.xlu0 %3783
        %3785 = vrot.lane.b32.xlu0 %v3636, 112
        %v3786 = vpop.permute.xlu0 %3785
        %3787 = vrot.lane.b32.xlu0 %v3637, 112
        %v3788 = vpop.permute.xlu0 %3787
        %3789 = vrot.lane.b32.xlu0 %v3638, 112
        %v3790 = vpop.permute.xlu0 %3789
        %3791 = vrot.lane.b32.xlu0 %v3639, 112
        %v3792 = vpop.permute.xlu0 %3791
        %3793 = vrot.lane.b32.xlu0 %v3640, 112
        %v3794 = vpop.permute.xlu0 %3793
        %3795 = vrot.lane.b32.xlu0 %v3641, 112
        %v3796 = vpop.permute.xlu0 %3795
        %3797 = vrot.lane.b32.xlu0 %v3642, 112
        %v3798 = vpop.permute.xlu0 %3797
        %3799 = vrot.lane.b32.xlu0 %v3643, 112
        %v3800 = vpop.permute.xlu0 %3799
        %3801 = vrot.lane.b32.xlu0 %v3644, 112
        %v3802 = vpop.permute.xlu0 %3801
        %3803 = vrot.lane.b32.xlu0 %v3645, 112
        %v3804 = vpop.permute.xlu0 %3803
        %3805 = vrot.lane.b32.xlu0 %v3646, 112
        %v3806 = vpop.permute.xlu0 %3805
        %3807 = vrot.lane.b32.xlu0 %v3647, 112
        %v3808 = vpop.permute.xlu0 %3807
        %3809 = vrot.lane.b32.xlu0 %v3616, 80
        %v3810 = vpop.permute.xlu0 %3809
        %3811 = vrot.lane.b32.xlu0 %v3617, 80
        %v3812 = vpop.permute.xlu0 %3811
        %3813 = vrot.lane.b32.xlu0 %v3618, 80
        %v3814 = vpop.permute.xlu0 %3813
        %3815 = vrot.lane.b32.xlu0 %v3619, 80
        %v3816 = vpop.permute.xlu0 %3815
        %3817 = vrot.lane.b32.xlu0 %v3620, 80
        %v3818 = vpop.permute.xlu0 %3817
        %3819 = vrot.lane.b32.xlu0 %v3621, 80
        %v3820 = vpop.permute.xlu0 %3819
        %3821 = vrot.lane.b32.xlu0 %v3622, 80
        %v3822 = vpop.permute.xlu0 %3821
        %3823 = vrot.lane.b32.xlu0 %v3623, 80
        %v3824 = vpop.permute.xlu0 %3823
        %3825 = vrot.lane.b32.xlu0 %v3624, 80
        %v3826 = vpop.permute.xlu0 %3825
        %3827 = vrot.lane.b32.xlu0 %v3625, 80
        %v3828 = vpop.permute.xlu0 %3827
        %3829 = vrot.lane.b32.xlu0 %v3626, 80
        %v3830 = vpop.permute.xlu0 %3829
        %3831 = vrot.lane.b32.xlu0 %v3627, 80
        %v3832 = vpop.permute.xlu0 %3831
        %3833 = vrot.lane.b32.xlu0 %v3628, 80
        %v3834 = vpop.permute.xlu0 %3833
        %3835 = vrot.lane.b32.xlu0 %v3629, 80
        %v3836 = vpop.permute.xlu0 %3835
        %3837 = vrot.lane.b32.xlu0 %v3630, 80
        %v3838 = vpop.permute.xlu0 %3837
        %3839 = vrot.lane.b32.xlu0 %v3631, 80
        %v3840 = vpop.permute.xlu0 %3839
        %3841 = vrot.lane.b32.xlu0 %v3632, 80
        %v3842 = vpop.permute.xlu0 %3841
        %3843 = vrot.lane.b32.xlu0 %v3633, 80
        %v3844 = vpop.permute.xlu0 %3843
        %3845 = vrot.lane.b32.xlu0 %v3634, 80
        %v3846 = vpop.permute.xlu0 %3845
        %3847 = vrot.lane.b32.xlu0 %v3635, 80
        %v3848 = vpop.permute.xlu0 %3847
        %3849 = vrot.lane.b32.xlu0 %v3636, 80
        %v3850 = vpop.permute.xlu0 %3849
        %3851 = vrot.lane.b32.xlu0 %v3637, 80
        %v3852 = vpop.permute.xlu0 %3851
        %3853 = vrot.lane.b32.xlu0 %v3638, 80
        %v3854 = vpop.permute.xlu0 %3853
        %3855 = vrot.lane.b32.xlu0 %v3639, 80
        %v3856 = vpop.permute.xlu0 %3855
        %3857 = vrot.lane.b32.xlu0 %v3640, 80
        %v3858 = vpop.permute.xlu0 %3857
        %3859 = vrot.lane.b32.xlu0 %v3641, 80
        %v3860 = vpop.permute.xlu0 %3859
        %3861 = vrot.lane.b32.xlu0 %v3642, 80
        %v3862 = vpop.permute.xlu0 %3861
        %3863 = vrot.lane.b32.xlu0 %v3643, 80
        %v3864 = vpop.permute.xlu0 %3863
        %3865 = vrot.lane.b32.xlu0 %v3644, 80
        %v3866 = vpop.permute.xlu0 %3865
        %3867 = vrot.lane.b32.xlu0 %v3645, 80
        %v3868 = vpop.permute.xlu0 %3867
        %3869 = vrot.lane.b32.xlu0 %v3646, 80
        %v3870 = vpop.permute.xlu0 %3869
        %3871 = vrot.lane.b32.xlu0 %v3647, 80
        %v3872 = vpop.permute.xlu0 %3871
        %v3873 = vsel %vm857, %v3746, 0
        %v3875 = vsel %vm857, %v3748, 0
        %v3877 = vsel %vm857, %v3750, 0
        %v3879 = vsel %vm857, %v3752, 0
        %v3881 = vsel %vm857, %v3754, 0
        %v3883 = vsel %vm857, %v3756, 0
        %v3885 = vsel %vm857, %v3758, 0
        %v3887 = vsel %vm857, %v3760, 0
        %v3889 = vsel %vm857, %v3762, 0
        %v3891 = vsel %vm857, %v3764, 0
        %v3893 = vsel %vm857, %v3766, 0
        %v3895 = vsel %vm857, %v3768, 0
        %v3897 = vsel %vm857, %v3770, 0
        %v3899 = vsel %vm857, %v3772, 0
        %v3901 = vsel %vm857, %v3774, 0
        %v3903 = vsel %vm857, %v3776, 0
        %v3905 = vsel %vm857, %v3778, 0
        %v3907 = vsel %vm857, %v3780, 0
        %v3909 = vsel %vm857, %v3782, 0
        %v3911 = vsel %vm857, %v3784, 0
        %v3913 = vsel %vm857, %v3786, 0
        %v3915 = vsel %vm857, %v3788, 0
        %v3917 = vsel %vm857, %v3790, 0
        %v3919 = vsel %vm857, %v3792, 0
        %v3921 = vsel %vm857, %v3794, 0
        %v3923 = vsel %vm857, %v3796, 0
        %v3925 = vsel %vm857, %v3798, 0
        %v3927 = vsel %vm857, %v3800, 0
        %v3929 = vsel %vm857, %v3802, 0
        %v3931 = vsel %vm857, %v3804, 0
        %v3933 = vsel %vm857, %v3806, 0
        %v3935 = vsel %vm857, %v3808, 0
        %v3937 = vsel %vm857, %v3810, 0
        %v3939 = vsel %vm857, %v3812, 0
        %v3941 = vsel %vm857, %v3814, 0
        %v3943 = vsel %vm857, %v3816, 0
        %v3945 = vsel %vm857, %v3818, 0
        %v3947 = vsel %vm857, %v3820, 0
        %v3949 = vsel %vm857, %v3822, 0
        %v3951 = vsel %vm857, %v3824, 0
        %v3953 = vsel %vm857, %v3826, 0
        %v3955 = vsel %vm857, %v3828, 0
        %v3957 = vsel %vm857, %v3830, 0
        %v3959 = vsel %vm857, %v3832, 0
        %v3961 = vsel %vm857, %v3834, 0
        %v3963 = vsel %vm857, %v3836, 0
        %v3965 = vsel %vm857, %v3838, 0
        %v3967 = vsel %vm857, %v3840, 0
        %v3969 = vsel %vm857, %v3842, 0
        %v3971 = vsel %vm857, %v3844, 0
        %v3973 = vsel %vm857, %v3846, 0
        %v3975 = vsel %vm857, %v3848, 0
        %v3977 = vsel %vm857, %v3850, 0
        %v3979 = vsel %vm857, %v3852, 0
        %v3981 = vsel %vm857, %v3854, 0
        %v3983 = vsel %vm857, %v3856, 0
        %v3985 = vsel %vm857, %v3858, 0
        %v3987 = vsel %vm857, %v3860, 0
        %v3989 = vsel %vm857, %v3862, 0
        %v3991 = vsel %vm857, %v3864, 0
        %v3993 = vsel %vm857, %v3866, 0
        %v3995 = vsel %vm857, %v3868, 0
        %v3997 = vsel %vm857, %v3870, 0
        %v3999 = vsel %vm857, %v3872, 0
        %4001 = vmatprep.subr.mxu0 0.0
        %4002 = vmatpush1.xpose.msra.mxu0 %v3937
        %4003 = vmatprep.subr.mxu0 0.0
        %4004 = vmatpush1.xpose.msra.mxu0 %v3939
        %4005 = vmatprep.subr.mxu0 0.0
        %4006 = vmatpush1.xpose.msra.mxu0 %v3941
        %4007 = vmatprep.subr.mxu0 0.0
        %4008 = vmatpush1.xpose.msra.mxu0 %v3943
        %4009 = vmatprep.subr.mxu0 0.0
        %4010 = vmatpush1.xpose.msra.mxu0 %v3945
        %4011 = vmatprep.subr.mxu0 0.0
        %4012 = vmatpush1.xpose.msra.mxu0 %v3947
        %4013 = vmatprep.subr.mxu0 0.0
        %4014 = vmatpush1.xpose.msra.mxu0 %v3949
        %4015 = vmatprep.subr.mxu0 0.0
        %4016 = vmatpush1.xpose.msra.mxu0 %v3951
        %4017 = vmatprep.subr.mxu0 0.0
        %4018 = vmatpush1.xpose.msra.mxu0 %v3953
        %4019 = vmatprep.subr.mxu0 0.0
        %4020 = vmatpush1.xpose.msra.mxu0 %v3955
        %4021 = vmatprep.subr.mxu0 0.0
        %4022 = vmatpush1.xpose.msra.mxu0 %v3957
        %4023 = vmatprep.subr.mxu0 0.0
        %4024 = vmatpush1.xpose.msra.mxu0 %v3959
        %4025 = vmatprep.subr.mxu0 0.0
        %4026 = vmatpush1.xpose.msra.mxu0 %v3961
        %4027 = vmatprep.subr.mxu0 0.0
        %4028 = vmatpush1.xpose.msra.mxu0 %v3963
        %4029 = vmatprep.subr.mxu0 0.0
        %4030 = vmatpush1.xpose.msra.mxu0 %v3965
        %4031 = vmatprep.subr.mxu0 0.0
        %4032 = vmatpush1.xpose.msra.mxu0 %v3967
        %4033 = vmatprep.subr.mxu0 0.0
        %4034 = vmatpush1.xpose.msra.mxu0 %v3969
        %4035 = vmatprep.subr.mxu0 0.0
        %4036 = vmatpush1.xpose.msra.mxu0 %v3971
        %4037 = vmatprep.subr.mxu0 0.0
        %4038 = vmatpush1.xpose.msra.mxu0 %v3973
        %4039 = vmatprep.subr.mxu0 0.0
        %4040 = vmatpush1.xpose.msra.mxu0 %v3975
        %4041 = vmatprep.subr.mxu0 0.0
        %4042 = vmatpush1.xpose.msra.mxu0 %v3977
        %4043 = vmatprep.subr.mxu0 0.0
        %4044 = vmatpush1.xpose.msra.mxu0 %v3979
        %4045 = vmatprep.subr.mxu0 0.0
        %4046 = vmatpush1.xpose.msra.mxu0 %v3981
        %4047 = vmatprep.subr.mxu0 0.0
        %4048 = vmatpush1.xpose.msra.mxu0 %v3983
        %4049 = vmatprep.subr.mxu0 0.0
        %4050 = vmatpush1.xpose.msra.mxu0 %v3985
        %4051 = vmatprep.subr.mxu0 0.0
        %4052 = vmatpush1.xpose.msra.mxu0 %v3987
        %4053 = vmatprep.subr.mxu0 0.0
        %4054 = vmatpush1.xpose.msra.mxu0 %v3989
        %4055 = vmatprep.subr.mxu0 0.0
        %4056 = vmatpush1.xpose.msra.mxu0 %v3991
        %4057 = vmatprep.subr.mxu0 0.0
        %4058 = vmatpush1.xpose.msra.mxu0 %v3993
        %4059 = vmatprep.subr.mxu0 0.0
        %4060 = vmatpush1.xpose.msra.mxu0 %v3995
        %4061 = vmatprep.subr.mxu0 0.0
        %4062 = vmatpush1.xpose.msra.mxu0 %v3997
        %4063 = vmatprep.subr.mxu0 0.0
        %4064 = vmatpush1.xpose.msra.mxu0 %v3999
        %4065 = vmatprep.mubr.f32.mxu0 0.0
        %4066 = vmatmul.mubr.f32.gmra.mrb[0].mxu0 %v3873
        %v4067 = vpop.f32.mrb[0].mxu0
        %v4068 = vadd.f32 %v3649, %v4067
        %v4069 = vpop.f32.mrb[0].mxu0
        %v4070 = vadd.f32 %v3650, %v4069
        %4071 = vmatprep.mubr.f32.mxu0 0.0
        %4072 = vmatmul.mubr.f32.gmra.mrb[0].mxu0 %v3875
        %v4073 = vpop.f32.mrb[0].mxu0
        %v4074 = vadd.f32 %v3651, %v4073
        %v4075 = vpop.f32.mrb[0].mxu0
        %v4076 = vadd.f32 %v3652, %v4075
        %4077 = vmatprep.mubr.f32.mxu0 0.0
        %4078 = vmatmul.mubr.f32.gmra.mrb[0].mxu0 %v3877
        %v4079 = vpop.f32.mrb[0].mxu0
        %v4080 = vadd.f32 %v3653, %v4079
        %v4081 = vpop.f32.mrb[0].mxu0
        %v4082 = vadd.f32 %v3654, %v4081
        %4083 = vmatprep.mubr.f32.mxu0 0.0
        %4084 = vmatmul.mubr.f32.gmra.mrb[0].mxu0 %v3879
        %v4085 = vpop.f32.mrb[0].mxu0
        %v4086 = vadd.f32 %v3655, %v4085
        %v4087 = vpop.f32.mrb[0].mxu0
        %v4088 = vadd.f32 %v3656, %v4087
        %4089 = vmatprep.mubr.f32.mxu0 0.0
        %4090 = vmatmul.mubr.f32.gmra.mrb[0].mxu0 %v3881
        %v4091 = vpop.f32.mrb[0].mxu0
        %v4092 = vadd.f32 %v3657, %v4091
        %v4093 = vpop.f32.mrb[0].mxu0
        %v4094 = vadd.f32 %v3658, %v4093
        %4095 = vmatprep.mubr.f32.mxu0 0.0
        %4096 = vmatmul.mubr.f32.gmra.mrb[0].mxu0 %v3883
        %v4097 = vpop.f32.mrb[0].mxu0
        %v4098 = vadd.f32 %v3659, %v4097
        %v4099 = vpop.f32.mrb[0].mxu0
        %v4100 = vadd.f32 %v3660, %v4099
        %4101 = vmatprep.mubr.f32.mxu0 0.0
        %4102 = vmatmul.mubr.f32.gmra.mrb[0].mxu0 %v3885
        %v4103 = vpop.f32.mrb[0].mxu0
        %v4104 = vadd.f32 %v3661, %v4103
        %v4105 = vpop.f32.mrb[0].mxu0
        %v4106 = vadd.f32 %v3662, %v4105
        %4107 = vmatprep.mubr.f32.mxu0 0.0
        %4108 = vmatmul.mubr.f32.gmra.mrb[0].mxu0 %v3887
        %v4109 = vpop.f32.mrb[0].mxu0
        %v4110 = vadd.f32 %v3663, %v4109
        %v4111 = vpop.f32.mrb[0].mxu0
        %v4112 = vadd.f32 %v3664, %v4111
        %4113 = vmatprep.mubr.f32.mxu0 0.0
        %4114 = vmatmul.mubr.f32.gmra.mrb[0].mxu0 %v3889
        %v4115 = vpop.f32.mrb[0].mxu0
        %v4116 = vadd.f32 %v3665, %v4115
        %v4117 = vpop.f32.mrb[0].mxu0
        %v4118 = vadd.f32 %v3666, %v4117
        %4119 = vmatprep.mubr.f32.mxu0 0.0
        %4120 = vmatmul.mubr.f32.gmra.mrb[0].mxu0 %v3891
        %v4121 = vpop.f32.mrb[0].mxu0
        %v4122 = vadd.f32 %v3667, %v4121
        %v4123 = vpop.f32.mrb[0].mxu0
        %v4124 = vadd.f32 %v3668, %v4123
        %4125 = vmatprep.mubr.f32.mxu0 0.0
        %4126 = vmatmul.mubr.f32.gmra.mrb[0].mxu0 %v3893
        %v4127 = vpop.f32.mrb[0].mxu0
        %v4128 = vadd.f32 %v3669, %v4127
        %v4129 = vpop.f32.mrb[0].mxu0
        %v4130 = vadd.f32 %v3670, %v4129
        %4131 = vmatprep.mubr.f32.mxu0 0.0
        %4132 = vmatmul.mubr.f32.gmra.mrb[0].mxu0 %v3895
        %v4133 = vpop.f32.mrb[0].mxu0
        %v4134 = vadd.f32 %v3671, %v4133
        %v4135 = vpop.f32.mrb[0].mxu0
        %v4136 = vadd.f32 %v3672, %v4135
        %4137 = vmatprep.mubr.f32.mxu0 0.0
        %4138 = vmatmul.mubr.f32.gmra.mrb[0].mxu0 %v3897
        %v4139 = vpop.f32.mrb[0].mxu0
        %v4140 = vadd.f32 %v3673, %v4139
        %v4141 = vpop.f32.mrb[0].mxu0
        %v4142 = vadd.f32 %v3674, %v4141
        %4143 = vmatprep.mubr.f32.mxu0 0.0
        %4144 = vmatmul.mubr.f32.gmra.mrb[0].mxu0 %v3899
        %v4145 = vpop.f32.mrb[0].mxu0
        %v4146 = vadd.f32 %v3675, %v4145
        %v4147 = vpop.f32.mrb[0].mxu0
        %v4148 = vadd.f32 %v3676, %v4147
        %4149 = vmatprep.mubr.f32.mxu0 0.0
        %4150 = vmatmul.mubr.f32.gmra.mrb[0].mxu0 %v3901
        %v4151 = vpop.f32.mrb[0].mxu0
        %v4152 = vadd.f32 %v3677, %v4151
        %v4153 = vpop.f32.mrb[0].mxu0
        %v4154 = vadd.f32 %v3678, %v4153
        %4155 = vmatprep.mubr.f32.mxu0 0.0
        %4156 = vmatmul.mubr.f32.gmra.mrb[0].mxu0 %v3903
        %v4157 = vpop.f32.mrb[0].mxu0
        %v4158 = vadd.f32 %v3679, %v4157
        %v4159 = vpop.f32.mrb[0].mxu0
        %v4160 = vadd.f32 %v3680, %v4159
        %4161 = vmatprep.mubr.f32.mxu0 0.0
        %4162 = vmatmul.mubr.f32.gmra.mrb[0].mxu0 %v3905
        %v4163 = vpop.f32.mrb[0].mxu0
        %v4164 = vadd.f32 %v3681, %v4163
        %v4165 = vpop.f32.mrb[0].mxu0
        %v4166 = vadd.f32 %v3682, %v4165
        %4167 = vmatprep.mubr.f32.mxu0 0.0
        %4168 = vmatmul.mubr.f32.gmra.mrb[0].mxu0 %v3907
        %v4169 = vpop.f32.mrb[0].mxu0
        %v4170 = vadd.f32 %v3683, %v4169
        %v4171 = vpop.f32.mrb[0].mxu0
        %v4172 = vadd.f32 %v3684, %v4171
        %4173 = vmatprep.mubr.f32.mxu0 0.0
        %4174 = vmatmul.mubr.f32.gmra.mrb[0].mxu0 %v3909
        %v4175 = vpop.f32.mrb[0].mxu0
        %v4176 = vadd.f32 %v3685, %v4175
        %v4177 = vpop.f32.mrb[0].mxu0
        %v4178 = vadd.f32 %v3686, %v4177
        %4179 = vmatprep.mubr.f32.mxu0 0.0
        %4180 = vmatmul.mubr.f32.gmra.mrb[0].mxu0 %v3911
        %v4181 = vpop.f32.mrb[0].mxu0
        %v4182 = vadd.f32 %v3687, %v4181
        %v4183 = vpop.f32.mrb[0].mxu0
        %v4184 = vadd.f32 %v3688, %v4183
        %4185 = vmatprep.mubr.f32.mxu0 0.0
        %4186 = vmatmul.mubr.f32.gmra.mrb[0].mxu0 %v3913
        %v4187 = vpop.f32.mrb[0].mxu0
        %v4188 = vadd.f32 %v3689, %v4187
        %v4189 = vpop.f32.mrb[0].mxu0
        %v4190 = vadd.f32 %v3690, %v4189
        %4191 = vmatprep.mubr.f32.mxu0 0.0
        %4192 = vmatmul.mubr.f32.gmra.mrb[0].mxu0 %v3915
        %v4193 = vpop.f32.mrb[0].mxu0
        %v4194 = vadd.f32 %v3691, %v4193
        %v4195 = vpop.f32.mrb[0].mxu0
        %v4196 = vadd.f32 %v3692, %v4195
        %4197 = vmatprep.mubr.f32.mxu0 0.0
        %4198 = vmatmul.mubr.f32.gmra.mrb[0].mxu0 %v3917
        %v4199 = vpop.f32.mrb[0].mxu0
        %v4200 = vadd.f32 %v3693, %v4199
        %v4201 = vpop.f32.mrb[0].mxu0
        %v4202 = vadd.f32 %v3694, %v4201
        %4203 = vmatprep.mubr.f32.mxu0 0.0
        %4204 = vmatmul.mubr.f32.gmra.mrb[0].mxu0 %v3919
        %v4205 = vpop.f32.mrb[0].mxu0
        %v4206 = vadd.f32 %v3695, %v4205
        %v4207 = vpop.f32.mrb[0].mxu0
        %v4208 = vadd.f32 %v3696, %v4207
        %4209 = vmatprep.mubr.f32.mxu0 0.0
        %4210 = vmatmul.mubr.f32.gmra.mrb[0].mxu0 %v3921
        %v4211 = vpop.f32.mrb[0].mxu0
        %v4212 = vadd.f32 %v3697, %v4211
        %v4213 = vpop.f32.mrb[0].mxu0
        %v4214 = vadd.f32 %v3698, %v4213
        %4215 = vmatprep.mubr.f32.mxu0 0.0
        %4216 = vmatmul.mubr.f32.gmra.mrb[0].mxu0 %v3923
        %v4217 = vpop.f32.mrb[0].mxu0
        %v4218 = vadd.f32 %v3699, %v4217
        %v4219 = vpop.f32.mrb[0].mxu0
        %v4220 = vadd.f32 %v3700, %v4219
        %4221 = vmatprep.mubr.f32.mxu0 0.0
        %4222 = vmatmul.mubr.f32.gmra.mrb[0].mxu0 %v3925
        %v4223 = vpop.f32.mrb[0].mxu0
        %v4224 = vadd.f32 %v3701, %v4223
        %v4225 = vpop.f32.mrb[0].mxu0
        %v4226 = vadd.f32 %v3702, %v4225
        %4227 = vmatprep.mubr.f32.mxu0 0.0
        %4228 = vmatmul.mubr.f32.gmra.mrb[0].mxu0 %v3927
        %v4229 = vpop.f32.mrb[0].mxu0
        %v4230 = vadd.f32 %v3703, %v4229
        %v4231 = vpop.f32.mrb[0].mxu0
        %v4232 = vadd.f32 %v3704, %v4231
        %4233 = vmatprep.mubr.f32.mxu0 0.0
        %4234 = vmatmul.mubr.f32.gmra.mrb[0].mxu0 %v3929
        %v4235 = vpop.f32.mrb[0].mxu0
        %v4236 = vadd.f32 %v3705, %v4235
        %v4237 = vpop.f32.mrb[0].mxu0
        %v4238 = vadd.f32 %v3706, %v4237
        %4239 = vmatprep.mubr.f32.mxu0 0.0
        %4240 = vmatmul.mubr.f32.gmra.mrb[0].mxu0 %v3931
        %v4241 = vpop.f32.mrb[0].mxu0
        %v4242 = vadd.f32 %v3707, %v4241
        %v4243 = vpop.f32.mrb[0].mxu0
        %v4244 = vadd.f32 %v3708, %v4243
        %4245 = vmatprep.mubr.f32.mxu0 0.0
        %4246 = vmatmul.mubr.f32.gmra.mrb[0].mxu0 %v3933
        %v4247 = vpop.f32.mrb[0].mxu0
        %v4248 = vadd.f32 %v3709, %v4247
        %v4249 = vpop.f32.mrb[0].mxu0
        %v4250 = vadd.f32 %v3710, %v4249
        %4251 = vmatprep.mubr.f32.mxu0 0.0
        %4252 = vmatmul.mubr.f32.gmra.mrb[0].mxu0 %v3935
        %v4253 = vpop.f32.mrb[0].mxu0
        %v4254 = vadd.f32 %v3711, %v4253
        %v4255 = vpop.f32.mrb[0].mxu0
        %v4256 = vadd.f32 %v3712, %v4255
        %4257 = vdwg.mxu0
        %v4258 = vmax.f32 %v4068, %v4070
        %4259 = vmax.xlane.f32.xlu0 %v4258
        %v4260 = vpop.xlane.xlu0 %4259
        %v4261 = vmax.f32 %v4074, %v4076
        %4262 = vmax.xlane.f32.xlu0 %v4261
        %v4263 = vpop.xlane.xlu0 %4262
        %v4264 = vmax.f32 %v4080, %v4082
        %4265 = vmax.xlane.f32.xlu0 %v4264
        %v4266 = vpop.xlane.xlu0 %4265
        %v4267 = vmax.f32 %v4086, %v4088
        %4268 = vmax.xlane.f32.xlu0 %v4267
        %v4269 = vpop.xlane.xlu0 %4268
        %v4270 = vmax.f32 %v4092, %v4094
        %4271 = vmax.xlane.f32.xlu0 %v4270
        %v4272 = vpop.xlane.xlu0 %4271
        %v4273 = vmax.f32 %v4098, %v4100
        %4274 = vmax.xlane.f32.xlu0 %v4273
        %v4275 = vpop.xlane.xlu0 %4274
        %v4276 = vmax.f32 %v4104, %v4106
        %4277 = vmax.xlane.f32.xlu0 %v4276
        %v4278 = vpop.xlane.xlu0 %4277
        %v4279 = vmax.f32 %v4110, %v4112
        %4280 = vmax.xlane.f32.xlu0 %v4279
        %v4281 = vpop.xlane.xlu0 %4280
        %v4282 = vmax.f32 %v4116, %v4118
        %4283 = vmax.xlane.f32.xlu0 %v4282
        %v4284 = vpop.xlane.xlu0 %4283
        %v4285 = vmax.f32 %v4122, %v4124
        %4286 = vmax.xlane.f32.xlu0 %v4285
        %v4287 = vpop.xlane.xlu0 %4286
        %v4288 = vmax.f32 %v4128, %v4130
        %4289 = vmax.xlane.f32.xlu0 %v4288
        %v4290 = vpop.xlane.xlu0 %4289
        %v4291 = vmax.f32 %v4134, %v4136
        %4292 = vmax.xlane.f32.xlu0 %v4291
        %v4293 = vpop.xlane.xlu0 %4292
        %v4294 = vmax.f32 %v4140, %v4142
        %4295 = vmax.xlane.f32.xlu0 %v4294
        %v4296 = vpop.xlane.xlu0 %4295
        %v4297 = vmax.f32 %v4146, %v4148
        %4298 = vmax.xlane.f32.xlu0 %v4297
        %v4299 = vpop.xlane.xlu0 %4298
        %v4300 = vmax.f32 %v4152, %v4154
        %4301 = vmax.xlane.f32.xlu0 %v4300
        %v4302 = vpop.xlane.xlu0 %4301
        %v4303 = vmax.f32 %v4158, %v4160
        %4304 = vmax.xlane.f32.xlu0 %v4303
        %v4305 = vpop.xlane.xlu0 %4304
        %v4306 = vmax.f32 %v4164, %v4166
        %4307 = vmax.xlane.f32.xlu0 %v4306
        %v4308 = vpop.xlane.xlu0 %4307
        %v4309 = vmax.f32 %v4170, %v4172
        %4310 = vmax.xlane.f32.xlu0 %v4309
        %v4311 = vpop.xlane.xlu0 %4310
        %v4312 = vmax.f32 %v4176, %v4178
        %4313 = vmax.xlane.f32.xlu0 %v4312
        %v4314 = vpop.xlane.xlu0 %4313
        %v4315 = vmax.f32 %v4182, %v4184
        %4316 = vmax.xlane.f32.xlu0 %v4315
        %v4317 = vpop.xlane.xlu0 %4316
        %v4318 = vmax.f32 %v4188, %v4190
        %4319 = vmax.xlane.f32.xlu0 %v4318
        %v4320 = vpop.xlane.xlu0 %4319
        %v4321 = vmax.f32 %v4194, %v4196
        %4322 = vmax.xlane.f32.xlu0 %v4321
        %v4323 = vpop.xlane.xlu0 %4322
        %v4324 = vmax.f32 %v4200, %v4202
        %4325 = vmax.xlane.f32.xlu0 %v4324
        %v4326 = vpop.xlane.xlu0 %4325
        %v4327 = vmax.f32 %v4206, %v4208
        %4328 = vmax.xlane.f32.xlu0 %v4327
        %v4329 = vpop.xlane.xlu0 %4328
        %v4330 = vmax.f32 %v4212, %v4214
        %4331 = vmax.xlane.f32.xlu0 %v4330
        %v4332 = vpop.xlane.xlu0 %4331
        %v4333 = vmax.f32 %v4218, %v4220
        %4334 = vmax.xlane.f32.xlu0 %v4333
        %v4335 = vpop.xlane.xlu0 %4334
        %v4336 = vmax.f32 %v4224, %v4226
        %4337 = vmax.xlane.f32.xlu0 %v4336
        %v4338 = vpop.xlane.xlu0 %4337
        %v4339 = vmax.f32 %v4230, %v4232
        %4340 = vmax.xlane.f32.xlu0 %v4339
        %v4341 = vpop.xlane.xlu0 %4340
        %v4342 = vmax.f32 %v4236, %v4238
        %4343 = vmax.xlane.f32.xlu0 %v4342
        %v4344 = vpop.xlane.xlu0 %4343
        %v4345 = vmax.f32 %v4242, %v4244
        %4346 = vmax.xlane.f32.xlu0 %v4345
        %v4347 = vpop.xlane.xlu0 %4346
        %v4348 = vmax.f32 %v4248, %v4250
        %4349 = vmax.xlane.f32.xlu0 %v4348
        %v4350 = vpop.xlane.xlu0 %4349
        %v4351 = vmax.f32 %v4254, %v4256
        %4352 = vmax.xlane.f32.xlu0 %v4351
        %v4353 = vpop.xlane.xlu0 %4352
        %v4354 = vsub.f32 %v4068, %v4260
        %v4355 = vsub.f32 %v4070, %v4260
        %v4356 = vsub.f32 %v4074, %v4263
        %v4357 = vsub.f32 %v4076, %v4263
        %v4358 = vsub.f32 %v4080, %v4266
        %v4359 = vsub.f32 %v4082, %v4266
        %v4360 = vsub.f32 %v4086, %v4269
        %v4361 = vsub.f32 %v4088, %v4269
        %v4362 = vsub.f32 %v4092, %v4272
        %v4363 = vsub.f32 %v4094, %v4272
        %v4364 = vsub.f32 %v4098, %v4275
        %v4365 = vsub.f32 %v4100, %v4275
        %v4366 = vsub.f32 %v4104, %v4278
        %v4367 = vsub.f32 %v4106, %v4278
        %v4368 = vsub.f32 %v4110, %v4281
        %v4369 = vsub.f32 %v4112, %v4281
        %v4370 = vsub.f32 %v4116, %v4284
        %v4371 = vsub.f32 %v4118, %v4284
        %v4372 = vsub.f32 %v4122, %v4287
        %v4373 = vsub.f32 %v4124, %v4287
        %v4374 = vsub.f32 %v4128, %v4290
        %v4375 = vsub.f32 %v4130, %v4290
        %v4376 = vsub.f32 %v4134, %v4293
        %v4377 = vsub.f32 %v4136, %v4293
        %v4378 = vsub.f32 %v4140, %v4296
        %v4379 = vsub.f32 %v4142, %v4296
        %v4380 = vsub.f32 %v4146, %v4299
        %v4381 = vsub.f32 %v4148, %v4299
        %v4382 = vsub.f32 %v4152, %v4302
        %v4383 = vsub.f32 %v4154, %v4302
        %v4384 = vsub.f32 %v4158, %v4305
        %v4385 = vsub.f32 %v4160, %v4305
        %v4386 = vsub.f32 %v4164, %v4308
        %v4387 = vsub.f32 %v4166, %v4308
        %v4388 = vsub.f32 %v4170, %v4311
        %v4389 = vsub.f32 %v4172, %v4311
        %v4390 = vsub.f32 %v4176, %v4314
        %v4391 = vsub.f32 %v4178, %v4314
        %v4392 = vsub.f32 %v4182, %v4317
        %v4393 = vsub.f32 %v4184, %v4317
        %v4394 = vsub.f32 %v4188, %v4320
        %v4395 = vsub.f32 %v4190, %v4320
        %v4396 = vsub.f32 %v4194, %v4323
        %v4397 = vsub.f32 %v4196, %v4323
        %v4398 = vsub.f32 %v4200, %v4326
        %v4399 = vsub.f32 %v4202, %v4326
        %v4400 = vsub.f32 %v4206, %v4329
        %v4401 = vsub.f32 %v4208, %v4329
        %v4402 = vsub.f32 %v4212, %v4332
        %v4403 = vsub.f32 %v4214, %v4332
        %v4404 = vsub.f32 %v4218, %v4335
        %v4405 = vsub.f32 %v4220, %v4335
        %v4406 = vsub.f32 %v4224, %v4338
        %v4407 = vsub.f32 %v4226, %v4338
        %v4408 = vsub.f32 %v4230, %v4341
        %v4409 = vsub.f32 %v4232, %v4341
        %v4410 = vsub.f32 %v4236, %v4344
        %v4411 = vsub.f32 %v4238, %v4344
        %v4412 = vsub.f32 %v4242, %v4347
        %v4413 = vsub.f32 %v4244, %v4347
        %v4414 = vsub.f32 %v4248, %v4350
        %v4415 = vsub.f32 %v4250, %v4350
        %v4416 = vsub.f32 %v4254, %v4353
        %v4417 = vsub.f32 %v4256, %v4353
        %v4418 = vmul.f32 %v4354, 1.442695
        %v4419 = vpow.pop %v4418
        %v4420 = vmul.f32 %v4355, 1.442695
        %v4421 = vpow.pop %v4420
        %v4422 = vmul.f32 %v4356, 1.442695
        %v4423 = vpow.pop %v4422
        %v4424 = vmul.f32 %v4357, 1.442695
        %v4425 = vpow.pop %v4424
        %v4426 = vmul.f32 %v4358, 1.442695
        %v4427 = vpow.pop %v4426
        %v4428 = vmul.f32 %v4359, 1.442695
        %v4429 = vpow.pop %v4428
        %v4430 = vmul.f32 %v4360, 1.442695
        %v4431 = vpow.pop %v4430
        %v4432 = vmul.f32 %v4361, 1.442695
        %v4433 = vpow.pop %v4432
        %v4434 = vmul.f32 %v4362, 1.442695
        %v4435 = vpow.pop %v4434
        %v4436 = vmul.f32 %v4363, 1.442695
        %v4437 = vpow.pop %v4436
        %v4438 = vmul.f32 %v4364, 1.442695
        %v4439 = vpow.pop %v4438
        %v4440 = vmul.f32 %v4365, 1.442695
        %v4441 = vpow.pop %v4440
        %v4442 = vmul.f32 %v4366, 1.442695
        %v4443 = vpow.pop %v4442
        %v4444 = vmul.f32 %v4367, 1.442695
        %v4445 = vpow.pop %v4444
        %v4446 = vmul.f32 %v4368, 1.442695
        %v4447 = vpow.pop %v4446
        %v4448 = vmul.f32 %v4369, 1.442695
        %v4449 = vpow.pop %v4448
        %v4450 = vmul.f32 %v4370, 1.442695
        %v4451 = vpow.pop %v4450
        %v4452 = vmul.f32 %v4371, 1.442695
        %v4453 = vpow.pop %v4452
        %v4454 = vmul.f32 %v4372, 1.442695
        %v4455 = vpow.pop %v4454
        %v4456 = vmul.f32 %v4373, 1.442695
        %v4457 = vpow.pop %v4456
        %v4458 = vmul.f32 %v4374, 1.442695
        %v4459 = vpow.pop %v4458
        %v4460 = vmul.f32 %v4375, 1.442695
        %v4461 = vpow.pop %v4460
        %v4462 = vmul.f32 %v4376, 1.442695
        %v4463 = vpow.pop %v4462
        %v4464 = vmul.f32 %v4377, 1.442695
        %v4465 = vpow.pop %v4464
        %v4466 = vmul.f32 %v4378, 1.442695
        %v4467 = vpow.pop %v4466
        %v4468 = vmul.f32 %v4379, 1.442695
        %v4469 = vpow.pop %v4468
        %v4470 = vmul.f32 %v4380, 1.442695
        %v4471 = vpow.pop %v4470
        %v4472 = vmul.f32 %v4381, 1.442695
        %v4473 = vpow.pop %v4472
        %v4474 = vmul.f32 %v4382, 1.442695
        %v4475 = vpow.pop %v4474
        %v4476 = vmul.f32 %v4383, 1.442695
        %v4477 = vpow.pop %v4476
        %v4478 = vmul.f32 %v4384, 1.442695
        %v4479 = vpow.pop %v4478
        %v4480 = vmul.f32 %v4385, 1.442695
        %v4481 = vpow.pop %v4480
        %v4482 = vmul.f32 %v4386, 1.442695
        %v4483 = vpow.pop %v4482
        %v4484 = vmul.f32 %v4387, 1.442695
        %v4485 = vpow.pop %v4484
        %v4486 = vmul.f32 %v4388, 1.442695
        %v4487 = vpow.pop %v4486
        %v4488 = vmul.f32 %v4389, 1.442695
        %v4489 = vpow.pop %v4488
        %v4490 = vmul.f32 %v4390, 1.442695
        %v4491 = vpow.pop %v4490
        %v4492 = vmul.f32 %v4391, 1.442695
        %v4493 = vpow.pop %v4492
        %v4494 = vmul.f32 %v4392, 1.442695
        %v4495 = vpow.pop %v4494
        %v4496 = vmul.f32 %v4393, 1.442695
        %v4497 = vpow.pop %v4496
        %v4498 = vmul.f32 %v4394, 1.442695
        %v4499 = vpow.pop %v4498
        %v4500 = vmul.f32 %v4395, 1.442695
        %v4501 = vpow.pop %v4500
        %v4502 = vmul.f32 %v4396, 1.442695
        %v4503 = vpow.pop %v4502
        %v4504 = vmul.f32 %v4397, 1.442695
        %v4505 = vpow.pop %v4504
        %v4506 = vmul.f32 %v4398, 1.442695
        %v4507 = vpow.pop %v4506
        %v4508 = vmul.f32 %v4399, 1.442695
        %v4509 = vpow.pop %v4508
        %v4510 = vmul.f32 %v4400, 1.442695
        %v4511 = vpow.pop %v4510
        %v4512 = vmul.f32 %v4401, 1.442695
        %v4513 = vpow.pop %v4512
        %v4514 = vmul.f32 %v4402, 1.442695
        %v4515 = vpow.pop %v4514
        %v4516 = vmul.f32 %v4403, 1.442695
        %v4517 = vpow.pop %v4516
        %v4518 = vmul.f32 %v4404, 1.442695
        %v4519 = vpow.pop %v4518
        %v4520 = vmul.f32 %v4405, 1.442695
        %v4521 = vpow.pop %v4520
        %v4522 = vmul.f32 %v4406, 1.442695
        %v4523 = vpow.pop %v4522
        %v4524 = vmul.f32 %v4407, 1.442695
        %v4525 = vpow.pop %v4524
        %v4526 = vmul.f32 %v4408, 1.442695
        %v4527 = vpow.pop %v4526
        %v4528 = vmul.f32 %v4409, 1.442695
        %v4529 = vpow.pop %v4528
        %v4530 = vmul.f32 %v4410, 1.442695
        %v4531 = vpow.pop %v4530
        %v4532 = vmul.f32 %v4411, 1.442695
        %v4533 = vpow.pop %v4532
        %v4534 = vmul.f32 %v4412, 1.442695
        %v4535 = vpow.pop %v4534
        %v4536 = vmul.f32 %v4413, 1.442695
        %v4537 = vpow.pop %v4536
        %v4538 = vmul.f32 %v4414, 1.442695
        %v4539 = vpow.pop %v4538
        %v4540 = vmul.f32 %v4415, 1.442695
        %v4541 = vpow.pop %v4540
        %v4542 = vmul.f32 %v4416, 1.442695
        %v4543 = vpow.pop %v4542
        %v4544 = vmul.f32 %v4417, 1.442695
        %v4545 = vpow.pop %v4544
        %v4546 = vadd.f32 %v4419, %v4421
        %4547 = vadd.xlane.f32.xlu0 %v4546
        %v4548 = vpop.xlane.xlu0 %4547
        %v4549 = vadd.f32 %v4423, %v4425
        %4550 = vadd.xlane.f32.xlu0 %v4549
        %v4551 = vpop.xlane.xlu0 %4550
        %v4552 = vadd.f32 %v4427, %v4429
        %4553 = vadd.xlane.f32.xlu0 %v4552
        %v4554 = vpop.xlane.xlu0 %4553
        %v4555 = vadd.f32 %v4431, %v4433
        %4556 = vadd.xlane.f32.xlu0 %v4555
        %v4557 = vpop.xlane.xlu0 %4556
        %v4558 = vadd.f32 %v4435, %v4437
        %4559 = vadd.xlane.f32.xlu0 %v4558
        %v4560 = vpop.xlane.xlu0 %4559
        %v4561 = vadd.f32 %v4439, %v4441
        %4562 = vadd.xlane.f32.xlu0 %v4561
        %v4563 = vpop.xlane.xlu0 %4562
        %v4564 = vadd.f32 %v4443, %v4445
        %4565 = vadd.xlane.f32.xlu0 %v4564
        %v4566 = vpop.xlane.xlu0 %4565
        %v4567 = vadd.f32 %v4447, %v4449
        %4568 = vadd.xlane.f32.xlu0 %v4567
        %v4569 = vpop.xlane.xlu0 %4568
        %v4570 = vadd.f32 %v4451, %v4453
        %4571 = vadd.xlane.f32.xlu0 %v4570
        %v4572 = vpop.xlane.xlu0 %4571
        %v4573 = vadd.f32 %v4455, %v4457
        %4574 = vadd.xlane.f32.xlu0 %v4573
        %v4575 = vpop.xlane.xlu0 %4574
        %v4576 = vadd.f32 %v4459, %v4461
        %4577 = vadd.xlane.f32.xlu0 %v4576
        %v4578 = vpop.xlane.xlu0 %4577
        %v4579 = vadd.f32 %v4463, %v4465
        %4580 = vadd.xlane.f32.xlu0 %v4579
        %v4581 = vpop.xlane.xlu0 %4580
        %v4582 = vadd.f32 %v4467, %v4469
        %4583 = vadd.xlane.f32.xlu0 %v4582
        %v4584 = vpop.xlane.xlu0 %4583
        %v4585 = vadd.f32 %v4471, %v4473
        %4586 = vadd.xlane.f32.xlu0 %v4585
        %v4587 = vpop.xlane.xlu0 %4586
        %v4588 = vadd.f32 %v4475, %v4477
        %4589 = vadd.xlane.f32.xlu0 %v4588
        %v4590 = vpop.xlane.xlu0 %4589
        %v4591 = vadd.f32 %v4479, %v4481
        %4592 = vadd.xlane.f32.xlu0 %v4591
        %v4593 = vpop.xlane.xlu0 %4592
        %v4594 = vadd.f32 %v4483, %v4485
        %4595 = vadd.xlane.f32.xlu0 %v4594
        %v4596 = vpop.xlane.xlu0 %4595
        %v4597 = vadd.f32 %v4487, %v4489
        %4598 = vadd.xlane.f32.xlu0 %v4597
        %v4599 = vpop.xlane.xlu0 %4598
        %v4600 = vadd.f32 %v4491, %v4493
        %4601 = vadd.xlane.f32.xlu0 %v4600
        %v4602 = vpop.xlane.xlu0 %4601
        %v4603 = vadd.f32 %v4495, %v4497
        %4604 = vadd.xlane.f32.xlu0 %v4603
        %v4605 = vpop.xlane.xlu0 %4604
        %v4606 = vadd.f32 %v4499, %v4501
        %4607 = vadd.xlane.f32.xlu0 %v4606
        %v4608 = vpop.xlane.xlu0 %4607
        %v4609 = vadd.f32 %v4503, %v4505
        %4610 = vadd.xlane.f32.xlu0 %v4609
        %v4611 = vpop.xlane.xlu0 %4610
        %v4612 = vadd.f32 %v4507, %v4509
        %4613 = vadd.xlane.f32.xlu0 %v4612
        %v4614 = vpop.xlane.xlu0 %4613
        %v4615 = vadd.f32 %v4511, %v4513
        %4616 = vadd.xlane.f32.xlu0 %v4615
        %v4617 = vpop.xlane.xlu0 %4616
        %v4618 = vadd.f32 %v4515, %v4517
        %4619 = vadd.xlane.f32.xlu0 %v4618
        %v4620 = vpop.xlane.xlu0 %4619
        %v4621 = vadd.f32 %v4519, %v4521
        %4622 = vadd.xlane.f32.xlu0 %v4621
        %v4623 = vpop.xlane.xlu0 %4622
        %v4624 = vadd.f32 %v4523, %v4525
        %4625 = vadd.xlane.f32.xlu0 %v4624
        %v4626 = vpop.xlane.xlu0 %4625
        %v4627 = vadd.f32 %v4527, %v4529
        %4628 = vadd.xlane.f32.xlu0 %v4627
        %v4629 = vpop.xlane.xlu0 %4628
        %v4630 = vadd.f32 %v4531, %v4533
        %4631 = vadd.xlane.f32.xlu0 %v4630
        %v4632 = vpop.xlane.xlu0 %4631
        %v4633 = vadd.f32 %v4535, %v4537
        %4634 = vadd.xlane.f32.xlu0 %v4633
        %v4635 = vpop.xlane.xlu0 %4634
        %v4636 = vadd.f32 %v4539, %v4541
        %4637 = vadd.xlane.f32.xlu0 %v4636
        %v4638 = vpop.xlane.xlu0 %4637
        %v4639 = vadd.f32 %v4543, %v4545
        %4640 = vadd.xlane.f32.xlu0 %v4639
        %v4641 = vpop.xlane.xlu0 %4640
        %4642 = vrot.lane.b32.xlu0 %v3616, 48
        %v4643 = vpop.permute.xlu0 %4642
        %4644 = vrot.lane.b32.xlu0 %v3617, 48
        %v4645 = vpop.permute.xlu0 %4644
        %4646 = vrot.lane.b32.xlu0 %v3618, 48
        %v4647 = vpop.permute.xlu0 %4646
        %4648 = vrot.lane.b32.xlu0 %v3619, 48
        %v4649 = vpop.permute.xlu0 %4648
        %4650 = vrot.lane.b32.xlu0 %v3620, 48
        %v4651 = vpop.permute.xlu0 %4650
        %4652 = vrot.lane.b32.xlu0 %v3621, 48
        %v4653 = vpop.permute.xlu0 %4652
        %4654 = vrot.lane.b32.xlu0 %v3622, 48
        %v4655 = vpop.permute.xlu0 %4654
        %4656 = vrot.lane.b32.xlu0 %v3623, 48
        %v4657 = vpop.permute.xlu0 %4656
        %4658 = vrot.lane.b32.xlu0 %v3624, 48
        %v4659 = vpop.permute.xlu0 %4658
        %4660 = vrot.lane.b32.xlu0 %v3625, 48
        %v4661 = vpop.permute.xlu0 %4660
        %4662 = vrot.lane.b32.xlu0 %v3626, 48
        %v4663 = vpop.permute.xlu0 %4662
        %4664 = vrot.lane.b32.xlu0 %v3627, 48
        %v4665 = vpop.permute.xlu0 %4664
        %4666 = vrot.lane.b32.xlu0 %v3628, 48
        %v4667 = vpop.permute.xlu0 %4666
        %4668 = vrot.lane.b32.xlu0 %v3629, 48
        %v4669 = vpop.permute.xlu0 %4668
        %4670 = vrot.lane.b32.xlu0 %v3630, 48
        %v4671 = vpop.permute.xlu0 %4670
        %4672 = vrot.lane.b32.xlu0 %v3631, 48
        %v4673 = vpop.permute.xlu0 %4672
        %4674 = vrot.lane.b32.xlu0 %v3632, 48
        %v4675 = vpop.permute.xlu0 %4674
        %4676 = vrot.lane.b32.xlu0 %v3633, 48
        %v4677 = vpop.permute.xlu0 %4676
        %4678 = vrot.lane.b32.xlu0 %v3634, 48
        %v4679 = vpop.permute.xlu0 %4678
        %4680 = vrot.lane.b32.xlu0 %v3635, 48
        %v4681 = vpop.permute.xlu0 %4680
        %4682 = vrot.lane.b32.xlu0 %v3636, 48
        %v4683 = vpop.permute.xlu0 %4682
        %4684 = vrot.lane.b32.xlu0 %v3637, 48
        %v4685 = vpop.permute.xlu0 %4684
        %4686 = vrot.lane.b32.xlu0 %v3638, 48
        %v4687 = vpop.permute.xlu0 %4686
        %4688 = vrot.lane.b32.xlu0 %v3639, 48
        %v4689 = vpop.permute.xlu0 %4688
        %4690 = vrot.lane.b32.xlu0 %v3640, 48
        %v4691 = vpop.permute.xlu0 %4690
        %4692 = vrot.lane.b32.xlu0 %v3641, 48
        %v4693 = vpop.permute.xlu0 %4692
        %4694 = vrot.lane.b32.xlu0 %v3642, 48
        %v4695 = vpop.permute.xlu0 %4694
        %4696 = vrot.lane.b32.xlu0 %v3643, 48
        %v4697 = vpop.permute.xlu0 %4696
        %4698 = vrot.lane.b32.xlu0 %v3644, 48
        %v4699 = vpop.permute.xlu0 %4698
        %4700 = vrot.lane.b32.xlu0 %v3645, 48
        %v4701 = vpop.permute.xlu0 %4700
        %4702 = vrot.lane.b32.xlu0 %v3646, 48
        %v4703 = vpop.permute.xlu0 %4702
        %4704 = vrot.lane.b32.xlu0 %v3647, 48
        %v4705 = vpop.permute.xlu0 %4704
        %4738 = vmatprep.subr.mxu0 0.0
        %4739 = vmatpush1.msra.mxu0 %v4643
        %4740 = vmatprep.subr.mxu0 0.0
        %4741 = vmatpush1.msra.mxu0 %v4645
        %4742 = vmatprep.subr.mxu0 0.0
        %4743 = vmatpush1.msra.mxu0 %v4647
        %4744 = vmatprep.subr.mxu0 0.0
        %4745 = vmatpush1.msra.mxu0 %v4649
        %4746 = vmatprep.subr.mxu0 0.0
        %4747 = vmatpush1.msra.mxu0 %v4651
        %4748 = vmatprep.subr.mxu0 0.0
        %4749 = vmatpush1.msra.mxu0 %v4653
        %4750 = vmatprep.subr.mxu0 0.0
        %4751 = vmatpush1.msra.mxu0 %v4655
        %4752 = vmatprep.subr.mxu0 0.0
        %4753 = vmatpush1.msra.mxu0 %v4657
        %4754 = vmatprep.subr.mxu0 0.0
        %4755 = vmatpush1.msra.mxu0 %v4659
        %4756 = vmatprep.subr.mxu0 0.0
        %4757 = vmatpush1.msra.mxu0 %v4661
        %4758 = vmatprep.subr.mxu0 0.0
        %4759 = vmatpush1.msra.mxu0 %v4663
        %4760 = vmatprep.subr.mxu0 0.0
        %4761 = vmatpush1.msra.mxu0 %v4665
        %4762 = vmatprep.subr.mxu0 0.0
        %4763 = vmatpush1.msra.mxu0 %v4667
        %4764 = vmatprep.subr.mxu0 0.0
        %4765 = vmatpush1.msra.mxu0 %v4669
        %4766 = vmatprep.subr.mxu0 0.0
        %4767 = vmatpush1.msra.mxu0 %v4671
        %4768 = vmatprep.subr.mxu0 0.0
        %4769 = vmatpush1.msra.mxu0 %v4673
        %4770 = vmatprep.subr.mxu0 0.0
        %4771 = vmatpush1.msra.mxu0 %v4675
        %4772 = vmatprep.subr.mxu0 0.0
        %4773 = vmatpush1.msra.mxu0 %v4677
        %4774 = vmatprep.subr.mxu0 0.0
        %4775 = vmatpush1.msra.mxu0 %v4679
        %4776 = vmatprep.subr.mxu0 0.0
        %4777 = vmatpush1.msra.mxu0 %v4681
        %4778 = vmatprep.subr.mxu0 0.0
        %4779 = vmatpush1.msra.mxu0 %v4683
        %4780 = vmatprep.subr.mxu0 0.0
        %4781 = vmatpush1.msra.mxu0 %v4685
        %4782 = vmatprep.subr.mxu0 0.0
        %4783 = vmatpush1.msra.mxu0 %v4687
        %4784 = vmatprep.subr.mxu0 0.0
        %4785 = vmatpush1.msra.mxu0 %v4689
        %4786 = vmatprep.subr.mxu0 0.0
        %4787 = vmatpush1.msra.mxu0 %v4691
        %4788 = vmatprep.subr.mxu0 0.0
        %4789 = vmatpush1.msra.mxu0 %v4693
        %4790 = vmatprep.subr.mxu0 0.0
        %4791 = vmatpush1.msra.mxu0 %v4695
        %4792 = vmatprep.subr.mxu0 0.0
        %4793 = vmatpush1.msra.mxu0 %v4697
        %4794 = vmatprep.subr.mxu0 0.0
        %4795 = vmatpush1.msra.mxu0 %v4699
        %4796 = vmatprep.subr.mxu0 0.0
        %4797 = vmatpush1.msra.mxu0 %v4701
        %4798 = vmatprep.subr.mxu0 0.0
        %4799 = vmatpush1.msra.mxu0 %v4703
        %4800 = vmatprep.subr.mxu0 0.0
        %4801 = vmatpush1.msra.mxu0 %v4705
        %4802 = vmatprep.mubr.f32.mxu0 %v4421
        %4803 = vmatmul.mubr.f32.gmra.mrb[0].mxu0 %v4419
        %v4804 = vpop.f32.mrb[0].mxu0
        %v4805 = vadd.f32 0.0, %v4804
        %v4806 = vpop.f32.mrb[0].mxu0
        %4807 = vmatprep.mubr.f32.mxu0 %v4425
        %4808 = vmatmul.mubr.f32.gmra.mrb[0].mxu0 %v4423
        %v4809 = vpop.f32.mrb[0].mxu0
        %v4810 = vadd.f32 0.0, %v4809
        %v4811 = vpop.f32.mrb[0].mxu0
        %4812 = vmatprep.mubr.f32.mxu0 %v4429
        %4813 = vmatmul.mubr.f32.gmra.mrb[0].mxu0 %v4427
        %v4814 = vpop.f32.mrb[0].mxu0
        %v4815 = vadd.f32 0.0, %v4814
        %v4816 = vpop.f32.mrb[0].mxu0
        %4817 = vmatprep.mubr.f32.mxu0 %v4433
        %4818 = vmatmul.mubr.f32.gmra.mrb[0].mxu0 %v4431
        %v4819 = vpop.f32.mrb[0].mxu0
        %v4820 = vadd.f32 0.0, %v4819
        %v4821 = vpop.f32.mrb[0].mxu0
        %4822 = vmatprep.mubr.f32.mxu0 %v4437
        %4823 = vmatmul.mubr.f32.gmra.mrb[0].mxu0 %v4435
        %v4824 = vpop.f32.mrb[0].mxu0
        %v4825 = vadd.f32 0.0, %v4824
        %v4826 = vpop.f32.mrb[0].mxu0
        %4827 = vmatprep.mubr.f32.mxu0 %v4441
        %4828 = vmatmul.mubr.f32.gmra.mrb[0].mxu0 %v4439
        %v4829 = vpop.f32.mrb[0].mxu0
        %v4830 = vadd.f32 0.0, %v4829
        %v4831 = vpop.f32.mrb[0].mxu0
        %4832 = vmatprep.mubr.f32.mxu0 %v4445
        %4833 = vmatmul.mubr.f32.gmra.mrb[0].mxu0 %v4443
        %v4834 = vpop.f32.mrb[0].mxu0
        %v4835 = vadd.f32 0.0, %v4834
        %v4836 = vpop.f32.mrb[0].mxu0
        %4837 = vmatprep.mubr.f32.mxu0 %v4449
        %4838 = vmatmul.mubr.f32.gmra.mrb[0].mxu0 %v4447
        %v4839 = vpop.f32.mrb[0].mxu0
        %v4840 = vadd.f32 0.0, %v4839
        %v4841 = vpop.f32.mrb[0].mxu0
        %4842 = vmatprep.mubr.f32.mxu0 %v4453
        %4843 = vmatmul.mubr.f32.gmra.mrb[0].mxu0 %v4451
        %v4844 = vpop.f32.mrb[0].mxu0
        %v4845 = vadd.f32 0.0, %v4844
        %v4846 = vpop.f32.mrb[0].mxu0
        %4847 = vmatprep.mubr.f32.mxu0 %v4457
        %4848 = vmatmul.mubr.f32.gmra.mrb[0].mxu0 %v4455
        %v4849 = vpop.f32.mrb[0].mxu0
        %v4850 = vadd.f32 0.0, %v4849
        %v4851 = vpop.f32.mrb[0].mxu0
        %4852 = vmatprep.mubr.f32.mxu0 %v4461
        %4853 = vmatmul.mubr.f32.gmra.mrb[0].mxu0 %v4459
        %v4854 = vpop.f32.mrb[0].mxu0
        %v4855 = vadd.f32 0.0, %v4854
        %v4856 = vpop.f32.mrb[0].mxu0
        %4857 = vmatprep.mubr.f32.mxu0 %v4465
        %4858 = vmatmul.mubr.f32.gmra.mrb[0].mxu0 %v4463
        %v4859 = vpop.f32.mrb[0].mxu0
        %v4860 = vadd.f32 0.0, %v4859
        %v4861 = vpop.f32.mrb[0].mxu0
        %4862 = vmatprep.mubr.f32.mxu0 %v4469
        %4863 = vmatmul.mubr.f32.gmra.mrb[0].mxu0 %v4467
        %v4864 = vpop.f32.mrb[0].mxu0
        %v4865 = vadd.f32 0.0, %v4864
        %v4866 = vpop.f32.mrb[0].mxu0
        %4867 = vmatprep.mubr.f32.mxu0 %v4473
        %4868 = vmatmul.mubr.f32.gmra.mrb[0].mxu0 %v4471
        %v4869 = vpop.f32.mrb[0].mxu0
        %v4870 = vadd.f32 0.0, %v4869
        %v4871 = vpop.f32.mrb[0].mxu0
        %4872 = vmatprep.mubr.f32.mxu0 %v4477
        %4873 = vmatmul.mubr.f32.gmra.mrb[0].mxu0 %v4475
        %v4874 = vpop.f32.mrb[0].mxu0
        %v4875 = vadd.f32 0.0, %v4874
        %v4876 = vpop.f32.mrb[0].mxu0
        %4877 = vmatprep.mubr.f32.mxu0 %v4481
        %4878 = vmatmul.mubr.f32.gmra.mrb[0].mxu0 %v4479
        %v4879 = vpop.f32.mrb[0].mxu0
        %v4880 = vadd.f32 0.0, %v4879
        %v4881 = vpop.f32.mrb[0].mxu0
        %4882 = vmatprep.mubr.f32.mxu0 %v4485
        %4883 = vmatmul.mubr.f32.gmra.mrb[0].mxu0 %v4483
        %v4884 = vpop.f32.mrb[0].mxu0
        %v4885 = vadd.f32 0.0, %v4884
        %v4886 = vpop.f32.mrb[0].mxu0
        %4887 = vmatprep.mubr.f32.mxu0 %v4489
        %4888 = vmatmul.mubr.f32.gmra.mrb[0].mxu0 %v4487
        %v4889 = vpop.f32.mrb[0].mxu0
        %v4890 = vadd.f32 0.0, %v4889
        %v4891 = vpop.f32.mrb[0].mxu0
        %4892 = vmatprep.mubr.f32.mxu0 %v4493
        %4893 = vmatmul.mubr.f32.gmra.mrb[0].mxu0 %v4491
        %v4894 = vpop.f32.mrb[0].mxu0
        %v4895 = vadd.f32 0.0, %v4894
        %v4896 = vpop.f32.mrb[0].mxu0
        %4897 = vmatprep.mubr.f32.mxu0 %v4497
        %4898 = vmatmul.mubr.f32.gmra.mrb[0].mxu0 %v4495
        %v4899 = vpop.f32.mrb[0].mxu0
        %v4900 = vadd.f32 0.0, %v4899
        %v4901 = vpop.f32.mrb[0].mxu0
        %4902 = vmatprep.mubr.f32.mxu0 %v4501
        %4903 = vmatmul.mubr.f32.gmra.mrb[0].mxu0 %v4499
        %v4904 = vpop.f32.mrb[0].mxu0
        %v4905 = vadd.f32 0.0, %v4904
        %v4906 = vpop.f32.mrb[0].mxu0
        %4907 = vmatprep.mubr.f32.mxu0 %v4505
        %4908 = vmatmul.mubr.f32.gmra.mrb[0].mxu0 %v4503
        %v4909 = vpop.f32.mrb[0].mxu0
        %v4910 = vadd.f32 0.0, %v4909
        %v4911 = vpop.f32.mrb[0].mxu0
        %4912 = vmatprep.mubr.f32.mxu0 %v4509
        %4913 = vmatmul.mubr.f32.gmra.mrb[0].mxu0 %v4507
        %v4914 = vpop.f32.mrb[0].mxu0
        %v4915 = vadd.f32 0.0, %v4914
        %v4916 = vpop.f32.mrb[0].mxu0
        %4917 = vmatprep.mubr.f32.mxu0 %v4513
        %4918 = vmatmul.mubr.f32.gmra.mrb[0].mxu0 %v4511
        %v4919 = vpop.f32.mrb[0].mxu0
        %v4920 = vadd.f32 0.0, %v4919
        %v4921 = vpop.f32.mrb[0].mxu0
        %4922 = vmatprep.mubr.f32.mxu0 %v4517
        %4923 = vmatmul.mubr.f32.gmra.mrb[0].mxu0 %v4515
        %v4924 = vpop.f32.mrb[0].mxu0
        %v4925 = vadd.f32 0.0, %v4924
        %v4926 = vpop.f32.mrb[0].mxu0
        %4927 = vmatprep.mubr.f32.mxu0 %v4521
        %4928 = vmatmul.mubr.f32.gmra.mrb[0].mxu0 %v4519
        %v4929 = vpop.f32.mrb[0].mxu0
        %v4930 = vadd.f32 0.0, %v4929
        %v4931 = vpop.f32.mrb[0].mxu0
        %4932 = vmatprep.mubr.f32.mxu0 %v4525
        %4933 = vmatmul.mubr.f32.gmra.mrb[0].mxu0 %v4523
        %v4934 = vpop.f32.mrb[0].mxu0
        %v4935 = vadd.f32 0.0, %v4934
        %v4936 = vpop.f32.mrb[0].mxu0
        %4937 = vmatprep.mubr.f32.mxu0 %v4529
        %4938 = vmatmul.mubr.f32.gmra.mrb[0].mxu0 %v4527
        %v4939 = vpop.f32.mrb[0].mxu0
        %v4940 = vadd.f32 0.0, %v4939
        %v4941 = vpop.f32.mrb[0].mxu0
        %4942 = vmatprep.mubr.f32.mxu0 %v4533
        %4943 = vmatmul.mubr.f32.gmra.mrb[0].mxu0 %v4531
        %v4944 = vpop.f32.mrb[0].mxu0
        %v4945 = vadd.f32 0.0, %v4944
        %v4946 = vpop.f32.mrb[0].mxu0
        %4947 = vmatprep.mubr.f32.mxu0 %v4537
        %4948 = vmatmul.mubr.f32.gmra.mrb[0].mxu0 %v4535
        %v4949 = vpop.f32.mrb[0].mxu0
        %v4950 = vadd.f32 0.0, %v4949
        %v4951 = vpop.f32.mrb[0].mxu0
        %4952 = vmatprep.mubr.f32.mxu0 %v4541
        %4953 = vmatmul.mubr.f32.gmra.mrb[0].mxu0 %v4539
        %v4954 = vpop.f32.mrb[0].mxu0
        %v4955 = vadd.f32 0.0, %v4954
        %v4956 = vpop.f32.mrb[0].mxu0
        %4957 = vmatprep.mubr.f32.mxu0 %v4545
        %4958 = vmatmul.mubr.f32.gmra.mrb[0].mxu0 %v4543
        %v4959 = vpop.f32.mrb[0].mxu0
        %v4960 = vadd.f32 0.0, %v4959
        %v4961 = vpop.f32.mrb[0].mxu0
        %4962 = vdwg.mxu0
        %v4963 = vrcp.pop %v4548
        %v4964 = vrcp.pop %v4551
        %v4965 = vrcp.pop %v4554
        %v4966 = vrcp.pop %v4557
        %v4967 = vrcp.pop %v4560
        %v4968 = vrcp.pop %v4563
        %v4969 = vrcp.pop %v4566
        %v4970 = vrcp.pop %v4569
        %v4971 = vrcp.pop %v4572
        %v4972 = vrcp.pop %v4575
        %v4973 = vrcp.pop %v4578
        %v4974 = vrcp.pop %v4581
        %v4975 = vrcp.pop %v4584
        %v4976 = vrcp.pop %v4587
        %v4977 = vrcp.pop %v4590
        %v4978 = vrcp.pop %v4593
        %v4979 = vrcp.pop %v4596
        %v4980 = vrcp.pop %v4599
        %v4981 = vrcp.pop %v4602
        %v4982 = vrcp.pop %v4605
        %v4983 = vrcp.pop %v4608
        %v4984 = vrcp.pop %v4611
        %v4985 = vrcp.pop %v4614
        %v4986 = vrcp.pop %v4617
        %v4987 = vrcp.pop %v4620
        %v4988 = vrcp.pop %v4623
        %v4989 = vrcp.pop %v4626
        %v4990 = vrcp.pop %v4629
        %v4991 = vrcp.pop %v4632
        %v4992 = vrcp.pop %v4635
        %v4993 = vrcp.pop %v4638
        %v4994 = vrcp.pop %v4641
        %v4995 = vmul.f32 %v4805, %v4963
        %v4996 = vmul.f32 %v4810, %v4964
        %v4997 = vmul.f32 %v4815, %v4965
        %v4998 = vmul.f32 %v4820, %v4966
        %v4999 = vmul.f32 %v4825, %v4967
        %v5000 = vmul.f32 %v4830, %v4968
        %v5001 = vmul.f32 %v4835, %v4969
        %v5002 = vmul.f32 %v4840, %v4970
        %v5003 = vmul.f32 %v4845, %v4971
        %v5004 = vmul.f32 %v4850, %v4972
        %v5005 = vmul.f32 %v4855, %v4973
        %v5006 = vmul.f32 %v4860, %v4974
        %v5007 = vmul.f32 %v4865, %v4975
        %v5008 = vmul.f32 %v4870, %v4976
        %v5009 = vmul.f32 %v4875, %v4977
        %v5010 = vmul.f32 %v4880, %v4978
        %v5011 = vmul.f32 %v4885, %v4979
        %v5012 = vmul.f32 %v4890, %v4980
        %v5013 = vmul.f32 %v4895, %v4981
        %v5014 = vmul.f32 %v4900, %v4982
        %v5015 = vmul.f32 %v4905, %v4983
        %v5016 = vmul.f32 %v4910, %v4984
        %v5017 = vmul.f32 %v4915, %v4985
        %v5018 = vmul.f32 %v4920, %v4986
        %v5019 = vmul.f32 %v4925, %v4987
        %v5020 = vmul.f32 %v4930, %v4988
        %v5021 = vmul.f32 %v4935, %v4989
        %v5022 = vmul.f32 %v4940, %v4990
        %v5023 = vmul.f32 %v4945, %v4991
        %v5024 = vmul.f32 %v4950, %v4992
        %v5025 = vmul.f32 %v4955, %v4993
        %v5026 = vmul.f32 %v4960, %v4994
        %5059 = vrot.lane.b32.xlu0 %v4995, 16
        %v5060 = vpop.permute.xlu0 %5059
        %5061 = vrot.lane.b32.xlu0 %v4996, 16
        %v5062 = vpop.permute.xlu0 %5061
        %5063 = vrot.lane.b32.xlu0 %v4997, 16
        %v5064 = vpop.permute.xlu0 %5063
        %5065 = vrot.lane.b32.xlu0 %v4998, 16
        %v5066 = vpop.permute.xlu0 %5065
        %5067 = vrot.lane.b32.xlu0 %v4999, 16
        %v5068 = vpop.permute.xlu0 %5067
        %5069 = vrot.lane.b32.xlu0 %v5000, 16
        %v5070 = vpop.permute.xlu0 %5069
        %5071 = vrot.lane.b32.xlu0 %v5001, 16
        %v5072 = vpop.permute.xlu0 %5071
        %5073 = vrot.lane.b32.xlu0 %v5002, 16
        %v5074 = vpop.permute.xlu0 %5073
        %5075 = vrot.lane.b32.xlu0 %v5003, 16
        %v5076 = vpop.permute.xlu0 %5075
        %5077 = vrot.lane.b32.xlu0 %v5004, 16
        %v5078 = vpop.permute.xlu0 %5077
        %5079 = vrot.lane.b32.xlu0 %v5005, 16
        %v5080 = vpop.permute.xlu0 %5079
        %5081 = vrot.lane.b32.xlu0 %v5006, 16
        %v5082 = vpop.permute.xlu0 %5081
        %5083 = vrot.lane.b32.xlu0 %v5007, 16
        %v5084 = vpop.permute.xlu0 %5083
        %5085 = vrot.lane.b32.xlu0 %v5008, 16
        %v5086 = vpop.permute.xlu0 %5085
        %5087 = vrot.lane.b32.xlu0 %v5009, 16
        %v5088 = vpop.permute.xlu0 %5087
        %5089 = vrot.lane.b32.xlu0 %v5010, 16
        %v5090 = vpop.permute.xlu0 %5089
        %5091 = vrot.lane.b32.xlu0 %v5011, 16
        %v5092 = vpop.permute.xlu0 %5091
        %5093 = vrot.lane.b32.xlu0 %v5012, 16
        %v5094 = vpop.permute.xlu0 %5093
        %5095 = vrot.lane.b32.xlu0 %v5013, 16
        %v5096 = vpop.permute.xlu0 %5095
        %5097 = vrot.lane.b32.xlu0 %v5014, 16
        %v5098 = vpop.permute.xlu0 %5097
        %5099 = vrot.lane.b32.xlu0 %v5015, 16
        %v5100 = vpop.permute.xlu0 %5099
        %5101 = vrot.lane.b32.xlu0 %v5016, 16
        %v5102 = vpop.permute.xlu0 %5101
        %5103 = vrot.lane.b32.xlu0 %v5017, 16
        %v5104 = vpop.permute.xlu0 %5103
        %5105 = vrot.lane.b32.xlu0 %v5018, 16
        %v5106 = vpop.permute.xlu0 %5105
        %5107 = vrot.lane.b32.xlu0 %v5019, 16
        %v5108 = vpop.permute.xlu0 %5107
        %5109 = vrot.lane.b32.xlu0 %v5020, 16
        %v5110 = vpop.permute.xlu0 %5109
        %5111 = vrot.lane.b32.xlu0 %v5021, 16
        %v5112 = vpop.permute.xlu0 %5111
        %5113 = vrot.lane.b32.xlu0 %v5022, 16
        %v5114 = vpop.permute.xlu0 %5113
        %5115 = vrot.lane.b32.xlu0 %v5023, 16
        %v5116 = vpop.permute.xlu0 %5115
        %5117 = vrot.lane.b32.xlu0 %v5024, 16
        %v5118 = vpop.permute.xlu0 %5117
        %5119 = vrot.lane.b32.xlu0 %v5025, 16
        %v5120 = vpop.permute.xlu0 %5119
        %5121 = vrot.lane.b32.xlu0 %v5026, 16
        %v5122 = vpop.permute.xlu0 %5121
        %vm5155 = vcmask 195712
        %5156 = vst.msk [vmem:[#allocation3] sm:$0xff] %vm5155, %v5060
        %5157 = vst.msk [vmem:[#allocation3 + $0x8] sm:$0xff] %vm5155, %v5062
        %5158 = vst.msk [vmem:[#allocation3 + $0x10] sm:$0xff] %vm5155, %v5064
        %5159 = vst.msk [vmem:[#allocation3 + $0x18] sm:$0xff] %vm5155, %v5066
        %5160 = vst.msk [vmem:[#allocation3 + $0x20] sm:$0xff] %vm5155, %v5068
        %5161 = vst.msk [vmem:[#allocation3 + $0x28] sm:$0xff] %vm5155, %v5070
        %5162 = vst.msk [vmem:[#allocation3 + $0x30] sm:$0xff] %vm5155, %v5072
        %5163 = vst.msk [vmem:[#allocation3 + $0x38] sm:$0xff] %vm5155, %v5074
        %5164 = vst.msk [vmem:[#allocation3 + $0x40] sm:$0xff] %vm5155, %v5076
        %5165 = vst.msk [vmem:[#allocation3 + $0x48] sm:$0xff] %vm5155, %v5078
        %5166 = vst.msk [vmem:[#allocation3 + $0x50] sm:$0xff] %vm5155, %v5080
        %5167 = vst.msk [vmem:[#allocation3 + $0x58] sm:$0xff] %vm5155, %v5082
        %5168 = vst.msk [vmem:[#allocation3 + $0x60] sm:$0xff] %vm5155, %v5084
        %5169 = vst.msk [vmem:[#allocation3 + $0x68] sm:$0xff] %vm5155, %v5086
        %5170 = vst.msk [vmem:[#allocation3 + $0x70] sm:$0xff] %vm5155, %v5088
        %5171 = vst.msk [vmem:[#allocation3 + $0x78] sm:$0xff] %vm5155, %v5090
        %5172 = vst.msk [vmem:[#allocation3 + $0x80] sm:$0xff] %vm5155, %v5092
        %5173 = vst.msk [vmem:[#allocation3 + $0x88] sm:$0xff] %vm5155, %v5094
        %5174 = vst.msk [vmem:[#allocation3 + $0x90] sm:$0xff] %vm5155, %v5096
        %5175 = vst.msk [vmem:[#allocation3 + $0x98] sm:$0xff] %vm5155, %v5098
        %5176 = vst.msk [vmem:[#allocation3 + $0xa0] sm:$0xff] %vm5155, %v5100
        %5177 = vst.msk [vmem:[#allocation3 + $0xa8] sm:$0xff] %vm5155, %v5102
        %5178 = vst.msk [vmem:[#allocation3 + $0xb0] sm:$0xff] %vm5155, %v5104
        %5179 = vst.msk [vmem:[#allocation3 + $0xb8] sm:$0xff] %vm5155, %v5106
        %5180 = vst.msk [vmem:[#allocation3 + $0xc0] sm:$0xff] %vm5155, %v5108
        %5181 = vst.msk [vmem:[#allocation3 + $0xc8] sm:$0xff] %vm5155, %v5110
        %5182 = vst.msk [vmem:[#allocation3 + $0xd0] sm:$0xff] %vm5155, %v5112
        %5183 = vst.msk [vmem:[#allocation3 + $0xd8] sm:$0xff] %vm5155, %v5114
        %5184 = vst.msk [vmem:[#allocation3 + $0xe0] sm:$0xff] %vm5155, %v5116
        %5185 = vst.msk [vmem:[#allocation3 + $0xe8] sm:$0xff] %vm5155, %v5118
        %5186 = vst.msk [vmem:[#allocation3 + $0xf0] sm:$0xff] %vm5155, %v5120
        %5187 = vst.msk [vmem:[#allocation3 + $0xf8] sm:$0xff] %vm5155, %v5122
        %v5188 = vld [vmem:[#allocation2] sm:$0xff]
        %v5189 = vld [vmem:[#allocation2 + $0x8] sm:$0xff]
        %v5190 = vld [vmem:[#allocation2 + $0x10] sm:$0xff]
        %v5191 = vld [vmem:[#allocation2 + $0x18] sm:$0xff]
        %v5192 = vld [vmem:[#allocation2 + $0x20] sm:$0xff]
        %v5193 = vld [vmem:[#allocation2 + $0x28] sm:$0xff]
        %v5194 = vld [vmem:[#allocation2 + $0x30] sm:$0xff]
        %v5195 = vld [vmem:[#allocation2 + $0x38] sm:$0xff]
        %v5196 = vld [vmem:[#allocation2 + $0x40] sm:$0xff]
        %v5197 = vld [vmem:[#allocation2 + $0x48] sm:$0xff]
        %v5198 = vld [vmem:[#allocation2 + $0x50] sm:$0xff]
        %v5199 = vld [vmem:[#allocation2 + $0x58] sm:$0xff]
        %v5200 = vld [vmem:[#allocation2 + $0x60] sm:$0xff]
        %v5201 = vld [vmem:[#allocation2 + $0x68] sm:$0xff]
        %v5202 = vld [vmem:[#allocation2 + $0x70] sm:$0xff]
        %v5203 = vld [vmem:[#allocation2 + $0x78] sm:$0xff]
        %v5204 = vld [vmem:[#allocation2 + $0x80] sm:$0xff]
        %v5205 = vld [vmem:[#allocation2 + $0x88] sm:$0xff]
        %v5206 = vld [vmem:[#allocation2 + $0x90] sm:$0xff]
        %v5207 = vld [vmem:[#allocation2 + $0x98] sm:$0xff]
        %v5208 = vld [vmem:[#allocation2 + $0xa0] sm:$0xff]
        %v5209 = vld [vmem:[#allocation2 + $0xa8] sm:$0xff]
        %v5210 = vld [vmem:[#allocation2 + $0xb0] sm:$0xff]
        %v5211 = vld [vmem:[#allocation2 + $0xb8] sm:$0xff]
        %v5212 = vld [vmem:[#allocation2 + $0xc0] sm:$0xff]
        %v5213 = vld [vmem:[#allocation2 + $0xc8] sm:$0xff]
        %v5214 = vld [vmem:[#allocation2 + $0xd0] sm:$0xff]
        %v5215 = vld [vmem:[#allocation2 + $0xd8] sm:$0xff]
        %v5216 = vld [vmem:[#allocation2 + $0xe0] sm:$0xff]
        %v5217 = vld [vmem:[#allocation2 + $0xe8] sm:$0xff]
        %v5218 = vld [vmem:[#allocation2 + $0xf0] sm:$0xff]
        %v5219 = vld [vmem:[#allocation2 + $0xf8] sm:$0xff]
        %s5220 = scalar_lea.vmem [#allocation4], 1536
        %v5221 = vld [vmem:[%s5220] sm:$0xff]
        %v5222 = vld [vmem:[%s5220 + $0x8] sm:$0xff]
        %v5223 = vld [vmem:[%s5220 + $0x10] sm:$0xff]
        %v5224 = vld [vmem:[%s5220 + $0x18] sm:$0xff]
        %v5225 = vld [vmem:[%s5220 + $0x20] sm:$0xff]
        %v5226 = vld [vmem:[%s5220 + $0x28] sm:$0xff]
        %v5227 = vld [vmem:[%s5220 + $0x30] sm:$0xff]
        %v5228 = vld [vmem:[%s5220 + $0x38] sm:$0xff]
        %v5229 = vld [vmem:[%s5220 + $0x40] sm:$0xff]
        %v5230 = vld [vmem:[%s5220 + $0x48] sm:$0xff]
        %v5231 = vld [vmem:[%s5220 + $0x50] sm:$0xff]
        %v5232 = vld [vmem:[%s5220 + $0x58] sm:$0xff]
        %v5233 = vld [vmem:[%s5220 + $0x60] sm:$0xff]
        %v5234 = vld [vmem:[%s5220 + $0x68] sm:$0xff]
        %v5235 = vld [vmem:[%s5220 + $0x70] sm:$0xff]
        %v5236 = vld [vmem:[%s5220 + $0x78] sm:$0xff]
        %v5237 = vld [vmem:[%s5220 + $0x80] sm:$0xff]
        %v5238 = vld [vmem:[%s5220 + $0x88] sm:$0xff]
        %v5239 = vld [vmem:[%s5220 + $0x90] sm:$0xff]
        %v5240 = vld [vmem:[%s5220 + $0x98] sm:$0xff]
        %v5241 = vld [vmem:[%s5220 + $0xa0] sm:$0xff]
        %v5242 = vld [vmem:[%s5220 + $0xa8] sm:$0xff]
        %v5243 = vld [vmem:[%s5220 + $0xb0] sm:$0xff]
        %v5244 = vld [vmem:[%s5220 + $0xb8] sm:$0xff]
        %v5245 = vld [vmem:[%s5220 + $0xc0] sm:$0xff]
        %v5246 = vld [vmem:[%s5220 + $0xc8] sm:$0xff]
        %v5247 = vld [vmem:[%s5220 + $0xd0] sm:$0xff]
        %v5248 = vld [vmem:[%s5220 + $0xd8] sm:$0xff]
        %v5249 = vld [vmem:[%s5220 + $0xe0] sm:$0xff]
        %v5250 = vld [vmem:[%s5220 + $0xe8] sm:$0xff]
        %v5251 = vld [vmem:[%s5220 + $0xf0] sm:$0xff]
        %v5252 = vld [vmem:[%s5220 + $0xf8] sm:$0xff]
        %v5253 = vld [vmem:[%s5220 + $0x100] sm:$0xff]
        %v5254 = vld [vmem:[%s5220 + $0x108] sm:$0xff]
        %v5255 = vld [vmem:[%s5220 + $0x110] sm:$0xff]
        %v5256 = vld [vmem:[%s5220 + $0x118] sm:$0xff]
        %v5257 = vld [vmem:[%s5220 + $0x120] sm:$0xff]
        %v5258 = vld [vmem:[%s5220 + $0x128] sm:$0xff]
        %v5259 = vld [vmem:[%s5220 + $0x130] sm:$0xff]
        %v5260 = vld [vmem:[%s5220 + $0x138] sm:$0xff]
        %v5261 = vld [vmem:[%s5220 + $0x140] sm:$0xff]
        %v5262 = vld [vmem:[%s5220 + $0x148] sm:$0xff]
        %v5263 = vld [vmem:[%s5220 + $0x150] sm:$0xff]
        %v5264 = vld [vmem:[%s5220 + $0x158] sm:$0xff]
        %v5265 = vld [vmem:[%s5220 + $0x160] sm:$0xff]
        %v5266 = vld [vmem:[%s5220 + $0x168] sm:$0xff]
        %v5267 = vld [vmem:[%s5220 + $0x170] sm:$0xff]
        %v5268 = vld [vmem:[%s5220 + $0x178] sm:$0xff]
        %v5269 = vld [vmem:[%s5220 + $0x180] sm:$0xff]
        %v5270 = vld [vmem:[%s5220 + $0x188] sm:$0xff]
        %v5271 = vld [vmem:[%s5220 + $0x190] sm:$0xff]
        %v5272 = vld [vmem:[%s5220 + $0x198] sm:$0xff]
        %v5273 = vld [vmem:[%s5220 + $0x1a0] sm:$0xff]
        %v5274 = vld [vmem:[%s5220 + $0x1a8] sm:$0xff]
        %v5275 = vld [vmem:[%s5220 + $0x1b0] sm:$0xff]
        %v5276 = vld [vmem:[%s5220 + $0x1b8] sm:$0xff]
        %v5277 = vld [vmem:[%s5220 + $0x1c0] sm:$0xff]
        %v5278 = vld [vmem:[%s5220 + $0x1c8] sm:$0xff]
        %v5279 = vld [vmem:[%s5220 + $0x1d0] sm:$0xff]
        %v5280 = vld [vmem:[%s5220 + $0x1d8] sm:$0xff]
        %v5281 = vld [vmem:[%s5220 + $0x1e0] sm:$0xff]
        %v5282 = vld [vmem:[%s5220 + $0x1e8] sm:$0xff]
        %v5283 = vld [vmem:[%s5220 + $0x1f0] sm:$0xff]
        %v5284 = vld [vmem:[%s5220 + $0x1f8] sm:$0xff]
        %5317 = vrot.lane.b32.xlu0 %v5188, 104
        %v5318 = vpop.permute.xlu0 %5317
        %5319 = vrot.lane.b32.xlu0 %v5189, 104
        %v5320 = vpop.permute.xlu0 %5319
        %5321 = vrot.lane.b32.xlu0 %v5190, 104
        %v5322 = vpop.permute.xlu0 %5321
        %5323 = vrot.lane.b32.xlu0 %v5191, 104
        %v5324 = vpop.permute.xlu0 %5323
        %5325 = vrot.lane.b32.xlu0 %v5192, 104
        %v5326 = vpop.permute.xlu0 %5325
        %5327 = vrot.lane.b32.xlu0 %v5193, 104
        %v5328 = vpop.permute.xlu0 %5327
        %5329 = vrot.lane.b32.xlu0 %v5194, 104
        %v5330 = vpop.permute.xlu0 %5329
        %5331 = vrot.lane.b32.xlu0 %v5195, 104
        %v5332 = vpop.permute.xlu0 %5331
        %5333 = vrot.lane.b32.xlu0 %v5196, 104
        %v5334 = vpop.permute.xlu0 %5333
        %5335 = vrot.lane.b32.xlu0 %v5197, 104
        %v5336 = vpop.permute.xlu0 %5335
        %5337 = vrot.lane.b32.xlu0 %v5198, 104
        %v5338 = vpop.permute.xlu0 %5337
        %5339 = vrot.lane.b32.xlu0 %v5199, 104
        %v5340 = vpop.permute.xlu0 %5339
        %5341 = vrot.lane.b32.xlu0 %v5200, 104
        %v5342 = vpop.permute.xlu0 %5341
        %5343 = vrot.lane.b32.xlu0 %v5201, 104
        %v5344 = vpop.permute.xlu0 %5343
        %5345 = vrot.lane.b32.xlu0 %v5202, 104
        %v5346 = vpop.permute.xlu0 %5345
        %5347 = vrot.lane.b32.xlu0 %v5203, 104
        %v5348 = vpop.permute.xlu0 %5347
        %5349 = vrot.lane.b32.xlu0 %v5204, 104
        %v5350 = vpop.permute.xlu0 %5349
        %5351 = vrot.lane.b32.xlu0 %v5205, 104
        %v5352 = vpop.permute.xlu0 %5351
        %5353 = vrot.lane.b32.xlu0 %v5206, 104
        %v5354 = vpop.permute.xlu0 %5353
        %5355 = vrot.lane.b32.xlu0 %v5207, 104
        %v5356 = vpop.permute.xlu0 %5355
        %5357 = vrot.lane.b32.xlu0 %v5208, 104
        %v5358 = vpop.permute.xlu0 %5357
        %5359 = vrot.lane.b32.xlu0 %v5209, 104
        %v5360 = vpop.permute.xlu0 %5359
        %5361 = vrot.lane.b32.xlu0 %v5210, 104
        %v5362 = vpop.permute.xlu0 %5361
        %5363 = vrot.lane.b32.xlu0 %v5211, 104
        %v5364 = vpop.permute.xlu0 %5363
        %5365 = vrot.lane.b32.xlu0 %v5212, 104
        %v5366 = vpop.permute.xlu0 %5365
        %5367 = vrot.lane.b32.xlu0 %v5213, 104
        %v5368 = vpop.permute.xlu0 %5367
        %5369 = vrot.lane.b32.xlu0 %v5214, 104
        %v5370 = vpop.permute.xlu0 %5369
        %5371 = vrot.lane.b32.xlu0 %v5215, 104
        %v5372 = vpop.permute.xlu0 %5371
        %5373 = vrot.lane.b32.xlu0 %v5216, 104
        %v5374 = vpop.permute.xlu0 %5373
        %5375 = vrot.lane.b32.xlu0 %v5217, 104
        %v5376 = vpop.permute.xlu0 %5375
        %5377 = vrot.lane.b32.xlu0 %v5218, 104
        %v5378 = vpop.permute.xlu0 %5377
        %5379 = vrot.lane.b32.xlu0 %v5219, 104
        %v5380 = vpop.permute.xlu0 %5379
        %5381 = vrot.lane.b32.xlu0 %v5188, 72
        %v5382 = vpop.permute.xlu0 %5381
        %5383 = vrot.lane.b32.xlu0 %v5189, 72
        %v5384 = vpop.permute.xlu0 %5383
        %5385 = vrot.lane.b32.xlu0 %v5190, 72
        %v5386 = vpop.permute.xlu0 %5385
        %5387 = vrot.lane.b32.xlu0 %v5191, 72
        %v5388 = vpop.permute.xlu0 %5387
        %5389 = vrot.lane.b32.xlu0 %v5192, 72
        %v5390 = vpop.permute.xlu0 %5389
        %5391 = vrot.lane.b32.xlu0 %v5193, 72
        %v5392 = vpop.permute.xlu0 %5391
        %5393 = vrot.lane.b32.xlu0 %v5194, 72
        %v5394 = vpop.permute.xlu0 %5393
        %5395 = vrot.lane.b32.xlu0 %v5195, 72
        %v5396 = vpop.permute.xlu0 %5395
        %5397 = vrot.lane.b32.xlu0 %v5196, 72
        %v5398 = vpop.permute.xlu0 %5397
        %5399 = vrot.lane.b32.xlu0 %v5197, 72
        %v5400 = vpop.permute.xlu0 %5399
        %5401 = vrot.lane.b32.xlu0 %v5198, 72
        %v5402 = vpop.permute.xlu0 %5401
        %5403 = vrot.lane.b32.xlu0 %v5199, 72
        %v5404 = vpop.permute.xlu0 %5403
        %5405 = vrot.lane.b32.xlu0 %v5200, 72
        %v5406 = vpop.permute.xlu0 %5405
        %5407 = vrot.lane.b32.xlu0 %v5201, 72
        %v5408 = vpop.permute.xlu0 %5407
        %5409 = vrot.lane.b32.xlu0 %v5202, 72
        %v5410 = vpop.permute.xlu0 %5409
        %5411 = vrot.lane.b32.xlu0 %v5203, 72
        %v5412 = vpop.permute.xlu0 %5411
        %5413 = vrot.lane.b32.xlu0 %v5204, 72
        %v5414 = vpop.permute.xlu0 %5413
        %5415 = vrot.lane.b32.xlu0 %v5205, 72
        %v5416 = vpop.permute.xlu0 %5415
        %5417 = vrot.lane.b32.xlu0 %v5206, 72
        %v5418 = vpop.permute.xlu0 %5417
        %5419 = vrot.lane.b32.xlu0 %v5207, 72
        %v5420 = vpop.permute.xlu0 %5419
        %5421 = vrot.lane.b32.xlu0 %v5208, 72
        %v5422 = vpop.permute.xlu0 %5421
        %5423 = vrot.lane.b32.xlu0 %v5209, 72
        %v5424 = vpop.permute.xlu0 %5423
        %5425 = vrot.lane.b32.xlu0 %v5210, 72
        %v5426 = vpop.permute.xlu0 %5425
        %5427 = vrot.lane.b32.xlu0 %v5211, 72
        %v5428 = vpop.permute.xlu0 %5427
        %5429 = vrot.lane.b32.xlu0 %v5212, 72
        %v5430 = vpop.permute.xlu0 %5429
        %5431 = vrot.lane.b32.xlu0 %v5213, 72
        %v5432 = vpop.permute.xlu0 %5431
        %5433 = vrot.lane.b32.xlu0 %v5214, 72
        %v5434 = vpop.permute.xlu0 %5433
        %5435 = vrot.lane.b32.xlu0 %v5215, 72
        %v5436 = vpop.permute.xlu0 %5435
        %5437 = vrot.lane.b32.xlu0 %v5216, 72
        %v5438 = vpop.permute.xlu0 %5437
        %5439 = vrot.lane.b32.xlu0 %v5217, 72
        %v5440 = vpop.permute.xlu0 %5439
        %5441 = vrot.lane.b32.xlu0 %v5218, 72
        %v5442 = vpop.permute.xlu0 %5441
        %5443 = vrot.lane.b32.xlu0 %v5219, 72
        %v5444 = vpop.permute.xlu0 %5443
        %v5445 = vsel %vm857, %v5318, 0
        %v5447 = vsel %vm857, %v5320, 0
        %v5449 = vsel %vm857, %v5322, 0
        %v5451 = vsel %vm857, %v5324, 0
        %v5453 = vsel %vm857, %v5326, 0
        %v5455 = vsel %vm857, %v5328, 0
        %v5457 = vsel %vm857, %v5330, 0
        %v5459 = vsel %vm857, %v5332, 0
        %v5461 = vsel %vm857, %v5334, 0
        %v5463 = vsel %vm857, %v5336, 0
        %v5465 = vsel %vm857, %v5338, 0
        %v5467 = vsel %vm857, %v5340, 0
        %v5469 = vsel %vm857, %v5342, 0
        %v5471 = vsel %vm857, %v5344, 0
        %v5473 = vsel %vm857, %v5346, 0
        %v5475 = vsel %vm857, %v5348, 0
        %v5477 = vsel %vm857, %v5350, 0
        %v5479 = vsel %vm857, %v5352, 0
        %v5481 = vsel %vm857, %v5354, 0
        %v5483 = vsel %vm857, %v5356, 0
        %v5485 = vsel %vm857, %v5358, 0
        %v5487 = vsel %vm857, %v5360, 0
        %v5489 = vsel %vm857, %v5362, 0
        %v5491 = vsel %vm857, %v5364, 0
        %v5493 = vsel %vm857, %v5366, 0
        %v5495 = vsel %vm857, %v5368, 0
        %v5497 = vsel %vm857, %v5370, 0
        %v5499 = vsel %vm857, %v5372, 0
        %v5501 = vsel %vm857, %v5374, 0
        %v5503 = vsel %vm857, %v5376, 0
        %v5505 = vsel %vm857, %v5378, 0
        %v5507 = vsel %vm857, %v5380, 0
        %v5509 = vsel %vm857, %v5382, 0
        %v5511 = vsel %vm857, %v5384, 0
        %v5513 = vsel %vm857, %v5386, 0
        %v5515 = vsel %vm857, %v5388, 0
        %v5517 = vsel %vm857, %v5390, 0
        %v5519 = vsel %vm857, %v5392, 0
        %v5521 = vsel %vm857, %v5394, 0
        %v5523 = vsel %vm857, %v5396, 0
        %v5525 = vsel %vm857, %v5398, 0
        %v5527 = vsel %vm857, %v5400, 0
        %v5529 = vsel %vm857, %v5402, 0
        %v5531 = vsel %vm857, %v5404, 0
        %v5533 = vsel %vm857, %v5406, 0
        %v5535 = vsel %vm857, %v5408, 0
        %v5537 = vsel %vm857, %v5410, 0
        %v5539 = vsel %vm857, %v5412, 0
        %v5541 = vsel %vm857, %v5414, 0
        %v5543 = vsel %vm857, %v5416, 0
        %v5545 = vsel %vm857, %v5418, 0
        %v5547 = vsel %vm857, %v5420, 0
        %v5549 = vsel %vm857, %v5422, 0
        %v5551 = vsel %vm857, %v5424, 0
        %v5553 = vsel %vm857, %v5426, 0
        %v5555 = vsel %vm857, %v5428, 0
        %v5557 = vsel %vm857, %v5430, 0
        %v5559 = vsel %vm857, %v5432, 0
        %v5561 = vsel %vm857, %v5434, 0
        %v5563 = vsel %vm857, %v5436, 0
        %v5565 = vsel %vm857, %v5438, 0
        %v5567 = vsel %vm857, %v5440, 0
        %v5569 = vsel %vm857, %v5442, 0
        %v5571 = vsel %vm857, %v5444, 0
        %5573 = vmatprep.subr.mxu0 0.0
        %5574 = vmatpush1.xpose.msra.mxu0 %v5509
        %5575 = vmatprep.subr.mxu0 0.0
        %5576 = vmatpush1.xpose.msra.mxu0 %v5511
        %5577 = vmatprep.subr.mxu0 0.0
        %5578 = vmatpush1.xpose.msra.mxu0 %v5513
        %5579 = vmatprep.subr.mxu0 0.0
        %5580 = vmatpush1.xpose.msra.mxu0 %v5515
        %5581 = vmatprep.subr.mxu0 0.0
        %5582 = vmatpush1.xpose.msra.mxu0 %v5517
        %5583 = vmatprep.subr.mxu0 0.0
        %5584 = vmatpush1.xpose.msra.mxu0 %v5519
        %5585 = vmatprep.subr.mxu0 0.0
        %5586 = vmatpush1.xpose.msra.mxu0 %v5521
        %5587 = vmatprep.subr.mxu0 0.0
        %5588 = vmatpush1.xpose.msra.mxu0 %v5523
        %5589 = vmatprep.subr.mxu0 0.0
        %5590 = vmatpush1.xpose.msra.mxu0 %v5525
        %5591 = vmatprep.subr.mxu0 0.0
        %5592 = vmatpush1.xpose.msra.mxu0 %v5527
        %5593 = vmatprep.subr.mxu0 0.0
        %5594 = vmatpush1.xpose.msra.mxu0 %v5529
        %5595 = vmatprep.subr.mxu0 0.0
        %5596 = vmatpush1.xpose.msra.mxu0 %v5531
        %5597 = vmatprep.subr.mxu0 0.0
        %5598 = vmatpush1.xpose.msra.mxu0 %v5533
        %5599 = vmatprep.subr.mxu0 0.0
        %5600 = vmatpush1.xpose.msra.mxu0 %v5535
        %5601 = vmatprep.subr.mxu0 0.0
        %5602 = vmatpush1.xpose.msra.mxu0 %v5537
        %5603 = vmatprep.subr.mxu0 0.0
        %5604 = vmatpush1.xpose.msra.mxu0 %v5539
        %5605 = vmatprep.subr.mxu0 0.0
        %5606 = vmatpush1.xpose.msra.mxu0 %v5541
        %5607 = vmatprep.subr.mxu0 0.0
        %5608 = vmatpush1.xpose.msra.mxu0 %v5543
        %5609 = vmatprep.subr.mxu0 0.0
        %5610 = vmatpush1.xpose.msra.mxu0 %v5545
        %5611 = vmatprep.subr.mxu0 0.0
        %5612 = vmatpush1.xpose.msra.mxu0 %v5547
        %5613 = vmatprep.subr.mxu0 0.0
        %5614 = vmatpush1.xpose.msra.mxu0 %v5549
        %5615 = vmatprep.subr.mxu0 0.0
        %5616 = vmatpush1.xpose.msra.mxu0 %v5551
        %5617 = vmatprep.subr.mxu0 0.0
        %5618 = vmatpush1.xpose.msra.mxu0 %v5553
        %5619 = vmatprep.subr.mxu0 0.0
        %5620 = vmatpush1.xpose.msra.mxu0 %v5555
        %5621 = vmatprep.subr.mxu0 0.0
        %5622 = vmatpush1.xpose.msra.mxu0 %v5557
        %5623 = vmatprep.subr.mxu0 0.0
        %5624 = vmatpush1.xpose.msra.mxu0 %v5559
        %5625 = vmatprep.subr.mxu0 0.0
        %5626 = vmatpush1.xpose.msra.mxu0 %v5561
        %5627 = vmatprep.subr.mxu0 0.0
        %5628 = vmatpush1.xpose.msra.mxu0 %v5563
        %5629 = vmatprep.subr.mxu0 0.0
        %5630 = vmatpush1.xpose.msra.mxu0 %v5565
        %5631 = vmatprep.subr.mxu0 0.0
        %5632 = vmatpush1.xpose.msra.mxu0 %v5567
        %5633 = vmatprep.subr.mxu0 0.0
        %5634 = vmatpush1.xpose.msra.mxu0 %v5569
        %5635 = vmatprep.subr.mxu0 0.0
        %5636 = vmatpush1.xpose.msra.mxu0 %v5571
        %5637 = vmatprep.mubr.f32.mxu0 0.0
        %5638 = vmatmul.mubr.f32.gmra.mrb[0].mxu0 %v5445
        %v5639 = vpop.f32.mrb[0].mxu0
        %v5640 = vadd.f32 %v5221, %v5639
        %v5641 = vpop.f32.mrb[0].mxu0
        %v5642 = vadd.f32 %v5222, %v5641
        %5643 = vmatprep.mubr.f32.mxu0 0.0
        %5644 = vmatmul.mubr.f32.gmra.mrb[0].mxu0 %v5447
        %v5645 = vpop.f32.mrb[0].mxu0
        %v5646 = vadd.f32 %v5223, %v5645
        %v5647 = vpop.f32.mrb[0].mxu0
        %v5648 = vadd.f32 %v5224, %v5647
        %5649 = vmatprep.mubr.f32.mxu0 0.0
        %5650 = vmatmul.mubr.f32.gmra.mrb[0].mxu0 %v5449
        %v5651 = vpop.f32.mrb[0].mxu0
        %v5652 = vadd.f32 %v5225, %v5651
        %v5653 = vpop.f32.mrb[0].mxu0
        %v5654 = vadd.f32 %v5226, %v5653
        %5655 = vmatprep.mubr.f32.mxu0 0.0
        %5656 = vmatmul.mubr.f32.gmra.mrb[0].mxu0 %v5451
        %v5657 = vpop.f32.mrb[0].mxu0
        %v5658 = vadd.f32 %v5227, %v5657
        %v5659 = vpop.f32.mrb[0].mxu0
        %v5660 = vadd.f32 %v5228, %v5659
        %5661 = vmatprep.mubr.f32.mxu0 0.0
        %5662 = vmatmul.mubr.f32.gmra.mrb[0].mxu0 %v5453
        %v5663 = vpop.f32.mrb[0].mxu0
        %v5664 = vadd.f32 %v5229, %v5663
        %v5665 = vpop.f32.mrb[0].mxu0
        %v5666 = vadd.f32 %v5230, %v5665
        %5667 = vmatprep.mubr.f32.mxu0 0.0
        %5668 = vmatmul.mubr.f32.gmra.mrb[0].mxu0 %v5455
        %v5669 = vpop.f32.mrb[0].mxu0
        %v5670 = vadd.f32 %v5231, %v5669
        %v5671 = vpop.f32.mrb[0].mxu0
        %v5672 = vadd.f32 %v5232, %v5671
        %5673 = vmatprep.mubr.f32.mxu0 0.0
        %5674 = vmatmul.mubr.f32.gmra.mrb[0].mxu0 %v5457
        %v5675 = vpop.f32.mrb[0].mxu0
        %v5676 = vadd.f32 %v5233, %v5675
        %v5677 = vpop.f32.mrb[0].mxu0
        %v5678 = vadd.f32 %v5234, %v5677
        %5679 = vmatprep.mubr.f32.mxu0 0.0
        %5680 = vmatmul.mubr.f32.gmra.mrb[0].mxu0 %v5459
        %v5681 = vpop.f32.mrb[0].mxu0
        %v5682 = vadd.f32 %v5235, %v5681
        %v5683 = vpop.f32.mrb[0].mxu0
        %v5684 = vadd.f32 %v5236, %v5683
        %5685 = vmatprep.mubr.f32.mxu0 0.0
        %5686 = vmatmul.mubr.f32.gmra.mrb[0].mxu0 %v5461
        %v5687 = vpop.f32.mrb[0].mxu0
        %v5688 = vadd.f32 %v5237, %v5687
        %v5689 = vpop.f32.mrb[0].mxu0
        %v5690 = vadd.f32 %v5238, %v5689
        %5691 = vmatprep.mubr.f32.mxu0 0.0
        %5692 = vmatmul.mubr.f32.gmra.mrb[0].mxu0 %v5463
        %v5693 = vpop.f32.mrb[0].mxu0
        %v5694 = vadd.f32 %v5239, %v5693
        %v5695 = vpop.f32.mrb[0].mxu0
        %v5696 = vadd.f32 %v5240, %v5695
        %5697 = vmatprep.mubr.f32.mxu0 0.0
        %5698 = vmatmul.mubr.f32.gmra.mrb[0].mxu0 %v5465
        %v5699 = vpop.f32.mrb[0].mxu0
        %v5700 = vadd.f32 %v5241, %v5699
        %v5701 = vpop.f32.mrb[0].mxu0
        %v5702 = vadd.f32 %v5242, %v5701
        %5703 = vmatprep.mubr.f32.mxu0 0.0
        %5704 = vmatmul.mubr.f32.gmra.mrb[0].mxu0 %v5467
        %v5705 = vpop.f32.mrb[0].mxu0
        %v5706 = vadd.f32 %v5243, %v5705
        %v5707 = vpop.f32.mrb[0].mxu0
        %v5708 = vadd.f32 %v5244, %v5707
        %5709 = vmatprep.mubr.f32.mxu0 0.0
        %5710 = vmatmul.mubr.f32.gmra.mrb[0].mxu0 %v5469
        %v5711 = vpop.f32.mrb[0].mxu0
        %v5712 = vadd.f32 %v5245, %v5711
        %v5713 = vpop.f32.mrb[0].mxu0
        %v5714 = vadd.f32 %v5246, %v5713
        %5715 = vmatprep.mubr.f32.mxu0 0.0
        %5716 = vmatmul.mubr.f32.gmra.mrb[0].mxu0 %v5471
        %v5717 = vpop.f32.mrb[0].mxu0
        %v5718 = vadd.f32 %v5247, %v5717
        %v5719 = vpop.f32.mrb[0].mxu0
        %v5720 = vadd.f32 %v5248, %v5719
        %5721 = vmatprep.mubr.f32.mxu0 0.0
        %5722 = vmatmul.mubr.f32.gmra.mrb[0].mxu0 %v5473
        %v5723 = vpop.f32.mrb[0].mxu0
        %v5724 = vadd.f32 %v5249, %v5723
        %v5725 = vpop.f32.mrb[0].mxu0
        %v5726 = vadd.f32 %v5250, %v5725
        %5727 = vmatprep.mubr.f32.mxu0 0.0
        %5728 = vmatmul.mubr.f32.gmra.mrb[0].mxu0 %v5475
        %v5729 = vpop.f32.mrb[0].mxu0
        %v5730 = vadd.f32 %v5251, %v5729
        %v5731 = vpop.f32.mrb[0].mxu0
        %v5732 = vadd.f32 %v5252, %v5731
        %5733 = vmatprep.mubr.f32.mxu0 0.0
        %5734 = vmatmul.mubr.f32.gmra.mrb[0].mxu0 %v5477
        %v5735 = vpop.f32.mrb[0].mxu0
        %v5736 = vadd.f32 %v5253, %v5735
        %v5737 = vpop.f32.mrb[0].mxu0
        %v5738 = vadd.f32 %v5254, %v5737
        %5739 = vmatprep.mubr.f32.mxu0 0.0
        %5740 = vmatmul.mubr.f32.gmra.mrb[0].mxu0 %v5479
        %v5741 = vpop.f32.mrb[0].mxu0
        %v5742 = vadd.f32 %v5255, %v5741
        %v5743 = vpop.f32.mrb[0].mxu0
        %v5744 = vadd.f32 %v5256, %v5743
        %5745 = vmatprep.mubr.f32.mxu0 0.0
        %5746 = vmatmul.mubr.f32.gmra.mrb[0].mxu0 %v5481
        %v5747 = vpop.f32.mrb[0].mxu0
        %v5748 = vadd.f32 %v5257, %v5747
        %v5749 = vpop.f32.mrb[0].mxu0
        %v5750 = vadd.f32 %v5258, %v5749
        %5751 = vmatprep.mubr.f32.mxu0 0.0
        %5752 = vmatmul.mubr.f32.gmra.mrb[0].mxu0 %v5483
        %v5753 = vpop.f32.mrb[0].mxu0
        %v5754 = vadd.f32 %v5259, %v5753
        %v5755 = vpop.f32.mrb[0].mxu0
        %v5756 = vadd.f32 %v5260, %v5755
        %5757 = vmatprep.mubr.f32.mxu0 0.0
        %5758 = vmatmul.mubr.f32.gmra.mrb[0].mxu0 %v5485
        %v5759 = vpop.f32.mrb[0].mxu0
        %v5760 = vadd.f32 %v5261, %v5759
        %v5761 = vpop.f32.mrb[0].mxu0
        %v5762 = vadd.f32 %v5262, %v5761
        %5763 = vmatprep.mubr.f32.mxu0 0.0
        %5764 = vmatmul.mubr.f32.gmra.mrb[0].mxu0 %v5487
        %v5765 = vpop.f32.mrb[0].mxu0
        %v5766 = vadd.f32 %v5263, %v5765
        %v5767 = vpop.f32.mrb[0].mxu0
        %v5768 = vadd.f32 %v5264, %v5767
        %5769 = vmatprep.mubr.f32.mxu0 0.0
        %5770 = vmatmul.mubr.f32.gmra.mrb[0].mxu0 %v5489
        %v5771 = vpop.f32.mrb[0].mxu0
        %v5772 = vadd.f32 %v5265, %v5771
        %v5773 = vpop.f32.mrb[0].mxu0
        %v5774 = vadd.f32 %v5266, %v5773
        %5775 = vmatprep.mubr.f32.mxu0 0.0
        %5776 = vmatmul.mubr.f32.gmra.mrb[0].mxu0 %v5491
        %v5777 = vpop.f32.mrb[0].mxu0
        %v5778 = vadd.f32 %v5267, %v5777
        %v5779 = vpop.f32.mrb[0].mxu0
        %v5780 = vadd.f32 %v5268, %v5779
        %5781 = vmatprep.mubr.f32.mxu0 0.0
        %5782 = vmatmul.mubr.f32.gmra.mrb[0].mxu0 %v5493
        %v5783 = vpop.f32.mrb[0].mxu0
        %v5784 = vadd.f32 %v5269, %v5783
        %v5785 = vpop.f32.mrb[0].mxu0
        %v5786 = vadd.f32 %v5270, %v5785
        %5787 = vmatprep.mubr.f32.mxu0 0.0
        %5788 = vmatmul.mubr.f32.gmra.mrb[0].mxu0 %v5495
        %v5789 = vpop.f32.mrb[0].mxu0
        %v5790 = vadd.f32 %v5271, %v5789
        %v5791 = vpop.f32.mrb[0].mxu0
        %v5792 = vadd.f32 %v5272, %v5791
        %5793 = vmatprep.mubr.f32.mxu0 0.0
        %5794 = vmatmul.mubr.f32.gmra.mrb[0].mxu0 %v5497
        %v5795 = vpop.f32.mrb[0].mxu0
        %v5796 = vadd.f32 %v5273, %v5795
        %v5797 = vpop.f32.mrb[0].mxu0
        %v5798 = vadd.f32 %v5274, %v5797
        %5799 = vmatprep.mubr.f32.mxu0 0.0
        %5800 = vmatmul.mubr.f32.gmra.mrb[0].mxu0 %v5499
        %v5801 = vpop.f32.mrb[0].mxu0
        %v5802 = vadd.f32 %v5275, %v5801
        %v5803 = vpop.f32.mrb[0].mxu0
        %v5804 = vadd.f32 %v5276, %v5803
        %5805 = vmatprep.mubr.f32.mxu0 0.0
        %5806 = vmatmul.mubr.f32.gmra.mrb[0].mxu0 %v5501
        %v5807 = vpop.f32.mrb[0].mxu0
        %v5808 = vadd.f32 %v5277, %v5807
        %v5809 = vpop.f32.mrb[0].mxu0
        %v5810 = vadd.f32 %v5278, %v5809
        %5811 = vmatprep.mubr.f32.mxu0 0.0
        %5812 = vmatmul.mubr.f32.gmra.mrb[0].mxu0 %v5503
        %v5813 = vpop.f32.mrb[0].mxu0
        %v5814 = vadd.f32 %v5279, %v5813
        %v5815 = vpop.f32.mrb[0].mxu0
        %v5816 = vadd.f32 %v5280, %v5815
        %5817 = vmatprep.mubr.f32.mxu0 0.0
        %5818 = vmatmul.mubr.f32.gmra.mrb[0].mxu0 %v5505
        %v5819 = vpop.f32.mrb[0].mxu0
        %v5820 = vadd.f32 %v5281, %v5819
        %v5821 = vpop.f32.mrb[0].mxu0
        %v5822 = vadd.f32 %v5282, %v5821
        %5823 = vmatprep.mubr.f32.mxu0 0.0
        %5824 = vmatmul.mubr.f32.gmra.mrb[0].mxu0 %v5507
        %v5825 = vpop.f32.mrb[0].mxu0
        %v5826 = vadd.f32 %v5283, %v5825
        %v5827 = vpop.f32.mrb[0].mxu0
        %v5828 = vadd.f32 %v5284, %v5827
        %5829 = vdwg.mxu0
        %v5830 = vmax.f32 %v5640, %v5642
        %5831 = vmax.xlane.f32.xlu0 %v5830
        %v5832 = vpop.xlane.xlu0 %5831
        %v5833 = vmax.f32 %v5646, %v5648
        %5834 = vmax.xlane.f32.xlu0 %v5833
        %v5835 = vpop.xlane.xlu0 %5834
        %v5836 = vmax.f32 %v5652, %v5654
        %5837 = vmax.xlane.f32.xlu0 %v5836
        %v5838 = vpop.xlane.xlu0 %5837
        %v5839 = vmax.f32 %v5658, %v5660
        %5840 = vmax.xlane.f32.xlu0 %v5839
        %v5841 = vpop.xlane.xlu0 %5840
        %v5842 = vmax.f32 %v5664, %v5666
        %5843 = vmax.xlane.f32.xlu0 %v5842
        %v5844 = vpop.xlane.xlu0 %5843
        %v5845 = vmax.f32 %v5670, %v5672
        %5846 = vmax.xlane.f32.xlu0 %v5845
        %v5847 = vpop.xlane.xlu0 %5846
        %v5848 = vmax.f32 %v5676, %v5678
        %5849 = vmax.xlane.f32.xlu0 %v5848
        %v5850 = vpop.xlane.xlu0 %5849
        %v5851 = vmax.f32 %v5682, %v5684
        %5852 = vmax.xlane.f32.xlu0 %v5851
        %v5853 = vpop.xlane.xlu0 %5852
        %v5854 = vmax.f32 %v5688, %v5690
        %5855 = vmax.xlane.f32.xlu0 %v5854
        %v5856 = vpop.xlane.xlu0 %5855
        %v5857 = vmax.f32 %v5694, %v5696
        %5858 = vmax.xlane.f32.xlu0 %v5857
        %v5859 = vpop.xlane.xlu0 %5858
        %v5860 = vmax.f32 %v5700, %v5702
        %5861 = vmax.xlane.f32.xlu0 %v5860
        %v5862 = vpop.xlane.xlu0 %5861
        %v5863 = vmax.f32 %v5706, %v5708
        %5864 = vmax.xlane.f32.xlu0 %v5863
        %v5865 = vpop.xlane.xlu0 %5864
        %v5866 = vmax.f32 %v5712, %v5714
        %5867 = vmax.xlane.f32.xlu0 %v5866
        %v5868 = vpop.xlane.xlu0 %5867
        %v5869 = vmax.f32 %v5718, %v5720
        %5870 = vmax.xlane.f32.xlu0 %v5869
        %v5871 = vpop.xlane.xlu0 %5870
        %v5872 = vmax.f32 %v5724, %v5726
        %5873 = vmax.xlane.f32.xlu0 %v5872
        %v5874 = vpop.xlane.xlu0 %5873
        %v5875 = vmax.f32 %v5730, %v5732
        %5876 = vmax.xlane.f32.xlu0 %v5875
        %v5877 = vpop.xlane.xlu0 %5876
        %v5878 = vmax.f32 %v5736, %v5738
        %5879 = vmax.xlane.f32.xlu0 %v5878
        %v5880 = vpop.xlane.xlu0 %5879
        %v5881 = vmax.f32 %v5742, %v5744
        %5882 = vmax.xlane.f32.xlu0 %v5881
        %v5883 = vpop.xlane.xlu0 %5882
        %v5884 = vmax.f32 %v5748, %v5750
        %5885 = vmax.xlane.f32.xlu0 %v5884
        %v5886 = vpop.xlane.xlu0 %5885
        %v5887 = vmax.f32 %v5754, %v5756
        %5888 = vmax.xlane.f32.xlu0 %v5887
        %v5889 = vpop.xlane.xlu0 %5888
        %v5890 = vmax.f32 %v5760, %v5762
        %5891 = vmax.xlane.f32.xlu0 %v5890
        %v5892 = vpop.xlane.xlu0 %5891
        %v5893 = vmax.f32 %v5766, %v5768
        %5894 = vmax.xlane.f32.xlu0 %v5893
        %v5895 = vpop.xlane.xlu0 %5894
        %v5896 = vmax.f32 %v5772, %v5774
        %5897 = vmax.xlane.f32.xlu0 %v5896
        %v5898 = vpop.xlane.xlu0 %5897
        %v5899 = vmax.f32 %v5778, %v5780
        %5900 = vmax.xlane.f32.xlu0 %v5899
        %v5901 = vpop.xlane.xlu0 %5900
        %v5902 = vmax.f32 %v5784, %v5786
        %5903 = vmax.xlane.f32.xlu0 %v5902
        %v5904 = vpop.xlane.xlu0 %5903
        %v5905 = vmax.f32 %v5790, %v5792
        %5906 = vmax.xlane.f32.xlu0 %v5905
        %v5907 = vpop.xlane.xlu0 %5906
        %v5908 = vmax.f32 %v5796, %v5798
        %5909 = vmax.xlane.f32.xlu0 %v5908
        %v5910 = vpop.xlane.xlu0 %5909
        %v5911 = vmax.f32 %v5802, %v5804
        %5912 = vmax.xlane.f32.xlu0 %v5911
        %v5913 = vpop.xlane.xlu0 %5912
        %v5914 = vmax.f32 %v5808, %v5810
        %5915 = vmax.xlane.f32.xlu0 %v5914
        %v5916 = vpop.xlane.xlu0 %5915
        %v5917 = vmax.f32 %v5814, %v5816
        %5918 = vmax.xlane.f32.xlu0 %v5917
        %v5919 = vpop.xlane.xlu0 %5918
        %v5920 = vmax.f32 %v5820, %v5822
        %5921 = vmax.xlane.f32.xlu0 %v5920
        %v5922 = vpop.xlane.xlu0 %5921
        %v5923 = vmax.f32 %v5826, %v5828
        %5924 = vmax.xlane.f32.xlu0 %v5923
        %v5925 = vpop.xlane.xlu0 %5924
        %v5926 = vsub.f32 %v5640, %v5832
        %v5927 = vsub.f32 %v5642, %v5832
        %v5928 = vsub.f32 %v5646, %v5835
        %v5929 = vsub.f32 %v5648, %v5835
        %v5930 = vsub.f32 %v5652, %v5838
        %v5931 = vsub.f32 %v5654, %v5838
        %v5932 = vsub.f32 %v5658, %v5841
        %v5933 = vsub.f32 %v5660, %v5841
        %v5934 = vsub.f32 %v5664, %v5844
        %v5935 = vsub.f32 %v5666, %v5844
        %v5936 = vsub.f32 %v5670, %v5847
        %v5937 = vsub.f32 %v5672, %v5847
        %v5938 = vsub.f32 %v5676, %v5850
        %v5939 = vsub.f32 %v5678, %v5850
        %v5940 = vsub.f32 %v5682, %v5853
        %v5941 = vsub.f32 %v5684, %v5853
        %v5942 = vsub.f32 %v5688, %v5856
        %v5943 = vsub.f32 %v5690, %v5856
        %v5944 = vsub.f32 %v5694, %v5859
        %v5945 = vsub.f32 %v5696, %v5859
        %v5946 = vsub.f32 %v5700, %v5862
        %v5947 = vsub.f32 %v5702, %v5862
        %v5948 = vsub.f32 %v5706, %v5865
        %v5949 = vsub.f32 %v5708, %v5865
        %v5950 = vsub.f32 %v5712, %v5868
        %v5951 = vsub.f32 %v5714, %v5868
        %v5952 = vsub.f32 %v5718, %v5871
        %v5953 = vsub.f32 %v5720, %v5871
        %v5954 = vsub.f32 %v5724, %v5874
        %v5955 = vsub.f32 %v5726, %v5874
        %v5956 = vsub.f32 %v5730, %v5877
        %v5957 = vsub.f32 %v5732, %v5877
        %v5958 = vsub.f32 %v5736, %v5880
        %v5959 = vsub.f32 %v5738, %v5880
        %v5960 = vsub.f32 %v5742, %v5883
        %v5961 = vsub.f32 %v5744, %v5883
        %v5962 = vsub.f32 %v5748, %v5886
        %v5963 = vsub.f32 %v5750, %v5886
        %v5964 = vsub.f32 %v5754, %v5889
        %v5965 = vsub.f32 %v5756, %v5889
        %v5966 = vsub.f32 %v5760, %v5892
        %v5967 = vsub.f32 %v5762, %v5892
        %v5968 = vsub.f32 %v5766, %v5895
        %v5969 = vsub.f32 %v5768, %v5895
        %v5970 = vsub.f32 %v5772, %v5898
        %v5971 = vsub.f32 %v5774, %v5898
        %v5972 = vsub.f32 %v5778, %v5901
        %v5973 = vsub.f32 %v5780, %v5901
        %v5974 = vsub.f32 %v5784, %v5904
        %v5975 = vsub.f32 %v5786, %v5904
        %v5976 = vsub.f32 %v5790, %v5907
        %v5977 = vsub.f32 %v5792, %v5907
        %v5978 = vsub.f32 %v5796, %v5910
        %v5979 = vsub.f32 %v5798, %v5910
        %v5980 = vsub.f32 %v5802, %v5913
        %v5981 = vsub.f32 %v5804, %v5913
        %v5982 = vsub.f32 %v5808, %v5916
        %v5983 = vsub.f32 %v5810, %v5916
        %v5984 = vsub.f32 %v5814, %v5919
        %v5985 = vsub.f32 %v5816, %v5919
        %v5986 = vsub.f32 %v5820, %v5922
        %v5987 = vsub.f32 %v5822, %v5922
        %v5988 = vsub.f32 %v5826, %v5925
        %v5989 = vsub.f32 %v5828, %v5925
        %v5990 = vmul.f32 %v5926, 1.442695
        %v5991 = vpow.pop %v5990
        %v5992 = vmul.f32 %v5927, 1.442695
        %v5993 = vpow.pop %v5992
        %v5994 = vmul.f32 %v5928, 1.442695
        %v5995 = vpow.pop %v5994
        %v5996 = vmul.f32 %v5929, 1.442695
        %v5997 = vpow.pop %v5996
        %v5998 = vmul.f32 %v5930, 1.442695
        %v5999 = vpow.pop %v5998
        %v6000 = vmul.f32 %v5931, 1.442695
        %v6001 = vpow.pop %v6000
        %v6002 = vmul.f32 %v5932, 1.442695
        %v6003 = vpow.pop %v6002
        %v6004 = vmul.f32 %v5933, 1.442695
        %v6005 = vpow.pop %v6004
        %v6006 = vmul.f32 %v5934, 1.442695
        %v6007 = vpow.pop %v6006
        %v6008 = vmul.f32 %v5935, 1.442695
        %v6009 = vpow.pop %v6008
        %v6010 = vmul.f32 %v5936, 1.442695
        %v6011 = vpow.pop %v6010
        %v6012 = vmul.f32 %v5937, 1.442695
        %v6013 = vpow.pop %v6012
        %v6014 = vmul.f32 %v5938, 1.442695
        %v6015 = vpow.pop %v6014
        %v6016 = vmul.f32 %v5939, 1.442695
        %v6017 = vpow.pop %v6016
        %v6018 = vmul.f32 %v5940, 1.442695
        %v6019 = vpow.pop %v6018
        %v6020 = vmul.f32 %v5941, 1.442695
        %v6021 = vpow.pop %v6020
        %v6022 = vmul.f32 %v5942, 1.442695
        %v6023 = vpow.pop %v6022
        %v6024 = vmul.f32 %v5943, 1.442695
        %v6025 = vpow.pop %v6024
        %v6026 = vmul.f32 %v5944, 1.442695
        %v6027 = vpow.pop %v6026
        %v6028 = vmul.f32 %v5945, 1.442695
        %v6029 = vpow.pop %v6028
        %v6030 = vmul.f32 %v5946, 1.442695
        %v6031 = vpow.pop %v6030
        %v6032 = vmul.f32 %v5947, 1.442695
        %v6033 = vpow.pop %v6032
        %v6034 = vmul.f32 %v5948, 1.442695
        %v6035 = vpow.pop %v6034
        %v6036 = vmul.f32 %v5949, 1.442695
        %v6037 = vpow.pop %v6036
        %v6038 = vmul.f32 %v5950, 1.442695
        %v6039 = vpow.pop %v6038
        %v6040 = vmul.f32 %v5951, 1.442695
        %v6041 = vpow.pop %v6040
        %v6042 = vmul.f32 %v5952, 1.442695
        %v6043 = vpow.pop %v6042
        %v6044 = vmul.f32 %v5953, 1.442695
        %v6045 = vpow.pop %v6044
        %v6046 = vmul.f32 %v5954, 1.442695
        %v6047 = vpow.pop %v6046
        %v6048 = vmul.f32 %v5955, 1.442695
        %v6049 = vpow.pop %v6048
        %v6050 = vmul.f32 %v5956, 1.442695
        %v6051 = vpow.pop %v6050
        %v6052 = vmul.f32 %v5957, 1.442695
        %v6053 = vpow.pop %v6052
        %v6054 = vmul.f32 %v5958, 1.442695
        %v6055 = vpow.pop %v6054
        %v6056 = vmul.f32 %v5959, 1.442695
        %v6057 = vpow.pop %v6056
        %v6058 = vmul.f32 %v5960, 1.442695
        %v6059 = vpow.pop %v6058
        %v6060 = vmul.f32 %v5961, 1.442695
        %v6061 = vpow.pop %v6060
        %v6062 = vmul.f32 %v5962, 1.442695
        %v6063 = vpow.pop %v6062
        %v6064 = vmul.f32 %v5963, 1.442695
        %v6065 = vpow.pop %v6064
        %v6066 = vmul.f32 %v5964, 1.442695
        %v6067 = vpow.pop %v6066
        %v6068 = vmul.f32 %v5965, 1.442695
        %v6069 = vpow.pop %v6068
        %v6070 = vmul.f32 %v5966, 1.442695
        %v6071 = vpow.pop %v6070
        %v6072 = vmul.f32 %v5967, 1.442695
        %v6073 = vpow.pop %v6072
        %v6074 = vmul.f32 %v5968, 1.442695
        %v6075 = vpow.pop %v6074
        %v6076 = vmul.f32 %v5969, 1.442695
        %v6077 = vpow.pop %v6076
        %v6078 = vmul.f32 %v5970, 1.442695
        %v6079 = vpow.pop %v6078
        %v6080 = vmul.f32 %v5971, 1.442695
        %v6081 = vpow.pop %v6080
        %v6082 = vmul.f32 %v5972, 1.442695
        %v6083 = vpow.pop %v6082
        %v6084 = vmul.f32 %v5973, 1.442695
        %v6085 = vpow.pop %v6084
        %v6086 = vmul.f32 %v5974, 1.442695
        %v6087 = vpow.pop %v6086
        %v6088 = vmul.f32 %v5975, 1.442695
        %v6089 = vpow.pop %v6088
        %v6090 = vmul.f32 %v5976, 1.442695
        %v6091 = vpow.pop %v6090
        %v6092 = vmul.f32 %v5977, 1.442695
        %v6093 = vpow.pop %v6092
        %v6094 = vmul.f32 %v5978, 1.442695
        %v6095 = vpow.pop %v6094
        %v6096 = vmul.f32 %v5979, 1.442695
        %v6097 = vpow.pop %v6096
        %v6098 = vmul.f32 %v5980, 1.442695
        %v6099 = vpow.pop %v6098
        %v6100 = vmul.f32 %v5981, 1.442695
        %v6101 = vpow.pop %v6100
        %v6102 = vmul.f32 %v5982, 1.442695
        %v6103 = vpow.pop %v6102
        %v6104 = vmul.f32 %v5983, 1.442695
        %v6105 = vpow.pop %v6104
        %v6106 = vmul.f32 %v5984, 1.442695
        %v6107 = vpow.pop %v6106
        %v6108 = vmul.f32 %v5985, 1.442695
        %v6109 = vpow.pop %v6108
        %v6110 = vmul.f32 %v5986, 1.442695
        %v6111 = vpow.pop %v6110
        %v6112 = vmul.f32 %v5987, 1.442695
        %v6113 = vpow.pop %v6112
        %v6114 = vmul.f32 %v5988, 1.442695
        %v6115 = vpow.pop %v6114
        %v6116 = vmul.f32 %v5989, 1.442695
        %v6117 = vpow.pop %v6116
        %v6118 = vadd.f32 %v5991, %v5993
        %6119 = vadd.xlane.f32.xlu0 %v6118
        %v6120 = vpop.xlane.xlu0 %6119
        %v6121 = vadd.f32 %v5995, %v5997
        %6122 = vadd.xlane.f32.xlu0 %v6121
        %v6123 = vpop.xlane.xlu0 %6122
        %v6124 = vadd.f32 %v5999, %v6001
        %6125 = vadd.xlane.f32.xlu0 %v6124
        %v6126 = vpop.xlane.xlu0 %6125
        %v6127 = vadd.f32 %v6003, %v6005
        %6128 = vadd.xlane.f32.xlu0 %v6127
        %v6129 = vpop.xlane.xlu0 %6128
        %v6130 = vadd.f32 %v6007, %v6009
        %6131 = vadd.xlane.f32.xlu0 %v6130
        %v6132 = vpop.xlane.xlu0 %6131
        %v6133 = vadd.f32 %v6011, %v6013
        %6134 = vadd.xlane.f32.xlu0 %v6133
        %v6135 = vpop.xlane.xlu0 %6134
        %v6136 = vadd.f32 %v6015, %v6017
        %6137 = vadd.xlane.f32.xlu0 %v6136
        %v6138 = vpop.xlane.xlu0 %6137
        %v6139 = vadd.f32 %v6019, %v6021
        %6140 = vadd.xlane.f32.xlu0 %v6139
        %v6141 = vpop.xlane.xlu0 %6140
        %v6142 = vadd.f32 %v6023, %v6025
        %6143 = vadd.xlane.f32.xlu0 %v6142
        %v6144 = vpop.xlane.xlu0 %6143
        %v6145 = vadd.f32 %v6027, %v6029
        %6146 = vadd.xlane.f32.xlu0 %v6145
        %v6147 = vpop.xlane.xlu0 %6146
        %v6148 = vadd.f32 %v6031, %v6033
        %6149 = vadd.xlane.f32.xlu0 %v6148
        %v6150 = vpop.xlane.xlu0 %6149
        %v6151 = vadd.f32 %v6035, %v6037
        %6152 = vadd.xlane.f32.xlu0 %v6151
        %v6153 = vpop.xlane.xlu0 %6152
        %v6154 = vadd.f32 %v6039, %v6041
        %6155 = vadd.xlane.f32.xlu0 %v6154
        %v6156 = vpop.xlane.xlu0 %6155
        %v6157 = vadd.f32 %v6043, %v6045
        %6158 = vadd.xlane.f32.xlu0 %v6157
        %v6159 = vpop.xlane.xlu0 %6158
        %v6160 = vadd.f32 %v6047, %v6049
        %6161 = vadd.xlane.f32.xlu0 %v6160
        %v6162 = vpop.xlane.xlu0 %6161
        %v6163 = vadd.f32 %v6051, %v6053
        %6164 = vadd.xlane.f32.xlu0 %v6163
        %v6165 = vpop.xlane.xlu0 %6164
        %v6166 = vadd.f32 %v6055, %v6057
        %6167 = vadd.xlane.f32.xlu0 %v6166
        %v6168 = vpop.xlane.xlu0 %6167
        %v6169 = vadd.f32 %v6059, %v6061
        %6170 = vadd.xlane.f32.xlu0 %v6169
        %v6171 = vpop.xlane.xlu0 %6170
        %v6172 = vadd.f32 %v6063, %v6065
        %6173 = vadd.xlane.f32.xlu0 %v6172
        %v6174 = vpop.xlane.xlu0 %6173
        %v6175 = vadd.f32 %v6067, %v6069
        %6176 = vadd.xlane.f32.xlu0 %v6175
        %v6177 = vpop.xlane.xlu0 %6176
        %v6178 = vadd.f32 %v6071, %v6073
        %6179 = vadd.xlane.f32.xlu0 %v6178
        %v6180 = vpop.xlane.xlu0 %6179
        %v6181 = vadd.f32 %v6075, %v6077
        %6182 = vadd.xlane.f32.xlu0 %v6181
        %v6183 = vpop.xlane.xlu0 %6182
        %v6184 = vadd.f32 %v6079, %v6081
        %6185 = vadd.xlane.f32.xlu0 %v6184
        %v6186 = vpop.xlane.xlu0 %6185
        %v6187 = vadd.f32 %v6083, %v6085
        %6188 = vadd.xlane.f32.xlu0 %v6187
        %v6189 = vpop.xlane.xlu0 %6188
        %v6190 = vadd.f32 %v6087, %v6089
        %6191 = vadd.xlane.f32.xlu0 %v6190
        %v6192 = vpop.xlane.xlu0 %6191
        %v6193 = vadd.f32 %v6091, %v6093
        %6194 = vadd.xlane.f32.xlu0 %v6193
        %v6195 = vpop.xlane.xlu0 %6194
        %v6196 = vadd.f32 %v6095, %v6097
        %6197 = vadd.xlane.f32.xlu0 %v6196
        %v6198 = vpop.xlane.xlu0 %6197
        %v6199 = vadd.f32 %v6099, %v6101
        %6200 = vadd.xlane.f32.xlu0 %v6199
        %v6201 = vpop.xlane.xlu0 %6200
        %v6202 = vadd.f32 %v6103, %v6105
        %6203 = vadd.xlane.f32.xlu0 %v6202
        %v6204 = vpop.xlane.xlu0 %6203
        %v6205 = vadd.f32 %v6107, %v6109
        %6206 = vadd.xlane.f32.xlu0 %v6205
        %v6207 = vpop.xlane.xlu0 %6206
        %v6208 = vadd.f32 %v6111, %v6113
        %6209 = vadd.xlane.f32.xlu0 %v6208
        %v6210 = vpop.xlane.xlu0 %6209
        %v6211 = vadd.f32 %v6115, %v6117
        %6212 = vadd.xlane.f32.xlu0 %v6211
        %v6213 = vpop.xlane.xlu0 %6212
        %6214 = vrot.lane.b32.xlu0 %v5188, 40
        %v6215 = vpop.permute.xlu0 %6214
        %6216 = vrot.lane.b32.xlu0 %v5189, 40
        %v6217 = vpop.permute.xlu0 %6216
        %6218 = vrot.lane.b32.xlu0 %v5190, 40
        %v6219 = vpop.permute.xlu0 %6218
        %6220 = vrot.lane.b32.xlu0 %v5191, 40
        %v6221 = vpop.permute.xlu0 %6220
        %6222 = vrot.lane.b32.xlu0 %v5192, 40
        %v6223 = vpop.permute.xlu0 %6222
        %6224 = vrot.lane.b32.xlu0 %v5193, 40
        %v6225 = vpop.permute.xlu0 %6224
        %6226 = vrot.lane.b32.xlu0 %v5194, 40
        %v6227 = vpop.permute.xlu0 %6226
        %6228 = vrot.lane.b32.xlu0 %v5195, 40
        %v6229 = vpop.permute.xlu0 %6228
        %6230 = vrot.lane.b32.xlu0 %v5196, 40
        %v6231 = vpop.permute.xlu0 %6230
        %6232 = vrot.lane.b32.xlu0 %v5197, 40
        %v6233 = vpop.permute.xlu0 %6232
        %6234 = vrot.lane.b32.xlu0 %v5198, 40
        %v6235 = vpop.permute.xlu0 %6234
        %6236 = vrot.lane.b32.xlu0 %v5199, 40
        %v6237 = vpop.permute.xlu0 %6236
        %6238 = vrot.lane.b32.xlu0 %v5200, 40
        %v6239 = vpop.permute.xlu0 %6238
        %6240 = vrot.lane.b32.xlu0 %v5201, 40
        %v6241 = vpop.permute.xlu0 %6240
        %6242 = vrot.lane.b32.xlu0 %v5202, 40
        %v6243 = vpop.permute.xlu0 %6242
        %6244 = vrot.lane.b32.xlu0 %v5203, 40
        %v6245 = vpop.permute.xlu0 %6244
        %6246 = vrot.lane.b32.xlu0 %v5204, 40
        %v6247 = vpop.permute.xlu0 %6246
        %6248 = vrot.lane.b32.xlu0 %v5205, 40
        %v6249 = vpop.permute.xlu0 %6248
        %6250 = vrot.lane.b32.xlu0 %v5206, 40
        %v6251 = vpop.permute.xlu0 %6250
        %6252 = vrot.lane.b32.xlu0 %v5207, 40
        %v6253 = vpop.permute.xlu0 %6252
        %6254 = vrot.lane.b32.xlu0 %v5208, 40
        %v6255 = vpop.permute.xlu0 %6254
        %6256 = vrot.lane.b32.xlu0 %v5209, 40
        %v6257 = vpop.permute.xlu0 %6256
        %6258 = vrot.lane.b32.xlu0 %v5210, 40
        %v6259 = vpop.permute.xlu0 %6258
        %6260 = vrot.lane.b32.xlu0 %v5211, 40
        %v6261 = vpop.permute.xlu0 %6260
        %6262 = vrot.lane.b32.xlu0 %v5212, 40
        %v6263 = vpop.permute.xlu0 %6262
        %6264 = vrot.lane.b32.xlu0 %v5213, 40
        %v6265 = vpop.permute.xlu0 %6264
        %6266 = vrot.lane.b32.xlu0 %v5214, 40
        %v6267 = vpop.permute.xlu0 %6266
        %6268 = vrot.lane.b32.xlu0 %v5215, 40
        %v6269 = vpop.permute.xlu0 %6268
        %6270 = vrot.lane.b32.xlu0 %v5216, 40
        %v6271 = vpop.permute.xlu0 %6270
        %6272 = vrot.lane.b32.xlu0 %v5217, 40
        %v6273 = vpop.permute.xlu0 %6272
        %6274 = vrot.lane.b32.xlu0 %v5218, 40
        %v6275 = vpop.permute.xlu0 %6274
        %6276 = vrot.lane.b32.xlu0 %v5219, 40
        %v6277 = vpop.permute.xlu0 %6276
        %6310 = vmatprep.subr.mxu0 0.0
        %6311 = vmatpush1.msra.mxu0 %v6215
        %6312 = vmatprep.subr.mxu0 0.0
        %6313 = vmatpush1.msra.mxu0 %v6217
        %6314 = vmatprep.subr.mxu0 0.0
        %6315 = vmatpush1.msra.mxu0 %v6219
        %6316 = vmatprep.subr.mxu0 0.0
        %6317 = vmatpush1.msra.mxu0 %v6221
        %6318 = vmatprep.subr.mxu0 0.0
        %6319 = vmatpush1.msra.mxu0 %v6223
        %6320 = vmatprep.subr.mxu0 0.0
        %6321 = vmatpush1.msra.mxu0 %v6225
        %6322 = vmatprep.subr.mxu0 0.0
        %6323 = vmatpush1.msra.mxu0 %v6227
        %6324 = vmatprep.subr.mxu0 0.0
        %6325 = vmatpush1.msra.mxu0 %v6229
        %6326 = vmatprep.subr.mxu0 0.0
        %6327 = vmatpush1.msra.mxu0 %v6231
        %6328 = vmatprep.subr.mxu0 0.0
        %6329 = vmatpush1.msra.mxu0 %v6233
        %6330 = vmatprep.subr.mxu0 0.0
        %6331 = vmatpush1.msra.mxu0 %v6235
        %6332 = vmatprep.subr.mxu0 0.0
        %6333 = vmatpush1.msra.mxu0 %v6237
        %6334 = vmatprep.subr.mxu0 0.0
        %6335 = vmatpush1.msra.mxu0 %v6239
        %6336 = vmatprep.subr.mxu0 0.0
        %6337 = vmatpush1.msra.mxu0 %v6241
        %6338 = vmatprep.subr.mxu0 0.0
        %6339 = vmatpush1.msra.mxu0 %v6243
        %6340 = vmatprep.subr.mxu0 0.0
        %6341 = vmatpush1.msra.mxu0 %v6245
        %6342 = vmatprep.subr.mxu0 0.0
        %6343 = vmatpush1.msra.mxu0 %v6247
        %6344 = vmatprep.subr.mxu0 0.0
        %6345 = vmatpush1.msra.mxu0 %v6249
        %6346 = vmatprep.subr.mxu0 0.0
        %6347 = vmatpush1.msra.mxu0 %v6251
        %6348 = vmatprep.subr.mxu0 0.0
        %6349 = vmatpush1.msra.mxu0 %v6253
        %6350 = vmatprep.subr.mxu0 0.0
        %6351 = vmatpush1.msra.mxu0 %v6255
        %6352 = vmatprep.subr.mxu0 0.0
        %6353 = vmatpush1.msra.mxu0 %v6257
        %6354 = vmatprep.subr.mxu0 0.0
        %6355 = vmatpush1.msra.mxu0 %v6259
        %6356 = vmatprep.subr.mxu0 0.0
        %6357 = vmatpush1.msra.mxu0 %v6261
        %6358 = vmatprep.subr.mxu0 0.0
        %6359 = vmatpush1.msra.mxu0 %v6263
        %6360 = vmatprep.subr.mxu0 0.0
        %6361 = vmatpush1.msra.mxu0 %v6265
        %6362 = vmatprep.subr.mxu0 0.0
        %6363 = vmatpush1.msra.mxu0 %v6267
        %6364 = vmatprep.subr.mxu0 0.0
        %6365 = vmatpush1.msra.mxu0 %v6269
        %6366 = vmatprep.subr.mxu0 0.0
        %6367 = vmatpush1.msra.mxu0 %v6271
        %6368 = vmatprep.subr.mxu0 0.0
        %6369 = vmatpush1.msra.mxu0 %v6273
        %6370 = vmatprep.subr.mxu0 0.0
        %6371 = vmatpush1.msra.mxu0 %v6275
        %6372 = vmatprep.subr.mxu0 0.0
        %6373 = vmatpush1.msra.mxu0 %v6277
        %6374 = vmatprep.mubr.f32.mxu0 %v5993
        %6375 = vmatmul.mubr.f32.gmra.mrb[0].mxu0 %v5991
        %v6376 = vpop.f32.mrb[0].mxu0
        %v6377 = vadd.f32 0.0, %v6376
        %v6378 = vpop.f32.mrb[0].mxu0
        %6379 = vmatprep.mubr.f32.mxu0 %v5997
        %6380 = vmatmul.mubr.f32.gmra.mrb[0].mxu0 %v5995
        %v6381 = vpop.f32.mrb[0].mxu0
        %v6382 = vadd.f32 0.0, %v6381
        %v6383 = vpop.f32.mrb[0].mxu0
        %6384 = vmatprep.mubr.f32.mxu0 %v6001
        %6385 = vmatmul.mubr.f32.gmra.mrb[0].mxu0 %v5999
        %v6386 = vpop.f32.mrb[0].mxu0
        %v6387 = vadd.f32 0.0, %v6386
        %v6388 = vpop.f32.mrb[0].mxu0
        %6389 = vmatprep.mubr.f32.mxu0 %v6005
        %6390 = vmatmul.mubr.f32.gmra.mrb[0].mxu0 %v6003
        %v6391 = vpop.f32.mrb[0].mxu0
        %v6392 = vadd.f32 0.0, %v6391
        %v6393 = vpop.f32.mrb[0].mxu0
        %6394 = vmatprep.mubr.f32.mxu0 %v6009
        %6395 = vmatmul.mubr.f32.gmra.mrb[0].mxu0 %v6007
        %v6396 = vpop.f32.mrb[0].mxu0
        %v6397 = vadd.f32 0.0, %v6396
        %v6398 = vpop.f32.mrb[0].mxu0
        %6399 = vmatprep.mubr.f32.mxu0 %v6013
        %6400 = vmatmul.mubr.f32.gmra.mrb[0].mxu0 %v6011
        %v6401 = vpop.f32.mrb[0].mxu0
        %v6402 = vadd.f32 0.0, %v6401
        %v6403 = vpop.f32.mrb[0].mxu0
        %6404 = vmatprep.mubr.f32.mxu0 %v6017
        %6405 = vmatmul.mubr.f32.gmra.mrb[0].mxu0 %v6015
        %v6406 = vpop.f32.mrb[0].mxu0
        %v6407 = vadd.f32 0.0, %v6406
        %v6408 = vpop.f32.mrb[0].mxu0
        %6409 = vmatprep.mubr.f32.mxu0 %v6021
        %6410 = vmatmul.mubr.f32.gmra.mrb[0].mxu0 %v6019
        %v6411 = vpop.f32.mrb[0].mxu0
        %v6412 = vadd.f32 0.0, %v6411
        %v6413 = vpop.f32.mrb[0].mxu0
        %6414 = vmatprep.mubr.f32.mxu0 %v6025
        %6415 = vmatmul.mubr.f32.gmra.mrb[0].mxu0 %v6023
        %v6416 = vpop.f32.mrb[0].mxu0
        %v6417 = vadd.f32 0.0, %v6416
        %v6418 = vpop.f32.mrb[0].mxu0
        %6419 = vmatprep.mubr.f32.mxu0 %v6029
        %6420 = vmatmul.mubr.f32.gmra.mrb[0].mxu0 %v6027
        %v6421 = vpop.f32.mrb[0].mxu0
        %v6422 = vadd.f32 0.0, %v6421
        %v6423 = vpop.f32.mrb[0].mxu0
        %6424 = vmatprep.mubr.f32.mxu0 %v6033
        %6425 = vmatmul.mubr.f32.gmra.mrb[0].mxu0 %v6031
        %v6426 = vpop.f32.mrb[0].mxu0
        %v6427 = vadd.f32 0.0, %v6426
        %v6428 = vpop.f32.mrb[0].mxu0
        %6429 = vmatprep.mubr.f32.mxu0 %v6037
        %6430 = vmatmul.mubr.f32.gmra.mrb[0].mxu0 %v6035
        %v6431 = vpop.f32.mrb[0].mxu0
        %v6432 = vadd.f32 0.0, %v6431
        %v6433 = vpop.f32.mrb[0].mxu0
        %6434 = vmatprep.mubr.f32.mxu0 %v6041
        %6435 = vmatmul.mubr.f32.gmra.mrb[0].mxu0 %v6039
        %v6436 = vpop.f32.mrb[0].mxu0
        %v6437 = vadd.f32 0.0, %v6436
        %v6438 = vpop.f32.mrb[0].mxu0
        %6439 = vmatprep.mubr.f32.mxu0 %v6045
        %6440 = vmatmul.mubr.f32.gmra.mrb[0].mxu0 %v6043
        %v6441 = vpop.f32.mrb[0].mxu0
        %v6442 = vadd.f32 0.0, %v6441
        %v6443 = vpop.f32.mrb[0].mxu0
        %6444 = vmatprep.mubr.f32.mxu0 %v6049
        %6445 = vmatmul.mubr.f32.gmra.mrb[0].mxu0 %v6047
        %v6446 = vpop.f32.mrb[0].mxu0
        %v6447 = vadd.f32 0.0, %v6446
        %v6448 = vpop.f32.mrb[0].mxu0
        %6449 = vmatprep.mubr.f32.mxu0 %v6053
        %6450 = vmatmul.mubr.f32.gmra.mrb[0].mxu0 %v6051
        %v6451 = vpop.f32.mrb[0].mxu0
        %v6452 = vadd.f32 0.0, %v6451
        %v6453 = vpop.f32.mrb[0].mxu0
        %6454 = vmatprep.mubr.f32.mxu0 %v6057
        %6455 = vmatmul.mubr.f32.gmra.mrb[0].mxu0 %v6055
        %v6456 = vpop.f32.mrb[0].mxu0
        %v6457 = vadd.f32 0.0, %v6456
        %v6458 = vpop.f32.mrb[0].mxu0
        %6459 = vmatprep.mubr.f32.mxu0 %v6061
        %6460 = vmatmul.mubr.f32.gmra.mrb[0].mxu0 %v6059
        %v6461 = vpop.f32.mrb[0].mxu0
        %v6462 = vadd.f32 0.0, %v6461
        %v6463 = vpop.f32.mrb[0].mxu0
        %6464 = vmatprep.mubr.f32.mxu0 %v6065
        %6465 = vmatmul.mubr.f32.gmra.mrb[0].mxu0 %v6063
        %v6466 = vpop.f32.mrb[0].mxu0
        %v6467 = vadd.f32 0.0, %v6466
        %v6468 = vpop.f32.mrb[0].mxu0
        %6469 = vmatprep.mubr.f32.mxu0 %v6069
        %6470 = vmatmul.mubr.f32.gmra.mrb[0].mxu0 %v6067
        %v6471 = vpop.f32.mrb[0].mxu0
        %v6472 = vadd.f32 0.0, %v6471
        %v6473 = vpop.f32.mrb[0].mxu0
        %6474 = vmatprep.mubr.f32.mxu0 %v6073
        %6475 = vmatmul.mubr.f32.gmra.mrb[0].mxu0 %v6071
        %v6476 = vpop.f32.mrb[0].mxu0
        %v6477 = vadd.f32 0.0, %v6476
        %v6478 = vpop.f32.mrb[0].mxu0
        %6479 = vmatprep.mubr.f32.mxu0 %v6077
        %6480 = vmatmul.mubr.f32.gmra.mrb[0].mxu0 %v6075
        %v6481 = vpop.f32.mrb[0].mxu0
        %v6482 = vadd.f32 0.0, %v6481
        %v6483 = vpop.f32.mrb[0].mxu0
        %6484 = vmatprep.mubr.f32.mxu0 %v6081
        %6485 = vmatmul.mubr.f32.gmra.mrb[0].mxu0 %v6079
        %v6486 = vpop.f32.mrb[0].mxu0
        %v6487 = vadd.f32 0.0, %v6486
        %v6488 = vpop.f32.mrb[0].mxu0
        %6489 = vmatprep.mubr.f32.mxu0 %v6085
        %6490 = vmatmul.mubr.f32.gmra.mrb[0].mxu0 %v6083
        %v6491 = vpop.f32.mrb[0].mxu0
        %v6492 = vadd.f32 0.0, %v6491
        %v6493 = vpop.f32.mrb[0].mxu0
        %6494 = vmatprep.mubr.f32.mxu0 %v6089
        %6495 = vmatmul.mubr.f32.gmra.mrb[0].mxu0 %v6087
        %v6496 = vpop.f32.mrb[0].mxu0
        %v6497 = vadd.f32 0.0, %v6496
        %v6498 = vpop.f32.mrb[0].mxu0
        %6499 = vmatprep.mubr.f32.mxu0 %v6093
        %6500 = vmatmul.mubr.f32.gmra.mrb[0].mxu0 %v6091
        %v6501 = vpop.f32.mrb[0].mxu0
        %v6502 = vadd.f32 0.0, %v6501
        %v6503 = vpop.f32.mrb[0].mxu0
        %6504 = vmatprep.mubr.f32.mxu0 %v6097
        %6505 = vmatmul.mubr.f32.gmra.mrb[0].mxu0 %v6095
        %v6506 = vpop.f32.mrb[0].mxu0
        %v6507 = vadd.f32 0.0, %v6506
        %v6508 = vpop.f32.mrb[0].mxu0
        %6509 = vmatprep.mubr.f32.mxu0 %v6101
        %6510 = vmatmul.mubr.f32.gmra.mrb[0].mxu0 %v6099
        %v6511 = vpop.f32.mrb[0].mxu0
        %v6512 = vadd.f32 0.0, %v6511
        %v6513 = vpop.f32.mrb[0].mxu0
        %6514 = vmatprep.mubr.f32.mxu0 %v6105
        %6515 = vmatmul.mubr.f32.gmra.mrb[0].mxu0 %v6103
        %v6516 = vpop.f32.mrb[0].mxu0
        %v6517 = vadd.f32 0.0, %v6516
        %v6518 = vpop.f32.mrb[0].mxu0
        %6519 = vmatprep.mubr.f32.mxu0 %v6109
        %6520 = vmatmul.mubr.f32.gmra.mrb[0].mxu0 %v6107
        %v6521 = vpop.f32.mrb[0].mxu0
        %v6522 = vadd.f32 0.0, %v6521
        %v6523 = vpop.f32.mrb[0].mxu0
        %6524 = vmatprep.mubr.f32.mxu0 %v6113
        %6525 = vmatmul.mubr.f32.gmra.mrb[0].mxu0 %v6111
        %v6526 = vpop.f32.mrb[0].mxu0
        %v6527 = vadd.f32 0.0, %v6526
        %v6528 = vpop.f32.mrb[0].mxu0
        %6529 = vmatprep.mubr.f32.mxu0 %v6117
        %6530 = vmatmul.mubr.f32.gmra.mrb[0].mxu0 %v6115
        %v6531 = vpop.f32.mrb[0].mxu0
        %v6532 = vadd.f32 0.0, %v6531
        %v6533 = vpop.f32.mrb[0].mxu0
        %6534 = vdwg.mxu0
        %v6535 = vrcp.pop %v6120
        %v6536 = vrcp.pop %v6123
        %v6537 = vrcp.pop %v6126
        %v6538 = vrcp.pop %v6129
        %v6539 = vrcp.pop %v6132
        %v6540 = vrcp.pop %v6135
        %v6541 = vrcp.pop %v6138
        %v6542 = vrcp.pop %v6141
        %v6543 = vrcp.pop %v6144
        %v6544 = vrcp.pop %v6147
        %v6545 = vrcp.pop %v6150
        %v6546 = vrcp.pop %v6153
        %v6547 = vrcp.pop %v6156
        %v6548 = vrcp.pop %v6159
        %v6549 = vrcp.pop %v6162
        %v6550 = vrcp.pop %v6165
        %v6551 = vrcp.pop %v6168
        %v6552 = vrcp.pop %v6171
        %v6553 = vrcp.pop %v6174
        %v6554 = vrcp.pop %v6177
        %v6555 = vrcp.pop %v6180
        %v6556 = vrcp.pop %v6183
        %v6557 = vrcp.pop %v6186
        %v6558 = vrcp.pop %v6189
        %v6559 = vrcp.pop %v6192
        %v6560 = vrcp.pop %v6195
        %v6561 = vrcp.pop %v6198
        %v6562 = vrcp.pop %v6201
        %v6563 = vrcp.pop %v6204
        %v6564 = vrcp.pop %v6207
        %v6565 = vrcp.pop %v6210
        %v6566 = vrcp.pop %v6213
        %v6567 = vmul.f32 %v6377, %v6535
        %v6568 = vmul.f32 %v6382, %v6536
        %v6569 = vmul.f32 %v6387, %v6537
        %v6570 = vmul.f32 %v6392, %v6538
        %v6571 = vmul.f32 %v6397, %v6539
        %v6572 = vmul.f32 %v6402, %v6540
        %v6573 = vmul.f32 %v6407, %v6541
        %v6574 = vmul.f32 %v6412, %v6542
        %v6575 = vmul.f32 %v6417, %v6543
        %v6576 = vmul.f32 %v6422, %v6544
        %v6577 = vmul.f32 %v6427, %v6545
        %v6578 = vmul.f32 %v6432, %v6546
        %v6579 = vmul.f32 %v6437, %v6547
        %v6580 = vmul.f32 %v6442, %v6548
        %v6581 = vmul.f32 %v6447, %v6549
        %v6582 = vmul.f32 %v6452, %v6550
        %v6583 = vmul.f32 %v6457, %v6551
        %v6584 = vmul.f32 %v6462, %v6552
        %v6585 = vmul.f32 %v6467, %v6553
        %v6586 = vmul.f32 %v6472, %v6554
        %v6587 = vmul.f32 %v6477, %v6555
        %v6588 = vmul.f32 %v6482, %v6556
        %v6589 = vmul.f32 %v6487, %v6557
        %v6590 = vmul.f32 %v6492, %v6558
        %v6591 = vmul.f32 %v6497, %v6559
        %v6592 = vmul.f32 %v6502, %v6560
        %v6593 = vmul.f32 %v6507, %v6561
        %v6594 = vmul.f32 %v6512, %v6562
        %v6595 = vmul.f32 %v6517, %v6563
        %v6596 = vmul.f32 %v6522, %v6564
        %v6597 = vmul.f32 %v6527, %v6565
        %v6598 = vmul.f32 %v6532, %v6566
        %6631 = vrot.lane.b32.xlu0 %v6567, 24
        %v6632 = vpop.permute.xlu0 %6631
        %6633 = vrot.lane.b32.xlu0 %v6568, 24
        %v6634 = vpop.permute.xlu0 %6633
        %6635 = vrot.lane.b32.xlu0 %v6569, 24
        %v6636 = vpop.permute.xlu0 %6635
        %6637 = vrot.lane.b32.xlu0 %v6570, 24
        %v6638 = vpop.permute.xlu0 %6637
        %6639 = vrot.lane.b32.xlu0 %v6571, 24
        %v6640 = vpop.permute.xlu0 %6639
        %6641 = vrot.lane.b32.xlu0 %v6572, 24
        %v6642 = vpop.permute.xlu0 %6641
        %6643 = vrot.lane.b32.xlu0 %v6573, 24
        %v6644 = vpop.permute.xlu0 %6643
        %6645 = vrot.lane.b32.xlu0 %v6574, 24
        %v6646 = vpop.permute.xlu0 %6645
        %6647 = vrot.lane.b32.xlu0 %v6575, 24
        %v6648 = vpop.permute.xlu0 %6647
        %6649 = vrot.lane.b32.xlu0 %v6576, 24
        %v6650 = vpop.permute.xlu0 %6649
        %6651 = vrot.lane.b32.xlu0 %v6577, 24
        %v6652 = vpop.permute.xlu0 %6651
        %6653 = vrot.lane.b32.xlu0 %v6578, 24
        %v6654 = vpop.permute.xlu0 %6653
        %6655 = vrot.lane.b32.xlu0 %v6579, 24
        %v6656 = vpop.permute.xlu0 %6655
        %6657 = vrot.lane.b32.xlu0 %v6580, 24
        %v6658 = vpop.permute.xlu0 %6657
        %6659 = vrot.lane.b32.xlu0 %v6581, 24
        %v6660 = vpop.permute.xlu0 %6659
        %6661 = vrot.lane.b32.xlu0 %v6582, 24
        %v6662 = vpop.permute.xlu0 %6661
        %6663 = vrot.lane.b32.xlu0 %v6583, 24
        %v6664 = vpop.permute.xlu0 %6663
        %6665 = vrot.lane.b32.xlu0 %v6584, 24
        %v6666 = vpop.permute.xlu0 %6665
        %6667 = vrot.lane.b32.xlu0 %v6585, 24
        %v6668 = vpop.permute.xlu0 %6667
        %6669 = vrot.lane.b32.xlu0 %v6586, 24
        %v6670 = vpop.permute.xlu0 %6669
        %6671 = vrot.lane.b32.xlu0 %v6587, 24
        %v6672 = vpop.permute.xlu0 %6671
        %6673 = vrot.lane.b32.xlu0 %v6588, 24
        %v6674 = vpop.permute.xlu0 %6673
        %6675 = vrot.lane.b32.xlu0 %v6589, 24
        %v6676 = vpop.permute.xlu0 %6675
        %6677 = vrot.lane.b32.xlu0 %v6590, 24
        %v6678 = vpop.permute.xlu0 %6677
        %6679 = vrot.lane.b32.xlu0 %v6591, 24
        %v6680 = vpop.permute.xlu0 %6679
        %6681 = vrot.lane.b32.xlu0 %v6592, 24
        %v6682 = vpop.permute.xlu0 %6681
        %6683 = vrot.lane.b32.xlu0 %v6593, 24
        %v6684 = vpop.permute.xlu0 %6683
        %6685 = vrot.lane.b32.xlu0 %v6594, 24
        %v6686 = vpop.permute.xlu0 %6685
        %6687 = vrot.lane.b32.xlu0 %v6595, 24
        %v6688 = vpop.permute.xlu0 %6687
        %6689 = vrot.lane.b32.xlu0 %v6596, 24
        %v6690 = vpop.permute.xlu0 %6689
        %6691 = vrot.lane.b32.xlu0 %v6597, 24
        %v6692 = vpop.permute.xlu0 %6691
        %6693 = vrot.lane.b32.xlu0 %v6598, 24
        %v6694 = vpop.permute.xlu0 %6693
        %vm6727 = vcmask 261312
        %6728 = vst.msk [vmem:[#allocation3] sm:$0xff] %vm6727, %v6632
        %6729 = vst.msk [vmem:[#allocation3 + $0x8] sm:$0xff] %vm6727, %v6634
        %6730 = vst.msk [vmem:[#allocation3 + $0x10] sm:$0xff] %vm6727, %v6636
        %6731 = vst.msk [vmem:[#allocation3 + $0x18] sm:$0xff] %vm6727, %v6638
        %6732 = vst.msk [vmem:[#allocation3 + $0x20] sm:$0xff] %vm6727, %v6640
        %6733 = vst.msk [vmem:[#allocation3 + $0x28] sm:$0xff] %vm6727, %v6642
        %6734 = vst.msk [vmem:[#allocation3 + $0x30] sm:$0xff] %vm6727, %v6644
        %6735 = vst.msk [vmem:[#allocation3 + $0x38] sm:$0xff] %vm6727, %v6646
        %6736 = vst.msk [vmem:[#allocation3 + $0x40] sm:$0xff] %vm6727, %v6648
        %6737 = vst.msk [vmem:[#allocation3 + $0x48] sm:$0xff] %vm6727, %v6650
        %6738 = vst.msk [vmem:[#allocation3 + $0x50] sm:$0xff] %vm6727, %v6652
        %6739 = vst.msk [vmem:[#allocation3 + $0x58] sm:$0xff] %vm6727, %v6654
        %6740 = vst.msk [vmem:[#allocation3 + $0x60] sm:$0xff] %vm6727, %v6656
        %6741 = vst.msk [vmem:[#allocation3 + $0x68] sm:$0xff] %vm6727, %v6658
        %6742 = vst.msk [vmem:[#allocation3 + $0x70] sm:$0xff] %vm6727, %v6660
        %6743 = vst.msk [vmem:[#allocation3 + $0x78] sm:$0xff] %vm6727, %v6662
        %6744 = vst.msk [vmem:[#allocation3 + $0x80] sm:$0xff] %vm6727, %v6664
        %6745 = vst.msk [vmem:[#allocation3 + $0x88] sm:$0xff] %vm6727, %v6666
        %6746 = vst.msk [vmem:[#allocation3 + $0x90] sm:$0xff] %vm6727, %v6668
        %6747 = vst.msk [vmem:[#allocation3 + $0x98] sm:$0xff] %vm6727, %v6670
        %6748 = vst.msk [vmem:[#allocation3 + $0xa0] sm:$0xff] %vm6727, %v6672
        %6749 = vst.msk [vmem:[#allocation3 + $0xa8] sm:$0xff] %vm6727, %v6674
        %6750 = vst.msk [vmem:[#allocation3 + $0xb0] sm:$0xff] %vm6727, %v6676
        %6751 = vst.msk [vmem:[#allocation3 + $0xb8] sm:$0xff] %vm6727, %v6678
        %6752 = vst.msk [vmem:[#allocation3 + $0xc0] sm:$0xff] %vm6727, %v6680
        %6753 = vst.msk [vmem:[#allocation3 + $0xc8] sm:$0xff] %vm6727, %v6682
        %6754 = vst.msk [vmem:[#allocation3 + $0xd0] sm:$0xff] %vm6727, %v6684
        %6755 = vst.msk [vmem:[#allocation3 + $0xd8] sm:$0xff] %vm6727, %v6686
        %6756 = vst.msk [vmem:[#allocation3 + $0xe0] sm:$0xff] %vm6727, %v6688
        %6757 = vst.msk [vmem:[#allocation3 + $0xe8] sm:$0xff] %vm6727, %v6690
        %6758 = vst.msk [vmem:[#allocation3 + $0xf0] sm:$0xff] %vm6727, %v6692
        %6759 = vst.msk [vmem:[#allocation3 + $0xf8] sm:$0xff] %vm6727, %v6694
        %v6760 = vld [vmem:[#allocation3] sm:$0xff]
        %v6761 = vld [vmem:[#allocation3 + $0x8] sm:$0xff]
        %v6762 = vld [vmem:[#allocation3 + $0x10] sm:$0xff]
        %v6763 = vld [vmem:[#allocation3 + $0x18] sm:$0xff]
        %v6764 = vld [vmem:[#allocation3 + $0x20] sm:$0xff]
        %v6765 = vld [vmem:[#allocation3 + $0x28] sm:$0xff]
        %v6766 = vld [vmem:[#allocation3 + $0x30] sm:$0xff]
        %v6767 = vld [vmem:[#allocation3 + $0x38] sm:$0xff]
        %v6768 = vld [vmem:[#allocation3 + $0x40] sm:$0xff]
        %v6769 = vld [vmem:[#allocation3 + $0x48] sm:$0xff]
        %v6770 = vld [vmem:[#allocation3 + $0x50] sm:$0xff]
        %v6771 = vld [vmem:[#allocation3 + $0x58] sm:$0xff]
        %v6772 = vld [vmem:[#allocation3 + $0x60] sm:$0xff]
        %v6773 = vld [vmem:[#allocation3 + $0x68] sm:$0xff]
        %v6774 = vld [vmem:[#allocation3 + $0x70] sm:$0xff]
        %v6775 = vld [vmem:[#allocation3 + $0x78] sm:$0xff]
        %v6776 = vld [vmem:[#allocation3 + $0x80] sm:$0xff]
        %v6777 = vld [vmem:[#allocation3 + $0x88] sm:$0xff]
        %v6778 = vld [vmem:[#allocation3 + $0x90] sm:$0xff]
        %v6779 = vld [vmem:[#allocation3 + $0x98] sm:$0xff]
        %v6780 = vld [vmem:[#allocation3 + $0xa0] sm:$0xff]
        %v6781 = vld [vmem:[#allocation3 + $0xa8] sm:$0xff]
        %v6782 = vld [vmem:[#allocation3 + $0xb0] sm:$0xff]
        %v6783 = vld [vmem:[#allocation3 + $0xb8] sm:$0xff]
        %v6784 = vld [vmem:[#allocation3 + $0xc0] sm:$0xff]
        %v6785 = vld [vmem:[#allocation3 + $0xc8] sm:$0xff]
        %v6786 = vld [vmem:[#allocation3 + $0xd0] sm:$0xff]
        %v6787 = vld [vmem:[#allocation3 + $0xd8] sm:$0xff]
        %v6788 = vld [vmem:[#allocation3 + $0xe0] sm:$0xff]
        %v6789 = vld [vmem:[#allocation3 + $0xe8] sm:$0xff]
        %v6790 = vld [vmem:[#allocation3 + $0xf0] sm:$0xff]
        %v6791 = vld [vmem:[#allocation3 + $0xf8] sm:$0xff]
        %v6792 = vld [vmem:[%s3] sm:$0xff]
        %v6793 = vld [vmem:[%s3 + $0x8] sm:$0xff]
        %v6794 = vld [vmem:[%s3 + $0x10] sm:$0xff]
        %v6795 = vld [vmem:[%s3 + $0x18] sm:$0xff]
        %v6796 = vld [vmem:[%s4] sm:$0x1]
        %v6798 = vlaneseq
        %v6799 = vshrl.u32 %v6798, 7
        %v6800 = vsub.s32 0, %v6799
        %v6801 = vrot.slane %v6796, %v6800
        %v6804 = vsel %vm310, %v6760, 0
        %v6807 = vsel %vm310, %v6761, 0
        %v6810 = vsel %vm310, %v6762, 0
        %v6813 = vsel %vm310, %v6763, 0
        %v6816 = vsel %vm310, %v6764, 0
        %v6819 = vsel %vm310, %v6765, 0
        %v6822 = vsel %vm310, %v6766, 0
        %v6825 = vsel %vm310, %v6767, 0
        %v6828 = vsel %vm310, %v6768, 0
        %v6831 = vsel %vm310, %v6769, 0
        %v6834 = vsel %vm310, %v6770, 0
        %v6837 = vsel %vm310, %v6771, 0
        %v6840 = vsel %vm310, %v6772, 0
        %v6843 = vsel %vm310, %v6773, 0
        %v6846 = vsel %vm310, %v6774, 0
        %v6849 = vsel %vm310, %v6775, 0
        %v6852 = vsel %vm310, %v6776, 0
        %v6855 = vsel %vm310, %v6777, 0
        %v6858 = vsel %vm310, %v6778, 0
        %v6861 = vsel %vm310, %v6779, 0
        %v6864 = vsel %vm310, %v6780, 0
        %v6867 = vsel %vm310, %v6781, 0
        %v6870 = vsel %vm310, %v6782, 0
        %v6873 = vsel %vm310, %v6783, 0
        %v6876 = vsel %vm310, %v6784, 0
        %v6879 = vsel %vm310, %v6785, 0
        %v6882 = vsel %vm310, %v6786, 0
        %v6885 = vsel %vm310, %v6787, 0
        %v6888 = vsel %vm310, %v6788, 0
        %v6891 = vsel %vm310, %v6789, 0
        %v6894 = vsel %vm310, %v6790, 0
        %v6897 = vsel %vm310, %v6791, 0
        %6899 = vmatprep.subr.mxu0 0.0
        %6900 = vmatpush1.msra.mxu0 %v6792
        %6901 = vmatprep.subr.mxu0 0.0
        %6902 = vmatpush1.msra.mxu0 %v6793
        %6903 = vmatprep.subr.mxu0 0.0
        %6904 = vmatpush1.msra.mxu0 %v6794
        %6905 = vmatprep.subr.mxu0 0.0
        %6906 = vmatpush1.msra.mxu0 %v6795
        %6907 = vmatprep.subr.mxu0 0.0
        %6908 = vmatpush1.msra.mxu0 0.0
        %6909 = vmatprep.subr.mxu0 0.0
        %6910 = vmatpush1.msra.mxu0 0.0
        %6911 = vmatprep.subr.mxu0 0.0
        %6912 = vmatpush1.msra.mxu0 0.0
        %6913 = vmatprep.subr.mxu0 0.0
        %6914 = vmatpush1.msra.mxu0 0.0
        %6915 = vmatprep.subr.mxu0 0.0
        %6916 = vmatpush1.msra.mxu0 0.0
        %6917 = vmatprep.subr.mxu0 0.0
        %6918 = vmatpush1.msra.mxu0 0.0
        %6919 = vmatprep.subr.mxu0 0.0
        %6920 = vmatpush1.msra.mxu0 0.0
        %6921 = vmatprep.subr.mxu0 0.0
        %6922 = vmatpush1.msra.mxu0 0.0
        %6923 = vmatprep.subr.mxu0 0.0
        %6924 = vmatpush1.msra.mxu0 0.0
        %6925 = vmatprep.subr.mxu0 0.0
        %6926 = vmatpush1.msra.mxu0 0.0
        %6927 = vmatprep.subr.mxu0 0.0
        %6928 = vmatpush1.msra.mxu0 0.0
        %6929 = vmatprep.subr.mxu0 0.0
        %6930 = vmatpush1.msra.mxu0 0.0
        %6931 = vmatprep.subr.mxu0 0.0
        %6932 = vmatpush1.msra.mxu0 0.0
        %6933 = vmatprep.subr.mxu0 0.0
        %6934 = vmatpush1.msra.mxu0 0.0
        %6935 = vmatprep.subr.mxu0 0.0
        %6936 = vmatpush1.msra.mxu0 0.0
        %6937 = vmatprep.subr.mxu0 0.0
        %6938 = vmatpush1.msra.mxu0 0.0
        %6939 = vmatprep.subr.mxu0 0.0
        %6940 = vmatpush1.msra.mxu0 0.0
        %6941 = vmatprep.subr.mxu0 0.0
        %6942 = vmatpush1.msra.mxu0 0.0
        %6943 = vmatprep.subr.mxu0 0.0
        %6944 = vmatpush1.msra.mxu0 0.0
        %6945 = vmatprep.subr.mxu0 0.0
        %6946 = vmatpush1.msra.mxu0 0.0
        %6947 = vmatprep.subr.mxu0 0.0
        %6948 = vmatpush1.msra.mxu0 0.0
        %6949 = vmatprep.subr.mxu0 0.0
        %6950 = vmatpush1.msra.mxu0 0.0
        %6951 = vmatprep.subr.mxu0 0.0
        %6952 = vmatpush1.msra.mxu0 0.0
        %6953 = vmatprep.subr.mxu0 0.0
        %6954 = vmatpush1.msra.mxu0 0.0
        %6955 = vmatprep.subr.mxu0 0.0
        %6956 = vmatpush1.msra.mxu0 0.0
        %6957 = vmatprep.subr.mxu0 0.0
        %6958 = vmatpush1.msra.mxu0 0.0
        %6959 = vmatprep.subr.mxu0 0.0
        %6960 = vmatpush1.msra.mxu0 0.0
        %6961 = vmatprep.subr.mxu0 0.0
        %6962 = vmatpush1.msra.mxu0 0.0
        %6963 = vmatprep.mubr.f32.mxu0 0.0
        %6964 = vmatmul.mubr.f32.gmra.mrb[0].mxu0 %v6804
        %v6965 = vpop.f32.mrb[0].mxu0
        %v6966 = vadd.f32 %v6801, %v6965
        %v6967 = vpop.f32.mrb[0].mxu0
        %6968 = vmatprep.mubr.f32.mxu0 0.0
        %6969 = vmatmul.mubr.f32.gmra.mrb[0].mxu0 %v6807
        %v6970 = vpop.f32.mrb[0].mxu0
        %v6971 = vadd.f32 %v6801, %v6970
        %v6972 = vpop.f32.mrb[0].mxu0
        %6973 = vmatprep.mubr.f32.mxu0 0.0
        %6974 = vmatmul.mubr.f32.gmra.mrb[0].mxu0 %v6810
        %v6975 = vpop.f32.mrb[0].mxu0
        %v6976 = vadd.f32 %v6801, %v6975
        %v6977 = vpop.f32.mrb[0].mxu0
        %6978 = vmatprep.mubr.f32.mxu0 0.0
        %6979 = vmatmul.mubr.f32.gmra.mrb[0].mxu0 %v6813
        %v6980 = vpop.f32.mrb[0].mxu0
        %v6981 = vadd.f32 %v6801, %v6980
        %v6982 = vpop.f32.mrb[0].mxu0
        %6983 = vmatprep.mubr.f32.mxu0 0.0
        %6984 = vmatmul.mubr.f32.gmra.mrb[0].mxu0 %v6816
        %v6985 = vpop.f32.mrb[0].mxu0
        %v6986 = vadd.f32 %v6801, %v6985
        %v6987 = vpop.f32.mrb[0].mxu0
        %6988 = vmatprep.mubr.f32.mxu0 0.0
        %6989 = vmatmul.mubr.f32.gmra.mrb[0].mxu0 %v6819
        %v6990 = vpop.f32.mrb[0].mxu0
        %v6991 = vadd.f32 %v6801, %v6990
        %v6992 = vpop.f32.mrb[0].mxu0
        %6993 = vmatprep.mubr.f32.mxu0 0.0
        %6994 = vmatmul.mubr.f32.gmra.mrb[0].mxu0 %v6822
        %v6995 = vpop.f32.mrb[0].mxu0
        %v6996 = vadd.f32 %v6801, %v6995
        %v6997 = vpop.f32.mrb[0].mxu0
        %6998 = vmatprep.mubr.f32.mxu0 0.0
        %6999 = vmatmul.mubr.f32.gmra.mrb[0].mxu0 %v6825
        %v7000 = vpop.f32.mrb[0].mxu0
        %v7001 = vadd.f32 %v6801, %v7000
        %v7002 = vpop.f32.mrb[0].mxu0
        %7003 = vmatprep.mubr.f32.mxu0 0.0
        %7004 = vmatmul.mubr.f32.gmra.mrb[0].mxu0 %v6828
        %v7005 = vpop.f32.mrb[0].mxu0
        %v7006 = vadd.f32 %v6801, %v7005
        %v7007 = vpop.f32.mrb[0].mxu0
        %7008 = vmatprep.mubr.f32.mxu0 0.0
        %7009 = vmatmul.mubr.f32.gmra.mrb[0].mxu0 %v6831
        %v7010 = vpop.f32.mrb[0].mxu0
        %v7011 = vadd.f32 %v6801, %v7010
        %v7012 = vpop.f32.mrb[0].mxu0
        %7013 = vmatprep.mubr.f32.mxu0 0.0
        %7014 = vmatmul.mubr.f32.gmra.mrb[0].mxu0 %v6834
        %v7015 = vpop.f32.mrb[0].mxu0
        %v7016 = vadd.f32 %v6801, %v7015
        %v7017 = vpop.f32.mrb[0].mxu0
        %7018 = vmatprep.mubr.f32.mxu0 0.0
        %7019 = vmatmul.mubr.f32.gmra.mrb[0].mxu0 %v6837
        %v7020 = vpop.f32.mrb[0].mxu0
        %v7021 = vadd.f32 %v6801, %v7020
        %v7022 = vpop.f32.mrb[0].mxu0
        %7023 = vmatprep.mubr.f32.mxu0 0.0
        %7024 = vmatmul.mubr.f32.gmra.mrb[0].mxu0 %v6840
        %v7025 = vpop.f32.mrb[0].mxu0
        %v7026 = vadd.f32 %v6801, %v7025
        %v7027 = vpop.f32.mrb[0].mxu0
        %7028 = vmatprep.mubr.f32.mxu0 0.0
        %7029 = vmatmul.mubr.f32.gmra.mrb[0].mxu0 %v6843
        %v7030 = vpop.f32.mrb[0].mxu0
        %v7031 = vadd.f32 %v6801, %v7030
        %v7032 = vpop.f32.mrb[0].mxu0
        %7033 = vmatprep.mubr.f32.mxu0 0.0
        %7034 = vmatmul.mubr.f32.gmra.mrb[0].mxu0 %v6846
        %v7035 = vpop.f32.mrb[0].mxu0
        %v7036 = vadd.f32 %v6801, %v7035
        %v7037 = vpop.f32.mrb[0].mxu0
        %7038 = vmatprep.mubr.f32.mxu0 0.0
        %7039 = vmatmul.mubr.f32.gmra.mrb[0].mxu0 %v6849
        %v7040 = vpop.f32.mrb[0].mxu0
        %v7041 = vadd.f32 %v6801, %v7040
        %v7042 = vpop.f32.mrb[0].mxu0
        %7043 = vmatprep.mubr.f32.mxu0 0.0
        %7044 = vmatmul.mubr.f32.gmra.mrb[0].mxu0 %v6852
        %v7045 = vpop.f32.mrb[0].mxu0
        %v7046 = vadd.f32 %v6801, %v7045
        %v7047 = vpop.f32.mrb[0].mxu0
        %7048 = vmatprep.mubr.f32.mxu0 0.0
        %7049 = vmatmul.mubr.f32.gmra.mrb[0].mxu0 %v6855
        %v7050 = vpop.f32.mrb[0].mxu0
        %v7051 = vadd.f32 %v6801, %v7050
        %v7052 = vpop.f32.mrb[0].mxu0
        %7053 = vmatprep.mubr.f32.mxu0 0.0
        %7054 = vmatmul.mubr.f32.gmra.mrb[0].mxu0 %v6858
        %v7055 = vpop.f32.mrb[0].mxu0
        %v7056 = vadd.f32 %v6801, %v7055
        %v7057 = vpop.f32.mrb[0].mxu0
        %7058 = vmatprep.mubr.f32.mxu0 0.0
        %7059 = vmatmul.mubr.f32.gmra.mrb[0].mxu0 %v6861
        %v7060 = vpop.f32.mrb[0].mxu0
        %v7061 = vadd.f32 %v6801, %v7060
        %v7062 = vpop.f32.mrb[0].mxu0
        %7063 = vmatprep.mubr.f32.mxu0 0.0
        %7064 = vmatmul.mubr.f32.gmra.mrb[0].mxu0 %v6864
        %v7065 = vpop.f32.mrb[0].mxu0
        %v7066 = vadd.f32 %v6801, %v7065
        %v7067 = vpop.f32.mrb[0].mxu0
        %7068 = vmatprep.mubr.f32.mxu0 0.0
        %7069 = vmatmul.mubr.f32.gmra.mrb[0].mxu0 %v6867
        %v7070 = vpop.f32.mrb[0].mxu0
        %v7071 = vadd.f32 %v6801, %v7070
        %v7072 = vpop.f32.mrb[0].mxu0
        %7073 = vmatprep.mubr.f32.mxu0 0.0
        %7074 = vmatmul.mubr.f32.gmra.mrb[0].mxu0 %v6870
        %v7075 = vpop.f32.mrb[0].mxu0
        %v7076 = vadd.f32 %v6801, %v7075
        %v7077 = vpop.f32.mrb[0].mxu0
        %7078 = vmatprep.mubr.f32.mxu0 0.0
        %7079 = vmatmul.mubr.f32.gmra.mrb[0].mxu0 %v6873
        %v7080 = vpop.f32.mrb[0].mxu0
        %v7081 = vadd.f32 %v6801, %v7080
        %v7082 = vpop.f32.mrb[0].mxu0
        %7083 = vmatprep.mubr.f32.mxu0 0.0
        %7084 = vmatmul.mubr.f32.gmra.mrb[0].mxu0 %v6876
        %v7085 = vpop.f32.mrb[0].mxu0
        %v7086 = vadd.f32 %v6801, %v7085
        %v7087 = vpop.f32.mrb[0].mxu0
        %7088 = vmatprep.mubr.f32.mxu0 0.0
        %7089 = vmatmul.mubr.f32.gmra.mrb[0].mxu0 %v6879
        %v7090 = vpop.f32.mrb[0].mxu0
        %v7091 = vadd.f32 %v6801, %v7090
        %v7092 = vpop.f32.mrb[0].mxu0
        %7093 = vmatprep.mubr.f32.mxu0 0.0
        %7094 = vmatmul.mubr.f32.gmra.mrb[0].mxu0 %v6882
        %v7095 = vpop.f32.mrb[0].mxu0
        %v7096 = vadd.f32 %v6801, %v7095
        %v7097 = vpop.f32.mrb[0].mxu0
        %7098 = vmatprep.mubr.f32.mxu0 0.0
        %7099 = vmatmul.mubr.f32.gmra.mrb[0].mxu0 %v6885
        %v7100 = vpop.f32.mrb[0].mxu0
        %v7101 = vadd.f32 %v6801, %v7100
        %v7102 = vpop.f32.mrb[0].mxu0
        %7103 = vmatprep.mubr.f32.mxu0 0.0
        %7104 = vmatmul.mubr.f32.gmra.mrb[0].mxu0 %v6888
        %v7105 = vpop.f32.mrb[0].mxu0
        %v7106 = vadd.f32 %v6801, %v7105
        %v7107 = vpop.f32.mrb[0].mxu0
        %7108 = vmatprep.mubr.f32.mxu0 0.0
        %7109 = vmatmul.mubr.f32.gmra.mrb[0].mxu0 %v6891
        %v7110 = vpop.f32.mrb[0].mxu0
        %v7111 = vadd.f32 %v6801, %v7110
        %v7112 = vpop.f32.mrb[0].mxu0
        %7113 = vmatprep.mubr.f32.mxu0 0.0
        %7114 = vmatmul.mubr.f32.gmra.mrb[0].mxu0 %v6894
        %v7115 = vpop.f32.mrb[0].mxu0
        %v7116 = vadd.f32 %v6801, %v7115
        %v7117 = vpop.f32.mrb[0].mxu0
        %7118 = vmatprep.mubr.f32.mxu0 0.0
        %7119 = vmatmul.mubr.f32.gmra.mrb[0].mxu0 %v6897
        %v7120 = vpop.f32.mrb[0].mxu0
        %v7121 = vadd.f32 %v6801, %v7120
        %v7122 = vpop.f32.mrb[0].mxu0
        %7123 = vdwg.mxu0
        %7124 = vst.msk [vmem:[%s266] sm:$0xff] %vm310, %v6966
        %7125 = vst.msk [vmem:[%s266 + $0x8] sm:$0xff] %vm310, %v6971
        %7126 = vst.msk [vmem:[%s266 + $0x10] sm:$0xff] %vm310, %v6976
        %7127 = vst.msk [vmem:[%s266 + $0x18] sm:$0xff] %vm310, %v6981
        %7128 = vst.msk [vmem:[%s266 + $0x20] sm:$0xff] %vm310, %v6986
        %7129 = vst.msk [vmem:[%s266 + $0x28] sm:$0xff] %vm310, %v6991
        %7130 = vst.msk [vmem:[%s266 + $0x30] sm:$0xff] %vm310, %v6996
        %7131 = vst.msk [vmem:[%s266 + $0x38] sm:$0xff] %vm310, %v7001
        %7132 = vst.msk [vmem:[%s266 + $0x40] sm:$0xff] %vm310, %v7006
        %7133 = vst.msk [vmem:[%s266 + $0x48] sm:$0xff] %vm310, %v7011
        %7134 = vst.msk [vmem:[%s266 + $0x50] sm:$0xff] %vm310, %v7016
        %7135 = vst.msk [vmem:[%s266 + $0x58] sm:$0xff] %vm310, %v7021
        %7136 = vst.msk [vmem:[%s266 + $0x60] sm:$0xff] %vm310, %v7026
        %7137 = vst.msk [vmem:[%s266 + $0x68] sm:$0xff] %vm310, %v7031
        %7138 = vst.msk [vmem:[%s266 + $0x70] sm:$0xff] %vm310, %v7036
        %7139 = vst.msk [vmem:[%s266 + $0x78] sm:$0xff] %vm310, %v7041
        %7140 = vst.msk [vmem:[%s266 + $0x80] sm:$0xff] %vm310, %v7046
        %7141 = vst.msk [vmem:[%s266 + $0x88] sm:$0xff] %vm310, %v7051
        %7142 = vst.msk [vmem:[%s266 + $0x90] sm:$0xff] %vm310, %v7056
        %7143 = vst.msk [vmem:[%s266 + $0x98] sm:$0xff] %vm310, %v7061
        %7144 = vst.msk [vmem:[%s266 + $0xa0] sm:$0xff] %vm310, %v7066
        %7145 = vst.msk [vmem:[%s266 + $0xa8] sm:$0xff] %vm310, %v7071
        %7146 = vst.msk [vmem:[%s266 + $0xb0] sm:$0xff] %vm310, %v7076
        %7147 = vst.msk [vmem:[%s266 + $0xb8] sm:$0xff] %vm310, %v7081
        %7148 = vst.msk [vmem:[%s266 + $0xc0] sm:$0xff] %vm310, %v7086
        %7149 = vst.msk [vmem:[%s266 + $0xc8] sm:$0xff] %vm310, %v7091
        %7150 = vst.msk [vmem:[%s266 + $0xd0] sm:$0xff] %vm310, %v7096
        %7151 = vst.msk [vmem:[%s266 + $0xd8] sm:$0xff] %vm310, %v7101
        %7152 = vst.msk [vmem:[%s266 + $0xe0] sm:$0xff] %vm310, %v7106
        %7153 = vst.msk [vmem:[%s266 + $0xe8] sm:$0xff] %vm310, %v7111
        %7154 = vst.msk [vmem:[%s266 + $0xf0] sm:$0xff] %vm310, %v7116
        %7155 = vst.msk [vmem:[%s266 + $0xf8] sm:$0xff] %vm310, %v7121
        %p7156 = scmp.lt.s32.totalorder %s18, 1
        %s7157 = scalar_select %p7156, %s18, 1
        %s7158 = smul.addr %s7157, 32
        %s7159 = smul.addr %s7158, 8
        %s7160 = scalar_lea.vmem %s6, %s7159
        // Predicated region
        $region49: #{tpu_custom_call.1} parent=43 // pred_check
          %p7161 = pneg %p167
        $region50: #{tpu_custom_call.1} parent=43 // pred_check_branch
          %7163 = sbr.rel (%p7161) target = $region52
        $region51: #{tpu_custom_call.1} parent=43 // pred_region
          _
        $region52: #{tpu_custom_call.1} parent=43 // pred_fallthru
          _
      $region44: #{tpu_custom_call.1} parent=5 // pred_fallthru
        _
      %p7164 = scmp.le.s32.totalorder 2, %s13
      // Predicated region
      $region53: #{tpu_custom_call.1} parent=5 // pred_check
        %p7165 = pneg %p7164
      $region54: #{tpu_custom_call.1} parent=5 // pred_check_branch
        %7167 = sbr.rel (%p7165) target = $region56
      $region55: #{tpu_custom_call.1} parent=5 // pred_region
        %s7168 = ssub.s32 %s13, 2
        // Predicated region
        $region57: #{tpu_custom_call.1} parent=55 // pred_check
          %p7169 = pneg %p173
        $region58: #{tpu_custom_call.1} parent=55 // pred_check_branch
          %7171 = sbr.rel (%p7169) target = $region60
        $region59: #{tpu_custom_call.1} parent=55 // pred_region
          %p7172 = scmp.lt.s32.totalorder %s19, 1
          %s7173 = scalar_select %p7172, %s19, 1
          %s7174 = smul.addr %s7173, 32
          %s7175 = smul.addr %s7174, 8
          %s7176 = scalar_lea.vmem %s6, %s7175
        $region60: #{tpu_custom_call.1} parent=55 // pred_fallthru
          _
      $region56: #{tpu_custom_call.1} parent=5 // pred_fallthru
        _
    $region6: #{tpu_custom_call.1} parent=1 // loop_footer
      %s17 = sadd.s32 1, %s13
    $region7: #{tpu_custom_call.1} parent=1 // loop_footer_branch
      %12 = sbr.rel target = $region3
    $region8: #{tpu_custom_call.1} parent=1 // loop_exit
      _
    %7177 = vsyncpa [#allocation5], 1
    %s7178 = scalar_lea.sflag [#allocation5], 1
    %7179 = vsyncpa %s7178, 1

</llo_original>
